<compile_context>
chip_gen: v7x
topology: tpu7x:2x2x1
jax: 0.10.0
libtpu: 0.0.40
codegen_flags: <defaults>
</compile_context>

<pallas_src>
import functools

import numpy as np
import jax
import jax.numpy as jnp
from jax.experimental import pallas as pl
from jax.experimental.pallas import tpu as pltpu

BN_EPS = 1e-5
CPAD = 128       # lane-dense channel padding for all conv outputs and the classifier
CIN0_PAD = 8     # input-channel padding for the first conv (3 -> 8)


# ----------------------------- Pallas kernels -----------------------------

def _conv_relu_window_max(x_ref, w_ref, b_ref, lm_ref, rm_ref, scr_ref, *, W, HW):
    """3x3 conv (9 shifted bf16 matmuls, f32 accumulation) + folded-BN bias + ReLU,
    followed by the 2x2 sliding-window max at every position.

    x_ref:  (1, (H+4)*W, Cin)  row-flattened input, 2 zero row-groups top & bottom
    w_ref:  (9, Cin, Cout)     bf16 weights (BN scale folded), rows ordered (ky, kx)
    b_ref:  (1, Cout)          folded bias
    lm/rm:  (HW, 1)            0/1 masks for the left / right image border columns
    scr:    (HW + 2W, Cout)    f32 VMEM scratch

    Returns an (HW, Cout) f32 value whose rows at (even y, even x) hold the
    MaxPool2d(2) outputs.
    """
    lm = lm_ref[...]
    rm = rm_ref[...]
    acc = None
    for t in range(9):
        ky, kx = t // 3, t % 3
        start = (ky + 1) * W + (kx - 1)          # row shift of this tap
        xt = x_ref[0, start:start + HW, :]
        if kx == 0:
            xt = xt * lm                         # conv zero-padding, left border
        elif kx == 2:
            xt = xt * rm                         # conv zero-padding, right border
        d = jnp.dot(xt.astype(jnp.bfloat16), w_ref[t],
                    preferred_element_type=jnp.float32)
        acc = d if acc is None else acc + d
    acc = jnp.maximum(acc + b_ref[...], 0.0)     # folded BN bias + ReLU (f32)

    # Stage full-res map in VMEM (tail rows zeroed), then 2x2 window max = three
    # elementwise maxes of row-shifted reads.
    scr_rows = scr_ref.shape[0]
    scr_ref[0:HW, :] = acc
    scr_ref[HW:scr_rows, :] = jnp.zeros((scr_rows - HW, scr_ref.shape[1]), jnp.float32)
    return jnp.maximum(
        jnp.maximum(scr_ref[0:HW, :], scr_ref[1:HW + 1, :]),
        jnp.maximum(scr_ref[W:HW + W, :], scr_ref[W + 1:HW + W + 1, :]))


def conv_block_kernel(x_ref, w_ref, b_ref, lm_ref, rm_ref, sel_ref, o_ref, scr_ref,
                      *, W, HW, WO, HOWO):
    """Fused Conv3x3 + BN + ReLU + MaxPool2d(2); output written in the next block's
    padded flat layout: (1, (Ho+4)*Wo, Cout) with 2 zero row-groups on each side."""
    m = _conv_relu_window_max(x_ref, w_ref, b_ref, lm_ref, rm_ref, scr_ref, W=W, HW=HW)
    # stride-2 down-sample (the actual MaxPool selection) as a 0/1 selection matmul
    pooled = jnp.dot(sel_ref[...], m, preferred_element_type=jnp.float32)   # (HOWO, Cout)
    c = o_ref.shape[2]
    pad = 2 * WO
    o_ref[0, 0:pad, :] = jnp.zeros((pad, c), jnp.float32)
    o_ref[0, pad:pad + HOWO, :] = pooled
    o_ref[0, pad + HOWO:pad + HOWO + pad, :] = jnp.zeros((pad, c), jnp.float32)


def conv_head_kernel(x_ref, w_ref, b_ref, lm_ref, rm_ref, avg_ref, lw_ref, lb_ref,
                     o_ref, scr_ref, *, W, HW):
    """Last conv block with the classifier head fused in: global average pool of the
    pooled map (avg-weighted selection row) + Linear. Feature map never leaves VMEM."""
    m = _conv_relu_window_max(x_ref, w_ref, b_ref, lm_ref, rm_ref, scr_ref, W=W, HW=HW)
    g = jnp.dot(avg_ref[...], m, preferred_element_type=jnp.float32)        # (1, C)
    logits = jnp.dot(g, lw_ref[...], preferred_element_type=jnp.float32) + lb_ref[...]
    o_ref[0, :, :] = logits


# ----------------------------- pallas_call wrappers -----------------------------

def conv_block(x_flat, w9, bias, lmask, rmask, sel, *, H, W, cin_p):
    n, rows_in, _ = x_flat.shape
    assert rows_in == (H + 4) * W
    HW = H * W
    HO, WO = H // 2, W // 2
    HOWO = HO * WO
    out_rows = (HO + 4) * WO
    scr_rows = HW + 2 * W
    kern = functools.partial(conv_block_kernel, W=W, HW=HW, WO=WO, HOWO=HOWO)
    return pl.pallas_call(
        kern,
        out_shape=jax.ShapeDtypeStruct((n, out_rows, CPAD), jnp.float32),
        grid_spec=pltpu.PrefetchScalarGridSpec(
            num_scalar_prefetch=0,
            grid=(n,),
            in_specs=[
                pl.BlockSpec((1, rows_in, cin_p), lambda i: (i, 0, 0)),
                pl.BlockSpec((9, cin_p, CPAD), lambda i: (0, 0, 0)),
                pl.BlockSpec((1, CPAD), lambda i: (0, 0)),
                pl.BlockSpec((HW, 1), lambda i: (0, 0)),
                pl.BlockSpec((HW, 1), lambda i: (0, 0)),
                pl.BlockSpec((HOWO, HW), lambda i: (0, 0)),
            ],
            out_specs=pl.BlockSpec((1, out_rows, CPAD), lambda i: (i, 0, 0)),
            scratch_shapes=[pltpu.VMEM((scr_rows, CPAD), jnp.float32)],
        ),
        compiler_params=pltpu.CompilerParams(dimension_semantics=("parallel",)),
    )(x_flat, w9, bias, lmask, rmask, sel)


def conv_block_with_head(x_flat, w9, bias, lmask, rmask, avg_sel, lin_w, lin_b,
                         *, H, W, cin_p):
    n, rows_in, _ = x_flat.shape
    assert rows_in == (H + 4) * W
    HW = H * W
    scr_rows = HW + 2 * W
    ncp = lin_w.shape[1]
    kern = functools.partial(conv_head_kernel, W=W, HW=HW)
    out = pl.pallas_call(
        kern,
        out_shape=jax.ShapeDtypeStruct((n, 1, ncp), jnp.float32),
        grid_spec=pltpu.PrefetchScalarGridSpec(
            num_scalar_prefetch=0,
            grid=(n,),
            in_specs=[
                pl.BlockSpec((1, rows_in, cin_p), lambda i: (i, 0, 0)),
                pl.BlockSpec((9, cin_p, CPAD), lambda i: (0, 0, 0)),
                pl.BlockSpec((1, CPAD), lambda i: (0, 0)),
                pl.BlockSpec((HW, 1), lambda i: (0, 0)),
                pl.BlockSpec((HW, 1), lambda i: (0, 0)),
                pl.BlockSpec((1, HW), lambda i: (0, 0)),
                pl.BlockSpec((CPAD, ncp), lambda i: (0, 0)),
                pl.BlockSpec((1, ncp), lambda i: (0, 0)),
            ],
            out_specs=pl.BlockSpec((1, 1, ncp), lambda i: (i, 0, 0)),
            scratch_shapes=[pltpu.VMEM((scr_rows, CPAD), jnp.float32)],
        ),
        compiler_params=pltpu.CompilerParams(dimension_semantics=("parallel",)),
    )(x_flat, w9, bias, lmask, rmask, avg_sel, lin_w, lin_b)
    return out.reshape(n, ncp)


# ----------------------------- trace-time parameter / layout prep -----------------------------

def _fold_conv_bn(p, cin_p, cout_p):
    """Fold BN (running stats) scale into the conv weights, pad channels, cast to bf16.
    Returns w9 (9, cin_p, cout_p) bf16 with rows ordered (ky, kx), bias (1, cout_p) f32."""
    w = p['w']                                           # (cout, cin, 3, 3) OIHW
    cout, cin = w.shape[0], w.shape[1]
    scale = p['gamma'] / jnp.sqrt(p['var'] + BN_EPS)
    wm = jnp.transpose(w, (2, 3, 1, 0)) * scale[None, None, None, :]   # (ky, kx, ci, co)
    wm = wm.reshape(9, cin, cout)
    wm = jnp.pad(wm, ((0, 0), (0, cin_p - cin), (0, cout_p - cout)))
    bias = p['beta'] + (p['b'] - p['mean']) * scale
    bias = jnp.pad(bias, (0, cout_p - cout)).reshape(1, cout_p)
    return wm.astype(jnp.bfloat16), bias.astype(jnp.float32)


def _border_masks(H, W):
    col = np.arange(H * W) % W
    lm = (col != 0).astype(np.float32).reshape(H * W, 1)
    rm = (col != W - 1).astype(np.float32).reshape(H * W, 1)
    return jnp.asarray(lm), jnp.asarray(rm)


def _pool_select_np(H, W):
    HO, WO = H // 2, W // 2
    s = np.zeros((HO * WO, H * W), np.float32)
    for yo in range(HO):
        for xo in range(WO):
            s[yo * WO + xo, (2 * yo) * W + 2 * xo] = 1.0
    return s


def _pool_select(H, W):
    """(HoWo, HW) 0/1 matrix selecting rows at (even y, even x)."""
    return jnp.asarray(_pool_select_np(H, W))


def _pool_avg_select(H, W):
    """(1, HW) row with 1/(Ho*Wo) at (even y, even x): global average of the pooled map."""
    HO, WO = H // 2, W // 2
    s = _pool_select_np(H, W).sum(axis=0, keepdims=True) / float(HO * WO)
    return jnp.asarray(s.astype(np.float32))


def _prep_input(x_nchw):
    """NCHW -> row-flattened NHWC with 2 zero row-groups top & bottom and input
    channels zero-padded to CIN0_PAD: (N, (H+4)*W, CIN0_PAD)."""
    n, c, h, w = x_nchw.shape
    x = jnp.transpose(x_nchw, (0, 2, 3, 1))
    x = jnp.pad(x, ((0, 0), (2, 2), (0, 0), (0, CIN0_PAD - c)))
    return x.reshape(n, (h + 4) * w, CIN0_PAD)


# ----------------------------- model -----------------------------

def init_params(key, num_classes):
    chans = [(3, 32), (32, 64), (64, 128)]
    convs = []
    k = key
    for cin, cout in chans:
        k, kw, kb, kg, kbeta = jax.random.split(k, 5)
        convs.append(dict(
            w=jax.random.normal(kw, (cout, cin, 3, 3), jnp.float32) * 0.1,
            b=jax.random.normal(kb, (cout,), jnp.float32) * 0.05,
            gamma=1.0 + 0.1 * jax.random.normal(kg, (cout,), jnp.float32),
            beta=0.1 * jax.random.normal(kbeta, (cout,), jnp.float32),
            mean=jnp.zeros((cout,), jnp.float32),
            var=jnp.ones((cout,), jnp.float32),
        ))
    k, kw, kb = jax.random.split(k, 3)
    lin_w = jax.random.normal(kw, (num_classes, 128), jnp.float32) * 0.1
    lin_b = jax.random.normal(kb, (num_classes,), jnp.float32) * 0.05
    return dict(convs=convs, lin_w=lin_w, lin_b=lin_b)


def audio_cnn_forward(x_nchw, params):
    """Pallas implementation of AudioCNN.forward (eval-mode BN). x_nchw: (N, 3, H, W)."""
    n, c, h, w = x_nchw.shape
    assert c == 3
    assert h % 8 == 0 and w % 8 == 0, "spatial dims must be divisible by 8 (three 2x2 pools)"
    num_classes = params['lin_w'].shape[0]

    x = _prep_input(x_nchw)
    cin_ps = (CIN0_PAD, CPAD, CPAD)
    dims = ((h, w), (h // 2, w // 2), (h // 4, w // 4))

    # Blocks 1 & 2: fused conv+BN+ReLU+maxpool, output already in the next block's layout.
    for li in range(2):
        hh, ww = dims[li]
        w9, bias = _fold_conv_bn(params['convs'][li], cin_ps[li], CPAD)
        lm, rm = _border_masks(hh, ww)
        sel = _pool_select(hh, ww)
        x = conv_block(x, w9, bias, lm, rm, sel, H=hh, W=ww, cin_p=cin_ps[li])

    # Block 3 with the global-avg-pool + Linear head fused in.
    hh, ww = dims[2]
    w9, bias = _fold_conv_bn(params['convs'][2], cin_ps[2], CPAD)
    lm, rm = _border_masks(hh, ww)
    avg_sel = _pool_avg_select(hh, ww)
    lin_w = jnp.pad(params['lin_w'].T, ((0, 0), (0, CPAD - num_classes))).astype(jnp.float32)
    lin_b = jnp.pad(params['lin_b'], (0, CPAD - num_classes)).reshape(1, CPAD).astype(jnp.float32)
    logits = conv_block_with_head(x, w9, bias, lm, rm, avg_sel, lin_w, lin_b,
                                  H=hh, W=ww, cin_p=cin_ps[2])
    return logits[:, :num_classes]


def audio_cnn_reference(x_nchw, params):
    """Pure-JAX reference (same semantics as the PyTorch module in eval mode, f32)."""
    x = x_nchw
    for p in params['convs']:
        x = jax.lax.conv_general_dilated(
            x, p['w'], window_strides=(1, 1), padding='SAME',
            dimension_numbers=('NCHW', 'OIHW', 'NCHW'))
        x = x + p['b'][None, :, None, None]
        scale = p['gamma'] / jnp.sqrt(p['var'] + BN_EPS)
        x = ((x - p['mean'][None, :, None, None]) * scale[None, :, None, None]
             + p['beta'][None, :, None, None])
        x = jnp.maximum(x, 0.0)
        n, ch, hh, ww = x.shape
        x = x.reshape(n, ch, hh // 2, 2, ww // 2, 2).max(axis=(3, 5))
    g = x.mean(axis=(2, 3))
    return g @ params['lin_w'].T + params['lin_b']


if __name__ == "__main__":
    key = jax.random.PRNGKey(0)
    kx, kp = jax.random.split(key)
    num_classes = 10
    # NCHW input like the PyTorch module: batch=2, 3 channels, 16x16 "spectrogram"
    x = jax.random.normal(kx, (2, 3, 16, 16), jnp.float32)
    params = init_params(kp, num_classes)

    fwd = jax.jit(audio_cnn_forward)
    out = jax.block_until_ready(fwd(x, params))
    ref = jax.block_until_ready(audio_cnn_reference(x, params))

    assert out.shape == (2, num_classes), out.shape
    # bf16 MXU inputs (per perf review) vs a pure-f32 reference => loosen tolerance a bit.
    max_err = float(jnp.max(jnp.abs(out - ref)))
    assert jnp.allclose(out, ref, atol=5e-2, rtol=5e-2), f"max abs err {max_err}"
    print("KERNEL_OK")
</pallas_src>

<mosaic_0001>
module attributes {stable_mosaic.version = 11 : i64} {
  func.func @conv_block_kernel(%arg0: i32, %arg1: memref<1x96x128xf32, #tpu.memory_space<vmem>>, %arg2: memref<9x128x128xbf16, #tpu.memory_space<vmem>>, %arg3: memref<1x128xf32, #tpu.memory_space<vmem>>, %arg4: memref<64x1xf32, #tpu.memory_space<vmem>>, %arg5: memref<64x1xf32, #tpu.memory_space<vmem>>, %arg6: memref<16x64xf32, #tpu.memory_space<vmem>>, %arg7: memref<1x32x128xf32, #tpu.memory_space<vmem>>, %arg8: memref<80x128xf32, #tpu.memory_space<vmem>>) attributes {dimension_semantics = [#tpu.dimension_semantics<parallel>], iteration_bounds = array<i64: 2>, scalar_prefetch = 0 : i64, scratch_operands = 1 : i64, tpu.core_type = #tpu.core_type<tc>, window_params = [{transform_indices = @transform_0, window_bounds = array<i64: 1, 96, 128>}, {pipeline_mode = #tpu.pipeline_mode<synchronous>, transform_indices = @transform_1, window_bounds = array<i64: 9, 128, 128>}, {pipeline_mode = #tpu.pipeline_mode<synchronous>, transform_indices = @transform_2, window_bounds = array<i64: 1, 128>}, {pipeline_mode = #tpu.pipeline_mode<synchronous>, transform_indices = @transform_3, window_bounds = array<i64: 64, 1>}, {pipeline_mode = #tpu.pipeline_mode<synchronous>, transform_indices = @transform_4, window_bounds = array<i64: 64, 1>}, {pipeline_mode = #tpu.pipeline_mode<synchronous>, transform_indices = @transform_5, window_bounds = array<i64: 16, 64>}, {transform_indices = @transform_6, window_bounds = array<i64: 1, 32, 128>}]} {
    %c0 = arith.constant 0 : index
    %c0_0 = arith.constant 0 : index
    %0 = vector.load %arg4[%c0, %c0_0] : memref<64x1xf32, #tpu.memory_space<vmem>>, vector<64x1xf32>
    %c0_1 = arith.constant 0 : index
    %c0_2 = arith.constant 0 : index
    %1 = vector.load %arg5[%c0_1, %c0_2] : memref<64x1xf32, #tpu.memory_space<vmem>>, vector<64x1xf32>
    %c0_3 = arith.constant 0 : index
    %c7 = arith.constant 7 : index
    %c0_4 = arith.constant 0 : index
    %2 = vector.load %arg1[%c0_3, %c7, %c0_4] : memref<1x96x128xf32, #tpu.memory_space<vmem>>, vector<1x64x128xf32>
    %3 = vector.shape_cast %2 : vector<1x64x128xf32> to vector<64x128xf32>
    %4 = vector.broadcast %0 : vector<64x1xf32> to vector<64x128xf32>
    %5 = arith.mulf %3, %4 : vector<64x128xf32>
    %6 = arith.truncf %5 : vector<64x128xf32> to vector<64x128xbf16>
    %c0_5 = arith.constant 0 : index
    %c0_6 = arith.constant 0 : index
    %c0_7 = arith.constant 0 : index
    %7 = vector.load %arg2[%c0_5, %c0_6, %c0_7] : memref<9x128x128xbf16, #tpu.memory_space<vmem>>, vector<1x128x128xbf16>
    %8 = vector.shape_cast %7 : vector<1x128x128xbf16> to vector<128x128xbf16>
    %cst = arith.constant dense<0.000000e+00> : vector<64x128xf32>
    %9 = tpu.matmul %6, %8, %cst {dimension_numbers = #tpu.dot_dimension_numbers<[1], [0], [0], [1], [0, 0, 1, 1], [], []>} : vector<64x128xbf16>, vector<128x128xbf16>, vector<64x128xf32> -> vector<64x128xf32>
    %c0_8 = arith.constant 0 : index
    %c8 = arith.constant 8 : index
    %c0_9 = arith.constant 0 : index
    %10 = vector.load %arg1[%c0_8, %c8, %c0_9] : memref<1x96x128xf32, #tpu.memory_space<vmem>>, vector<1x64x128xf32>
    %11 = vector.shape_cast %10 : vector<1x64x128xf32> to vector<64x128xf32>
    %12 = arith.truncf %11 : vector<64x128xf32> to vector<64x128xbf16>
    %c1 = arith.constant 1 : index
    %c0_10 = arith.constant 0 : index
    %c0_11 = arith.constant 0 : index
    %13 = vector.load %arg2[%c1, %c0_10, %c0_11] : memref<9x128x128xbf16, #tpu.memory_space<vmem>>, vector<1x128x128xbf16>
    %14 = vector.shape_cast %13 : vector<1x128x128xbf16> to vector<128x128xbf16>
    %cst_12 = arith.constant dense<0.000000e+00> : vector<64x128xf32>
    %15 = tpu.matmul %12, %14, %cst_12 {dimension_numbers = #tpu.dot_dimension_numbers<[1], [0], [0], [1], [0, 0, 1, 1], [], []>} : vector<64x128xbf16>, vector<128x128xbf16>, vector<64x128xf32> -> vector<64x128xf32>
    %16 = arith.addf %9, %15 : vector<64x128xf32>
    %c0_13 = arith.constant 0 : index
    %c9 = arith.constant 9 : index
    %c0_14 = arith.constant 0 : index
    %17 = vector.load %arg1[%c0_13, %c9, %c0_14] : memref<1x96x128xf32, #tpu.memory_space<vmem>>, vector<1x64x128xf32>
    %18 = vector.shape_cast %17 : vector<1x64x128xf32> to vector<64x128xf32>
    %19 = vector.broadcast %1 : vector<64x1xf32> to vector<64x128xf32>
    %20 = arith.mulf %18, %19 : vector<64x128xf32>
    %21 = arith.truncf %20 : vector<64x128xf32> to vector<64x128xbf16>
    %c2 = arith.constant 2 : index
    %c0_15 = arith.constant 0 : index
    %c0_16 = arith.constant 0 : index
    %22 = vector.load %arg2[%c2, %c0_15, %c0_16] : memref<9x128x128xbf16, #tpu.memory_space<vmem>>, vector<1x128x128xbf16>
    %23 = vector.shape_cast %22 : vector<1x128x128xbf16> to vector<128x128xbf16>
    %cst_17 = arith.constant dense<0.000000e+00> : vector<64x128xf32>
    %24 = tpu.matmul %21, %23, %cst_17 {dimension_numbers = #tpu.dot_dimension_numbers<[1], [0], [0], [1], [0, 0, 1, 1], [], []>} : vector<64x128xbf16>, vector<128x128xbf16>, vector<64x128xf32> -> vector<64x128xf32>
    %25 = arith.addf %16, %24 : vector<64x128xf32>
    %c0_18 = arith.constant 0 : index
    %c15 = arith.constant 15 : index
    %c0_19 = arith.constant 0 : index
    %26 = vector.load %arg1[%c0_18, %c15, %c0_19] : memref<1x96x128xf32, #tpu.memory_space<vmem>>, vector<1x64x128xf32>
    %27 = vector.shape_cast %26 : vector<1x64x128xf32> to vector<64x128xf32>
    %28 = vector.broadcast %0 : vector<64x1xf32> to vector<64x128xf32>
    %29 = arith.mulf %27, %28 : vector<64x128xf32>
    %30 = arith.truncf %29 : vector<64x128xf32> to vector<64x128xbf16>
    %c3 = arith.constant 3 : index
    %c0_20 = arith.constant 0 : index
    %c0_21 = arith.constant 0 : index
    %31 = vector.load %arg2[%c3, %c0_20, %c0_21] : memref<9x128x128xbf16, #tpu.memory_space<vmem>>, vector<1x128x128xbf16>
    %32 = vector.shape_cast %31 : vector<1x128x128xbf16> to vector<128x128xbf16>
    %cst_22 = arith.constant dense<0.000000e+00> : vector<64x128xf32>
    %33 = tpu.matmul %30, %32, %cst_22 {dimension_numbers = #tpu.dot_dimension_numbers<[1], [0], [0], [1], [0, 0, 1, 1], [], []>} : vector<64x128xbf16>, vector<128x128xbf16>, vector<64x128xf32> -> vector<64x128xf32>
    %34 = arith.addf %25, %33 : vector<64x128xf32>
    %c0_23 = arith.constant 0 : index
    %c16 = arith.constant 16 : index
    %c0_24 = arith.constant 0 : index
    %35 = vector.load %arg1[%c0_23, %c16, %c0_24] : memref<1x96x128xf32, #tpu.memory_space<vmem>>, vector<1x64x128xf32>
    %36 = vector.shape_cast %35 : vector<1x64x128xf32> to vector<64x128xf32>
    %37 = arith.truncf %36 : vector<64x128xf32> to vector<64x128xbf16>
    %c4 = arith.constant 4 : index
    %c0_25 = arith.constant 0 : index
    %c0_26 = arith.constant 0 : index
    %38 = vector.load %arg2[%c4, %c0_25, %c0_26] : memref<9x128x128xbf16, #tpu.memory_space<vmem>>, vector<1x128x128xbf16>
    %39 = vector.shape_cast %38 : vector<1x128x128xbf16> to vector<128x128xbf16>
    %cst_27 = arith.constant dense<0.000000e+00> : vector<64x128xf32>
    %40 = tpu.matmul %37, %39, %cst_27 {dimension_numbers = #tpu.dot_dimension_numbers<[1], [0], [0], [1], [0, 0, 1, 1], [], []>} : vector<64x128xbf16>, vector<128x128xbf16>, vector<64x128xf32> -> vector<64x128xf32>
    %41 = arith.addf %34, %40 : vector<64x128xf32>
    %c0_28 = arith.constant 0 : index
    %c17 = arith.constant 17 : index
    %c0_29 = arith.constant 0 : index
    %42 = vector.load %arg1[%c0_28, %c17, %c0_29] : memref<1x96x128xf32, #tpu.memory_space<vmem>>, vector<1x64x128xf32>
    %43 = vector.shape_cast %42 : vector<1x64x128xf32> to vector<64x128xf32>
    %44 = vector.broadcast %1 : vector<64x1xf32> to vector<64x128xf32>
    %45 = arith.mulf %43, %44 : vector<64x128xf32>
    %46 = arith.truncf %45 : vector<64x128xf32> to vector<64x128xbf16>
    %c5 = arith.constant 5 : index
    %c0_30 = arith.constant 0 : index
    %c0_31 = arith.constant 0 : index
    %47 = vector.load %arg2[%c5, %c0_30, %c0_31] : memref<9x128x128xbf16, #tpu.memory_space<vmem>>, vector<1x128x128xbf16>
    %48 = vector.shape_cast %47 : vector<1x128x128xbf16> to vector<128x128xbf16>
    %cst_32 = arith.constant dense<0.000000e+00> : vector<64x128xf32>
    %49 = tpu.matmul %46, %48, %cst_32 {dimension_numbers = #tpu.dot_dimension_numbers<[1], [0], [0], [1], [0, 0, 1, 1], [], []>} : vector<64x128xbf16>, vector<128x128xbf16>, vector<64x128xf32> -> vector<64x128xf32>
    %50 = arith.addf %41, %49 : vector<64x128xf32>
    %c0_33 = arith.constant 0 : index
    %c23 = arith.constant 23 : index
    %c0_34 = arith.constant 0 : index
    %51 = vector.load %arg1[%c0_33, %c23, %c0_34] : memref<1x96x128xf32, #tpu.memory_space<vmem>>, vector<1x64x128xf32>
    %52 = vector.shape_cast %51 : vector<1x64x128xf32> to vector<64x128xf32>
    %53 = vector.broadcast %0 : vector<64x1xf32> to vector<64x128xf32>
    %54 = arith.mulf %52, %53 : vector<64x128xf32>
    %55 = arith.truncf %54 : vector<64x128xf32> to vector<64x128xbf16>
    %c6 = arith.constant 6 : index
    %c0_35 = arith.constant 0 : index
    %c0_36 = arith.constant 0 : index
    %56 = vector.load %arg2[%c6, %c0_35, %c0_36] : memref<9x128x128xbf16, #tpu.memory_space<vmem>>, vector<1x128x128xbf16>
    %57 = vector.shape_cast %56 : vector<1x128x128xbf16> to vector<128x128xbf16>
    %cst_37 = arith.constant dense<0.000000e+00> : vector<64x128xf32>
    %58 = tpu.matmul %55, %57, %cst_37 {dimension_numbers = #tpu.dot_dimension_numbers<[1], [0], [0], [1], [0, 0, 1, 1], [], []>} : vector<64x128xbf16>, vector<128x128xbf16>, vector<64x128xf32> -> vector<64x128xf32>
    %59 = arith.addf %50, %58 : vector<64x128xf32>
    %c0_38 = arith.constant 0 : index
    %c24 = arith.constant 24 : index
    %c0_39 = arith.constant 0 : index
    %60 = vector.load %arg1[%c0_38, %c24, %c0_39] : memref<1x96x128xf32, #tpu.memory_space<vmem>>, vector<1x64x128xf32>
    %61 = vector.shape_cast %60 : vector<1x64x128xf32> to vector<64x128xf32>
    %62 = arith.truncf %61 : vector<64x128xf32> to vector<64x128xbf16>
    %c7_40 = arith.constant 7 : index
    %c0_41 = arith.constant 0 : index
    %c0_42 = arith.constant 0 : index
    %63 = vector.load %arg2[%c7_40, %c0_41, %c0_42] : memref<9x128x128xbf16, #tpu.memory_space<vmem>>, vector<1x128x128xbf16>
    %64 = vector.shape_cast %63 : vector<1x128x128xbf16> to vector<128x128xbf16>
    %cst_43 = arith.constant dense<0.000000e+00> : vector<64x128xf32>
    %65 = tpu.matmul %62, %64, %cst_43 {dimension_numbers = #tpu.dot_dimension_numbers<[1], [0], [0], [1], [0, 0, 1, 1], [], []>} : vector<64x128xbf16>, vector<128x128xbf16>, vector<64x128xf32> -> vector<64x128xf32>
    %66 = arith.addf %59, %65 : vector<64x128xf32>
    %c0_44 = arith.constant 0 : index
    %c25 = arith.constant 25 : index
    %c0_45 = arith.constant 0 : index
    %67 = vector.load %arg1[%c0_44, %c25, %c0_45] : memref<1x96x128xf32, #tpu.memory_space<vmem>>, vector<1x64x128xf32>
    %68 = vector.shape_cast %67 : vector<1x64x128xf32> to vector<64x128xf32>
    %69 = vector.broadcast %1 : vector<64x1xf32> to vector<64x128xf32>
    %70 = arith.mulf %68, %69 : vector<64x128xf32>
    %71 = arith.truncf %70 : vector<64x128xf32> to vector<64x128xbf16>
    %c8_46 = arith.constant 8 : index
    %c0_47 = arith.constant 0 : index
    %c0_48 = arith.constant 0 : index
    %72 = vector.load %arg2[%c8_46, %c0_47, %c0_48] : memref<9x128x128xbf16, #tpu.memory_space<vmem>>, vector<1x128x128xbf16>
    %73 = vector.shape_cast %72 : vector<1x128x128xbf16> to vector<128x128xbf16>
    %cst_49 = arith.constant dense<0.000000e+00> : vector<64x128xf32>
    %74 = tpu.matmul %71, %73, %cst_49 {dimension_numbers = #tpu.dot_dimension_numbers<[1], [0], [0], [1], [0, 0, 1, 1], [], []>} : vector<64x128xbf16>, vector<128x128xbf16>, vector<64x128xf32> -> vector<64x128xf32>
    %75 = arith.addf %66, %74 : vector<64x128xf32>
    %c0_50 = arith.constant 0 : index
    %c0_51 = arith.constant 0 : index
    %76 = vector.load %arg3[%c0_50, %c0_51] : memref<1x128xf32, #tpu.memory_space<vmem>>, vector<1x128xf32>
    %77 = vector.broadcast %76 : vector<1x128xf32> to vector<64x128xf32>
    %78 = arith.addf %75, %77 : vector<64x128xf32>
    %cst_52 = arith.constant 0.000000e+00 : f32
    %79 = vector.broadcast %cst_52 : f32 to vector<64x128xf32>
    %80 = arith.maximumf %78, %79 : vector<64x128xf32>
    %c0_53 = arith.constant 0 : index
    %c0_54 = arith.constant 0 : index
    %81 = vector.load %arg8[%c0_53, %c0_54] : memref<80x128xf32, #tpu.memory_space<vmem>>, vector<64x128xf32>
    tpu.vector_store %arg8[%c0_53, %c0_54], %80 {strides = array<i32>} : memref<80x128xf32, #tpu.memory_space<vmem>>, vector<64x128xf32>,
    %cst_55 = arith.constant 0.000000e+00 : f32
    %82 = vector.broadcast %cst_55 : f32 to vector<16x128xf32>
    %c64 = arith.constant 64 : index
    %c0_56 = arith.constant 0 : index
    %83 = vector.load %arg8[%c64, %c0_56] : memref<80x128xf32, #tpu.memory_space<vmem>>, vector<16x128xf32>
    tpu.vector_store %arg8[%c64, %c0_56], %82 {strides = array<i32>} : memref<80x128xf32, #tpu.memory_space<vmem>>, vector<16x128xf32>,
    %c0_57 = arith.constant 0 : index
    %c0_58 = arith.constant 0 : index
    %84 = vector.load %arg8[%c0_57, %c0_58] : memref<80x128xf32, #tpu.memory_space<vmem>>, vector<64x128xf32>
    %c1_59 = arith.constant 1 : index
    %c0_60 = arith.constant 0 : index
    %85 = vector.load %arg8[%c1_59, %c0_60] : memref<80x128xf32, #tpu.memory_space<vmem>>, vector<64x128xf32>
    %86 = arith.maximumf %84, %85 : vector<64x128xf32>
    %c8_61 = arith.constant 8 : index
    %c0_62 = arith.constant 0 : index
    %87 = vector.load %arg8[%c8_61, %c0_62] : memref<80x128xf32, #tpu.memory_space<vmem>>, vector<64x128xf32>
    %c9_63 = arith.constant 9 : index
    %c0_64 = arith.constant 0 : index
    %88 = vector.load %arg8[%c9_63, %c0_64] : memref<80x128xf32, #tpu.memory_space<vmem>>, vector<64x128xf32>
    %89 = arith.maximumf %87, %88 : vector<64x128xf32>
    %90 = arith.maximumf %86, %89 : vector<64x128xf32>
    %c0_65 = arith.constant 0 : index
    %c0_66 = arith.constant 0 : index
    %91 = vector.load %arg6[%c0_65, %c0_66] : memref<16x64xf32, #tpu.memory_space<vmem>>, vector<16x64xf32>
    %cst_67 = arith.constant dense<0.000000e+00> : vector<16x128xf32>
    %92 = tpu.matmul %91, %90, %cst_67 {dimension_numbers = #tpu.dot_dimension_numbers<[1], [0], [0], [1], [0, 0, 1, 1], [], []>} : vector<16x64xf32>, vector<64x128xf32>, vector<16x128xf32> -> vector<16x128xf32>
    %cst_68 = arith.constant 0.000000e+00 : f32
    %93 = vector.broadcast %cst_68 : f32 to vector<8x128xf32>
    %c0_69 = arith.constant 0 : index
    %c0_70 = arith.constant 0 : index
    %c0_71 = arith.constant 0 : index
    %94 = vector.load %arg7[%c0_69, %c0_70, %c0_71] : memref<1x32x128xf32, #tpu.memory_space<vmem>>, vector<1x8x128xf32>
    %95 = vector.shape_cast %94 : vector<1x8x128xf32> to vector<8x128xf32>
    %96 = vector.shape_cast %93 : vector<8x128xf32> to vector<1x8x128xf32>
    tpu.vector_store %arg7[%c0_69, %c0_70, %c0_71], %96 {strides = array<i32>} : memref<1x32x128xf32, #tpu.memory_space<vmem>>, vector<1x8x128xf32>,
    %c0_72 = arith.constant 0 : index
    %c8_73 = arith.constant 8 : index
    %c0_74 = arith.constant 0 : index
    %97 = vector.load %arg7[%c0_72, %c8_73, %c0_74] : memref<1x32x128xf32, #tpu.memory_space<vmem>>, vector<1x16x128xf32>
    %98 = vector.shape_cast %97 : vector<1x16x128xf32> to vector<16x128xf32>
    %99 = vector.shape_cast %92 : vector<16x128xf32> to vector<1x16x128xf32>
    tpu.vector_store %arg7[%c0_72, %c8_73, %c0_74], %99 {strides = array<i32>} : memref<1x32x128xf32, #tpu.memory_space<vmem>>, vector<1x16x128xf32>,
    %cst_75 = arith.constant 0.000000e+00 : f32
    %100 = vector.broadcast %cst_75 : f32 to vector<8x128xf32>
    %c0_76 = arith.constant 0 : index
    %c24_77 = arith.constant 24 : index
    %c0_78 = arith.constant 0 : index
    %101 = vector.load %arg7[%c0_76, %c24_77, %c0_78] : memref<1x32x128xf32, #tpu.memory_space<vmem>>, vector<1x8x128xf32>
    %102 = vector.shape_cast %101 : vector<1x8x128xf32> to vector<8x128xf32>
    %103 = vector.shape_cast %100 : vector<8x128xf32> to vector<1x8x128xf32>
    tpu.vector_store %arg7[%c0_76, %c24_77, %c0_78], %103 {strides = array<i32>} : memref<1x32x128xf32, #tpu.memory_space<vmem>>, vector<1x8x128xf32>,
    return
  }
  func.func @transform_0(%arg0: i32) -> (i32, i32, i32) {
    %c0_i32 = arith.constant 0 : i32
    %c0_i32_0 = arith.constant 0 : i32
    %c0_i32_1 = arith.constant 0 : i32
    return %arg0, %c0_i32, %c0_i32_0 : i32, i32, i32
  }
  func.func @transform_1(%arg0: i32) -> (i32, i32, i32) {
    %c0_i32 = arith.constant 0 : i32
    %c0_i32_0 = arith.constant 0 : i32
    %c0_i32_1 = arith.constant 0 : i32
    %c0_i32_2 = arith.constant 0 : i32
    return %c0_i32, %c0_i32_0, %c0_i32_1 : i32, i32, i32
  }
  func.func @transform_2(%arg0: i32) -> (i32, i32) {
    %c0_i32 = arith.constant 0 : i32
    %c0_i32_0 = arith.constant 0 : i32
    %c0_i32_1 = arith.constant 0 : i32
    return %c0_i32, %c0_i32_0 : i32, i32
  }
  func.func @transform_3(%arg0: i32) -> (i32, i32) {
    %c0_i32 = arith.constant 0 : i32
    %c0_i32_0 = arith.constant 0 : i32
    %c0_i32_1 = arith.constant 0 : i32
    return %c0_i32, %c0_i32_0 : i32, i32
  }
  func.func @transform_4(%arg0: i32) -> (i32, i32) {
    %c0_i32 = arith.constant 0 : i32
    %c0_i32_0 = arith.constant 0 : i32
    %c0_i32_1 = arith.constant 0 : i32
    return %c0_i32, %c0_i32_0 : i32, i32
  }
  func.func @transform_5(%arg0: i32) -> (i32, i32) {
    %c0_i32 = arith.constant 0 : i32
    %c0_i32_0 = arith.constant 0 : i32
    %c0_i32_1 = arith.constant 0 : i32
    return %c0_i32, %c0_i32_0 : i32, i32
  }
  func.func @transform_6(%arg0: i32) -> (i32, i32, i32) {
    %c0_i32 = arith.constant 0 : i32
    %c0_i32_0 = arith.constant 0 : i32
    %c0_i32_1 = arith.constant 0 : i32
    return %arg0, %c0_i32, %c0_i32_0 : i32, i32, i32
  }
}

module attributes {stable_mosaic.version = 11 : i64} {
  func.func @conv_block_kernel(%arg0: i32, %arg1: memref<1x320x8xf32, #tpu.memory_space<vmem>>, %arg2: memref<9x8x128xbf16, #tpu.memory_space<vmem>>, %arg3: memref<1x128xf32, #tpu.memory_space<vmem>>, %arg4: memref<256x1xf32, #tpu.memory_space<vmem>>, %arg5: memref<256x1xf32, #tpu.memory_space<vmem>>, %arg6: memref<64x256xf32, #tpu.memory_space<vmem>>, %arg7: memref<1x96x128xf32, #tpu.memory_space<vmem>>, %arg8: memref<288x128xf32, #tpu.memory_space<vmem>>) attributes {dimension_semantics = [#tpu.dimension_semantics<parallel>], iteration_bounds = array<i64: 2>, scalar_prefetch = 0 : i64, scratch_operands = 1 : i64, tpu.core_type = #tpu.core_type<tc>, window_params = [{transform_indices = @transform_0, window_bounds = array<i64: 1, 320, 8>}, {pipeline_mode = #tpu.pipeline_mode<synchronous>, transform_indices = @transform_1, window_bounds = array<i64: 9, 8, 128>}, {pipeline_mode = #tpu.pipeline_mode<synchronous>, transform_indices = @transform_2, window_bounds = array<i64: 1, 128>}, {pipeline_mode = #tpu.pipeline_mode<synchronous>, transform_indices = @transform_3, window_bounds = array<i64: 256, 1>}, {pipeline_mode = #tpu.pipeline_mode<synchronous>, transform_indices = @transform_4, window_bounds = array<i64: 256, 1>}, {pipeline_mode = #tpu.pipeline_mode<synchronous>, transform_indices = @transform_5, window_bounds = array<i64: 64, 256>}, {transform_indices = @transform_6, window_bounds = array<i64: 1, 96, 128>}]} {
    %c0 = arith.constant 0 : index
    %c0_0 = arith.constant 0 : index
    %0 = vector.load %arg4[%c0, %c0_0] : memref<256x1xf32, #tpu.memory_space<vmem>>, vector<256x1xf32>
    %c0_1 = arith.constant 0 : index
    %c0_2 = arith.constant 0 : index
    %1 = vector.load %arg5[%c0_1, %c0_2] : memref<256x1xf32, #tpu.memory_space<vmem>>, vector<256x1xf32>
    %c0_3 = arith.constant 0 : index
    %c15 = arith.constant 15 : index
    %c0_4 = arith.constant 0 : index
    %2 = vector.load %arg1[%c0_3, %c15, %c0_4] : memref<1x320x8xf32, #tpu.memory_space<vmem>>, vector<1x256x8xf32>
    %3 = vector.shape_cast %2 : vector<1x256x8xf32> to vector<256x8xf32>
    %4 = vector.broadcast %0 : vector<256x1xf32> to vector<256x8xf32>
    %5 = arith.mulf %3, %4 : vector<256x8xf32>
    %6 = arith.truncf %5 : vector<256x8xf32> to vector<256x8xbf16>
    %c0_5 = arith.constant 0 : index
    %c0_6 = arith.constant 0 : index
    %c0_7 = arith.constant 0 : index
    %7 = vector.load %arg2[%c0_5, %c0_6, %c0_7] : memref<9x8x128xbf16, #tpu.memory_space<vmem>>, vector<1x8x128xbf16>
    %8 = vector.shape_cast %7 : vector<1x8x128xbf16> to vector<8x128xbf16>
    %cst = arith.constant dense<0.000000e+00> : vector<256x128xf32>
    %9 = tpu.matmul %6, %8, %cst {dimension_numbers = #tpu.dot_dimension_numbers<[1], [0], [0], [1], [0, 0, 1, 1], [], []>} : vector<256x8xbf16>, vector<8x128xbf16>, vector<256x128xf32> -> vector<256x128xf32>
    %c0_8 = arith.constant 0 : index
    %c16 = arith.constant 16 : index
    %c0_9 = arith.constant 0 : index
    %10 = vector.load %arg1[%c0_8, %c16, %c0_9] : memref<1x320x8xf32, #tpu.memory_space<vmem>>, vector<1x256x8xf32>
    %11 = vector.shape_cast %10 : vector<1x256x8xf32> to vector<256x8xf32>
    %12 = arith.truncf %11 : vector<256x8xf32> to vector<256x8xbf16>
    %c1 = arith.constant 1 : index
    %c0_10 = arith.constant 0 : index
    %c0_11 = arith.constant 0 : index
    %13 = vector.load %arg2[%c1, %c0_10, %c0_11] : memref<9x8x128xbf16, #tpu.memory_space<vmem>>, vector<1x8x128xbf16>
    %14 = vector.shape_cast %13 : vector<1x8x128xbf16> to vector<8x128xbf16>
    %cst_12 = arith.constant dense<0.000000e+00> : vector<256x128xf32>
    %15 = tpu.matmul %12, %14, %cst_12 {dimension_numbers = #tpu.dot_dimension_numbers<[1], [0], [0], [1], [0, 0, 1, 1], [], []>} : vector<256x8xbf16>, vector<8x128xbf16>, vector<256x128xf32> -> vector<256x128xf32>
    %16 = arith.addf %9, %15 : vector<256x128xf32>
    %c0_13 = arith.constant 0 : index
    %c17 = arith.constant 17 : index
    %c0_14 = arith.constant 0 : index
    %17 = vector.load %arg1[%c0_13, %c17, %c0_14] : memref<1x320x8xf32, #tpu.memory_space<vmem>>, vector<1x256x8xf32>
    %18 = vector.shape_cast %17 : vector<1x256x8xf32> to vector<256x8xf32>
    %19 = vector.broadcast %1 : vector<256x1xf32> to vector<256x8xf32>
    %20 = arith.mulf %18, %19 : vector<256x8xf32>
    %21 = arith.truncf %20 : vector<256x8xf32> to vector<256x8xbf16>
    %c2 = arith.constant 2 : index
    %c0_15 = arith.constant 0 : index
    %c0_16 = arith.constant 0 : index
    %22 = vector.load %arg2[%c2, %c0_15, %c0_16] : memref<9x8x128xbf16, #tpu.memory_space<vmem>>, vector<1x8x128xbf16>
    %23 = vector.shape_cast %22 : vector<1x8x128xbf16> to vector<8x128xbf16>
    %cst_17 = arith.constant dense<0.000000e+00> : vector<256x128xf32>
    %24 = tpu.matmul %21, %23, %cst_17 {dimension_numbers = #tpu.dot_dimension_numbers<[1], [0], [0], [1], [0, 0, 1, 1], [], []>} : vector<256x8xbf16>, vector<8x128xbf16>, vector<256x128xf32> -> vector<256x128xf32>
    %25 = arith.addf %16, %24 : vector<256x128xf32>
    %c0_18 = arith.constant 0 : index
    %c31 = arith.constant 31 : index
    %c0_19 = arith.constant 0 : index
    %26 = vector.load %arg1[%c0_18, %c31, %c0_19] : memref<1x320x8xf32, #tpu.memory_space<vmem>>, vector<1x256x8xf32>
    %27 = vector.shape_cast %26 : vector<1x256x8xf32> to vector<256x8xf32>
    %28 = vector.broadcast %0 : vector<256x1xf32> to vector<256x8xf32>
    %29 = arith.mulf %27, %28 : vector<256x8xf32>
    %30 = arith.truncf %29 : vector<256x8xf32> to vector<256x8xbf16>
    %c3 = arith.constant 3 : index
    %c0_20 = arith.constant 0 : index
    %c0_21 = arith.constant 0 : index
    %31 = vector.load %arg2[%c3, %c0_20, %c0_21] : memref<9x8x128xbf16, #tpu.memory_space<vmem>>, vector<1x8x128xbf16>
    %32 = vector.shape_cast %31 : vector<1x8x128xbf16> to vector<8x128xbf16>
    %cst_22 = arith.constant dense<0.000000e+00> : vector<256x128xf32>
    %33 = tpu.matmul %30, %32, %cst_22 {dimension_numbers = #tpu.dot_dimension_numbers<[1], [0], [0], [1], [0, 0, 1, 1], [], []>} : vector<256x8xbf16>, vector<8x128xbf16>, vector<256x128xf32> -> vector<256x128xf32>
    %34 = arith.addf %25, %33 : vector<256x128xf32>
    %c0_23 = arith.constant 0 : index
    %c32 = arith.constant 32 : index
    %c0_24 = arith.constant 0 : index
    %35 = vector.load %arg1[%c0_23, %c32, %c0_24] : memref<1x320x8xf32, #tpu.memory_space<vmem>>, vector<1x256x8xf32>
    %36 = vector.shape_cast %35 : vector<1x256x8xf32> to vector<256x8xf32>
    %37 = arith.truncf %36 : vector<256x8xf32> to vector<256x8xbf16>
    %c4 = arith.constant 4 : index
    %c0_25 = arith.constant 0 : index
    %c0_26 = arith.constant 0 : index
    %38 = vector.load %arg2[%c4, %c0_25, %c0_26] : memref<9x8x128xbf16, #tpu.memory_space<vmem>>, vector<1x8x128xbf16>
    %39 = vector.shape_cast %38 : vector<1x8x128xbf16> to vector<8x128xbf16>
    %cst_27 = arith.constant dense<0.000000e+00> : vector<256x128xf32>
    %40 = tpu.matmul %37, %39, %cst_27 {dimension_numbers = #tpu.dot_dimension_numbers<[1], [0], [0], [1], [0, 0, 1, 1], [], []>} : vector<256x8xbf16>, vector<8x128xbf16>, vector<256x128xf32> -> vector<256x128xf32>
    %41 = arith.addf %34, %40 : vector<256x128xf32>
    %c0_28 = arith.constant 0 : index
    %c33 = arith.constant 33 : index
    %c0_29 = arith.constant 0 : index
    %42 = vector.load %arg1[%c0_28, %c33, %c0_29] : memref<1x320x8xf32, #tpu.memory_space<vmem>>, vector<1x256x8xf32>
    %43 = vector.shape_cast %42 : vector<1x256x8xf32> to vector<256x8xf32>
    %44 = vector.broadcast %1 : vector<256x1xf32> to vector<256x8xf32>
    %45 = arith.mulf %43, %44 : vector<256x8xf32>
    %46 = arith.truncf %45 : vector<256x8xf32> to vector<256x8xbf16>
    %c5 = arith.constant 5 : index
    %c0_30 = arith.constant 0 : index
    %c0_31 = arith.constant 0 : index
    %47 = vector.load %arg2[%c5, %c0_30, %c0_31] : memref<9x8x128xbf16, #tpu.memory_space<vmem>>, vector<1x8x128xbf16>
    %48 = vector.shape_cast %47 : vector<1x8x128xbf16> to vector<8x128xbf16>
    %cst_32 = arith.constant dense<0.000000e+00> : vector<256x128xf32>
    %49 = tpu.matmul %46, %48, %cst_32 {dimension_numbers = #tpu.dot_dimension_numbers<[1], [0], [0], [1], [0, 0, 1, 1], [], []>} : vector<256x8xbf16>, vector<8x128xbf16>, vector<256x128xf32> -> vector<256x128xf32>
    %50 = arith.addf %41, %49 : vector<256x128xf32>
    %c0_33 = arith.constant 0 : index
    %c47 = arith.constant 47 : index
    %c0_34 = arith.constant 0 : index
    %51 = vector.load %arg1[%c0_33, %c47, %c0_34] : memref<1x320x8xf32, #tpu.memory_space<vmem>>, vector<1x256x8xf32>
    %52 = vector.shape_cast %51 : vector<1x256x8xf32> to vector<256x8xf32>
    %53 = vector.broadcast %0 : vector<256x1xf32> to vector<256x8xf32>
    %54 = arith.mulf %52, %53 : vector<256x8xf32>
    %55 = arith.truncf %54 : vector<256x8xf32> to vector<256x8xbf16>
    %c6 = arith.constant 6 : index
    %c0_35 = arith.constant 0 : index
    %c0_36 = arith.constant 0 : index
    %56 = vector.load %arg2[%c6, %c0_35, %c0_36] : memref<9x8x128xbf16, #tpu.memory_space<vmem>>, vector<1x8x128xbf16>
    %57 = vector.shape_cast %56 : vector<1x8x128xbf16> to vector<8x128xbf16>
    %cst_37 = arith.constant dense<0.000000e+00> : vector<256x128xf32>
    %58 = tpu.matmul %55, %57, %cst_37 {dimension_numbers = #tpu.dot_dimension_numbers<[1], [0], [0], [1], [0, 0, 1, 1], [], []>} : vector<256x8xbf16>, vector<8x128xbf16>, vector<256x128xf32> -> vector<256x128xf32>
    %59 = arith.addf %50, %58 : vector<256x128xf32>
    %c0_38 = arith.constant 0 : index
    %c48 = arith.constant 48 : index
    %c0_39 = arith.constant 0 : index
    %60 = vector.load %arg1[%c0_38, %c48, %c0_39] : memref<1x320x8xf32, #tpu.memory_space<vmem>>, vector<1x256x8xf32>
    %61 = vector.shape_cast %60 : vector<1x256x8xf32> to vector<256x8xf32>
    %62 = arith.truncf %61 : vector<256x8xf32> to vector<256x8xbf16>
    %c7 = arith.constant 7 : index
    %c0_40 = arith.constant 0 : index
    %c0_41 = arith.constant 0 : index
    %63 = vector.load %arg2[%c7, %c0_40, %c0_41] : memref<9x8x128xbf16, #tpu.memory_space<vmem>>, vector<1x8x128xbf16>
    %64 = vector.shape_cast %63 : vector<1x8x128xbf16> to vector<8x128xbf16>
    %cst_42 = arith.constant dense<0.000000e+00> : vector<256x128xf32>
    %65 = tpu.matmul %62, %64, %cst_42 {dimension_numbers = #tpu.dot_dimension_numbers<[1], [0], [0], [1], [0, 0, 1, 1], [], []>} : vector<256x8xbf16>, vector<8x128xbf16>, vector<256x128xf32> -> vector<256x128xf32>
    %66 = arith.addf %59, %65 : vector<256x128xf32>
    %c0_43 = arith.constant 0 : index
    %c49 = arith.constant 49 : index
    %c0_44 = arith.constant 0 : index
    %67 = vector.load %arg1[%c0_43, %c49, %c0_44] : memref<1x320x8xf32, #tpu.memory_space<vmem>>, vector<1x256x8xf32>
    %68 = vector.shape_cast %67 : vector<1x256x8xf32> to vector<256x8xf32>
    %69 = vector.broadcast %1 : vector<256x1xf32> to vector<256x8xf32>
    %70 = arith.mulf %68, %69 : vector<256x8xf32>
    %71 = arith.truncf %70 : vector<256x8xf32> to vector<256x8xbf16>
    %c8 = arith.constant 8 : index
    %c0_45 = arith.constant 0 : index
    %c0_46 = arith.constant 0 : index
    %72 = vector.load %arg2[%c8, %c0_45, %c0_46] : memref<9x8x128xbf16, #tpu.memory_space<vmem>>, vector<1x8x128xbf16>
    %73 = vector.shape_cast %72 : vector<1x8x128xbf16> to vector<8x128xbf16>
    %cst_47 = arith.constant dense<0.000000e+00> : vector<256x128xf32>
    %74 = tpu.matmul %71, %73, %cst_47 {dimension_numbers = #tpu.dot_dimension_numbers<[1], [0], [0], [1], [0, 0, 1, 1], [], []>} : vector<256x8xbf16>, vector<8x128xbf16>, vector<256x128xf32> -> vector<256x128xf32>
    %75 = arith.addf %66, %74 : vector<256x128xf32>
    %c0_48 = arith.constant 0 : index
    %c0_49 = arith.constant 0 : index
    %76 = vector.load %arg3[%c0_48, %c0_49] : memref<1x128xf32, #tpu.memory_space<vmem>>, vector<1x128xf32>
    %77 = vector.broadcast %76 : vector<1x128xf32> to vector<256x128xf32>
    %78 = arith.addf %75, %77 : vector<256x128xf32>
    %cst_50 = arith.constant 0.000000e+00 : f32
    %79 = vector.broadcast %cst_50 : f32 to vector<256x128xf32>
    %80 = arith.maximumf %78, %79 : vector<256x128xf32>
    %c0_51 = arith.constant 0 : index
    %c0_52 = arith.constant 0 : index
    %81 = vector.load %arg8[%c0_51, %c0_52] : memref<288x128xf32, #tpu.memory_space<vmem>>, vector<256x128xf32>
    tpu.vector_store %arg8[%c0_51, %c0_52], %80 {strides = array<i32>} : memref<288x128xf32, #tpu.memory_space<vmem>>, vector<256x128xf32>,
    %cst_53 = arith.constant 0.000000e+00 : f32
    %82 = vector.broadcast %cst_53 : f32 to vector<32x128xf32>
    %c256 = arith.constant 256 : index
    %c0_54 = arith.constant 0 : index
    %83 = vector.load %arg8[%c256, %c0_54] : memref<288x128xf32, #tpu.memory_space<vmem>>, vector<32x128xf32>
    tpu.vector_store %arg8[%c256, %c0_54], %82 {strides = array<i32>} : memref<288x128xf32, #tpu.memory_space<vmem>>, vector<32x128xf32>,
    %c0_55 = arith.constant 0 : index
    %c0_56 = arith.constant 0 : index
    %84 = vector.load %arg8[%c0_55, %c0_56] : memref<288x128xf32, #tpu.memory_space<vmem>>, vector<256x128xf32>
    %c1_57 = arith.constant 1 : index
    %c0_58 = arith.constant 0 : index
    %85 = vector.load %arg8[%c1_57, %c0_58] : memref<288x128xf32, #tpu.memory_space<vmem>>, vector<256x128xf32>
    %86 = arith.maximumf %84, %85 : vector<256x128xf32>
    %c16_59 = arith.constant 16 : index
    %c0_60 = arith.constant 0 : index
    %87 = vector.load %arg8[%c16_59, %c0_60] : memref<288x128xf32, #tpu.memory_space<vmem>>, vector<256x128xf32>
    %c17_61 = arith.constant 17 : index
    %c0_62 = arith.constant 0 : index
    %88 = vector.load %arg8[%c17_61, %c0_62] : memref<288x128xf32, #tpu.memory_space<vmem>>, vector<256x128xf32>
    %89 = arith.maximumf %87, %88 : vector<256x128xf32>
    %90 = arith.maximumf %86, %89 : vector<256x128xf32>
    %c0_63 = arith.constant 0 : index
    %c0_64 = arith.constant 0 : index
    %91 = vector.load %arg6[%c0_63, %c0_64] : memref<64x256xf32, #tpu.memory_space<vmem>>, vector<64x256xf32>
    %cst_65 = arith.constant dense<0.000000e+00> : vector<64x128xf32>
    %92 = tpu.matmul %91, %90, %cst_65 {dimension_numbers = #tpu.dot_dimension_numbers<[1], [0], [0], [1], [0, 0, 1, 1], [], []>} : vector<64x256xf32>, vector<256x128xf32>, vector<64x128xf32> -> vector<64x128xf32>
    %cst_66 = arith.constant 0.000000e+00 : f32
    %93 = vector.broadcast %cst_66 : f32 to vector<16x128xf32>
    %c0_67 = arith.constant 0 : index
    %c0_68 = arith.constant 0 : index
    %c0_69 = arith.constant 0 : index
    %94 = vector.load %arg7[%c0_67, %c0_68, %c0_69] : memref<1x96x128xf32, #tpu.memory_space<vmem>>, vector<1x16x128xf32>
    %95 = vector.shape_cast %94 : vector<1x16x128xf32> to vector<16x128xf32>
    %96 = vector.shape_cast %93 : vector<16x128xf32> to vector<1x16x128xf32>
    tpu.vector_store %arg7[%c0_67, %c0_68, %c0_69], %96 {strides = array<i32>} : memref<1x96x128xf32, #tpu.memory_space<vmem>>, vector<1x16x128xf32>,
    %c0_70 = arith.constant 0 : index
    %c16_71 = arith.constant 16 : index
    %c0_72 = arith.constant 0 : index
    %97 = vector.load %arg7[%c0_70, %c16_71, %c0_72] : memref<1x96x128xf32, #tpu.memory_space<vmem>>, vector<1x64x128xf32>
    %98 = vector.shape_cast %97 : vector<1x64x128xf32> to vector<64x128xf32>
    %99 = vector.shape_cast %92 : vector<64x128xf32> to vector<1x64x128xf32>
    tpu.vector_store %arg7[%c0_70, %c16_71, %c0_72], %99 {strides = array<i32>} : memref<1x96x128xf32, #tpu.memory_space<vmem>>, vector<1x64x128xf32>,
    %cst_73 = arith.constant 0.000000e+00 : f32
    %100 = vector.broadcast %cst_73 : f32 to vector<16x128xf32>
    %c0_74 = arith.constant 0 : index
    %c80 = arith.constant 80 : index
    %c0_75 = arith.constant 0 : index
    %101 = vector.load %arg7[%c0_74, %c80, %c0_75] : memref<1x96x128xf32, #tpu.memory_space<vmem>>, vector<1x16x128xf32>
    %102 = vector.shape_cast %101 : vector<1x16x128xf32> to vector<16x128xf32>
    %103 = vector.shape_cast %100 : vector<16x128xf32> to vector<1x16x128xf32>
    tpu.vector_store %arg7[%c0_74, %c80, %c0_75], %103 {strides = array<i32>} : memref<1x96x128xf32, #tpu.memory_space<vmem>>, vector<1x16x128xf32>,
    return
  }
  func.func @transform_0(%arg0: i32) -> (i32, i32, i32) {
    %c0_i32 = arith.constant 0 : i32
    %c0_i32_0 = arith.constant 0 : i32
    %c0_i32_1 = arith.constant 0 : i32
    return %arg0, %c0_i32, %c0_i32_0 : i32, i32, i32
  }
  func.func @transform_1(%arg0: i32) -> (i32, i32, i32) {
    %c0_i32 = arith.constant 0 : i32
    %c0_i32_0 = arith.constant 0 : i32
    %c0_i32_1 = arith.constant 0 : i32
    %c0_i32_2 = arith.constant 0 : i32
    return %c0_i32, %c0_i32_0, %c0_i32_1 : i32, i32, i32
  }
  func.func @transform_2(%arg0: i32) -> (i32, i32) {
    %c0_i32 = arith.constant 0 : i32
    %c0_i32_0 = arith.constant 0 : i32
    %c0_i32_1 = arith.constant 0 : i32
    return %c0_i32, %c0_i32_0 : i32, i32
  }
  func.func @transform_3(%arg0: i32) -> (i32, i32) {
    %c0_i32 = arith.constant 0 : i32
    %c0_i32_0 = arith.constant 0 : i32
    %c0_i32_1 = arith.constant 0 : i32
    return %c0_i32, %c0_i32_0 : i32, i32
  }
  func.func @transform_4(%arg0: i32) -> (i32, i32) {
    %c0_i32 = arith.constant 0 : i32
    %c0_i32_0 = arith.constant 0 : i32
    %c0_i32_1 = arith.constant 0 : i32
    return %c0_i32, %c0_i32_0 : i32, i32
  }
  func.func @transform_5(%arg0: i32) -> (i32, i32) {
    %c0_i32 = arith.constant 0 : i32
    %c0_i32_0 = arith.constant 0 : i32
    %c0_i32_1 = arith.constant 0 : i32
    return %c0_i32, %c0_i32_0 : i32, i32
  }
  func.func @transform_6(%arg0: i32) -> (i32, i32, i32) {
    %c0_i32 = arith.constant 0 : i32
    %c0_i32_0 = arith.constant 0 : i32
    %c0_i32_1 = arith.constant 0 : i32
    return %arg0, %c0_i32, %c0_i32_0 : i32, i32, i32
  }
}

module attributes {stable_mosaic.version = 11 : i64} {
  func.func @conv_head_kernel(%arg0: i32, %arg1: memref<1x32x128xf32, #tpu.memory_space<vmem>>, %arg2: memref<9x128x128xbf16, #tpu.memory_space<vmem>>, %arg3: memref<1x128xf32, #tpu.memory_space<vmem>>, %arg4: memref<16x1xf32, #tpu.memory_space<vmem>>, %arg5: memref<16x1xf32, #tpu.memory_space<vmem>>, %arg6: memref<1x16xf32, #tpu.memory_space<vmem>>, %arg7: memref<128x128xf32, #tpu.memory_space<vmem>>, %arg8: memref<1x128xf32, #tpu.memory_space<vmem>>, %arg9: memref<1x1x128xf32, #tpu.memory_space<vmem>>, %arg10: memref<24x128xf32, #tpu.memory_space<vmem>>) attributes {dimension_semantics = [#tpu.dimension_semantics<parallel>], iteration_bounds = array<i64: 2>, scalar_prefetch = 0 : i64, scratch_operands = 1 : i64, tpu.core_type = #tpu.core_type<tc>, window_params = [{transform_indices = @transform_0, window_bounds = array<i64: 1, 32, 128>}, {pipeline_mode = #tpu.pipeline_mode<synchronous>, transform_indices = @transform_1, window_bounds = array<i64: 9, 128, 128>}, {pipeline_mode = #tpu.pipeline_mode<synchronous>, transform_indices = @transform_2, window_bounds = array<i64: 1, 128>}, {pipeline_mode = #tpu.pipeline_mode<synchronous>, transform_indices = @transform_3, window_bounds = array<i64: 16, 1>}, {pipeline_mode = #tpu.pipeline_mode<synchronous>, transform_indices = @transform_4, window_bounds = array<i64: 16, 1>}, {pipeline_mode = #tpu.pipeline_mode<synchronous>, transform_indices = @transform_5, window_bounds = array<i64: 1, 16>}, {pipeline_mode = #tpu.pipeline_mode<synchronous>, transform_indices = @transform_6, window_bounds = array<i64: 128, 128>}, {pipeline_mode = #tpu.pipeline_mode<synchronous>, transform_indices = @transform_7, window_bounds = array<i64: 1, 128>}, {transform_indices = @transform_8, window_bounds = array<i64: 1, 1, 128>}]} {
    %c0 = arith.constant 0 : index
    %c0_0 = arith.constant 0 : index
    %0 = vector.load %arg4[%c0, %c0_0] : memref<16x1xf32, #tpu.memory_space<vmem>>, vector<16x1xf32>
    %c0_1 = arith.constant 0 : index
    %c0_2 = arith.constant 0 : index
    %1 = vector.load %arg5[%c0_1, %c0_2] : memref<16x1xf32, #tpu.memory_space<vmem>>, vector<16x1xf32>
    %c0_3 = arith.constant 0 : index
    %c3 = arith.constant 3 : index
    %c0_4 = arith.constant 0 : index
    %2 = vector.load %arg1[%c0_3, %c3, %c0_4] : memref<1x32x128xf32, #tpu.memory_space<vmem>>, vector<1x16x128xf32>
    %3 = vector.shape_cast %2 : vector<1x16x128xf32> to vector<16x128xf32>
    %4 = vector.broadcast %0 : vector<16x1xf32> to vector<16x128xf32>
    %5 = arith.mulf %3, %4 : vector<16x128xf32>
    %6 = arith.truncf %5 : vector<16x128xf32> to vector<16x128xbf16>
    %c0_5 = arith.constant 0 : index
    %c0_6 = arith.constant 0 : index
    %c0_7 = arith.constant 0 : index
    %7 = vector.load %arg2[%c0_5, %c0_6, %c0_7] : memref<9x128x128xbf16, #tpu.memory_space<vmem>>, vector<1x128x128xbf16>
    %8 = vector.shape_cast %7 : vector<1x128x128xbf16> to vector<128x128xbf16>
    %cst = arith.constant dense<0.000000e+00> : vector<16x128xf32>
    %9 = tpu.matmul %6, %8, %cst {dimension_numbers = #tpu.dot_dimension_numbers<[1], [0], [0], [1], [0, 0, 1, 1], [], []>} : vector<16x128xbf16>, vector<128x128xbf16>, vector<16x128xf32> -> vector<16x128xf32>
    %c0_8 = arith.constant 0 : index
    %c4 = arith.constant 4 : index
    %c0_9 = arith.constant 0 : index
    %10 = vector.load %arg1[%c0_8, %c4, %c0_9] : memref<1x32x128xf32, #tpu.memory_space<vmem>>, vector<1x16x128xf32>
    %11 = vector.shape_cast %10 : vector<1x16x128xf32> to vector<16x128xf32>
    %12 = arith.truncf %11 : vector<16x128xf32> to vector<16x128xbf16>
    %c1 = arith.constant 1 : index
    %c0_10 = arith.constant 0 : index
    %c0_11 = arith.constant 0 : index
    %13 = vector.load %arg2[%c1, %c0_10, %c0_11] : memref<9x128x128xbf16, #tpu.memory_space<vmem>>, vector<1x128x128xbf16>
    %14 = vector.shape_cast %13 : vector<1x128x128xbf16> to vector<128x128xbf16>
    %cst_12 = arith.constant dense<0.000000e+00> : vector<16x128xf32>
    %15 = tpu.matmul %12, %14, %cst_12 {dimension_numbers = #tpu.dot_dimension_numbers<[1], [0], [0], [1], [0, 0, 1, 1], [], []>} : vector<16x128xbf16>, vector<128x128xbf16>, vector<16x128xf32> -> vector<16x128xf32>
    %16 = arith.addf %9, %15 : vector<16x128xf32>
    %c0_13 = arith.constant 0 : index
    %c5 = arith.constant 5 : index
    %c0_14 = arith.constant 0 : index
    %17 = vector.load %arg1[%c0_13, %c5, %c0_14] : memref<1x32x128xf32, #tpu.memory_space<vmem>>, vector<1x16x128xf32>
    %18 = vector.shape_cast %17 : vector<1x16x128xf32> to vector<16x128xf32>
    %19 = vector.broadcast %1 : vector<16x1xf32> to vector<16x128xf32>
    %20 = arith.mulf %18, %19 : vector<16x128xf32>
    %21 = arith.truncf %20 : vector<16x128xf32> to vector<16x128xbf16>
    %c2 = arith.constant 2 : index
    %c0_15 = arith.constant 0 : index
    %c0_16 = arith.constant 0 : index
    %22 = vector.load %arg2[%c2, %c0_15, %c0_16] : memref<9x128x128xbf16, #tpu.memory_space<vmem>>, vector<1x128x128xbf16>
    %23 = vector.shape_cast %22 : vector<1x128x128xbf16> to vector<128x128xbf16>
    %cst_17 = arith.constant dense<0.000000e+00> : vector<16x128xf32>
    %24 = tpu.matmul %21, %23, %cst_17 {dimension_numbers = #tpu.dot_dimension_numbers<[1], [0], [0], [1], [0, 0, 1, 1], [], []>} : vector<16x128xbf16>, vector<128x128xbf16>, vector<16x128xf32> -> vector<16x128xf32>
    %25 = arith.addf %16, %24 : vector<16x128xf32>
    %c0_18 = arith.constant 0 : index
    %c7 = arith.constant 7 : index
    %c0_19 = arith.constant 0 : index
    %26 = vector.load %arg1[%c0_18, %c7, %c0_19] : memref<1x32x128xf32, #tpu.memory_space<vmem>>, vector<1x16x128xf32>
    %27 = vector.shape_cast %26 : vector<1x16x128xf32> to vector<16x128xf32>
    %28 = vector.broadcast %0 : vector<16x1xf32> to vector<16x128xf32>
    %29 = arith.mulf %27, %28 : vector<16x128xf32>
    %30 = arith.truncf %29 : vector<16x128xf32> to vector<16x128xbf16>
    %c3_20 = arith.constant 3 : index
    %c0_21 = arith.constant 0 : index
    %c0_22 = arith.constant 0 : index
    %31 = vector.load %arg2[%c3_20, %c0_21, %c0_22] : memref<9x128x128xbf16, #tpu.memory_space<vmem>>, vector<1x128x128xbf16>
    %32 = vector.shape_cast %31 : vector<1x128x128xbf16> to vector<128x128xbf16>
    %cst_23 = arith.constant dense<0.000000e+00> : vector<16x128xf32>
    %33 = tpu.matmul %30, %32, %cst_23 {dimension_numbers = #tpu.dot_dimension_numbers<[1], [0], [0], [1], [0, 0, 1, 1], [], []>} : vector<16x128xbf16>, vector<128x128xbf16>, vector<16x128xf32> -> vector<16x128xf32>
    %34 = arith.addf %25, %33 : vector<16x128xf32>
    %c0_24 = arith.constant 0 : index
    %c8 = arith.constant 8 : index
    %c0_25 = arith.constant 0 : index
    %35 = vector.load %arg1[%c0_24, %c8, %c0_25] : memref<1x32x128xf32, #tpu.memory_space<vmem>>, vector<1x16x128xf32>
    %36 = vector.shape_cast %35 : vector<1x16x128xf32> to vector<16x128xf32>
    %37 = arith.truncf %36 : vector<16x128xf32> to vector<16x128xbf16>
    %c4_26 = arith.constant 4 : index
    %c0_27 = arith.constant 0 : index
    %c0_28 = arith.constant 0 : index
    %38 = vector.load %arg2[%c4_26, %c0_27, %c0_28] : memref<9x128x128xbf16, #tpu.memory_space<vmem>>, vector<1x128x128xbf16>
    %39 = vector.shape_cast %38 : vector<1x128x128xbf16> to vector<128x128xbf16>
    %cst_29 = arith.constant dense<0.000000e+00> : vector<16x128xf32>
    %40 = tpu.matmul %37, %39, %cst_29 {dimension_numbers = #tpu.dot_dimension_numbers<[1], [0], [0], [1], [0, 0, 1, 1], [], []>} : vector<16x128xbf16>, vector<128x128xbf16>, vector<16x128xf32> -> vector<16x128xf32>
    %41 = arith.addf %34, %40 : vector<16x128xf32>
    %c0_30 = arith.constant 0 : index
    %c9 = arith.constant 9 : index
    %c0_31 = arith.constant 0 : index
    %42 = vector.load %arg1[%c0_30, %c9, %c0_31] : memref<1x32x128xf32, #tpu.memory_space<vmem>>, vector<1x16x128xf32>
    %43 = vector.shape_cast %42 : vector<1x16x128xf32> to vector<16x128xf32>
    %44 = vector.broadcast %1 : vector<16x1xf32> to vector<16x128xf32>
    %45 = arith.mulf %43, %44 : vector<16x128xf32>
    %46 = arith.truncf %45 : vector<16x128xf32> to vector<16x128xbf16>
    %c5_32 = arith.constant 5 : index
    %c0_33 = arith.constant 0 : index
    %c0_34 = arith.constant 0 : index
    %47 = vector.load %arg2[%c5_32, %c0_33, %c0_34] : memref<9x128x128xbf16, #tpu.memory_space<vmem>>, vector<1x128x128xbf16>
    %48 = vector.shape_cast %47 : vector<1x128x128xbf16> to vector<128x128xbf16>
    %cst_35 = arith.constant dense<0.000000e+00> : vector<16x128xf32>
    %49 = tpu.matmul %46, %48, %cst_35 {dimension_numbers = #tpu.dot_dimension_numbers<[1], [0], [0], [1], [0, 0, 1, 1], [], []>} : vector<16x128xbf16>, vector<128x128xbf16>, vector<16x128xf32> -> vector<16x128xf32>
    %50 = arith.addf %41, %49 : vector<16x128xf32>
    %c0_36 = arith.constant 0 : index
    %c11 = arith.constant 11 : index
    %c0_37 = arith.constant 0 : index
    %51 = vector.load %arg1[%c0_36, %c11, %c0_37] : memref<1x32x128xf32, #tpu.memory_space<vmem>>, vector<1x16x128xf32>
    %52 = vector.shape_cast %51 : vector<1x16x128xf32> to vector<16x128xf32>
    %53 = vector.broadcast %0 : vector<16x1xf32> to vector<16x128xf32>
    %54 = arith.mulf %52, %53 : vector<16x128xf32>
    %55 = arith.truncf %54 : vector<16x128xf32> to vector<16x128xbf16>
    %c6 = arith.constant 6 : index
    %c0_38 = arith.constant 0 : index
    %c0_39 = arith.constant 0 : index
    %56 = vector.load %arg2[%c6, %c0_38, %c0_39] : memref<9x128x128xbf16, #tpu.memory_space<vmem>>, vector<1x128x128xbf16>
    %57 = vector.shape_cast %56 : vector<1x128x128xbf16> to vector<128x128xbf16>
    %cst_40 = arith.constant dense<0.000000e+00> : vector<16x128xf32>
    %58 = tpu.matmul %55, %57, %cst_40 {dimension_numbers = #tpu.dot_dimension_numbers<[1], [0], [0], [1], [0, 0, 1, 1], [], []>} : vector<16x128xbf16>, vector<128x128xbf16>, vector<16x128xf32> -> vector<16x128xf32>
    %59 = arith.addf %50, %58 : vector<16x128xf32>
    %c0_41 = arith.constant 0 : index
    %c12 = arith.constant 12 : index
    %c0_42 = arith.constant 0 : index
    %60 = vector.load %arg1[%c0_41, %c12, %c0_42] : memref<1x32x128xf32, #tpu.memory_space<vmem>>, vector<1x16x128xf32>
    %61 = vector.shape_cast %60 : vector<1x16x128xf32> to vector<16x128xf32>
    %62 = arith.truncf %61 : vector<16x128xf32> to vector<16x128xbf16>
    %c7_43 = arith.constant 7 : index
    %c0_44 = arith.constant 0 : index
    %c0_45 = arith.constant 0 : index
    %63 = vector.load %arg2[%c7_43, %c0_44, %c0_45] : memref<9x128x128xbf16, #tpu.memory_space<vmem>>, vector<1x128x128xbf16>
    %64 = vector.shape_cast %63 : vector<1x128x128xbf16> to vector<128x128xbf16>
    %cst_46 = arith.constant dense<0.000000e+00> : vector<16x128xf32>
    %65 = tpu.matmul %62, %64, %cst_46 {dimension_numbers = #tpu.dot_dimension_numbers<[1], [0], [0], [1], [0, 0, 1, 1], [], []>} : vector<16x128xbf16>, vector<128x128xbf16>, vector<16x128xf32> -> vector<16x128xf32>
    %66 = arith.addf %59, %65 : vector<16x128xf32>
    %c0_47 = arith.constant 0 : index
    %c13 = arith.constant 13 : index
    %c0_48 = arith.constant 0 : index
    %67 = vector.load %arg1[%c0_47, %c13, %c0_48] : memref<1x32x128xf32, #tpu.memory_space<vmem>>, vector<1x16x128xf32>
    %68 = vector.shape_cast %67 : vector<1x16x128xf32> to vector<16x128xf32>
    %69 = vector.broadcast %1 : vector<16x1xf32> to vector<16x128xf32>
    %70 = arith.mulf %68, %69 : vector<16x128xf32>
    %71 = arith.truncf %70 : vector<16x128xf32> to vector<16x128xbf16>
    %c8_49 = arith.constant 8 : index
    %c0_50 = arith.constant 0 : index
    %c0_51 = arith.constant 0 : index
    %72 = vector.load %arg2[%c8_49, %c0_50, %c0_51] : memref<9x128x128xbf16, #tpu.memory_space<vmem>>, vector<1x128x128xbf16>
    %73 = vector.shape_cast %72 : vector<1x128x128xbf16> to vector<128x128xbf16>
    %cst_52 = arith.constant dense<0.000000e+00> : vector<16x128xf32>
    %74 = tpu.matmul %71, %73, %cst_52 {dimension_numbers = #tpu.dot_dimension_numbers<[1], [0], [0], [1], [0, 0, 1, 1], [], []>} : vector<16x128xbf16>, vector<128x128xbf16>, vector<16x128xf32> -> vector<16x128xf32>
    %75 = arith.addf %66, %74 : vector<16x128xf32>
    %c0_53 = arith.constant 0 : index
    %c0_54 = arith.constant 0 : index
    %76 = vector.load %arg3[%c0_53, %c0_54] : memref<1x128xf32, #tpu.memory_space<vmem>>, vector<1x128xf32>
    %77 = vector.broadcast %76 : vector<1x128xf32> to vector<16x128xf32>
    %78 = arith.addf %75, %77 : vector<16x128xf32>
    %cst_55 = arith.constant 0.000000e+00 : f32
    %79 = vector.broadcast %cst_55 : f32 to vector<16x128xf32>
    %80 = arith.maximumf %78, %79 : vector<16x128xf32>
    %c0_56 = arith.constant 0 : index
    %c0_57 = arith.constant 0 : index
    %81 = vector.load %arg10[%c0_56, %c0_57] : memref<24x128xf32, #tpu.memory_space<vmem>>, vector<16x128xf32>
    tpu.vector_store %arg10[%c0_56, %c0_57], %80 {strides = array<i32>} : memref<24x128xf32, #tpu.memory_space<vmem>>, vector<16x128xf32>,
    %cst_58 = arith.constant 0.000000e+00 : f32
    %82 = vector.broadcast %cst_58 : f32 to vector<8x128xf32>
    %c16 = arith.constant 16 : index
    %c0_59 = arith.constant 0 : index
    %83 = vector.load %arg10[%c16, %c0_59] : memref<24x128xf32, #tpu.memory_space<vmem>>, vector<8x128xf32>
    tpu.vector_store %arg10[%c16, %c0_59], %82 {strides = array<i32>} : memref<24x128xf32, #tpu.memory_space<vmem>>, vector<8x128xf32>,
    %c0_60 = arith.constant 0 : index
    %c0_61 = arith.constant 0 : index
    %84 = vector.load %arg10[%c0_60, %c0_61] : memref<24x128xf32, #tpu.memory_space<vmem>>, vector<16x128xf32>
    %c1_62 = arith.constant 1 : index
    %c0_63 = arith.constant 0 : index
    %85 = vector.load %arg10[%c1_62, %c0_63] : memref<24x128xf32, #tpu.memory_space<vmem>>, vector<16x128xf32>
    %86 = arith.maximumf %84, %85 : vector<16x128xf32>
    %c4_64 = arith.constant 4 : index
    %c0_65 = arith.constant 0 : index
    %87 = vector.load %arg10[%c4_64, %c0_65] : memref<24x128xf32, #tpu.memory_space<vmem>>, vector<16x128xf32>
    %c5_66 = arith.constant 5 : index
    %c0_67 = arith.constant 0 : index
    %88 = vector.load %arg10[%c5_66, %c0_67] : memref<24x128xf32, #tpu.memory_space<vmem>>, vector<16x128xf32>
    %89 = arith.maximumf %87, %88 : vector<16x128xf32>
    %90 = arith.maximumf %86, %89 : vector<16x128xf32>
    %c0_68 = arith.constant 0 : index
    %c0_69 = arith.constant 0 : index
    %91 = vector.load %arg6[%c0_68, %c0_69] : memref<1x16xf32, #tpu.memory_space<vmem>>, vector<1x16xf32>
    %cst_70 = arith.constant dense<0.000000e+00> : vector<1x128xf32>
    %92 = tpu.matmul %91, %90, %cst_70 {dimension_numbers = #tpu.dot_dimension_numbers<[1], [0], [0], [1], [0, 0, 1, 1], [], []>} : vector<1x16xf32>, vector<16x128xf32>, vector<1x128xf32> -> vector<1x128xf32>
    %c0_71 = arith.constant 0 : index
    %c0_72 = arith.constant 0 : index
    %93 = vector.load %arg7[%c0_71, %c0_72] : memref<128x128xf32, #tpu.memory_space<vmem>>, vector<128x128xf32>
    %cst_73 = arith.constant dense<0.000000e+00> : vector<1x128xf32>
    %94 = tpu.matmul %92, %93, %cst_73 {dimension_numbers = #tpu.dot_dimension_numbers<[1], [0], [0], [1], [0, 0, 1, 1], [], []>} : vector<1x128xf32>, vector<128x128xf32>, vector<1x128xf32> -> vector<1x128xf32>
    %c0_74 = arith.constant 0 : index
    %c0_75 = arith.constant 0 : index
    %95 = vector.load %arg8[%c0_74, %c0_75] : memref<1x128xf32, #tpu.memory_space<vmem>>, vector<1x128xf32>
    %96 = arith.addf %94, %95 : vector<1x128xf32>
    %c0_76 = arith.constant 0 : index
    %c0_77 = arith.constant 0 : index
    %c0_78 = arith.constant 0 : index
    %97 = vector.load %arg9[%c0_76, %c0_77, %c0_78] : memref<1x1x128xf32, #tpu.memory_space<vmem>>, vector<1x1x128xf32>
    %98 = vector.shape_cast %97 : vector<1x1x128xf32> to vector<1x128xf32>
    %99 = vector.shape_cast %96 : vector<1x128xf32> to vector<1x1x128xf32>
    tpu.vector_store %arg9[%c0_76, %c0_77, %c0_78], %99 {strides = array<i32>} : memref<1x1x128xf32, #tpu.memory_space<vmem>>, vector<1x1x128xf32>,
    return
  }
  func.func @transform_0(%arg0: i32) -> (i32, i32, i32) {
    %c0_i32 = arith.constant 0 : i32
    %c0_i32_0 = arith.constant 0 : i32
    %c0_i32_1 = arith.constant 0 : i32
    return %arg0, %c0_i32, %c0_i32_0 : i32, i32, i32
  }
  func.func @transform_1(%arg0: i32) -> (i32, i32, i32) {
    %c0_i32 = arith.constant 0 : i32
    %c0_i32_0 = arith.constant 0 : i32
    %c0_i32_1 = arith.constant 0 : i32
    %c0_i32_2 = arith.constant 0 : i32
    return %c0_i32, %c0_i32_0, %c0_i32_1 : i32, i32, i32
  }
  func.func @transform_2(%arg0: i32) -> (i32, i32) {
    %c0_i32 = arith.constant 0 : i32
    %c0_i32_0 = arith.constant 0 : i32
    %c0_i32_1 = arith.constant 0 : i32
    return %c0_i32, %c0_i32_0 : i32, i32
  }
  func.func @transform_3(%arg0: i32) -> (i32, i32) {
    %c0_i32 = arith.constant 0 : i32
    %c0_i32_0 = arith.constant 0 : i32
    %c0_i32_1 = arith.constant 0 : i32
    return %c0_i32, %c0_i32_0 : i32, i32
  }
  func.func @transform_4(%arg0: i32) -> (i32, i32) {
    %c0_i32 = arith.constant 0 : i32
    %c0_i32_0 = arith.constant 0 : i32
    %c0_i32_1 = arith.constant 0 : i32
    return %c0_i32, %c0_i32_0 : i32, i32
  }
  func.func @transform_5(%arg0: i32) -> (i32, i32) {
    %c0_i32 = arith.constant 0 : i32
    %c0_i32_0 = arith.constant 0 : i32
    %c0_i32_1 = arith.constant 0 : i32
    return %c0_i32, %c0_i32_0 : i32, i32
  }
  func.func @transform_6(%arg0: i32) -> (i32, i32) {
    %c0_i32 = arith.constant 0 : i32
    %c0_i32_0 = arith.constant 0 : i32
    %c0_i32_1 = arith.constant 0 : i32
    return %c0_i32, %c0_i32_0 : i32, i32
  }
  func.func @transform_7(%arg0: i32) -> (i32, i32) {
    %c0_i32 = arith.constant 0 : i32
    %c0_i32_0 = arith.constant 0 : i32
    %c0_i32_1 = arith.constant 0 : i32
    return %c0_i32, %c0_i32_0 : i32, i32
  }
  func.func @transform_8(%arg0: i32) -> (i32, i32, i32) {
    %c0_i32 = arith.constant 0 : i32
    %c0_i32_0 = arith.constant 0 : i32
    %c0_i32_1 = arith.constant 0 : i32
    return %arg0, %c0_i32, %c0_i32_0 : i32, i32, i32
  }
}

</mosaic_0001>

<llo_original>
// kernel: audio_cnn_forward.4
$region0: #{audio_cnn_forward.4}
  #allocation0 [shape = 'u32[]', space=smem, size = 0x4, offset = 0x4, fixed_abs, tag = 'smem constant byte address 0x4 - core index']
  #allocation1 [shape = 'u32[144,128]{1,0:T(1,128)}', space=vmem, size = 0x12000, scoped, tag = 'internal scratch']
  #allocation2 [shape = 'f32[80,128]{1,0:T(8,128)}', space=vmem, size = 0xa000, scoped, tag = 'scratch operand']
  %s0 = inlined_call_operand.vmem [shape: f32[2,96,128], index: 0, kind: input, shape index: {}]
  %s1 = inlined_call_operand.vmem [shape: bf16[9,128,128], index: 1, kind: input, shape index: {}]
  %s2 = inlined_call_operand.vmem [shape: f32[1,128], index: 2, kind: input, shape index: {}]
  %s3 = inlined_call_operand.vmem [shape: f32[64,1], index: 3, kind: input, shape index: {}]
  %s4 = inlined_call_operand.vmem [shape: f32[64,1], index: 4, kind: input, shape index: {}]
  %s5 = inlined_call_operand.vmem [shape: f32[16,64], index: 5, kind: input, shape index: {}]
  %s6 = inlined_call_operand.vmem [shape: f32[2,32,128], index: 6, kind: output, shape index: {}]
  %s7 = sld [smem:[#allocation0]]
  $region57: #{audio_cnn_forward.4} parent=0
    _
  %s9 = ssub.s32 1, %s7
  %s10 = scalar_select 0, %s9, %s7
  loop: start=0, step=1, limit=4
  $region2: #{audio_cnn_forward.4} parent=0 // loop_pre_header
    _
  $region3: #{audio_cnn_forward.4} parent=0 // loop_header
    %s12 = sphi 0, %s16
    %p13 = scmp.ge.s32.totalorder %s12, 4
    %s22 = sphi 0, %s24
    %s25 = sphi 0, %s22
    %s26 = sphi 0, %s25
    %s42 = sphi 0, %s26
    %s46 = sphi 0, %s46
    %s48 = sphi 0, %s46
    %s49 = sphi 0, %s48
    %s63 = sphi 0, %s49
    %s67 = sphi 0, %s67
    %s69 = sphi 0, %s67
    %s70 = sphi 0, %s69
    %s84 = sphi 0, %s70
    %s88 = sphi 0, %s88
    %s90 = sphi 0, %s88
    %s91 = sphi 0, %s90
    %s105 = sphi 0, %s91
    %s109 = sphi 0, %s109
    %s111 = sphi 0, %s109
    %s112 = sphi 0, %s111
    %s126 = sphi 0, %s112
    %s130 = sphi 0, %s130
    %s132 = sphi 0, %s130
    %s133 = sphi 0, %s132
    %s147 = sphi 0, %s133
    %s153 = sphi 0, %s155
    %s156 = sphi 0, %s153
    %s157 = sphi 0, %s156
    %s173 = sphi 0, %s157
  $region4: #{audio_cnn_forward.4} parent=0 // loop_header_branch
    %15 = sbr.rel (%p13) target = $region8
  $region5: #{audio_cnn_forward.4} parent=0 // loop_body
    %s17 = ssub.s32 %s12, 1
    %s18 = ssub.s32 %s12, 2
    %s19 = sadd.s32 %s12, 1
    %s20 = ssub.s32 %s12, %s19
    %p21 = scmp.eq.s32.totalorder %s20, 0
    %s23 = sadd.s32 %s22, 1
    %s24 = scalar_select %p21, %s22, %s23
    %p27 = pneg %p21
    %p28 = scmp.eq.s32.totalorder %s12, 1
    %p29 = por %p27, %p28
    %p30 = scmp.ne.s32.totalorder %s22, %s25
    %p31 = scmp.eq.s32.totalorder %s12, 0
    %p32 = por %p30, %p31
    %p33 = scmp.ne.s32.totalorder %s22, %s25
    %p34 = scmp.eq.s32.totalorder %s17, 1
    %p35 = por %p33, %p34
    %p36 = scmp.ne.s32.totalorder %s25, %s26
    %p37 = scmp.eq.s32.totalorder %s17, 0
    %p38 = por %p36, %p37
    %p39 = scmp.ne.s32.totalorder %s25, %s26
    %p40 = scmp.eq.s32.totalorder %s18, 1
    %p41 = por %p39, %p40
    %p43 = scmp.ne.s32.totalorder %s26, %s42
    %p44 = scmp.eq.s32.totalorder %s18, 0
    %p45 = por %p43, %p44
    %s47 = sadd.s32 %s46, 1
    %p50 = scmp.eq.s32.totalorder %s12, 1
    %p51 = scmp.ne.s32.totalorder %s46, %s48
    %p52 = scmp.eq.s32.totalorder %s12, 0
    %p53 = por %p51, %p52
    %p54 = scmp.ne.s32.totalorder %s46, %s48
    %p55 = scmp.eq.s32.totalorder %s17, 1
    %p56 = por %p54, %p55
    %p57 = scmp.ne.s32.totalorder %s48, %s49
    %p58 = scmp.eq.s32.totalorder %s17, 0
    %p59 = por %p57, %p58
    %p60 = scmp.ne.s32.totalorder %s48, %s49
    %p61 = scmp.eq.s32.totalorder %s18, 1
    %p62 = por %p60, %p61
    %p64 = scmp.ne.s32.totalorder %s49, %s63
    %p65 = scmp.eq.s32.totalorder %s18, 0
    %p66 = por %p64, %p65
    %s68 = sadd.s32 %s67, 1
    %p71 = scmp.eq.s32.totalorder %s12, 1
    %p72 = scmp.ne.s32.totalorder %s67, %s69
    %p73 = scmp.eq.s32.totalorder %s12, 0
    %p74 = por %p72, %p73
    %p75 = scmp.ne.s32.totalorder %s67, %s69
    %p76 = scmp.eq.s32.totalorder %s17, 1
    %p77 = por %p75, %p76
    %p78 = scmp.ne.s32.totalorder %s69, %s70
    %p79 = scmp.eq.s32.totalorder %s17, 0
    %p80 = por %p78, %p79
    %p81 = scmp.ne.s32.totalorder %s69, %s70
    %p82 = scmp.eq.s32.totalorder %s18, 1
    %p83 = por %p81, %p82
    %p85 = scmp.ne.s32.totalorder %s70, %s84
    %p86 = scmp.eq.s32.totalorder %s18, 0
    %p87 = por %p85, %p86
    %s89 = sadd.s32 %s88, 1
    %p92 = scmp.eq.s32.totalorder %s12, 1
    %p93 = scmp.ne.s32.totalorder %s88, %s90
    %p94 = scmp.eq.s32.totalorder %s12, 0
    %p95 = por %p93, %p94
    %p96 = scmp.ne.s32.totalorder %s88, %s90
    %p97 = scmp.eq.s32.totalorder %s17, 1
    %p98 = por %p96, %p97
    %p99 = scmp.ne.s32.totalorder %s90, %s91
    %p100 = scmp.eq.s32.totalorder %s17, 0
    %p101 = por %p99, %p100
    %p102 = scmp.ne.s32.totalorder %s90, %s91
    %p103 = scmp.eq.s32.totalorder %s18, 1
    %p104 = por %p102, %p103
    %p106 = scmp.ne.s32.totalorder %s91, %s105
    %p107 = scmp.eq.s32.totalorder %s18, 0
    %p108 = por %p106, %p107
    %s110 = sadd.s32 %s109, 1
    %p113 = scmp.eq.s32.totalorder %s12, 1
    %p114 = scmp.ne.s32.totalorder %s109, %s111
    %p115 = scmp.eq.s32.totalorder %s12, 0
    %p116 = por %p114, %p115
    %p117 = scmp.ne.s32.totalorder %s109, %s111
    %p118 = scmp.eq.s32.totalorder %s17, 1
    %p119 = por %p117, %p118
    %p120 = scmp.ne.s32.totalorder %s111, %s112
    %p121 = scmp.eq.s32.totalorder %s17, 0
    %p122 = por %p120, %p121
    %p123 = scmp.ne.s32.totalorder %s111, %s112
    %p124 = scmp.eq.s32.totalorder %s18, 1
    %p125 = por %p123, %p124
    %p127 = scmp.ne.s32.totalorder %s112, %s126
    %p128 = scmp.eq.s32.totalorder %s18, 0
    %p129 = por %p127, %p128
    %s131 = sadd.s32 %s130, 1
    %p134 = scmp.eq.s32.totalorder %s12, 1
    %p135 = scmp.ne.s32.totalorder %s130, %s132
    %p136 = scmp.eq.s32.totalorder %s12, 0
    %p137 = por %p135, %p136
    %p138 = scmp.ne.s32.totalorder %s130, %s132
    %p139 = scmp.eq.s32.totalorder %s17, 1
    %p140 = por %p138, %p139
    %p141 = scmp.ne.s32.totalorder %s132, %s133
    %p142 = scmp.eq.s32.totalorder %s17, 0
    %p143 = por %p141, %p142
    %p144 = scmp.ne.s32.totalorder %s132, %s133
    %p145 = scmp.eq.s32.totalorder %s18, 1
    %p146 = por %p144, %p145
    %p148 = scmp.ne.s32.totalorder %s133, %s147
    %p149 = scmp.eq.s32.totalorder %s18, 0
    %p150 = por %p148, %p149
    %s151 = ssub.s32 %s12, %s19
    %p152 = scmp.eq.s32.totalorder %s151, 0
    %s154 = sadd.s32 %s153, 1
    %s155 = scalar_select %p152, %s153, %s154
    %p158 = pneg %p152
    %p159 = scmp.eq.s32.totalorder %s12, 1
    %p160 = por %p158, %p159
    %p161 = scmp.ne.s32.totalorder %s153, %s156
    %p162 = scmp.eq.s32.totalorder %s12, 0
    %p163 = por %p161, %p162
    %p164 = scmp.ne.s32.totalorder %s153, %s156
    %p165 = scmp.eq.s32.totalorder %s17, 1
    %p166 = por %p164, %p165
    %p167 = scmp.ne.s32.totalorder %s156, %s157
    %p168 = scmp.eq.s32.totalorder %s17, 0
    %p169 = por %p167, %p168
    %p170 = scmp.ne.s32.totalorder %s156, %s157
    %p171 = scmp.eq.s32.totalorder %s18, 1
    %p172 = por %p170, %p171
    %p174 = scmp.ne.s32.totalorder %s157, %s173
    %p175 = scmp.eq.s32.totalorder %s18, 0
    %p176 = por %p174, %p175
    %p177 = scmp.le.s32.totalorder 1, %s12
    %p178 = scmp.lt.s32.totalorder %s12, 3
    %p179 = pnand %p177, %p178
    %p180 = pneg %p179
    // Predicated region
    $region9: #{audio_cnn_forward.4} parent=5 // pred_check
      _
    $region10: #{audio_cnn_forward.4} parent=5 // pred_check_branch
      %182 = sbr.rel (%p179) target = $region12
    $region11: #{audio_cnn_forward.4} parent=5 // pred_region
      %s183 = ssub.s32 %s12, 1
      // Predicated region
      $region13: #{audio_cnn_forward.4} parent=11 // pred_check
        %p184 = pneg %p59
      $region14: #{audio_cnn_forward.4} parent=11 // pred_check_branch
        %186 = sbr.rel (%p184) target = $region16
      $region15: #{audio_cnn_forward.4} parent=11 // pred_region
        _
      $region16: #{audio_cnn_forward.4} parent=11 // pred_fallthru
        _
      // Predicated region
      $region17: #{audio_cnn_forward.4} parent=11 // pred_check
        %p187 = pneg %p80
      $region18: #{audio_cnn_forward.4} parent=11 // pred_check_branch
        %189 = sbr.rel (%p187) target = $region20
      $region19: #{audio_cnn_forward.4} parent=11 // pred_region
        _
      $region20: #{audio_cnn_forward.4} parent=11 // pred_fallthru
        _
      // Predicated region
      $region21: #{audio_cnn_forward.4} parent=11 // pred_check
        %p190 = pneg %p101
      $region22: #{audio_cnn_forward.4} parent=11 // pred_check_branch
        %192 = sbr.rel (%p190) target = $region24
      $region23: #{audio_cnn_forward.4} parent=11 // pred_region
        _
      $region24: #{audio_cnn_forward.4} parent=11 // pred_fallthru
        _
      // Predicated region
      $region25: #{audio_cnn_forward.4} parent=11 // pred_check
        %p193 = pneg %p122
      $region26: #{audio_cnn_forward.4} parent=11 // pred_check_branch
        %195 = sbr.rel (%p193) target = $region28
      $region27: #{audio_cnn_forward.4} parent=11 // pred_region
        _
      $region28: #{audio_cnn_forward.4} parent=11 // pred_fallthru
        _
      // Predicated region
      $region29: #{audio_cnn_forward.4} parent=11 // pred_check
        %p196 = pneg %p143
      $region30: #{audio_cnn_forward.4} parent=11 // pred_check_branch
        %198 = sbr.rel (%p196) target = $region32
      $region31: #{audio_cnn_forward.4} parent=11 // pred_region
        _
      $region32: #{audio_cnn_forward.4} parent=11 // pred_fallthru
        _
    $region12: #{audio_cnn_forward.4} parent=5 // pred_fallthru
      _
    %p199 = scmp.lt.s32.totalorder %s12, 2
    // Predicated region
    $region33: #{audio_cnn_forward.4} parent=5 // pred_check
      %p200 = pneg %p199
    $region34: #{audio_cnn_forward.4} parent=5 // pred_check_branch
      %202 = sbr.rel (%p200) target = $region36
    $region35: #{audio_cnn_forward.4} parent=5 // pred_region
      // Predicated region
      $region37: #{audio_cnn_forward.4} parent=35 // pred_check
        %p203 = pneg %p32
      $region38: #{audio_cnn_forward.4} parent=35 // pred_check_branch
        %205 = sbr.rel (%p203) target = $region40
      $region39: #{audio_cnn_forward.4} parent=35 // pred_region
        %p206 = scmp.lt.s32.totalorder %s12, 1
        %s207 = scalar_select %p206, %s12, 1
        %s208 = smul.addr %s207, 12
        %s209 = smul.addr %s208, 8
        %s210 = scalar_lea.vmem %s0, %s209
      $region40: #{audio_cnn_forward.4} parent=35 // pred_fallthru
        _
    $region36: #{audio_cnn_forward.4} parent=5 // pred_fallthru
      _
    %p211 = scmp.le.s32.totalorder 1, %s12
    %p212 = scmp.lt.s32.totalorder %s12, 3
    %p213 = pnand %p211, %p212
    %p214 = pneg %p213
    // Predicated region
    $region41: #{audio_cnn_forward.4} parent=5 // pred_check
      _
    $region42: #{audio_cnn_forward.4} parent=5 // pred_check_branch
      %216 = sbr.rel (%p213) target = $region44
    $region43: #{audio_cnn_forward.4} parent=5 // pred_region
      %s217 = ssub.s32 %s12, 1
      %p218 = scmp.lt.s32.totalorder %s17, 1
      %s219 = scalar_select %p218, %s17, 1
      %s220 = smul.addr %s219, 12
      %s221 = smul.addr %s220, 8
      %s222 = scalar_lea.vmem %s0, %s221
      %p223 = pneg %p38
      %p224 = pneg %p35
      %p225 = pneg %p59
      %p226 = pneg %p56
      %p227 = pneg %p80
      %p228 = pneg %p77
      %p229 = pneg %p101
      %p230 = pneg %p98
      %p231 = pneg %p122
      %p232 = pneg %p119
      %p233 = pneg %p143
      %p234 = pneg %p140
      %p235 = pneg %p169
      %p236 = pneg %p166
      %p237 = scmp.lt.s32.totalorder %s17, 1
      %s238 = scalar_select %p237, %s17, 1
      %s239 = smul.addr %s238, 4
      %s240 = smul.addr %s239, 8
      %s241 = scalar_lea.vmem %s6, %s240
      %p242 = scmp.lt.s32.totalorder %s17, 1
      %s243 = scalar_select %p242, %s17, 1
      %s244 = smul.addr %s243, 12
      %s245 = smul.addr %s244, 8
      %s246 = scalar_lea.vmem %s0, %s245
      %p247 = scmp.lt.s32.totalorder %s17, 1
      %s248 = scalar_select %p247, %s17, 1
      %s249 = smul.addr %s248, 4
      %s250 = smul.addr %s249, 8
      %s251 = scalar_lea.vmem %s6, %s250
      %v253 = vld [vmem:[%s3] sm:$0xff]
      %v254 = vld [vmem:[%s3 + $0x8] sm:$0xff]
      %v255 = vld [vmem:[%s3 + $0x10] sm:$0xff]
      %v256 = vld [vmem:[%s3 + $0x18] sm:$0xff]
      %v257 = vld [vmem:[%s3 + $0x20] sm:$0xff]
      %v258 = vld [vmem:[%s3 + $0x28] sm:$0xff]
      %v259 = vld [vmem:[%s3 + $0x30] sm:$0xff]
      %v260 = vld [vmem:[%s3 + $0x38] sm:$0xff]
      %v261 = vld [vmem:[%s4] sm:$0xff]
      %v262 = vld [vmem:[%s4 + $0x8] sm:$0xff]
      %v263 = vld [vmem:[%s4 + $0x10] sm:$0xff]
      %v264 = vld [vmem:[%s4 + $0x18] sm:$0xff]
      %v265 = vld [vmem:[%s4 + $0x20] sm:$0xff]
      %v266 = vld [vmem:[%s4 + $0x28] sm:$0xff]
      %v267 = vld [vmem:[%s4 + $0x30] sm:$0xff]
      %v268 = vld [vmem:[%s4 + $0x38] sm:$0xff]
      %v269 = vld [vmem:[%s246 + $0x7] sm:$0xff]
      %v270 = vld [vmem:[%s246 + $0xf] sm:$0xff]
      %v271 = vld [vmem:[%s246 + $0x17] sm:$0xff]
      %v272 = vld [vmem:[%s246 + $0x1f] sm:$0xff]
      %v273 = vld [vmem:[%s246 + $0x27] sm:$0xff]
      %v274 = vld [vmem:[%s246 + $0x2f] sm:$0xff]
      %v275 = vld [vmem:[%s246 + $0x37] sm:$0xff]
      %v276 = vld [vmem:[%s246 + $0x3f] sm:$0xff]
      %278 = vset.pattern.permute.xlu0 0
      %279 = vperm.xlu0 %278, %v253
      %v280 = vpop.permute.xlu0 %279
      %283 = vset.pattern.permute.xlu0 0
      %284 = vperm.xlu0 %283, %v254
      %v285 = vpop.permute.xlu0 %284
      %288 = vset.pattern.permute.xlu0 0
      %289 = vperm.xlu0 %288, %v255
      %v290 = vpop.permute.xlu0 %289
      %293 = vset.pattern.permute.xlu0 0
      %294 = vperm.xlu0 %293, %v256
      %v295 = vpop.permute.xlu0 %294
      %298 = vset.pattern.permute.xlu0 0
      %299 = vperm.xlu0 %298, %v257
      %v300 = vpop.permute.xlu0 %299
      %303 = vset.pattern.permute.xlu0 0
      %304 = vperm.xlu0 %303, %v258
      %v305 = vpop.permute.xlu0 %304
      %308 = vset.pattern.permute.xlu0 0
      %309 = vperm.xlu0 %308, %v259
      %v310 = vpop.permute.xlu0 %309
      %313 = vset.pattern.permute.xlu0 0
      %314 = vperm.xlu0 %313, %v260
      %v315 = vpop.permute.xlu0 %314
      %v317 = vmul.f32 %v269, %v280
      %v318 = vmul.f32 %v270, %v285
      %v319 = vmul.f32 %v271, %v290
      %v320 = vmul.f32 %v272, %v295
      %v321 = vmul.f32 %v273, %v300
      %v322 = vmul.f32 %v274, %v305
      %v323 = vmul.f32 %v275, %v310
      %v324 = vmul.f32 %v276, %v315
      %v325 = vpack.c.bf16 %v318, %v317
      %v326 = vpack.c.bf16 %v320, %v319
      %v327 = vpack.c.bf16 %v322, %v321
      %v328 = vpack.c.bf16 %v324, %v323
      %v329 = vld [vmem:[%s1] sm:$0xf]
      %v330 = vld [vmem:[%s1 + $0x4] sm:$0xf]
      %v331 = vld [vmem:[%s1 + $0x8] sm:$0xf]
      %v332 = vld [vmem:[%s1 + $0xc] sm:$0xf]
      %v333 = vld [vmem:[%s1 + $0x10] sm:$0xf]
      %v334 = vld [vmem:[%s1 + $0x14] sm:$0xf]
      %v335 = vld [vmem:[%s1 + $0x18] sm:$0xf]
      %v336 = vld [vmem:[%s1 + $0x1c] sm:$0xf]
      %v337 = vld [vmem:[%s1 + $0x20] sm:$0xf]
      %v338 = vld [vmem:[%s1 + $0x24] sm:$0xf]
      %v339 = vld [vmem:[%s1 + $0x28] sm:$0xf]
      %v340 = vld [vmem:[%s1 + $0x2c] sm:$0xf]
      %v341 = vld [vmem:[%s1 + $0x30] sm:$0xf]
      %v342 = vld [vmem:[%s1 + $0x34] sm:$0xf]
      %v343 = vld [vmem:[%s1 + $0x38] sm:$0xf]
      %v344 = vld [vmem:[%s1 + $0x3c] sm:$0xf]
      %v345 = vld [vmem:[%s246 + $0x8] sm:$0xff]
      %v346 = vld [vmem:[%s246 + $0x10] sm:$0xff]
      %v347 = vld [vmem:[%s246 + $0x18] sm:$0xff]
      %v348 = vld [vmem:[%s246 + $0x20] sm:$0xff]
      %v349 = vld [vmem:[%s246 + $0x28] sm:$0xff]
      %v350 = vld [vmem:[%s246 + $0x30] sm:$0xff]
      %v351 = vld [vmem:[%s246 + $0x38] sm:$0xff]
      %v352 = vld [vmem:[%s246 + $0x40] sm:$0xff]
      %v353 = vpack.c.bf16 %v346, %v345
      %v354 = vpack.c.bf16 %v348, %v347
      %v355 = vpack.c.bf16 %v350, %v349
      %v356 = vpack.c.bf16 %v352, %v351
      %s357 = scalar_lea.vmem %s1, 64
      %v358 = vld [vmem:[%s357] sm:$0xf]
      %v359 = vld [vmem:[%s357 + $0x4] sm:$0xf]
      %v360 = vld [vmem:[%s357 + $0x8] sm:$0xf]
      %v361 = vld [vmem:[%s357 + $0xc] sm:$0xf]
      %v362 = vld [vmem:[%s357 + $0x10] sm:$0xf]
      %v363 = vld [vmem:[%s357 + $0x14] sm:$0xf]
      %v364 = vld [vmem:[%s357 + $0x18] sm:$0xf]
      %v365 = vld [vmem:[%s357 + $0x1c] sm:$0xf]
      %v366 = vld [vmem:[%s357 + $0x20] sm:$0xf]
      %v367 = vld [vmem:[%s357 + $0x24] sm:$0xf]
      %v368 = vld [vmem:[%s357 + $0x28] sm:$0xf]
      %v369 = vld [vmem:[%s357 + $0x2c] sm:$0xf]
      %v370 = vld [vmem:[%s357 + $0x30] sm:$0xf]
      %v371 = vld [vmem:[%s357 + $0x34] sm:$0xf]
      %v372 = vld [vmem:[%s357 + $0x38] sm:$0xf]
      %v373 = vld [vmem:[%s357 + $0x3c] sm:$0xf]
      %v390 = vunpack.c.l.b16 %v358
      %v391 = vunpack.c.l.b16 %v359
      %v392 = vunpack.c.l.b16 %v360
      %v393 = vunpack.c.l.b16 %v361
      %v394 = vunpack.c.l.b16 %v362
      %v395 = vunpack.c.l.b16 %v363
      %v396 = vunpack.c.l.b16 %v364
      %v397 = vunpack.c.l.b16 %v365
      %v398 = vunpack.c.l.b16 %v366
      %v399 = vunpack.c.l.b16 %v367
      %v400 = vunpack.c.l.b16 %v368
      %v401 = vunpack.c.l.b16 %v369
      %v402 = vunpack.c.l.b16 %v370
      %v403 = vunpack.c.l.b16 %v371
      %v404 = vunpack.c.l.b16 %v372
      %v405 = vunpack.c.l.b16 %v373
      %v406 = vpack.c.b16 %v391, %v390
      %v407 = vpack.c.b16 %v393, %v392
      %v408 = vpack.c.b16 %v395, %v394
      %v409 = vpack.c.b16 %v397, %v396
      %v410 = vpack.c.b16 %v399, %v398
      %v411 = vpack.c.b16 %v401, %v400
      %v412 = vpack.c.b16 %v403, %v402
      %v413 = vpack.c.b16 %v405, %v404
      %422 = vmatprep.subr.bf16.mxu0 0
      %423 = vmatpush1.bf16.msra.mxu0 %v406
      %424 = vmatprep.subr.bf16.mxu0 0
      %425 = vmatpush1.bf16.msra.mxu0 %v407
      %426 = vmatprep.subr.bf16.mxu0 0
      %427 = vmatpush1.bf16.msra.mxu0 %v408
      %428 = vmatprep.subr.bf16.mxu0 0
      %429 = vmatpush1.bf16.msra.mxu0 %v409
      %430 = vmatprep.subr.bf16.mxu0 0
      %431 = vmatpush1.bf16.msra.mxu0 %v410
      %432 = vmatprep.subr.bf16.mxu0 0
      %433 = vmatpush1.bf16.msra.mxu0 %v411
      %434 = vmatprep.subr.bf16.mxu0 0
      %435 = vmatpush1.bf16.msra.mxu0 %v412
      %436 = vmatprep.subr.bf16.mxu0 0
      %437 = vmatpush1.bf16.msra.mxu0 %v413
      %438 = vmatprep.subr.bf16.mxu0 0
      %439 = vmatpush1.bf16.msra.mxu0 0
      %440 = vmatprep.subr.bf16.mxu0 0
      %441 = vmatpush1.bf16.msra.mxu0 0
      %442 = vmatprep.subr.bf16.mxu0 0
      %443 = vmatpush1.bf16.msra.mxu0 0
      %444 = vmatprep.subr.bf16.mxu0 0
      %445 = vmatpush1.bf16.msra.mxu0 0
      %446 = vmatprep.subr.bf16.mxu0 0
      %447 = vmatpush1.bf16.msra.mxu0 0
      %448 = vmatprep.subr.bf16.mxu0 0
      %449 = vmatpush1.bf16.msra.mxu0 0
      %450 = vmatprep.subr.bf16.mxu0 0
      %451 = vmatpush1.bf16.msra.mxu0 0
      %452 = vmatprep.subr.bf16.mxu0 0
      %453 = vmatpush1.bf16.msra.mxu0 0
      %454 = vmatprep.mubr.bf16.mxu0 0
      %455 = vmatmul.mubr.bf16.gmra.mrb[0].mxu0 %v353
      %v456 = vpop.f32.mrb[0].mxu0
      %v457 = vadd.f32 0.0, %v456
      %v458 = vpop.f32.mrb[0].mxu0
      %v459 = vpop.f32.mrb[0].mxu0
      %v460 = vadd.f32 0.0, %v459
      %v461 = vpop.f32.mrb[0].mxu0
      %462 = vmatprep.mubr.bf16.mxu0 0
      %463 = vmatmul.mubr.bf16.gmra.mrb[0].mxu0 %v354
      %v464 = vpop.f32.mrb[0].mxu0
      %v465 = vadd.f32 0.0, %v464
      %v466 = vpop.f32.mrb[0].mxu0
      %v467 = vpop.f32.mrb[0].mxu0
      %v468 = vadd.f32 0.0, %v467
      %v469 = vpop.f32.mrb[0].mxu0
      %470 = vmatprep.mubr.bf16.mxu0 0
      %471 = vmatmul.mubr.bf16.gmra.mrb[0].mxu0 %v355
      %v472 = vpop.f32.mrb[0].mxu0
      %v473 = vadd.f32 0.0, %v472
      %v474 = vpop.f32.mrb[0].mxu0
      %v475 = vpop.f32.mrb[0].mxu0
      %v476 = vadd.f32 0.0, %v475
      %v477 = vpop.f32.mrb[0].mxu0
      %478 = vmatprep.mubr.bf16.mxu0 0
      %479 = vmatmul.mubr.bf16.gmra.mrb[0].mxu0 %v356
      %v480 = vpop.f32.mrb[0].mxu0
      %v481 = vadd.f32 0.0, %v480
      %v482 = vpop.f32.mrb[0].mxu0
      %v483 = vpop.f32.mrb[0].mxu0
      %v484 = vadd.f32 0.0, %v483
      %v485 = vpop.f32.mrb[0].mxu0
      %486 = vdwg.mxu0
      %v503 = vunpack.c.l.b16 %v329
      %v504 = vunpack.c.l.b16 %v330
      %v505 = vunpack.c.l.b16 %v331
      %v506 = vunpack.c.l.b16 %v332
      %v507 = vunpack.c.l.b16 %v333
      %v508 = vunpack.c.l.b16 %v334
      %v509 = vunpack.c.l.b16 %v335
      %v510 = vunpack.c.l.b16 %v336
      %v511 = vunpack.c.l.b16 %v337
      %v512 = vunpack.c.l.b16 %v338
      %v513 = vunpack.c.l.b16 %v339
      %v514 = vunpack.c.l.b16 %v340
      %v515 = vunpack.c.l.b16 %v341
      %v516 = vunpack.c.l.b16 %v342
      %v517 = vunpack.c.l.b16 %v343
      %v518 = vunpack.c.l.b16 %v344
      %v519 = vpack.c.b16 %v504, %v503
      %v520 = vpack.c.b16 %v506, %v505
      %v521 = vpack.c.b16 %v508, %v507
      %v522 = vpack.c.b16 %v510, %v509
      %v523 = vpack.c.b16 %v512, %v511
      %v524 = vpack.c.b16 %v514, %v513
      %v525 = vpack.c.b16 %v516, %v515
      %v526 = vpack.c.b16 %v518, %v517
      %535 = vmatprep.subr.bf16.mxu0 0
      %536 = vmatpush1.bf16.msra.mxu0 %v519
      %537 = vmatprep.subr.bf16.mxu0 0
      %538 = vmatpush1.bf16.msra.mxu0 %v520
      %539 = vmatprep.subr.bf16.mxu0 0
      %540 = vmatpush1.bf16.msra.mxu0 %v521
      %541 = vmatprep.subr.bf16.mxu0 0
      %542 = vmatpush1.bf16.msra.mxu0 %v522
      %543 = vmatprep.subr.bf16.mxu0 0
      %544 = vmatpush1.bf16.msra.mxu0 %v523
      %545 = vmatprep.subr.bf16.mxu0 0
      %546 = vmatpush1.bf16.msra.mxu0 %v524
      %547 = vmatprep.subr.bf16.mxu0 0
      %548 = vmatpush1.bf16.msra.mxu0 %v525
      %549 = vmatprep.subr.bf16.mxu0 0
      %550 = vmatpush1.bf16.msra.mxu0 %v526
      %551 = vmatprep.subr.bf16.mxu0 0
      %552 = vmatpush1.bf16.msra.mxu0 0
      %553 = vmatprep.subr.bf16.mxu0 0
      %554 = vmatpush1.bf16.msra.mxu0 0
      %555 = vmatprep.subr.bf16.mxu0 0
      %556 = vmatpush1.bf16.msra.mxu0 0
      %557 = vmatprep.subr.bf16.mxu0 0
      %558 = vmatpush1.bf16.msra.mxu0 0
      %559 = vmatprep.subr.bf16.mxu0 0
      %560 = vmatpush1.bf16.msra.mxu0 0
      %561 = vmatprep.subr.bf16.mxu0 0
      %562 = vmatpush1.bf16.msra.mxu0 0
      %563 = vmatprep.subr.bf16.mxu0 0
      %564 = vmatpush1.bf16.msra.mxu0 0
      %565 = vmatprep.subr.bf16.mxu0 0
      %566 = vmatpush1.bf16.msra.mxu0 0
      %567 = vmatprep.mubr.bf16.mxu0 0
      %568 = vmatmul.mubr.bf16.gmra.mrb[0].mxu0 %v325
      %v569 = vpop.f32.mrb[0].mxu0
      %v570 = vadd.f32 %v457, %v569
      %v571 = vpop.f32.mrb[0].mxu0
      %v572 = vpop.f32.mrb[0].mxu0
      %v573 = vadd.f32 %v460, %v572
      %v574 = vpop.f32.mrb[0].mxu0
      %575 = vmatprep.mubr.bf16.mxu0 0
      %576 = vmatmul.mubr.bf16.gmra.mrb[0].mxu0 %v326
      %v577 = vpop.f32.mrb[0].mxu0
      %v578 = vadd.f32 %v465, %v577
      %v579 = vpop.f32.mrb[0].mxu0
      %v580 = vpop.f32.mrb[0].mxu0
      %v581 = vadd.f32 %v468, %v580
      %v582 = vpop.f32.mrb[0].mxu0
      %583 = vmatprep.mubr.bf16.mxu0 0
      %584 = vmatmul.mubr.bf16.gmra.mrb[0].mxu0 %v327
      %v585 = vpop.f32.mrb[0].mxu0
      %v586 = vadd.f32 %v473, %v585
      %v587 = vpop.f32.mrb[0].mxu0
      %v588 = vpop.f32.mrb[0].mxu0
      %v589 = vadd.f32 %v476, %v588
      %v590 = vpop.f32.mrb[0].mxu0
      %591 = vmatprep.mubr.bf16.mxu0 0
      %592 = vmatmul.mubr.bf16.gmra.mrb[0].mxu0 %v328
      %v593 = vpop.f32.mrb[0].mxu0
      %v594 = vadd.f32 %v481, %v593
      %v595 = vpop.f32.mrb[0].mxu0
      %v596 = vpop.f32.mrb[0].mxu0
      %v597 = vadd.f32 %v484, %v596
      %v598 = vpop.f32.mrb[0].mxu0
      %599 = vdwg.mxu0
      %v600 = vld [vmem:[%s246 + $0x9] sm:$0xff]
      %v601 = vld [vmem:[%s246 + $0x11] sm:$0xff]
      %v602 = vld [vmem:[%s246 + $0x19] sm:$0xff]
      %v603 = vld [vmem:[%s246 + $0x21] sm:$0xff]
      %v604 = vld [vmem:[%s246 + $0x29] sm:$0xff]
      %v605 = vld [vmem:[%s246 + $0x31] sm:$0xff]
      %v606 = vld [vmem:[%s246 + $0x39] sm:$0xff]
      %v607 = vld [vmem:[%s246 + $0x41] sm:$0xff]
      %609 = vset.pattern.permute.xlu0 0
      %610 = vperm.xlu0 %609, %v261
      %v611 = vpop.permute.xlu0 %610
      %614 = vset.pattern.permute.xlu0 0
      %615 = vperm.xlu0 %614, %v262
      %v616 = vpop.permute.xlu0 %615
      %619 = vset.pattern.permute.xlu0 0
      %620 = vperm.xlu0 %619, %v263
      %v621 = vpop.permute.xlu0 %620
      %624 = vset.pattern.permute.xlu0 0
      %625 = vperm.xlu0 %624, %v264
      %v626 = vpop.permute.xlu0 %625
      %629 = vset.pattern.permute.xlu0 0
      %630 = vperm.xlu0 %629, %v265
      %v631 = vpop.permute.xlu0 %630
      %634 = vset.pattern.permute.xlu0 0
      %635 = vperm.xlu0 %634, %v266
      %v636 = vpop.permute.xlu0 %635
      %639 = vset.pattern.permute.xlu0 0
      %640 = vperm.xlu0 %639, %v267
      %v641 = vpop.permute.xlu0 %640
      %644 = vset.pattern.permute.xlu0 0
      %645 = vperm.xlu0 %644, %v268
      %v646 = vpop.permute.xlu0 %645
      %v648 = vmul.f32 %v600, %v611
      %v649 = vmul.f32 %v601, %v616
      %v650 = vmul.f32 %v602, %v621
      %v651 = vmul.f32 %v603, %v626
      %v652 = vmul.f32 %v604, %v631
      %v653 = vmul.f32 %v605, %v636
      %v654 = vmul.f32 %v606, %v641
      %v655 = vmul.f32 %v607, %v646
      %v656 = vpack.c.bf16 %v649, %v648
      %v657 = vpack.c.bf16 %v651, %v650
      %v658 = vpack.c.bf16 %v653, %v652
      %v659 = vpack.c.bf16 %v655, %v654
      %s660 = scalar_lea.vmem %s1, 128
      %v661 = vld [vmem:[%s660] sm:$0xf]
      %v662 = vld [vmem:[%s660 + $0x4] sm:$0xf]
      %v663 = vld [vmem:[%s660 + $0x8] sm:$0xf]
      %v664 = vld [vmem:[%s660 + $0xc] sm:$0xf]
      %v665 = vld [vmem:[%s660 + $0x10] sm:$0xf]
      %v666 = vld [vmem:[%s660 + $0x14] sm:$0xf]
      %v667 = vld [vmem:[%s660 + $0x18] sm:$0xf]
      %v668 = vld [vmem:[%s660 + $0x1c] sm:$0xf]
      %v669 = vld [vmem:[%s660 + $0x20] sm:$0xf]
      %v670 = vld [vmem:[%s660 + $0x24] sm:$0xf]
      %v671 = vld [vmem:[%s660 + $0x28] sm:$0xf]
      %v672 = vld [vmem:[%s660 + $0x2c] sm:$0xf]
      %v673 = vld [vmem:[%s660 + $0x30] sm:$0xf]
      %v674 = vld [vmem:[%s660 + $0x34] sm:$0xf]
      %v675 = vld [vmem:[%s660 + $0x38] sm:$0xf]
      %v676 = vld [vmem:[%s660 + $0x3c] sm:$0xf]
      %v693 = vunpack.c.l.b16 %v661
      %v694 = vunpack.c.l.b16 %v662
      %v695 = vunpack.c.l.b16 %v663
      %v696 = vunpack.c.l.b16 %v664
      %v697 = vunpack.c.l.b16 %v665
      %v698 = vunpack.c.l.b16 %v666
      %v699 = vunpack.c.l.b16 %v667
      %v700 = vunpack.c.l.b16 %v668
      %v701 = vunpack.c.l.b16 %v669
      %v702 = vunpack.c.l.b16 %v670
      %v703 = vunpack.c.l.b16 %v671
      %v704 = vunpack.c.l.b16 %v672
      %v705 = vunpack.c.l.b16 %v673
      %v706 = vunpack.c.l.b16 %v674
      %v707 = vunpack.c.l.b16 %v675
      %v708 = vunpack.c.l.b16 %v676
      %v709 = vpack.c.b16 %v694, %v693
      %v710 = vpack.c.b16 %v696, %v695
      %v711 = vpack.c.b16 %v698, %v697
      %v712 = vpack.c.b16 %v700, %v699
      %v713 = vpack.c.b16 %v702, %v701
      %v714 = vpack.c.b16 %v704, %v703
      %v715 = vpack.c.b16 %v706, %v705
      %v716 = vpack.c.b16 %v708, %v707
      %725 = vmatprep.subr.bf16.mxu0 0
      %726 = vmatpush1.bf16.msra.mxu0 %v709
      %727 = vmatprep.subr.bf16.mxu0 0
      %728 = vmatpush1.bf16.msra.mxu0 %v710
      %729 = vmatprep.subr.bf16.mxu0 0
      %730 = vmatpush1.bf16.msra.mxu0 %v711
      %731 = vmatprep.subr.bf16.mxu0 0
      %732 = vmatpush1.bf16.msra.mxu0 %v712
      %733 = vmatprep.subr.bf16.mxu0 0
      %734 = vmatpush1.bf16.msra.mxu0 %v713
      %735 = vmatprep.subr.bf16.mxu0 0
      %736 = vmatpush1.bf16.msra.mxu0 %v714
      %737 = vmatprep.subr.bf16.mxu0 0
      %738 = vmatpush1.bf16.msra.mxu0 %v715
      %739 = vmatprep.subr.bf16.mxu0 0
      %740 = vmatpush1.bf16.msra.mxu0 %v716
      %741 = vmatprep.subr.bf16.mxu0 0
      %742 = vmatpush1.bf16.msra.mxu0 0
      %743 = vmatprep.subr.bf16.mxu0 0
      %744 = vmatpush1.bf16.msra.mxu0 0
      %745 = vmatprep.subr.bf16.mxu0 0
      %746 = vmatpush1.bf16.msra.mxu0 0
      %747 = vmatprep.subr.bf16.mxu0 0
      %748 = vmatpush1.bf16.msra.mxu0 0
      %749 = vmatprep.subr.bf16.mxu0 0
      %750 = vmatpush1.bf16.msra.mxu0 0
      %751 = vmatprep.subr.bf16.mxu0 0
      %752 = vmatpush1.bf16.msra.mxu0 0
      %753 = vmatprep.subr.bf16.mxu0 0
      %754 = vmatpush1.bf16.msra.mxu0 0
      %755 = vmatprep.subr.bf16.mxu0 0
      %756 = vmatpush1.bf16.msra.mxu0 0
      %757 = vmatprep.mubr.bf16.mxu0 0
      %758 = vmatmul.mubr.bf16.gmra.mrb[0].mxu0 %v656
      %v759 = vpop.f32.mrb[0].mxu0
      %v760 = vadd.f32 0.0, %v759
      %v761 = vpop.f32.mrb[0].mxu0
      %v762 = vpop.f32.mrb[0].mxu0
      %v763 = vadd.f32 0.0, %v762
      %v764 = vpop.f32.mrb[0].mxu0
      %765 = vmatprep.mubr.bf16.mxu0 0
      %766 = vmatmul.mubr.bf16.gmra.mrb[0].mxu0 %v657
      %v767 = vpop.f32.mrb[0].mxu0
      %v768 = vadd.f32 0.0, %v767
      %v769 = vpop.f32.mrb[0].mxu0
      %v770 = vpop.f32.mrb[0].mxu0
      %v771 = vadd.f32 0.0, %v770
      %v772 = vpop.f32.mrb[0].mxu0
      %773 = vmatprep.mubr.bf16.mxu0 0
      %774 = vmatmul.mubr.bf16.gmra.mrb[0].mxu0 %v658
      %v775 = vpop.f32.mrb[0].mxu0
      %v776 = vadd.f32 0.0, %v775
      %v777 = vpop.f32.mrb[0].mxu0
      %v778 = vpop.f32.mrb[0].mxu0
      %v779 = vadd.f32 0.0, %v778
      %v780 = vpop.f32.mrb[0].mxu0
      %781 = vmatprep.mubr.bf16.mxu0 0
      %782 = vmatmul.mubr.bf16.gmra.mrb[0].mxu0 %v659
      %v783 = vpop.f32.mrb[0].mxu0
      %v784 = vadd.f32 0.0, %v783
      %v785 = vpop.f32.mrb[0].mxu0
      %v786 = vpop.f32.mrb[0].mxu0
      %v787 = vadd.f32 0.0, %v786
      %v788 = vpop.f32.mrb[0].mxu0
      %789 = vdwg.mxu0
      %v790 = vadd.f32 %v570, %v760
      %v791 = vadd.f32 %v573, %v763
      %v792 = vadd.f32 %v578, %v768
      %v793 = vadd.f32 %v581, %v771
      %v794 = vadd.f32 %v586, %v776
      %v795 = vadd.f32 %v589, %v779
      %v796 = vadd.f32 %v594, %v784
      %v797 = vadd.f32 %v597, %v787
      %v798 = vld [vmem:[%s246 + $0xf] sm:$0xff]
      %v799 = vld [vmem:[%s246 + $0x17] sm:$0xff]
      %v800 = vld [vmem:[%s246 + $0x1f] sm:$0xff]
      %v801 = vld [vmem:[%s246 + $0x27] sm:$0xff]
      %v802 = vld [vmem:[%s246 + $0x2f] sm:$0xff]
      %v803 = vld [vmem:[%s246 + $0x37] sm:$0xff]
      %v804 = vld [vmem:[%s246 + $0x3f] sm:$0xff]
      %v805 = vld [vmem:[%s246 + $0x47] sm:$0xff]
      %v806 = vmul.f32 %v798, %v280
      %v807 = vmul.f32 %v799, %v285
      %v808 = vmul.f32 %v800, %v290
      %v809 = vmul.f32 %v801, %v295
      %v810 = vmul.f32 %v802, %v300
      %v811 = vmul.f32 %v803, %v305
      %v812 = vmul.f32 %v804, %v310
      %v813 = vmul.f32 %v805, %v315
      %v814 = vpack.c.bf16 %v807, %v806
      %v815 = vpack.c.bf16 %v809, %v808
      %v816 = vpack.c.bf16 %v811, %v810
      %v817 = vpack.c.bf16 %v813, %v812
      %s818 = scalar_lea.vmem %s1, 192
      %v819 = vld [vmem:[%s818] sm:$0xf]
      %v820 = vld [vmem:[%s818 + $0x4] sm:$0xf]
      %v821 = vld [vmem:[%s818 + $0x8] sm:$0xf]
      %v822 = vld [vmem:[%s818 + $0xc] sm:$0xf]
      %v823 = vld [vmem:[%s818 + $0x10] sm:$0xf]
      %v824 = vld [vmem:[%s818 + $0x14] sm:$0xf]
      %v825 = vld [vmem:[%s818 + $0x18] sm:$0xf]
      %v826 = vld [vmem:[%s818 + $0x1c] sm:$0xf]
      %v827 = vld [vmem:[%s818 + $0x20] sm:$0xf]
      %v828 = vld [vmem:[%s818 + $0x24] sm:$0xf]
      %v829 = vld [vmem:[%s818 + $0x28] sm:$0xf]
      %v830 = vld [vmem:[%s818 + $0x2c] sm:$0xf]
      %v831 = vld [vmem:[%s818 + $0x30] sm:$0xf]
      %v832 = vld [vmem:[%s818 + $0x34] sm:$0xf]
      %v833 = vld [vmem:[%s818 + $0x38] sm:$0xf]
      %v834 = vld [vmem:[%s818 + $0x3c] sm:$0xf]
      %v851 = vunpack.c.l.b16 %v819
      %v852 = vunpack.c.l.b16 %v820
      %v853 = vunpack.c.l.b16 %v821
      %v854 = vunpack.c.l.b16 %v822
      %v855 = vunpack.c.l.b16 %v823
      %v856 = vunpack.c.l.b16 %v824
      %v857 = vunpack.c.l.b16 %v825
      %v858 = vunpack.c.l.b16 %v826
      %v859 = vunpack.c.l.b16 %v827
      %v860 = vunpack.c.l.b16 %v828
      %v861 = vunpack.c.l.b16 %v829
      %v862 = vunpack.c.l.b16 %v830
      %v863 = vunpack.c.l.b16 %v831
      %v864 = vunpack.c.l.b16 %v832
      %v865 = vunpack.c.l.b16 %v833
      %v866 = vunpack.c.l.b16 %v834
      %v867 = vpack.c.b16 %v852, %v851
      %v868 = vpack.c.b16 %v854, %v853
      %v869 = vpack.c.b16 %v856, %v855
      %v870 = vpack.c.b16 %v858, %v857
      %v871 = vpack.c.b16 %v860, %v859
      %v872 = vpack.c.b16 %v862, %v861
      %v873 = vpack.c.b16 %v864, %v863
      %v874 = vpack.c.b16 %v866, %v865
      %883 = vmatprep.subr.bf16.mxu0 0
      %884 = vmatpush1.bf16.msra.mxu0 %v867
      %885 = vmatprep.subr.bf16.mxu0 0
      %886 = vmatpush1.bf16.msra.mxu0 %v868
      %887 = vmatprep.subr.bf16.mxu0 0
      %888 = vmatpush1.bf16.msra.mxu0 %v869
      %889 = vmatprep.subr.bf16.mxu0 0
      %890 = vmatpush1.bf16.msra.mxu0 %v870
      %891 = vmatprep.subr.bf16.mxu0 0
      %892 = vmatpush1.bf16.msra.mxu0 %v871
      %893 = vmatprep.subr.bf16.mxu0 0
      %894 = vmatpush1.bf16.msra.mxu0 %v872
      %895 = vmatprep.subr.bf16.mxu0 0
      %896 = vmatpush1.bf16.msra.mxu0 %v873
      %897 = vmatprep.subr.bf16.mxu0 0
      %898 = vmatpush1.bf16.msra.mxu0 %v874
      %899 = vmatprep.subr.bf16.mxu0 0
      %900 = vmatpush1.bf16.msra.mxu0 0
      %901 = vmatprep.subr.bf16.mxu0 0
      %902 = vmatpush1.bf16.msra.mxu0 0
      %903 = vmatprep.subr.bf16.mxu0 0
      %904 = vmatpush1.bf16.msra.mxu0 0
      %905 = vmatprep.subr.bf16.mxu0 0
      %906 = vmatpush1.bf16.msra.mxu0 0
      %907 = vmatprep.subr.bf16.mxu0 0
      %908 = vmatpush1.bf16.msra.mxu0 0
      %909 = vmatprep.subr.bf16.mxu0 0
      %910 = vmatpush1.bf16.msra.mxu0 0
      %911 = vmatprep.subr.bf16.mxu0 0
      %912 = vmatpush1.bf16.msra.mxu0 0
      %913 = vmatprep.subr.bf16.mxu0 0
      %914 = vmatpush1.bf16.msra.mxu0 0
      %915 = vmatprep.mubr.bf16.mxu0 0
      %916 = vmatmul.mubr.bf16.gmra.mrb[0].mxu0 %v814
      %v917 = vpop.f32.mrb[0].mxu0
      %v918 = vadd.f32 0.0, %v917
      %v919 = vpop.f32.mrb[0].mxu0
      %v920 = vpop.f32.mrb[0].mxu0
      %v921 = vadd.f32 0.0, %v920
      %v922 = vpop.f32.mrb[0].mxu0
      %923 = vmatprep.mubr.bf16.mxu0 0
      %924 = vmatmul.mubr.bf16.gmra.mrb[0].mxu0 %v815
      %v925 = vpop.f32.mrb[0].mxu0
      %v926 = vadd.f32 0.0, %v925
      %v927 = vpop.f32.mrb[0].mxu0
      %v928 = vpop.f32.mrb[0].mxu0
      %v929 = vadd.f32 0.0, %v928
      %v930 = vpop.f32.mrb[0].mxu0
      %931 = vmatprep.mubr.bf16.mxu0 0
      %932 = vmatmul.mubr.bf16.gmra.mrb[0].mxu0 %v816
      %v933 = vpop.f32.mrb[0].mxu0
      %v934 = vadd.f32 0.0, %v933
      %v935 = vpop.f32.mrb[0].mxu0
      %v936 = vpop.f32.mrb[0].mxu0
      %v937 = vadd.f32 0.0, %v936
      %v938 = vpop.f32.mrb[0].mxu0
      %939 = vmatprep.mubr.bf16.mxu0 0
      %940 = vmatmul.mubr.bf16.gmra.mrb[0].mxu0 %v817
      %v941 = vpop.f32.mrb[0].mxu0
      %v942 = vadd.f32 0.0, %v941
      %v943 = vpop.f32.mrb[0].mxu0
      %v944 = vpop.f32.mrb[0].mxu0
      %v945 = vadd.f32 0.0, %v944
      %v946 = vpop.f32.mrb[0].mxu0
      %947 = vdwg.mxu0
      %v948 = vadd.f32 %v790, %v918
      %v949 = vadd.f32 %v791, %v921
      %v950 = vadd.f32 %v792, %v926
      %v951 = vadd.f32 %v793, %v929
      %v952 = vadd.f32 %v794, %v934
      %v953 = vadd.f32 %v795, %v937
      %v954 = vadd.f32 %v796, %v942
      %v955 = vadd.f32 %v797, %v945
      %v956 = vld [vmem:[%s246 + $0x10] sm:$0xff]
      %v957 = vld [vmem:[%s246 + $0x18] sm:$0xff]
      %v958 = vld [vmem:[%s246 + $0x20] sm:$0xff]
      %v959 = vld [vmem:[%s246 + $0x28] sm:$0xff]
      %v960 = vld [vmem:[%s246 + $0x30] sm:$0xff]
      %v961 = vld [vmem:[%s246 + $0x38] sm:$0xff]
      %v962 = vld [vmem:[%s246 + $0x40] sm:$0xff]
      %v963 = vld [vmem:[%s246 + $0x48] sm:$0xff]
      %v964 = vpack.c.bf16 %v957, %v956
      %v965 = vpack.c.bf16 %v959, %v958
      %v966 = vpack.c.bf16 %v961, %v960
      %v967 = vpack.c.bf16 %v963, %v962
      %s968 = scalar_lea.vmem %s1, 256
      %v969 = vld [vmem:[%s968] sm:$0xf]
      %v970 = vld [vmem:[%s968 + $0x4] sm:$0xf]
      %v971 = vld [vmem:[%s968 + $0x8] sm:$0xf]
      %v972 = vld [vmem:[%s968 + $0xc] sm:$0xf]
      %v973 = vld [vmem:[%s968 + $0x10] sm:$0xf]
      %v974 = vld [vmem:[%s968 + $0x14] sm:$0xf]
      %v975 = vld [vmem:[%s968 + $0x18] sm:$0xf]
      %v976 = vld [vmem:[%s968 + $0x1c] sm:$0xf]
      %v977 = vld [vmem:[%s968 + $0x20] sm:$0xf]
      %v978 = vld [vmem:[%s968 + $0x24] sm:$0xf]
      %v979 = vld [vmem:[%s968 + $0x28] sm:$0xf]
      %v980 = vld [vmem:[%s968 + $0x2c] sm:$0xf]
      %v981 = vld [vmem:[%s968 + $0x30] sm:$0xf]
      %v982 = vld [vmem:[%s968 + $0x34] sm:$0xf]
      %v983 = vld [vmem:[%s968 + $0x38] sm:$0xf]
      %v984 = vld [vmem:[%s968 + $0x3c] sm:$0xf]
      %v1001 = vunpack.c.l.b16 %v969
      %v1002 = vunpack.c.l.b16 %v970
      %v1003 = vunpack.c.l.b16 %v971
      %v1004 = vunpack.c.l.b16 %v972
      %v1005 = vunpack.c.l.b16 %v973
      %v1006 = vunpack.c.l.b16 %v974
      %v1007 = vunpack.c.l.b16 %v975
      %v1008 = vunpack.c.l.b16 %v976
      %v1009 = vunpack.c.l.b16 %v977
      %v1010 = vunpack.c.l.b16 %v978
      %v1011 = vunpack.c.l.b16 %v979
      %v1012 = vunpack.c.l.b16 %v980
      %v1013 = vunpack.c.l.b16 %v981
      %v1014 = vunpack.c.l.b16 %v982
      %v1015 = vunpack.c.l.b16 %v983
      %v1016 = vunpack.c.l.b16 %v984
      %v1017 = vpack.c.b16 %v1002, %v1001
      %v1018 = vpack.c.b16 %v1004, %v1003
      %v1019 = vpack.c.b16 %v1006, %v1005
      %v1020 = vpack.c.b16 %v1008, %v1007
      %v1021 = vpack.c.b16 %v1010, %v1009
      %v1022 = vpack.c.b16 %v1012, %v1011
      %v1023 = vpack.c.b16 %v1014, %v1013
      %v1024 = vpack.c.b16 %v1016, %v1015
      %1033 = vmatprep.subr.bf16.mxu0 0
      %1034 = vmatpush1.bf16.msra.mxu0 %v1017
      %1035 = vmatprep.subr.bf16.mxu0 0
      %1036 = vmatpush1.bf16.msra.mxu0 %v1018
      %1037 = vmatprep.subr.bf16.mxu0 0
      %1038 = vmatpush1.bf16.msra.mxu0 %v1019
      %1039 = vmatprep.subr.bf16.mxu0 0
      %1040 = vmatpush1.bf16.msra.mxu0 %v1020
      %1041 = vmatprep.subr.bf16.mxu0 0
      %1042 = vmatpush1.bf16.msra.mxu0 %v1021
      %1043 = vmatprep.subr.bf16.mxu0 0
      %1044 = vmatpush1.bf16.msra.mxu0 %v1022
      %1045 = vmatprep.subr.bf16.mxu0 0
      %1046 = vmatpush1.bf16.msra.mxu0 %v1023
      %1047 = vmatprep.subr.bf16.mxu0 0
      %1048 = vmatpush1.bf16.msra.mxu0 %v1024
      %1049 = vmatprep.subr.bf16.mxu0 0
      %1050 = vmatpush1.bf16.msra.mxu0 0
      %1051 = vmatprep.subr.bf16.mxu0 0
      %1052 = vmatpush1.bf16.msra.mxu0 0
      %1053 = vmatprep.subr.bf16.mxu0 0
      %1054 = vmatpush1.bf16.msra.mxu0 0
      %1055 = vmatprep.subr.bf16.mxu0 0
      %1056 = vmatpush1.bf16.msra.mxu0 0
      %1057 = vmatprep.subr.bf16.mxu0 0
      %1058 = vmatpush1.bf16.msra.mxu0 0
      %1059 = vmatprep.subr.bf16.mxu0 0
      %1060 = vmatpush1.bf16.msra.mxu0 0
      %1061 = vmatprep.subr.bf16.mxu0 0
      %1062 = vmatpush1.bf16.msra.mxu0 0
      %1063 = vmatprep.subr.bf16.mxu0 0
      %1064 = vmatpush1.bf16.msra.mxu0 0
      %1065 = vmatprep.mubr.bf16.mxu0 0
      %1066 = vmatmul.mubr.bf16.gmra.mrb[0].mxu0 %v964
      %v1067 = vpop.f32.mrb[0].mxu0
      %v1068 = vadd.f32 0.0, %v1067
      %v1069 = vpop.f32.mrb[0].mxu0
      %v1070 = vpop.f32.mrb[0].mxu0
      %v1071 = vadd.f32 0.0, %v1070
      %v1072 = vpop.f32.mrb[0].mxu0
      %1073 = vmatprep.mubr.bf16.mxu0 0
      %1074 = vmatmul.mubr.bf16.gmra.mrb[0].mxu0 %v965
      %v1075 = vpop.f32.mrb[0].mxu0
      %v1076 = vadd.f32 0.0, %v1075
      %v1077 = vpop.f32.mrb[0].mxu0
      %v1078 = vpop.f32.mrb[0].mxu0
      %v1079 = vadd.f32 0.0, %v1078
      %v1080 = vpop.f32.mrb[0].mxu0
      %1081 = vmatprep.mubr.bf16.mxu0 0
      %1082 = vmatmul.mubr.bf16.gmra.mrb[0].mxu0 %v966
      %v1083 = vpop.f32.mrb[0].mxu0
      %v1084 = vadd.f32 0.0, %v1083
      %v1085 = vpop.f32.mrb[0].mxu0
      %v1086 = vpop.f32.mrb[0].mxu0
      %v1087 = vadd.f32 0.0, %v1086
      %v1088 = vpop.f32.mrb[0].mxu0
      %1089 = vmatprep.mubr.bf16.mxu0 0
      %1090 = vmatmul.mubr.bf16.gmra.mrb[0].mxu0 %v967
      %v1091 = vpop.f32.mrb[0].mxu0
      %v1092 = vadd.f32 0.0, %v1091
      %v1093 = vpop.f32.mrb[0].mxu0
      %v1094 = vpop.f32.mrb[0].mxu0
      %v1095 = vadd.f32 0.0, %v1094
      %v1096 = vpop.f32.mrb[0].mxu0
      %1097 = vdwg.mxu0
      %v1098 = vadd.f32 %v948, %v1068
      %v1099 = vadd.f32 %v949, %v1071
      %v1100 = vadd.f32 %v950, %v1076
      %v1101 = vadd.f32 %v951, %v1079
      %v1102 = vadd.f32 %v952, %v1084
      %v1103 = vadd.f32 %v953, %v1087
      %v1104 = vadd.f32 %v954, %v1092
      %v1105 = vadd.f32 %v955, %v1095
      %v1106 = vld [vmem:[%s246 + $0x11] sm:$0xff]
      %v1107 = vld [vmem:[%s246 + $0x19] sm:$0xff]
      %v1108 = vld [vmem:[%s246 + $0x21] sm:$0xff]
      %v1109 = vld [vmem:[%s246 + $0x29] sm:$0xff]
      %v1110 = vld [vmem:[%s246 + $0x31] sm:$0xff]
      %v1111 = vld [vmem:[%s246 + $0x39] sm:$0xff]
      %v1112 = vld [vmem:[%s246 + $0x41] sm:$0xff]
      %v1113 = vld [vmem:[%s246 + $0x49] sm:$0xff]
      %v1114 = vmul.f32 %v1106, %v611
      %v1115 = vmul.f32 %v1107, %v616
      %v1116 = vmul.f32 %v1108, %v621
      %v1117 = vmul.f32 %v1109, %v626
      %v1118 = vmul.f32 %v1110, %v631
      %v1119 = vmul.f32 %v1111, %v636
      %v1120 = vmul.f32 %v1112, %v641
      %v1121 = vmul.f32 %v1113, %v646
      %v1122 = vpack.c.bf16 %v1115, %v1114
      %v1123 = vpack.c.bf16 %v1117, %v1116
      %v1124 = vpack.c.bf16 %v1119, %v1118
      %v1125 = vpack.c.bf16 %v1121, %v1120
      %s1126 = scalar_lea.vmem %s1, 320
      %v1127 = vld [vmem:[%s1126] sm:$0xf]
      %v1128 = vld [vmem:[%s1126 + $0x4] sm:$0xf]
      %v1129 = vld [vmem:[%s1126 + $0x8] sm:$0xf]
      %v1130 = vld [vmem:[%s1126 + $0xc] sm:$0xf]
      %v1131 = vld [vmem:[%s1126 + $0x10] sm:$0xf]
      %v1132 = vld [vmem:[%s1126 + $0x14] sm:$0xf]
      %v1133 = vld [vmem:[%s1126 + $0x18] sm:$0xf]
      %v1134 = vld [vmem:[%s1126 + $0x1c] sm:$0xf]
      %v1135 = vld [vmem:[%s1126 + $0x20] sm:$0xf]
      %v1136 = vld [vmem:[%s1126 + $0x24] sm:$0xf]
      %v1137 = vld [vmem:[%s1126 + $0x28] sm:$0xf]
      %v1138 = vld [vmem:[%s1126 + $0x2c] sm:$0xf]
      %v1139 = vld [vmem:[%s1126 + $0x30] sm:$0xf]
      %v1140 = vld [vmem:[%s1126 + $0x34] sm:$0xf]
      %v1141 = vld [vmem:[%s1126 + $0x38] sm:$0xf]
      %v1142 = vld [vmem:[%s1126 + $0x3c] sm:$0xf]
      %v1159 = vunpack.c.l.b16 %v1127
      %v1160 = vunpack.c.l.b16 %v1128
      %v1161 = vunpack.c.l.b16 %v1129
      %v1162 = vunpack.c.l.b16 %v1130
      %v1163 = vunpack.c.l.b16 %v1131
      %v1164 = vunpack.c.l.b16 %v1132
      %v1165 = vunpack.c.l.b16 %v1133
      %v1166 = vunpack.c.l.b16 %v1134
      %v1167 = vunpack.c.l.b16 %v1135
      %v1168 = vunpack.c.l.b16 %v1136
      %v1169 = vunpack.c.l.b16 %v1137
      %v1170 = vunpack.c.l.b16 %v1138
      %v1171 = vunpack.c.l.b16 %v1139
      %v1172 = vunpack.c.l.b16 %v1140
      %v1173 = vunpack.c.l.b16 %v1141
      %v1174 = vunpack.c.l.b16 %v1142
      %v1175 = vpack.c.b16 %v1160, %v1159
      %v1176 = vpack.c.b16 %v1162, %v1161
      %v1177 = vpack.c.b16 %v1164, %v1163
      %v1178 = vpack.c.b16 %v1166, %v1165
      %v1179 = vpack.c.b16 %v1168, %v1167
      %v1180 = vpack.c.b16 %v1170, %v1169
      %v1181 = vpack.c.b16 %v1172, %v1171
      %v1182 = vpack.c.b16 %v1174, %v1173
      %1191 = vmatprep.subr.bf16.mxu0 0
      %1192 = vmatpush1.bf16.msra.mxu0 %v1175
      %1193 = vmatprep.subr.bf16.mxu0 0
      %1194 = vmatpush1.bf16.msra.mxu0 %v1176
      %1195 = vmatprep.subr.bf16.mxu0 0
      %1196 = vmatpush1.bf16.msra.mxu0 %v1177
      %1197 = vmatprep.subr.bf16.mxu0 0
      %1198 = vmatpush1.bf16.msra.mxu0 %v1178
      %1199 = vmatprep.subr.bf16.mxu0 0
      %1200 = vmatpush1.bf16.msra.mxu0 %v1179
      %1201 = vmatprep.subr.bf16.mxu0 0
      %1202 = vmatpush1.bf16.msra.mxu0 %v1180
      %1203 = vmatprep.subr.bf16.mxu0 0
      %1204 = vmatpush1.bf16.msra.mxu0 %v1181
      %1205 = vmatprep.subr.bf16.mxu0 0
      %1206 = vmatpush1.bf16.msra.mxu0 %v1182
      %1207 = vmatprep.subr.bf16.mxu0 0
      %1208 = vmatpush1.bf16.msra.mxu0 0
      %1209 = vmatprep.subr.bf16.mxu0 0
      %1210 = vmatpush1.bf16.msra.mxu0 0
      %1211 = vmatprep.subr.bf16.mxu0 0
      %1212 = vmatpush1.bf16.msra.mxu0 0
      %1213 = vmatprep.subr.bf16.mxu0 0
      %1214 = vmatpush1.bf16.msra.mxu0 0
      %1215 = vmatprep.subr.bf16.mxu0 0
      %1216 = vmatpush1.bf16.msra.mxu0 0
      %1217 = vmatprep.subr.bf16.mxu0 0
      %1218 = vmatpush1.bf16.msra.mxu0 0
      %1219 = vmatprep.subr.bf16.mxu0 0
      %1220 = vmatpush1.bf16.msra.mxu0 0
      %1221 = vmatprep.subr.bf16.mxu0 0
      %1222 = vmatpush1.bf16.msra.mxu0 0
      %1223 = vmatprep.mubr.bf16.mxu0 0
      %1224 = vmatmul.mubr.bf16.gmra.mrb[0].mxu0 %v1122
      %v1225 = vpop.f32.mrb[0].mxu0
      %v1226 = vadd.f32 0.0, %v1225
      %v1227 = vpop.f32.mrb[0].mxu0
      %v1228 = vpop.f32.mrb[0].mxu0
      %v1229 = vadd.f32 0.0, %v1228
      %v1230 = vpop.f32.mrb[0].mxu0
      %1231 = vmatprep.mubr.bf16.mxu0 0
      %1232 = vmatmul.mubr.bf16.gmra.mrb[0].mxu0 %v1123
      %v1233 = vpop.f32.mrb[0].mxu0
      %v1234 = vadd.f32 0.0, %v1233
      %v1235 = vpop.f32.mrb[0].mxu0
      %v1236 = vpop.f32.mrb[0].mxu0
      %v1237 = vadd.f32 0.0, %v1236
      %v1238 = vpop.f32.mrb[0].mxu0
      %1239 = vmatprep.mubr.bf16.mxu0 0
      %1240 = vmatmul.mubr.bf16.gmra.mrb[0].mxu0 %v1124
      %v1241 = vpop.f32.mrb[0].mxu0
      %v1242 = vadd.f32 0.0, %v1241
      %v1243 = vpop.f32.mrb[0].mxu0
      %v1244 = vpop.f32.mrb[0].mxu0
      %v1245 = vadd.f32 0.0, %v1244
      %v1246 = vpop.f32.mrb[0].mxu0
      %1247 = vmatprep.mubr.bf16.mxu0 0
      %1248 = vmatmul.mubr.bf16.gmra.mrb[0].mxu0 %v1125
      %v1249 = vpop.f32.mrb[0].mxu0
      %v1250 = vadd.f32 0.0, %v1249
      %v1251 = vpop.f32.mrb[0].mxu0
      %v1252 = vpop.f32.mrb[0].mxu0
      %v1253 = vadd.f32 0.0, %v1252
      %v1254 = vpop.f32.mrb[0].mxu0
      %1255 = vdwg.mxu0
      %v1256 = vadd.f32 %v1098, %v1226
      %v1257 = vadd.f32 %v1099, %v1229
      %v1258 = vadd.f32 %v1100, %v1234
      %v1259 = vadd.f32 %v1101, %v1237
      %v1260 = vadd.f32 %v1102, %v1242
      %v1261 = vadd.f32 %v1103, %v1245
      %v1262 = vadd.f32 %v1104, %v1250
      %v1263 = vadd.f32 %v1105, %v1253
      %v1264 = vld [vmem:[%s246 + $0x17] sm:$0xff]
      %v1265 = vld [vmem:[%s246 + $0x1f] sm:$0xff]
      %v1266 = vld [vmem:[%s246 + $0x27] sm:$0xff]
      %v1267 = vld [vmem:[%s246 + $0x2f] sm:$0xff]
      %v1268 = vld [vmem:[%s246 + $0x37] sm:$0xff]
      %v1269 = vld [vmem:[%s246 + $0x3f] sm:$0xff]
      %v1270 = vld [vmem:[%s246 + $0x47] sm:$0xff]
      %v1271 = vld [vmem:[%s246 + $0x4f] sm:$0xff]
      %v1272 = vmul.f32 %v1264, %v280
      %v1273 = vmul.f32 %v1265, %v285
      %v1274 = vmul.f32 %v1266, %v290
      %v1275 = vmul.f32 %v1267, %v295
      %v1276 = vmul.f32 %v1268, %v300
      %v1277 = vmul.f32 %v1269, %v305
      %v1278 = vmul.f32 %v1270, %v310
      %v1279 = vmul.f32 %v1271, %v315
      %v1280 = vpack.c.bf16 %v1273, %v1272
      %v1281 = vpack.c.bf16 %v1275, %v1274
      %v1282 = vpack.c.bf16 %v1277, %v1276
      %v1283 = vpack.c.bf16 %v1279, %v1278
      %s1284 = scalar_lea.vmem %s1, 384
      %v1285 = vld [vmem:[%s1284] sm:$0xf]
      %v1286 = vld [vmem:[%s1284 + $0x4] sm:$0xf]
      %v1287 = vld [vmem:[%s1284 + $0x8] sm:$0xf]
      %v1288 = vld [vmem:[%s1284 + $0xc] sm:$0xf]
      %v1289 = vld [vmem:[%s1284 + $0x10] sm:$0xf]
      %v1290 = vld [vmem:[%s1284 + $0x14] sm:$0xf]
      %v1291 = vld [vmem:[%s1284 + $0x18] sm:$0xf]
      %v1292 = vld [vmem:[%s1284 + $0x1c] sm:$0xf]
      %v1293 = vld [vmem:[%s1284 + $0x20] sm:$0xf]
      %v1294 = vld [vmem:[%s1284 + $0x24] sm:$0xf]
      %v1295 = vld [vmem:[%s1284 + $0x28] sm:$0xf]
      %v1296 = vld [vmem:[%s1284 + $0x2c] sm:$0xf]
      %v1297 = vld [vmem:[%s1284 + $0x30] sm:$0xf]
      %v1298 = vld [vmem:[%s1284 + $0x34] sm:$0xf]
      %v1299 = vld [vmem:[%s1284 + $0x38] sm:$0xf]
      %v1300 = vld [vmem:[%s1284 + $0x3c] sm:$0xf]
      %v1317 = vunpack.c.l.b16 %v1285
      %v1318 = vunpack.c.l.b16 %v1286
      %v1319 = vunpack.c.l.b16 %v1287
      %v1320 = vunpack.c.l.b16 %v1288
      %v1321 = vunpack.c.l.b16 %v1289
      %v1322 = vunpack.c.l.b16 %v1290
      %v1323 = vunpack.c.l.b16 %v1291
      %v1324 = vunpack.c.l.b16 %v1292
      %v1325 = vunpack.c.l.b16 %v1293
      %v1326 = vunpack.c.l.b16 %v1294
      %v1327 = vunpack.c.l.b16 %v1295
      %v1328 = vunpack.c.l.b16 %v1296
      %v1329 = vunpack.c.l.b16 %v1297
      %v1330 = vunpack.c.l.b16 %v1298
      %v1331 = vunpack.c.l.b16 %v1299
      %v1332 = vunpack.c.l.b16 %v1300
      %v1333 = vpack.c.b16 %v1318, %v1317
      %v1334 = vpack.c.b16 %v1320, %v1319
      %v1335 = vpack.c.b16 %v1322, %v1321
      %v1336 = vpack.c.b16 %v1324, %v1323
      %v1337 = vpack.c.b16 %v1326, %v1325
      %v1338 = vpack.c.b16 %v1328, %v1327
      %v1339 = vpack.c.b16 %v1330, %v1329
      %v1340 = vpack.c.b16 %v1332, %v1331
      %1349 = vmatprep.subr.bf16.mxu0 0
      %1350 = vmatpush1.bf16.msra.mxu0 %v1333
      %1351 = vmatprep.subr.bf16.mxu0 0
      %1352 = vmatpush1.bf16.msra.mxu0 %v1334
      %1353 = vmatprep.subr.bf16.mxu0 0
      %1354 = vmatpush1.bf16.msra.mxu0 %v1335
      %1355 = vmatprep.subr.bf16.mxu0 0
      %1356 = vmatpush1.bf16.msra.mxu0 %v1336
      %1357 = vmatprep.subr.bf16.mxu0 0
      %1358 = vmatpush1.bf16.msra.mxu0 %v1337
      %1359 = vmatprep.subr.bf16.mxu0 0
      %1360 = vmatpush1.bf16.msra.mxu0 %v1338
      %1361 = vmatprep.subr.bf16.mxu0 0
      %1362 = vmatpush1.bf16.msra.mxu0 %v1339
      %1363 = vmatprep.subr.bf16.mxu0 0
      %1364 = vmatpush1.bf16.msra.mxu0 %v1340
      %1365 = vmatprep.subr.bf16.mxu0 0
      %1366 = vmatpush1.bf16.msra.mxu0 0
      %1367 = vmatprep.subr.bf16.mxu0 0
      %1368 = vmatpush1.bf16.msra.mxu0 0
      %1369 = vmatprep.subr.bf16.mxu0 0
      %1370 = vmatpush1.bf16.msra.mxu0 0
      %1371 = vmatprep.subr.bf16.mxu0 0
      %1372 = vmatpush1.bf16.msra.mxu0 0
      %1373 = vmatprep.subr.bf16.mxu0 0
      %1374 = vmatpush1.bf16.msra.mxu0 0
      %1375 = vmatprep.subr.bf16.mxu0 0
      %1376 = vmatpush1.bf16.msra.mxu0 0
      %1377 = vmatprep.subr.bf16.mxu0 0
      %1378 = vmatpush1.bf16.msra.mxu0 0
      %1379 = vmatprep.subr.bf16.mxu0 0
      %1380 = vmatpush1.bf16.msra.mxu0 0
      %1381 = vmatprep.mubr.bf16.mxu0 0
      %1382 = vmatmul.mubr.bf16.gmra.mrb[0].mxu0 %v1280
      %v1383 = vpop.f32.mrb[0].mxu0
      %v1384 = vadd.f32 0.0, %v1383
      %v1385 = vpop.f32.mrb[0].mxu0
      %v1386 = vpop.f32.mrb[0].mxu0
      %v1387 = vadd.f32 0.0, %v1386
      %v1388 = vpop.f32.mrb[0].mxu0
      %1389 = vmatprep.mubr.bf16.mxu0 0
      %1390 = vmatmul.mubr.bf16.gmra.mrb[0].mxu0 %v1281
      %v1391 = vpop.f32.mrb[0].mxu0
      %v1392 = vadd.f32 0.0, %v1391
      %v1393 = vpop.f32.mrb[0].mxu0
      %v1394 = vpop.f32.mrb[0].mxu0
      %v1395 = vadd.f32 0.0, %v1394
      %v1396 = vpop.f32.mrb[0].mxu0
      %1397 = vmatprep.mubr.bf16.mxu0 0
      %1398 = vmatmul.mubr.bf16.gmra.mrb[0].mxu0 %v1282
      %v1399 = vpop.f32.mrb[0].mxu0
      %v1400 = vadd.f32 0.0, %v1399
      %v1401 = vpop.f32.mrb[0].mxu0
      %v1402 = vpop.f32.mrb[0].mxu0
      %v1403 = vadd.f32 0.0, %v1402
      %v1404 = vpop.f32.mrb[0].mxu0
      %1405 = vmatprep.mubr.bf16.mxu0 0
      %1406 = vmatmul.mubr.bf16.gmra.mrb[0].mxu0 %v1283
      %v1407 = vpop.f32.mrb[0].mxu0
      %v1408 = vadd.f32 0.0, %v1407
      %v1409 = vpop.f32.mrb[0].mxu0
      %v1410 = vpop.f32.mrb[0].mxu0
      %v1411 = vadd.f32 0.0, %v1410
      %v1412 = vpop.f32.mrb[0].mxu0
      %1413 = vdwg.mxu0
      %v1414 = vadd.f32 %v1256, %v1384
      %v1415 = vadd.f32 %v1257, %v1387
      %v1416 = vadd.f32 %v1258, %v1392
      %v1417 = vadd.f32 %v1259, %v1395
      %v1418 = vadd.f32 %v1260, %v1400
      %v1419 = vadd.f32 %v1261, %v1403
      %v1420 = vadd.f32 %v1262, %v1408
      %v1421 = vadd.f32 %v1263, %v1411
      %v1422 = vld [vmem:[%s246 + $0x18] sm:$0xff]
      %v1423 = vld [vmem:[%s246 + $0x20] sm:$0xff]
      %v1424 = vld [vmem:[%s246 + $0x28] sm:$0xff]
      %v1425 = vld [vmem:[%s246 + $0x30] sm:$0xff]
      %v1426 = vld [vmem:[%s246 + $0x38] sm:$0xff]
      %v1427 = vld [vmem:[%s246 + $0x40] sm:$0xff]
      %v1428 = vld [vmem:[%s246 + $0x48] sm:$0xff]
      %v1429 = vld [vmem:[%s246 + $0x50] sm:$0xff]
      %v1430 = vpack.c.bf16 %v1423, %v1422
      %v1431 = vpack.c.bf16 %v1425, %v1424
      %v1432 = vpack.c.bf16 %v1427, %v1426
      %v1433 = vpack.c.bf16 %v1429, %v1428
      %s1434 = scalar_lea.vmem %s1, 448
      %v1435 = vld [vmem:[%s1434] sm:$0xf]
      %v1436 = vld [vmem:[%s1434 + $0x4] sm:$0xf]
      %v1437 = vld [vmem:[%s1434 + $0x8] sm:$0xf]
      %v1438 = vld [vmem:[%s1434 + $0xc] sm:$0xf]
      %v1439 = vld [vmem:[%s1434 + $0x10] sm:$0xf]
      %v1440 = vld [vmem:[%s1434 + $0x14] sm:$0xf]
      %v1441 = vld [vmem:[%s1434 + $0x18] sm:$0xf]
      %v1442 = vld [vmem:[%s1434 + $0x1c] sm:$0xf]
      %v1443 = vld [vmem:[%s1434 + $0x20] sm:$0xf]
      %v1444 = vld [vmem:[%s1434 + $0x24] sm:$0xf]
      %v1445 = vld [vmem:[%s1434 + $0x28] sm:$0xf]
      %v1446 = vld [vmem:[%s1434 + $0x2c] sm:$0xf]
      %v1447 = vld [vmem:[%s1434 + $0x30] sm:$0xf]
      %v1448 = vld [vmem:[%s1434 + $0x34] sm:$0xf]
      %v1449 = vld [vmem:[%s1434 + $0x38] sm:$0xf]
      %v1450 = vld [vmem:[%s1434 + $0x3c] sm:$0xf]
      %v1467 = vunpack.c.l.b16 %v1435
      %v1468 = vunpack.c.l.b16 %v1436
      %v1469 = vunpack.c.l.b16 %v1437
      %v1470 = vunpack.c.l.b16 %v1438
      %v1471 = vunpack.c.l.b16 %v1439
      %v1472 = vunpack.c.l.b16 %v1440
      %v1473 = vunpack.c.l.b16 %v1441
      %v1474 = vunpack.c.l.b16 %v1442
      %v1475 = vunpack.c.l.b16 %v1443
      %v1476 = vunpack.c.l.b16 %v1444
      %v1477 = vunpack.c.l.b16 %v1445
      %v1478 = vunpack.c.l.b16 %v1446
      %v1479 = vunpack.c.l.b16 %v1447
      %v1480 = vunpack.c.l.b16 %v1448
      %v1481 = vunpack.c.l.b16 %v1449
      %v1482 = vunpack.c.l.b16 %v1450
      %v1483 = vpack.c.b16 %v1468, %v1467
      %v1484 = vpack.c.b16 %v1470, %v1469
      %v1485 = vpack.c.b16 %v1472, %v1471
      %v1486 = vpack.c.b16 %v1474, %v1473
      %v1487 = vpack.c.b16 %v1476, %v1475
      %v1488 = vpack.c.b16 %v1478, %v1477
      %v1489 = vpack.c.b16 %v1480, %v1479
      %v1490 = vpack.c.b16 %v1482, %v1481
      %1499 = vmatprep.subr.bf16.mxu0 0
      %1500 = vmatpush1.bf16.msra.mxu0 %v1483
      %1501 = vmatprep.subr.bf16.mxu0 0
      %1502 = vmatpush1.bf16.msra.mxu0 %v1484
      %1503 = vmatprep.subr.bf16.mxu0 0
      %1504 = vmatpush1.bf16.msra.mxu0 %v1485
      %1505 = vmatprep.subr.bf16.mxu0 0
      %1506 = vmatpush1.bf16.msra.mxu0 %v1486
      %1507 = vmatprep.subr.bf16.mxu0 0
      %1508 = vmatpush1.bf16.msra.mxu0 %v1487
      %1509 = vmatprep.subr.bf16.mxu0 0
      %1510 = vmatpush1.bf16.msra.mxu0 %v1488
      %1511 = vmatprep.subr.bf16.mxu0 0
      %1512 = vmatpush1.bf16.msra.mxu0 %v1489
      %1513 = vmatprep.subr.bf16.mxu0 0
      %1514 = vmatpush1.bf16.msra.mxu0 %v1490
      %1515 = vmatprep.subr.bf16.mxu0 0
      %1516 = vmatpush1.bf16.msra.mxu0 0
      %1517 = vmatprep.subr.bf16.mxu0 0
      %1518 = vmatpush1.bf16.msra.mxu0 0
      %1519 = vmatprep.subr.bf16.mxu0 0
      %1520 = vmatpush1.bf16.msra.mxu0 0
      %1521 = vmatprep.subr.bf16.mxu0 0
      %1522 = vmatpush1.bf16.msra.mxu0 0
      %1523 = vmatprep.subr.bf16.mxu0 0
      %1524 = vmatpush1.bf16.msra.mxu0 0
      %1525 = vmatprep.subr.bf16.mxu0 0
      %1526 = vmatpush1.bf16.msra.mxu0 0
      %1527 = vmatprep.subr.bf16.mxu0 0
      %1528 = vmatpush1.bf16.msra.mxu0 0
      %1529 = vmatprep.subr.bf16.mxu0 0
      %1530 = vmatpush1.bf16.msra.mxu0 0
      %1531 = vmatprep.mubr.bf16.mxu0 0
      %1532 = vmatmul.mubr.bf16.gmra.mrb[0].mxu0 %v1430
      %v1533 = vpop.f32.mrb[0].mxu0
      %v1534 = vadd.f32 0.0, %v1533
      %v1535 = vpop.f32.mrb[0].mxu0
      %v1536 = vpop.f32.mrb[0].mxu0
      %v1537 = vadd.f32 0.0, %v1536
      %v1538 = vpop.f32.mrb[0].mxu0
      %1539 = vmatprep.mubr.bf16.mxu0 0
      %1540 = vmatmul.mubr.bf16.gmra.mrb[0].mxu0 %v1431
      %v1541 = vpop.f32.mrb[0].mxu0
      %v1542 = vadd.f32 0.0, %v1541
      %v1543 = vpop.f32.mrb[0].mxu0
      %v1544 = vpop.f32.mrb[0].mxu0
      %v1545 = vadd.f32 0.0, %v1544
      %v1546 = vpop.f32.mrb[0].mxu0
      %1547 = vmatprep.mubr.bf16.mxu0 0
      %1548 = vmatmul.mubr.bf16.gmra.mrb[0].mxu0 %v1432
      %v1549 = vpop.f32.mrb[0].mxu0
      %v1550 = vadd.f32 0.0, %v1549
      %v1551 = vpop.f32.mrb[0].mxu0
      %v1552 = vpop.f32.mrb[0].mxu0
      %v1553 = vadd.f32 0.0, %v1552
      %v1554 = vpop.f32.mrb[0].mxu0
      %1555 = vmatprep.mubr.bf16.mxu0 0
      %1556 = vmatmul.mubr.bf16.gmra.mrb[0].mxu0 %v1433
      %v1557 = vpop.f32.mrb[0].mxu0
      %v1558 = vadd.f32 0.0, %v1557
      %v1559 = vpop.f32.mrb[0].mxu0
      %v1560 = vpop.f32.mrb[0].mxu0
      %v1561 = vadd.f32 0.0, %v1560
      %v1562 = vpop.f32.mrb[0].mxu0
      %1563 = vdwg.mxu0
      %v1564 = vadd.f32 %v1414, %v1534
      %v1565 = vadd.f32 %v1415, %v1537
      %v1566 = vadd.f32 %v1416, %v1542
      %v1567 = vadd.f32 %v1417, %v1545
      %v1568 = vadd.f32 %v1418, %v1550
      %v1569 = vadd.f32 %v1419, %v1553
      %v1570 = vadd.f32 %v1420, %v1558
      %v1571 = vadd.f32 %v1421, %v1561
      %v1572 = vld [vmem:[%s246 + $0x19] sm:$0xff]
      %v1573 = vld [vmem:[%s246 + $0x21] sm:$0xff]
      %v1574 = vld [vmem:[%s246 + $0x29] sm:$0xff]
      %v1575 = vld [vmem:[%s246 + $0x31] sm:$0xff]
      %v1576 = vld [vmem:[%s246 + $0x39] sm:$0xff]
      %v1577 = vld [vmem:[%s246 + $0x41] sm:$0xff]
      %v1578 = vld [vmem:[%s246 + $0x49] sm:$0xff]
      %v1579 = vld [vmem:[%s246 + $0x51] sm:$0xff]
      %v1580 = vmul.f32 %v1572, %v611
      %v1581 = vmul.f32 %v1573, %v616
      %v1582 = vmul.f32 %v1574, %v621
      %v1583 = vmul.f32 %v1575, %v626
      %v1584 = vmul.f32 %v1576, %v631
      %v1585 = vmul.f32 %v1577, %v636
      %v1586 = vmul.f32 %v1578, %v641
      %v1587 = vmul.f32 %v1579, %v646
      %v1588 = vpack.c.bf16 %v1581, %v1580
      %v1589 = vpack.c.bf16 %v1583, %v1582
      %v1590 = vpack.c.bf16 %v1585, %v1584
      %v1591 = vpack.c.bf16 %v1587, %v1586
      %s1592 = scalar_lea.vmem %s1, 512
      %v1593 = vld [vmem:[%s1592] sm:$0xf]
      %v1594 = vld [vmem:[%s1592 + $0x4] sm:$0xf]
      %v1595 = vld [vmem:[%s1592 + $0x8] sm:$0xf]
      %v1596 = vld [vmem:[%s1592 + $0xc] sm:$0xf]
      %v1597 = vld [vmem:[%s1592 + $0x10] sm:$0xf]
      %v1598 = vld [vmem:[%s1592 + $0x14] sm:$0xf]
      %v1599 = vld [vmem:[%s1592 + $0x18] sm:$0xf]
      %v1600 = vld [vmem:[%s1592 + $0x1c] sm:$0xf]
      %v1601 = vld [vmem:[%s1592 + $0x20] sm:$0xf]
      %v1602 = vld [vmem:[%s1592 + $0x24] sm:$0xf]
      %v1603 = vld [vmem:[%s1592 + $0x28] sm:$0xf]
      %v1604 = vld [vmem:[%s1592 + $0x2c] sm:$0xf]
      %v1605 = vld [vmem:[%s1592 + $0x30] sm:$0xf]
      %v1606 = vld [vmem:[%s1592 + $0x34] sm:$0xf]
      %v1607 = vld [vmem:[%s1592 + $0x38] sm:$0xf]
      %v1608 = vld [vmem:[%s1592 + $0x3c] sm:$0xf]
      %v1625 = vunpack.c.l.b16 %v1593
      %v1626 = vunpack.c.l.b16 %v1594
      %v1627 = vunpack.c.l.b16 %v1595
      %v1628 = vunpack.c.l.b16 %v1596
      %v1629 = vunpack.c.l.b16 %v1597
      %v1630 = vunpack.c.l.b16 %v1598
      %v1631 = vunpack.c.l.b16 %v1599
      %v1632 = vunpack.c.l.b16 %v1600
      %v1633 = vunpack.c.l.b16 %v1601
      %v1634 = vunpack.c.l.b16 %v1602
      %v1635 = vunpack.c.l.b16 %v1603
      %v1636 = vunpack.c.l.b16 %v1604
      %v1637 = vunpack.c.l.b16 %v1605
      %v1638 = vunpack.c.l.b16 %v1606
      %v1639 = vunpack.c.l.b16 %v1607
      %v1640 = vunpack.c.l.b16 %v1608
      %v1641 = vpack.c.b16 %v1626, %v1625
      %v1642 = vpack.c.b16 %v1628, %v1627
      %v1643 = vpack.c.b16 %v1630, %v1629
      %v1644 = vpack.c.b16 %v1632, %v1631
      %v1645 = vpack.c.b16 %v1634, %v1633
      %v1646 = vpack.c.b16 %v1636, %v1635
      %v1647 = vpack.c.b16 %v1638, %v1637
      %v1648 = vpack.c.b16 %v1640, %v1639
      %1657 = vmatprep.subr.bf16.mxu0 0
      %1658 = vmatpush1.bf16.msra.mxu0 %v1641
      %1659 = vmatprep.subr.bf16.mxu0 0
      %1660 = vmatpush1.bf16.msra.mxu0 %v1642
      %1661 = vmatprep.subr.bf16.mxu0 0
      %1662 = vmatpush1.bf16.msra.mxu0 %v1643
      %1663 = vmatprep.subr.bf16.mxu0 0
      %1664 = vmatpush1.bf16.msra.mxu0 %v1644
      %1665 = vmatprep.subr.bf16.mxu0 0
      %1666 = vmatpush1.bf16.msra.mxu0 %v1645
      %1667 = vmatprep.subr.bf16.mxu0 0
      %1668 = vmatpush1.bf16.msra.mxu0 %v1646
      %1669 = vmatprep.subr.bf16.mxu0 0
      %1670 = vmatpush1.bf16.msra.mxu0 %v1647
      %1671 = vmatprep.subr.bf16.mxu0 0
      %1672 = vmatpush1.bf16.msra.mxu0 %v1648
      %1673 = vmatprep.subr.bf16.mxu0 0
      %1674 = vmatpush1.bf16.msra.mxu0 0
      %1675 = vmatprep.subr.bf16.mxu0 0
      %1676 = vmatpush1.bf16.msra.mxu0 0
      %1677 = vmatprep.subr.bf16.mxu0 0
      %1678 = vmatpush1.bf16.msra.mxu0 0
      %1679 = vmatprep.subr.bf16.mxu0 0
      %1680 = vmatpush1.bf16.msra.mxu0 0
      %1681 = vmatprep.subr.bf16.mxu0 0
      %1682 = vmatpush1.bf16.msra.mxu0 0
      %1683 = vmatprep.subr.bf16.mxu0 0
      %1684 = vmatpush1.bf16.msra.mxu0 0
      %1685 = vmatprep.subr.bf16.mxu0 0
      %1686 = vmatpush1.bf16.msra.mxu0 0
      %1687 = vmatprep.subr.bf16.mxu0 0
      %1688 = vmatpush1.bf16.msra.mxu0 0
      %1689 = vmatprep.mubr.bf16.mxu0 0
      %1690 = vmatmul.mubr.bf16.gmra.mrb[0].mxu0 %v1588
      %v1691 = vpop.f32.mrb[0].mxu0
      %v1692 = vadd.f32 0.0, %v1691
      %v1693 = vpop.f32.mrb[0].mxu0
      %v1694 = vpop.f32.mrb[0].mxu0
      %v1695 = vadd.f32 0.0, %v1694
      %v1696 = vpop.f32.mrb[0].mxu0
      %1697 = vmatprep.mubr.bf16.mxu0 0
      %1698 = vmatmul.mubr.bf16.gmra.mrb[0].mxu0 %v1589
      %v1699 = vpop.f32.mrb[0].mxu0
      %v1700 = vadd.f32 0.0, %v1699
      %v1701 = vpop.f32.mrb[0].mxu0
      %v1702 = vpop.f32.mrb[0].mxu0
      %v1703 = vadd.f32 0.0, %v1702
      %v1704 = vpop.f32.mrb[0].mxu0
      %1705 = vmatprep.mubr.bf16.mxu0 0
      %1706 = vmatmul.mubr.bf16.gmra.mrb[0].mxu0 %v1590
      %v1707 = vpop.f32.mrb[0].mxu0
      %v1708 = vadd.f32 0.0, %v1707
      %v1709 = vpop.f32.mrb[0].mxu0
      %v1710 = vpop.f32.mrb[0].mxu0
      %v1711 = vadd.f32 0.0, %v1710
      %v1712 = vpop.f32.mrb[0].mxu0
      %1713 = vmatprep.mubr.bf16.mxu0 0
      %1714 = vmatmul.mubr.bf16.gmra.mrb[0].mxu0 %v1591
      %v1715 = vpop.f32.mrb[0].mxu0
      %v1716 = vadd.f32 0.0, %v1715
      %v1717 = vpop.f32.mrb[0].mxu0
      %v1718 = vpop.f32.mrb[0].mxu0
      %v1719 = vadd.f32 0.0, %v1718
      %v1720 = vpop.f32.mrb[0].mxu0
      %1721 = vdwg.mxu0
      %v1722 = vadd.f32 %v1564, %v1692
      %v1723 = vadd.f32 %v1565, %v1695
      %v1724 = vadd.f32 %v1566, %v1700
      %v1725 = vadd.f32 %v1567, %v1703
      %v1726 = vadd.f32 %v1568, %v1708
      %v1727 = vadd.f32 %v1569, %v1711
      %v1728 = vadd.f32 %v1570, %v1716
      %v1729 = vadd.f32 %v1571, %v1719
      %v1730 = vld [vmem:[%s2] sm:$0x1]
      %v1732 = vlaneseq
      %v1733 = vshrl.u32 %v1732, 7
      %v1734 = vsub.s32 0, %v1733
      %v1735 = vrot.slane %v1730, %v1734
      %v1737 = vadd.f32 %v1722, %v1735
      %v1738 = vadd.f32 %v1723, %v1735
      %v1739 = vadd.f32 %v1724, %v1735
      %v1740 = vadd.f32 %v1725, %v1735
      %v1741 = vadd.f32 %v1726, %v1735
      %v1742 = vadd.f32 %v1727, %v1735
      %v1743 = vadd.f32 %v1728, %v1735
      %v1744 = vadd.f32 %v1729, %v1735
      %v1745 = vmax.f32 %v1737, 0.0
      %v1746 = vmax.f32 %v1738, 0.0
      %v1747 = vmax.f32 %v1739, 0.0
      %v1748 = vmax.f32 %v1740, 0.0
      %v1749 = vmax.f32 %v1741, 0.0
      %v1750 = vmax.f32 %v1742, 0.0
      %v1751 = vmax.f32 %v1743, 0.0
      %v1752 = vmax.f32 %v1744, 0.0
      %1753 = vst [vmem:[#allocation2] sm:$0xff] %v1745
      %1754 = vst [vmem:[#allocation2 + $0x8] sm:$0xff] %v1746
      %1755 = vst [vmem:[#allocation2 + $0x10] sm:$0xff] %v1747
      %1756 = vst [vmem:[#allocation2 + $0x18] sm:$0xff] %v1748
      %1757 = vst [vmem:[#allocation2 + $0x20] sm:$0xff] %v1749
      %1758 = vst [vmem:[#allocation2 + $0x28] sm:$0xff] %v1750
      %1759 = vst [vmem:[#allocation2 + $0x30] sm:$0xff] %v1751
      %1760 = vst [vmem:[#allocation2 + $0x38] sm:$0xff] %v1752
      %1761 = vst [vmem:[#allocation2 + $0x40] sm:$0xff] 0.0
      %1762 = vst [vmem:[#allocation2 + $0x48] sm:$0xff] 0.0
      %v1763 = vld [vmem:[#allocation2] sm:$0xff]
      %v1764 = vld [vmem:[#allocation2 + $0x8] sm:$0xff]
      %v1765 = vld [vmem:[#allocation2 + $0x10] sm:$0xff]
      %v1766 = vld [vmem:[#allocation2 + $0x18] sm:$0xff]
      %v1767 = vld [vmem:[#allocation2 + $0x20] sm:$0xff]
      %v1768 = vld [vmem:[#allocation2 + $0x28] sm:$0xff]
      %v1769 = vld [vmem:[#allocation2 + $0x30] sm:$0xff]
      %v1770 = vld [vmem:[#allocation2 + $0x38] sm:$0xff]
      %v1771 = vld [vmem:[#allocation2 + $0x1] sm:$0xff]
      %v1772 = vld [vmem:[#allocation2 + $0x9] sm:$0xff]
      %v1773 = vld [vmem:[#allocation2 + $0x11] sm:$0xff]
      %v1774 = vld [vmem:[#allocation2 + $0x19] sm:$0xff]
      %v1775 = vld [vmem:[#allocation2 + $0x21] sm:$0xff]
      %v1776 = vld [vmem:[#allocation2 + $0x29] sm:$0xff]
      %v1777 = vld [vmem:[#allocation2 + $0x31] sm:$0xff]
      %v1778 = vld [vmem:[#allocation2 + $0x39] sm:$0xff]
      %v1779 = vmax.f32 %v1763, %v1771
      %v1780 = vmax.f32 %v1764, %v1772
      %v1781 = vmax.f32 %v1765, %v1773
      %v1782 = vmax.f32 %v1766, %v1774
      %v1783 = vmax.f32 %v1767, %v1775
      %v1784 = vmax.f32 %v1768, %v1776
      %v1785 = vmax.f32 %v1769, %v1777
      %v1786 = vmax.f32 %v1770, %v1778
      %v1787 = vld [vmem:[#allocation2 + $0x40] sm:$0xff]
      %v1788 = vld [vmem:[#allocation2 + $0x41] sm:$0xff]
      %v1789 = vmax.f32 %v1787, %v1788
      %v1790 = vmax.f32 %v1779, %v1780
      %v1791 = vmax.f32 %v1780, %v1781
      %v1792 = vmax.f32 %v1781, %v1782
      %v1793 = vmax.f32 %v1782, %v1783
      %v1794 = vmax.f32 %v1783, %v1784
      %v1795 = vmax.f32 %v1784, %v1785
      %v1796 = vmax.f32 %v1785, %v1786
      %v1797 = vmax.f32 %v1786, %v1789
      %v1798 = vld [vmem:[%s5] sm:$0xff]
      %v1799 = vld [vmem:[%s5 + $0x8] sm:$0xff]
      %vm1800 = vcmask 523264
      %v1802 = vsel %vm1800, %v1798, 0
      %v1805 = vsel %vm1800, %v1799, 0
      %1807 = vmatprep.subr.mxu0 0.0
      %1808 = vmatpush1.msra.mxu0 %v1790
      %1809 = vmatprep.subr.mxu0 0.0
      %1810 = vmatpush1.msra.mxu0 %v1791
      %1811 = vmatprep.subr.mxu0 0.0
      %1812 = vmatpush1.msra.mxu0 %v1792
      %1813 = vmatprep.subr.mxu0 0.0
      %1814 = vmatpush1.msra.mxu0 %v1793
      %1815 = vmatprep.subr.mxu0 0.0
      %1816 = vmatpush1.msra.mxu0 %v1794
      %1817 = vmatprep.subr.mxu0 0.0
      %1818 = vmatpush1.msra.mxu0 %v1795
      %1819 = vmatprep.subr.mxu0 0.0
      %1820 = vmatpush1.msra.mxu0 %v1796
      %1821 = vmatprep.subr.mxu0 0.0
      %1822 = vmatpush1.msra.mxu0 %v1797
      %1823 = vmatprep.subr.mxu0 0.0
      %1824 = vmatpush1.msra.mxu0 0.0
      %1825 = vmatprep.subr.mxu0 0.0
      %1826 = vmatpush1.msra.mxu0 0.0
      %1827 = vmatprep.subr.mxu0 0.0
      %1828 = vmatpush1.msra.mxu0 0.0
      %1829 = vmatprep.subr.mxu0 0.0
      %1830 = vmatpush1.msra.mxu0 0.0
      %1831 = vmatprep.subr.mxu0 0.0
      %1832 = vmatpush1.msra.mxu0 0.0
      %1833 = vmatprep.subr.mxu0 0.0
      %1834 = vmatpush1.msra.mxu0 0.0
      %1835 = vmatprep.subr.mxu0 0.0
      %1836 = vmatpush1.msra.mxu0 0.0
      %1837 = vmatprep.subr.mxu0 0.0
      %1838 = vmatpush1.msra.mxu0 0.0
      %1839 = vmatprep.subr.mxu0 0.0
      %1840 = vmatpush1.msra.mxu0 0.0
      %1841 = vmatprep.subr.mxu0 0.0
      %1842 = vmatpush1.msra.mxu0 0.0
      %1843 = vmatprep.subr.mxu0 0.0
      %1844 = vmatpush1.msra.mxu0 0.0
      %1845 = vmatprep.subr.mxu0 0.0
      %1846 = vmatpush1.msra.mxu0 0.0
      %1847 = vmatprep.subr.mxu0 0.0
      %1848 = vmatpush1.msra.mxu0 0.0
      %1849 = vmatprep.subr.mxu0 0.0
      %1850 = vmatpush1.msra.mxu0 0.0
      %1851 = vmatprep.subr.mxu0 0.0
      %1852 = vmatpush1.msra.mxu0 0.0
      %1853 = vmatprep.subr.mxu0 0.0
      %1854 = vmatpush1.msra.mxu0 0.0
      %1855 = vmatprep.subr.mxu0 0.0
      %1856 = vmatpush1.msra.mxu0 0.0
      %1857 = vmatprep.subr.mxu0 0.0
      %1858 = vmatpush1.msra.mxu0 0.0
      %1859 = vmatprep.subr.mxu0 0.0
      %1860 = vmatpush1.msra.mxu0 0.0
      %1861 = vmatprep.subr.mxu0 0.0
      %1862 = vmatpush1.msra.mxu0 0.0
      %1863 = vmatprep.subr.mxu0 0.0
      %1864 = vmatpush1.msra.mxu0 0.0
      %1865 = vmatprep.subr.mxu0 0.0
      %1866 = vmatpush1.msra.mxu0 0.0
      %1867 = vmatprep.subr.mxu0 0.0
      %1868 = vmatpush1.msra.mxu0 0.0
      %1869 = vmatprep.subr.mxu0 0.0
      %1870 = vmatpush1.msra.mxu0 0.0
      %1871 = vmatprep.mubr.f32.mxu0 0.0
      %1872 = vmatmul.mubr.f32.gmra.mrb[0].mxu0 %v1802
      %v1873 = vpop.f32.mrb[0].mxu0
      %v1874 = vadd.f32 0.0, %v1873
      %v1875 = vpop.f32.mrb[0].mxu0
      %1876 = vmatprep.mubr.f32.mxu0 0.0
      %1877 = vmatmul.mubr.f32.gmra.mrb[0].mxu0 %v1805
      %v1878 = vpop.f32.mrb[0].mxu0
      %v1879 = vadd.f32 0.0, %v1878
      %v1880 = vpop.f32.mrb[0].mxu0
      %1881 = vdwg.mxu0
      %1882 = vst [vmem:[%s251] sm:$0xff] 0.0
      %1883 = vst [vmem:[%s251 + $0x8] sm:$0xff] %v1874
      %1884 = vst [vmem:[%s251 + $0x10] sm:$0xff] %v1879
      %1885 = vst [vmem:[%s251 + $0x18] sm:$0xff] 0.0
      %p1886 = scmp.lt.s32.totalorder %s17, 1
      %s1887 = scalar_select %p1886, %s17, 1
      %s1888 = smul.addr %s1887, 4
      %s1889 = smul.addr %s1888, 8
      %s1890 = scalar_lea.vmem %s6, %s1889
      // Predicated region
      $region45: #{audio_cnn_forward.4} parent=43 // pred_check
        %p1891 = pneg %p166
      $region46: #{audio_cnn_forward.4} parent=43 // pred_check_branch
        %1893 = sbr.rel (%p1891) target = $region48
      $region47: #{audio_cnn_forward.4} parent=43 // pred_region
        _
      $region48: #{audio_cnn_forward.4} parent=43 // pred_fallthru
        _
    $region44: #{audio_cnn_forward.4} parent=5 // pred_fallthru
      _
    %p1894 = scmp.le.s32.totalorder 2, %s12
    // Predicated region
    $region49: #{audio_cnn_forward.4} parent=5 // pred_check
      %p1895 = pneg %p1894
    $region50: #{audio_cnn_forward.4} parent=5 // pred_check_branch
      %1897 = sbr.rel (%p1895) target = $region52
    $region51: #{audio_cnn_forward.4} parent=5 // pred_region
      %s1898 = ssub.s32 %s12, 2
      // Predicated region
      $region53: #{audio_cnn_forward.4} parent=51 // pred_check
        %p1899 = pneg %p172
      $region54: #{audio_cnn_forward.4} parent=51 // pred_check_branch
        %1901 = sbr.rel (%p1899) target = $region56
      $region55: #{audio_cnn_forward.4} parent=51 // pred_region
        %p1902 = scmp.lt.s32.totalorder %s18, 1
        %s1903 = scalar_select %p1902, %s18, 1
        %s1904 = smul.addr %s1903, 4
        %s1905 = smul.addr %s1904, 8
        %s1906 = scalar_lea.vmem %s6, %s1905
      $region56: #{audio_cnn_forward.4} parent=51 // pred_fallthru
        _
    $region52: #{audio_cnn_forward.4} parent=5 // pred_fallthru
      _
  $region6: #{audio_cnn_forward.4} parent=0 // loop_footer
    %s16 = sadd.s32 1, %s12
  $region7: #{audio_cnn_forward.4} parent=0 // loop_footer_branch
    %11 = sbr.rel target = $region3
  $region8: #{audio_cnn_forward.4} parent=0 // loop_exit
    _

// kernel: audio_cnn_forward.5
$region0: #{audio_cnn_forward.5}
  #allocation0 [shape = 'u32[]', space=smem, size = 0x4, offset = 0x4, fixed_abs, tag = 'smem constant byte address 0x4 - core index']
  #allocation1 [shape = 'u32[144,128]{1,0:T(1,128)}', space=vmem, size = 0x12000, scoped, tag = 'internal scratch']
  #allocation2 [shape = 'f32[24,128]{1,0:T(8,128)}', space=vmem, size = 0x3000, scoped, tag = 'scratch operand']
  %s0 = inlined_call_operand.vmem [shape: f32[2,32,128], index: 0, kind: input, shape index: {}]
  %s1 = inlined_call_operand.vmem [shape: bf16[9,128,128], index: 1, kind: input, shape index: {}]
  %s2 = inlined_call_operand.vmem [shape: f32[1,128], index: 2, kind: input, shape index: {}]
  %s3 = inlined_call_operand.vmem [shape: f32[16,1], index: 3, kind: input, shape index: {}]
  %s4 = inlined_call_operand.vmem [shape: f32[16,1], index: 4, kind: input, shape index: {}]
  %s5 = inlined_call_operand.vmem [shape: f32[1,16], index: 5, kind: input, shape index: {}]
  %s6 = inlined_call_operand.vmem [shape: f32[128,128], index: 6, kind: input, shape index: {}]
  %s7 = inlined_call_operand.vmem [shape: f32[1,128], index: 7, kind: input, shape index: {}]
  %s8 = inlined_call_operand.hbm [shape: f32[2,1,128], index: 8, kind: output, shape index: {}]
  %s9 = sld [smem:[#allocation0]]
  $region65: #{audio_cnn_forward.5} parent=0
    _
  %s11 = ssub.s32 1, %s9
  %s12 = scalar_select 0, %s11, %s9
  $region1: #{audio_cnn_forward.5} parent=0
    #allocation3 [shape = 'u8[1024]{0}', space=vmem, size = 0x400, scoped, tag = 'output window, operand 0']
    #allocation4 [shape = 's32[2]{0}', space=sflag, size = 0x8, scoped, tag = 'scoped memory for audio_cnn_forward.5']
    %13 = vsyncpa [#allocation4], 0
    %s14 = scalar_lea.sflag [#allocation4], 1
    %15 = vsyncpa %s14, 0
    loop: start=0, step=1, limit=4
    $region2: #{audio_cnn_forward.5} parent=1 // loop_pre_header
      _
    $region3: #{audio_cnn_forward.5} parent=1 // loop_header
      %s17 = sphi 0, %s21
      %p18 = scmp.ge.s32.totalorder %s17, 4
      %s27 = sphi 0, %s29
      %s30 = sphi 0, %s27
      %s31 = sphi 0, %s30
      %s47 = sphi 0, %s31
      %s51 = sphi 0, %s51
      %s53 = sphi 0, %s51
      %s54 = sphi 0, %s53
      %s68 = sphi 0, %s54
      %s72 = sphi 0, %s72
      %s74 = sphi 0, %s72
      %s75 = sphi 0, %s74
      %s89 = sphi 0, %s75
      %s93 = sphi 0, %s93
      %s95 = sphi 0, %s93
      %s96 = sphi 0, %s95
      %s110 = sphi 0, %s96
      %s114 = sphi 0, %s114
      %s116 = sphi 0, %s114
      %s117 = sphi 0, %s116
      %s131 = sphi 0, %s117
      %s135 = sphi 0, %s135
      %s137 = sphi 0, %s135
      %s138 = sphi 0, %s137
      %s152 = sphi 0, %s138
      %s156 = sphi 0, %s156
      %s158 = sphi 0, %s156
      %s159 = sphi 0, %s158
      %s173 = sphi 0, %s159
      %s177 = sphi 0, %s177
      %s179 = sphi 0, %s177
      %s180 = sphi 0, %s179
      %s194 = sphi 0, %s180
      %s200 = sphi 0, %s202
      %s203 = sphi 0, %s200
      %s204 = sphi 0, %s203
      %s220 = sphi 0, %s204
    $region4: #{audio_cnn_forward.5} parent=1 // loop_header_branch
      %20 = sbr.rel (%p18) target = $region8
    $region5: #{audio_cnn_forward.5} parent=1 // loop_body
      %s22 = ssub.s32 %s17, 1
      %s23 = ssub.s32 %s17, 2
      %s24 = sadd.s32 %s17, 1
      %s25 = ssub.s32 %s17, %s24
      %p26 = scmp.eq.s32.totalorder %s25, 0
      %s28 = sadd.s32 %s27, 1
      %s29 = scalar_select %p26, %s27, %s28
      %p32 = pneg %p26
      %p33 = scmp.eq.s32.totalorder %s17, 1
      %p34 = por %p32, %p33
      %p35 = scmp.ne.s32.totalorder %s27, %s30
      %p36 = scmp.eq.s32.totalorder %s17, 0
      %p37 = por %p35, %p36
      %p38 = scmp.ne.s32.totalorder %s27, %s30
      %p39 = scmp.eq.s32.totalorder %s22, 1
      %p40 = por %p38, %p39
      %p41 = scmp.ne.s32.totalorder %s30, %s31
      %p42 = scmp.eq.s32.totalorder %s22, 0
      %p43 = por %p41, %p42
      %p44 = scmp.ne.s32.totalorder %s30, %s31
      %p45 = scmp.eq.s32.totalorder %s23, 1
      %p46 = por %p44, %p45
      %p48 = scmp.ne.s32.totalorder %s31, %s47
      %p49 = scmp.eq.s32.totalorder %s23, 0
      %p50 = por %p48, %p49
      %s52 = sadd.s32 %s51, 1
      %p55 = scmp.eq.s32.totalorder %s17, 1
      %p56 = scmp.ne.s32.totalorder %s51, %s53
      %p57 = scmp.eq.s32.totalorder %s17, 0
      %p58 = por %p56, %p57
      %p59 = scmp.ne.s32.totalorder %s51, %s53
      %p60 = scmp.eq.s32.totalorder %s22, 1
      %p61 = por %p59, %p60
      %p62 = scmp.ne.s32.totalorder %s53, %s54
      %p63 = scmp.eq.s32.totalorder %s22, 0
      %p64 = por %p62, %p63
      %p65 = scmp.ne.s32.totalorder %s53, %s54
      %p66 = scmp.eq.s32.totalorder %s23, 1
      %p67 = por %p65, %p66
      %p69 = scmp.ne.s32.totalorder %s54, %s68
      %p70 = scmp.eq.s32.totalorder %s23, 0
      %p71 = por %p69, %p70
      %s73 = sadd.s32 %s72, 1
      %p76 = scmp.eq.s32.totalorder %s17, 1
      %p77 = scmp.ne.s32.totalorder %s72, %s74
      %p78 = scmp.eq.s32.totalorder %s17, 0
      %p79 = por %p77, %p78
      %p80 = scmp.ne.s32.totalorder %s72, %s74
      %p81 = scmp.eq.s32.totalorder %s22, 1
      %p82 = por %p80, %p81
      %p83 = scmp.ne.s32.totalorder %s74, %s75
      %p84 = scmp.eq.s32.totalorder %s22, 0
      %p85 = por %p83, %p84
      %p86 = scmp.ne.s32.totalorder %s74, %s75
      %p87 = scmp.eq.s32.totalorder %s23, 1
      %p88 = por %p86, %p87
      %p90 = scmp.ne.s32.totalorder %s75, %s89
      %p91 = scmp.eq.s32.totalorder %s23, 0
      %p92 = por %p90, %p91
      %s94 = sadd.s32 %s93, 1
      %p97 = scmp.eq.s32.totalorder %s17, 1
      %p98 = scmp.ne.s32.totalorder %s93, %s95
      %p99 = scmp.eq.s32.totalorder %s17, 0
      %p100 = por %p98, %p99
      %p101 = scmp.ne.s32.totalorder %s93, %s95
      %p102 = scmp.eq.s32.totalorder %s22, 1
      %p103 = por %p101, %p102
      %p104 = scmp.ne.s32.totalorder %s95, %s96
      %p105 = scmp.eq.s32.totalorder %s22, 0
      %p106 = por %p104, %p105
      %p107 = scmp.ne.s32.totalorder %s95, %s96
      %p108 = scmp.eq.s32.totalorder %s23, 1
      %p109 = por %p107, %p108
      %p111 = scmp.ne.s32.totalorder %s96, %s110
      %p112 = scmp.eq.s32.totalorder %s23, 0
      %p113 = por %p111, %p112
      %s115 = sadd.s32 %s114, 1
      %p118 = scmp.eq.s32.totalorder %s17, 1
      %p119 = scmp.ne.s32.totalorder %s114, %s116
      %p120 = scmp.eq.s32.totalorder %s17, 0
      %p121 = por %p119, %p120
      %p122 = scmp.ne.s32.totalorder %s114, %s116
      %p123 = scmp.eq.s32.totalorder %s22, 1
      %p124 = por %p122, %p123
      %p125 = scmp.ne.s32.totalorder %s116, %s117
      %p126 = scmp.eq.s32.totalorder %s22, 0
      %p127 = por %p125, %p126
      %p128 = scmp.ne.s32.totalorder %s116, %s117
      %p129 = scmp.eq.s32.totalorder %s23, 1
      %p130 = por %p128, %p129
      %p132 = scmp.ne.s32.totalorder %s117, %s131
      %p133 = scmp.eq.s32.totalorder %s23, 0
      %p134 = por %p132, %p133
      %s136 = sadd.s32 %s135, 1
      %p139 = scmp.eq.s32.totalorder %s17, 1
      %p140 = scmp.ne.s32.totalorder %s135, %s137
      %p141 = scmp.eq.s32.totalorder %s17, 0
      %p142 = por %p140, %p141
      %p143 = scmp.ne.s32.totalorder %s135, %s137
      %p144 = scmp.eq.s32.totalorder %s22, 1
      %p145 = por %p143, %p144
      %p146 = scmp.ne.s32.totalorder %s137, %s138
      %p147 = scmp.eq.s32.totalorder %s22, 0
      %p148 = por %p146, %p147
      %p149 = scmp.ne.s32.totalorder %s137, %s138
      %p150 = scmp.eq.s32.totalorder %s23, 1
      %p151 = por %p149, %p150
      %p153 = scmp.ne.s32.totalorder %s138, %s152
      %p154 = scmp.eq.s32.totalorder %s23, 0
      %p155 = por %p153, %p154
      %s157 = sadd.s32 %s156, 1
      %p160 = scmp.eq.s32.totalorder %s17, 1
      %p161 = scmp.ne.s32.totalorder %s156, %s158
      %p162 = scmp.eq.s32.totalorder %s17, 0
      %p163 = por %p161, %p162
      %p164 = scmp.ne.s32.totalorder %s156, %s158
      %p165 = scmp.eq.s32.totalorder %s22, 1
      %p166 = por %p164, %p165
      %p167 = scmp.ne.s32.totalorder %s158, %s159
      %p168 = scmp.eq.s32.totalorder %s22, 0
      %p169 = por %p167, %p168
      %p170 = scmp.ne.s32.totalorder %s158, %s159
      %p171 = scmp.eq.s32.totalorder %s23, 1
      %p172 = por %p170, %p171
      %p174 = scmp.ne.s32.totalorder %s159, %s173
      %p175 = scmp.eq.s32.totalorder %s23, 0
      %p176 = por %p174, %p175
      %s178 = sadd.s32 %s177, 1
      %p181 = scmp.eq.s32.totalorder %s17, 1
      %p182 = scmp.ne.s32.totalorder %s177, %s179
      %p183 = scmp.eq.s32.totalorder %s17, 0
      %p184 = por %p182, %p183
      %p185 = scmp.ne.s32.totalorder %s177, %s179
      %p186 = scmp.eq.s32.totalorder %s22, 1
      %p187 = por %p185, %p186
      %p188 = scmp.ne.s32.totalorder %s179, %s180
      %p189 = scmp.eq.s32.totalorder %s22, 0
      %p190 = por %p188, %p189
      %p191 = scmp.ne.s32.totalorder %s179, %s180
      %p192 = scmp.eq.s32.totalorder %s23, 1
      %p193 = por %p191, %p192
      %p195 = scmp.ne.s32.totalorder %s180, %s194
      %p196 = scmp.eq.s32.totalorder %s23, 0
      %p197 = por %p195, %p196
      %s198 = ssub.s32 %s17, %s24
      %p199 = scmp.eq.s32.totalorder %s198, 0
      %s201 = sadd.s32 %s200, 1
      %s202 = scalar_select %p199, %s200, %s201
      %p205 = pneg %p199
      %p206 = scmp.eq.s32.totalorder %s17, 1
      %p207 = por %p205, %p206
      %p208 = scmp.ne.s32.totalorder %s200, %s203
      %p209 = scmp.eq.s32.totalorder %s17, 0
      %p210 = por %p208, %p209
      %p211 = scmp.ne.s32.totalorder %s200, %s203
      %p212 = scmp.eq.s32.totalorder %s22, 1
      %p213 = por %p211, %p212
      %p214 = scmp.ne.s32.totalorder %s203, %s204
      %p215 = scmp.eq.s32.totalorder %s22, 0
      %p216 = por %p214, %p215
      %p217 = scmp.ne.s32.totalorder %s203, %s204
      %p218 = scmp.eq.s32.totalorder %s23, 1
      %p219 = por %p217, %p218
      %p221 = scmp.ne.s32.totalorder %s204, %s220
      %p222 = scmp.eq.s32.totalorder %s23, 0
      %p223 = por %p221, %p222
      %p224 = scmp.le.s32.totalorder 1, %s17
      %p225 = scmp.lt.s32.totalorder %s17, 3
      %p226 = pnand %p224, %p225
      %p227 = pneg %p226
      // Predicated region
      $region9: #{audio_cnn_forward.5} parent=5 // pred_check
        _
      $region10: #{audio_cnn_forward.5} parent=5 // pred_check_branch
        %229 = sbr.rel (%p226) target = $region12
      $region11: #{audio_cnn_forward.5} parent=5 // pred_region
        %s230 = ssub.s32 %s17, 1
        // Predicated region
        $region13: #{audio_cnn_forward.5} parent=11 // pred_check
          %p231 = pneg %p64
        $region14: #{audio_cnn_forward.5} parent=11 // pred_check_branch
          %233 = sbr.rel (%p231) target = $region16
        $region15: #{audio_cnn_forward.5} parent=11 // pred_region
          _
        $region16: #{audio_cnn_forward.5} parent=11 // pred_fallthru
          _
        // Predicated region
        $region17: #{audio_cnn_forward.5} parent=11 // pred_check
          %p234 = pneg %p85
        $region18: #{audio_cnn_forward.5} parent=11 // pred_check_branch
          %236 = sbr.rel (%p234) target = $region20
        $region19: #{audio_cnn_forward.5} parent=11 // pred_region
          _
        $region20: #{audio_cnn_forward.5} parent=11 // pred_fallthru
          _
        // Predicated region
        $region21: #{audio_cnn_forward.5} parent=11 // pred_check
          %p237 = pneg %p106
        $region22: #{audio_cnn_forward.5} parent=11 // pred_check_branch
          %239 = sbr.rel (%p237) target = $region24
        $region23: #{audio_cnn_forward.5} parent=11 // pred_region
          _
        $region24: #{audio_cnn_forward.5} parent=11 // pred_fallthru
          _
        // Predicated region
        $region25: #{audio_cnn_forward.5} parent=11 // pred_check
          %p240 = pneg %p127
        $region26: #{audio_cnn_forward.5} parent=11 // pred_check_branch
          %242 = sbr.rel (%p240) target = $region28
        $region27: #{audio_cnn_forward.5} parent=11 // pred_region
          _
        $region28: #{audio_cnn_forward.5} parent=11 // pred_fallthru
          _
        // Predicated region
        $region29: #{audio_cnn_forward.5} parent=11 // pred_check
          %p243 = pneg %p148
        $region30: #{audio_cnn_forward.5} parent=11 // pred_check_branch
          %245 = sbr.rel (%p243) target = $region32
        $region31: #{audio_cnn_forward.5} parent=11 // pred_region
          _
        $region32: #{audio_cnn_forward.5} parent=11 // pred_fallthru
          _
        // Predicated region
        $region33: #{audio_cnn_forward.5} parent=11 // pred_check
          %p246 = pneg %p169
        $region34: #{audio_cnn_forward.5} parent=11 // pred_check_branch
          %248 = sbr.rel (%p246) target = $region36
        $region35: #{audio_cnn_forward.5} parent=11 // pred_region
          _
        $region36: #{audio_cnn_forward.5} parent=11 // pred_fallthru
          _
        // Predicated region
        $region37: #{audio_cnn_forward.5} parent=11 // pred_check
          %p249 = pneg %p190
        $region38: #{audio_cnn_forward.5} parent=11 // pred_check_branch
          %251 = sbr.rel (%p249) target = $region40
        $region39: #{audio_cnn_forward.5} parent=11 // pred_region
          _
        $region40: #{audio_cnn_forward.5} parent=11 // pred_fallthru
          _
      $region12: #{audio_cnn_forward.5} parent=5 // pred_fallthru
        _
      %p252 = scmp.lt.s32.totalorder %s17, 2
      // Predicated region
      $region41: #{audio_cnn_forward.5} parent=5 // pred_check
        %p253 = pneg %p252
      $region42: #{audio_cnn_forward.5} parent=5 // pred_check_branch
        %255 = sbr.rel (%p253) target = $region44
      $region43: #{audio_cnn_forward.5} parent=5 // pred_region
        // Predicated region
        $region45: #{audio_cnn_forward.5} parent=43 // pred_check
          %p256 = pneg %p37
        $region46: #{audio_cnn_forward.5} parent=43 // pred_check_branch
          %258 = sbr.rel (%p256) target = $region48
        $region47: #{audio_cnn_forward.5} parent=43 // pred_region
          %p259 = scmp.lt.s32.totalorder %s17, 1
          %s260 = scalar_select %p259, %s17, 1
          %s261 = smul.addr %s260, 4
          %s262 = smul.addr %s261, 8
          %s263 = scalar_lea.vmem %s0, %s262
        $region48: #{audio_cnn_forward.5} parent=43 // pred_fallthru
          _
      $region44: #{audio_cnn_forward.5} parent=5 // pred_fallthru
        _
      %p264 = scmp.le.s32.totalorder 1, %s17
      %p265 = scmp.lt.s32.totalorder %s17, 3
      %p266 = pnand %p264, %p265
      %p267 = pneg %p266
      // Predicated region
      $region49: #{audio_cnn_forward.5} parent=5 // pred_check
        _
      $region50: #{audio_cnn_forward.5} parent=5 // pred_check_branch
        %269 = sbr.rel (%p266) target = $region52
      $region51: #{audio_cnn_forward.5} parent=5 // pred_region
        %s270 = ssub.s32 %s17, 1
        %p271 = scmp.lt.s32.totalorder %s22, 1
        %s272 = scalar_select %p271, %s22, 1
        %s273 = smul.addr %s272, 4
        %s274 = smul.addr %s273, 8
        %s275 = scalar_lea.vmem %s0, %s274
        %p276 = pneg %p43
        %p277 = pneg %p40
        %p278 = pneg %p64
        %p279 = pneg %p61
        %p280 = pneg %p85
        %p281 = pneg %p82
        %p282 = pneg %p106
        %p283 = pneg %p103
        %p284 = pneg %p127
        %p285 = pneg %p124
        %p286 = pneg %p148
        %p287 = pneg %p145
        %p288 = pneg %p169
        %p289 = pneg %p166
        %p290 = pneg %p190
        %p291 = pneg %p187
        %p292 = pneg %p216
        %p293 = pneg %p213
        %s294 = sand.u32 %s203, 1
        %s295 = scalar_lea.sflag [#allocation4], %s294
        %s296 = sand.u32 %s203, 1
        %s297 = scalar_lea.vmem [#allocation3], %s296
        %p298 = scmp.lt.s32.totalorder %s22, 1
        %s299 = scalar_select %p298, %s22, 1
        %s300 = smul.addr %s299, 4
        %s301 = smul.addr %s300, 8
        %s302 = scalar_lea.vmem %s0, %s301
        %v304 = vld [vmem:[%s3] sm:$0xff]
        %v305 = vld [vmem:[%s3 + $0x8] sm:$0xff]
        %v306 = vld [vmem:[%s4] sm:$0xff]
        %v307 = vld [vmem:[%s4 + $0x8] sm:$0xff]
        %v308 = vld [vmem:[%s302 + $0x3] sm:$0xff]
        %v309 = vld [vmem:[%s302 + $0xb] sm:$0xff]
        %311 = vset.pattern.permute.xlu0 0
        %312 = vperm.xlu0 %311, %v304
        %v313 = vpop.permute.xlu0 %312
        %316 = vset.pattern.permute.xlu0 0
        %317 = vperm.xlu0 %316, %v305
        %v318 = vpop.permute.xlu0 %317
        %v320 = vmul.f32 %v308, %v313
        %v321 = vmul.f32 %v309, %v318
        %v322 = vpack.c.bf16 %v321, %v320
        %v323 = vld [vmem:[%s1] sm:$0xf]
        %v324 = vld [vmem:[%s1 + $0x4] sm:$0xf]
        %v325 = vld [vmem:[%s1 + $0x8] sm:$0xf]
        %v326 = vld [vmem:[%s1 + $0xc] sm:$0xf]
        %v327 = vld [vmem:[%s1 + $0x10] sm:$0xf]
        %v328 = vld [vmem:[%s1 + $0x14] sm:$0xf]
        %v329 = vld [vmem:[%s1 + $0x18] sm:$0xf]
        %v330 = vld [vmem:[%s1 + $0x1c] sm:$0xf]
        %v331 = vld [vmem:[%s1 + $0x20] sm:$0xf]
        %v332 = vld [vmem:[%s1 + $0x24] sm:$0xf]
        %v333 = vld [vmem:[%s1 + $0x28] sm:$0xf]
        %v334 = vld [vmem:[%s1 + $0x2c] sm:$0xf]
        %v335 = vld [vmem:[%s1 + $0x30] sm:$0xf]
        %v336 = vld [vmem:[%s1 + $0x34] sm:$0xf]
        %v337 = vld [vmem:[%s1 + $0x38] sm:$0xf]
        %v338 = vld [vmem:[%s1 + $0x3c] sm:$0xf]
        %v339 = vld [vmem:[%s302 + $0x4] sm:$0xff]
        %v340 = vld [vmem:[%s302 + $0xc] sm:$0xff]
        %v341 = vpack.c.bf16 %v340, %v339
        %s342 = scalar_lea.vmem %s1, 64
        %v343 = vld [vmem:[%s342] sm:$0xf]
        %v344 = vld [vmem:[%s342 + $0x4] sm:$0xf]
        %v345 = vld [vmem:[%s342 + $0x8] sm:$0xf]
        %v346 = vld [vmem:[%s342 + $0xc] sm:$0xf]
        %v347 = vld [vmem:[%s342 + $0x10] sm:$0xf]
        %v348 = vld [vmem:[%s342 + $0x14] sm:$0xf]
        %v349 = vld [vmem:[%s342 + $0x18] sm:$0xf]
        %v350 = vld [vmem:[%s342 + $0x1c] sm:$0xf]
        %v351 = vld [vmem:[%s342 + $0x20] sm:$0xf]
        %v352 = vld [vmem:[%s342 + $0x24] sm:$0xf]
        %v353 = vld [vmem:[%s342 + $0x28] sm:$0xf]
        %v354 = vld [vmem:[%s342 + $0x2c] sm:$0xf]
        %v355 = vld [vmem:[%s342 + $0x30] sm:$0xf]
        %v356 = vld [vmem:[%s342 + $0x34] sm:$0xf]
        %v357 = vld [vmem:[%s342 + $0x38] sm:$0xf]
        %v358 = vld [vmem:[%s342 + $0x3c] sm:$0xf]
        %v375 = vunpack.c.l.b16 %v343
        %v376 = vunpack.c.l.b16 %v344
        %v377 = vunpack.c.l.b16 %v345
        %v378 = vunpack.c.l.b16 %v346
        %v379 = vunpack.c.l.b16 %v347
        %v380 = vunpack.c.l.b16 %v348
        %v381 = vunpack.c.l.b16 %v349
        %v382 = vunpack.c.l.b16 %v350
        %v383 = vunpack.c.l.b16 %v351
        %v384 = vunpack.c.l.b16 %v352
        %v385 = vunpack.c.l.b16 %v353
        %v386 = vunpack.c.l.b16 %v354
        %v387 = vunpack.c.l.b16 %v355
        %v388 = vunpack.c.l.b16 %v356
        %v389 = vunpack.c.l.b16 %v357
        %v390 = vunpack.c.l.b16 %v358
        %v391 = vpack.c.b16 %v376, %v375
        %v392 = vpack.c.b16 %v378, %v377
        %v393 = vpack.c.b16 %v380, %v379
        %v394 = vpack.c.b16 %v382, %v381
        %v395 = vpack.c.b16 %v384, %v383
        %v396 = vpack.c.b16 %v386, %v385
        %v397 = vpack.c.b16 %v388, %v387
        %v398 = vpack.c.b16 %v390, %v389
        %407 = vmatprep.subr.bf16.mxu0 0
        %408 = vmatpush1.bf16.msra.mxu0 %v391
        %409 = vmatprep.subr.bf16.mxu0 0
        %410 = vmatpush1.bf16.msra.mxu0 %v392
        %411 = vmatprep.subr.bf16.mxu0 0
        %412 = vmatpush1.bf16.msra.mxu0 %v393
        %413 = vmatprep.subr.bf16.mxu0 0
        %414 = vmatpush1.bf16.msra.mxu0 %v394
        %415 = vmatprep.subr.bf16.mxu0 0
        %416 = vmatpush1.bf16.msra.mxu0 %v395
        %417 = vmatprep.subr.bf16.mxu0 0
        %418 = vmatpush1.bf16.msra.mxu0 %v396
        %419 = vmatprep.subr.bf16.mxu0 0
        %420 = vmatpush1.bf16.msra.mxu0 %v397
        %421 = vmatprep.subr.bf16.mxu0 0
        %422 = vmatpush1.bf16.msra.mxu0 %v398
        %423 = vmatprep.subr.bf16.mxu0 0
        %424 = vmatpush1.bf16.msra.mxu0 0
        %425 = vmatprep.subr.bf16.mxu0 0
        %426 = vmatpush1.bf16.msra.mxu0 0
        %427 = vmatprep.subr.bf16.mxu0 0
        %428 = vmatpush1.bf16.msra.mxu0 0
        %429 = vmatprep.subr.bf16.mxu0 0
        %430 = vmatpush1.bf16.msra.mxu0 0
        %431 = vmatprep.subr.bf16.mxu0 0
        %432 = vmatpush1.bf16.msra.mxu0 0
        %433 = vmatprep.subr.bf16.mxu0 0
        %434 = vmatpush1.bf16.msra.mxu0 0
        %435 = vmatprep.subr.bf16.mxu0 0
        %436 = vmatpush1.bf16.msra.mxu0 0
        %437 = vmatprep.subr.bf16.mxu0 0
        %438 = vmatpush1.bf16.msra.mxu0 0
        %439 = vmatprep.mubr.bf16.mxu0 0
        %440 = vmatmul.mubr.bf16.gmra.mrb[0].mxu0 %v341
        %v441 = vpop.f32.mrb[0].mxu0
        %v442 = vadd.f32 0.0, %v441
        %v443 = vpop.f32.mrb[0].mxu0
        %v444 = vpop.f32.mrb[0].mxu0
        %v445 = vadd.f32 0.0, %v444
        %v446 = vpop.f32.mrb[0].mxu0
        %447 = vdwg.mxu0
        %v464 = vunpack.c.l.b16 %v323
        %v465 = vunpack.c.l.b16 %v324
        %v466 = vunpack.c.l.b16 %v325
        %v467 = vunpack.c.l.b16 %v326
        %v468 = vunpack.c.l.b16 %v327
        %v469 = vunpack.c.l.b16 %v328
        %v470 = vunpack.c.l.b16 %v329
        %v471 = vunpack.c.l.b16 %v330
        %v472 = vunpack.c.l.b16 %v331
        %v473 = vunpack.c.l.b16 %v332
        %v474 = vunpack.c.l.b16 %v333
        %v475 = vunpack.c.l.b16 %v334
        %v476 = vunpack.c.l.b16 %v335
        %v477 = vunpack.c.l.b16 %v336
        %v478 = vunpack.c.l.b16 %v337
        %v479 = vunpack.c.l.b16 %v338
        %v480 = vpack.c.b16 %v465, %v464
        %v481 = vpack.c.b16 %v467, %v466
        %v482 = vpack.c.b16 %v469, %v468
        %v483 = vpack.c.b16 %v471, %v470
        %v484 = vpack.c.b16 %v473, %v472
        %v485 = vpack.c.b16 %v475, %v474
        %v486 = vpack.c.b16 %v477, %v476
        %v487 = vpack.c.b16 %v479, %v478
        %496 = vmatprep.subr.bf16.mxu0 0
        %497 = vmatpush1.bf16.msra.mxu0 %v480
        %498 = vmatprep.subr.bf16.mxu0 0
        %499 = vmatpush1.bf16.msra.mxu0 %v481
        %500 = vmatprep.subr.bf16.mxu0 0
        %501 = vmatpush1.bf16.msra.mxu0 %v482
        %502 = vmatprep.subr.bf16.mxu0 0
        %503 = vmatpush1.bf16.msra.mxu0 %v483
        %504 = vmatprep.subr.bf16.mxu0 0
        %505 = vmatpush1.bf16.msra.mxu0 %v484
        %506 = vmatprep.subr.bf16.mxu0 0
        %507 = vmatpush1.bf16.msra.mxu0 %v485
        %508 = vmatprep.subr.bf16.mxu0 0
        %509 = vmatpush1.bf16.msra.mxu0 %v486
        %510 = vmatprep.subr.bf16.mxu0 0
        %511 = vmatpush1.bf16.msra.mxu0 %v487
        %512 = vmatprep.subr.bf16.mxu0 0
        %513 = vmatpush1.bf16.msra.mxu0 0
        %514 = vmatprep.subr.bf16.mxu0 0
        %515 = vmatpush1.bf16.msra.mxu0 0
        %516 = vmatprep.subr.bf16.mxu0 0
        %517 = vmatpush1.bf16.msra.mxu0 0
        %518 = vmatprep.subr.bf16.mxu0 0
        %519 = vmatpush1.bf16.msra.mxu0 0
        %520 = vmatprep.subr.bf16.mxu0 0
        %521 = vmatpush1.bf16.msra.mxu0 0
        %522 = vmatprep.subr.bf16.mxu0 0
        %523 = vmatpush1.bf16.msra.mxu0 0
        %524 = vmatprep.subr.bf16.mxu0 0
        %525 = vmatpush1.bf16.msra.mxu0 0
        %526 = vmatprep.subr.bf16.mxu0 0
        %527 = vmatpush1.bf16.msra.mxu0 0
        %528 = vmatprep.mubr.bf16.mxu0 0
        %529 = vmatmul.mubr.bf16.gmra.mrb[0].mxu0 %v322
        %v530 = vpop.f32.mrb[0].mxu0
        %v531 = vadd.f32 %v442, %v530
        %v532 = vpop.f32.mrb[0].mxu0
        %v533 = vpop.f32.mrb[0].mxu0
        %v534 = vadd.f32 %v445, %v533
        %v535 = vpop.f32.mrb[0].mxu0
        %536 = vdwg.mxu0
        %v537 = vld [vmem:[%s302 + $0x5] sm:$0xff]
        %v538 = vld [vmem:[%s302 + $0xd] sm:$0xff]
        %540 = vset.pattern.permute.xlu0 0
        %541 = vperm.xlu0 %540, %v306
        %v542 = vpop.permute.xlu0 %541
        %545 = vset.pattern.permute.xlu0 0
        %546 = vperm.xlu0 %545, %v307
        %v547 = vpop.permute.xlu0 %546
        %v549 = vmul.f32 %v537, %v542
        %v550 = vmul.f32 %v538, %v547
        %v551 = vpack.c.bf16 %v550, %v549
        %s552 = scalar_lea.vmem %s1, 128
        %v553 = vld [vmem:[%s552] sm:$0xf]
        %v554 = vld [vmem:[%s552 + $0x4] sm:$0xf]
        %v555 = vld [vmem:[%s552 + $0x8] sm:$0xf]
        %v556 = vld [vmem:[%s552 + $0xc] sm:$0xf]
        %v557 = vld [vmem:[%s552 + $0x10] sm:$0xf]
        %v558 = vld [vmem:[%s552 + $0x14] sm:$0xf]
        %v559 = vld [vmem:[%s552 + $0x18] sm:$0xf]
        %v560 = vld [vmem:[%s552 + $0x1c] sm:$0xf]
        %v561 = vld [vmem:[%s552 + $0x20] sm:$0xf]
        %v562 = vld [vmem:[%s552 + $0x24] sm:$0xf]
        %v563 = vld [vmem:[%s552 + $0x28] sm:$0xf]
        %v564 = vld [vmem:[%s552 + $0x2c] sm:$0xf]
        %v565 = vld [vmem:[%s552 + $0x30] sm:$0xf]
        %v566 = vld [vmem:[%s552 + $0x34] sm:$0xf]
        %v567 = vld [vmem:[%s552 + $0x38] sm:$0xf]
        %v568 = vld [vmem:[%s552 + $0x3c] sm:$0xf]
        %v585 = vunpack.c.l.b16 %v553
        %v586 = vunpack.c.l.b16 %v554
        %v587 = vunpack.c.l.b16 %v555
        %v588 = vunpack.c.l.b16 %v556
        %v589 = vunpack.c.l.b16 %v557
        %v590 = vunpack.c.l.b16 %v558
        %v591 = vunpack.c.l.b16 %v559
        %v592 = vunpack.c.l.b16 %v560
        %v593 = vunpack.c.l.b16 %v561
        %v594 = vunpack.c.l.b16 %v562
        %v595 = vunpack.c.l.b16 %v563
        %v596 = vunpack.c.l.b16 %v564
        %v597 = vunpack.c.l.b16 %v565
        %v598 = vunpack.c.l.b16 %v566
        %v599 = vunpack.c.l.b16 %v567
        %v600 = vunpack.c.l.b16 %v568
        %v601 = vpack.c.b16 %v586, %v585
        %v602 = vpack.c.b16 %v588, %v587
        %v603 = vpack.c.b16 %v590, %v589
        %v604 = vpack.c.b16 %v592, %v591
        %v605 = vpack.c.b16 %v594, %v593
        %v606 = vpack.c.b16 %v596, %v595
        %v607 = vpack.c.b16 %v598, %v597
        %v608 = vpack.c.b16 %v600, %v599
        %617 = vmatprep.subr.bf16.mxu0 0
        %618 = vmatpush1.bf16.msra.mxu0 %v601
        %619 = vmatprep.subr.bf16.mxu0 0
        %620 = vmatpush1.bf16.msra.mxu0 %v602
        %621 = vmatprep.subr.bf16.mxu0 0
        %622 = vmatpush1.bf16.msra.mxu0 %v603
        %623 = vmatprep.subr.bf16.mxu0 0
        %624 = vmatpush1.bf16.msra.mxu0 %v604
        %625 = vmatprep.subr.bf16.mxu0 0
        %626 = vmatpush1.bf16.msra.mxu0 %v605
        %627 = vmatprep.subr.bf16.mxu0 0
        %628 = vmatpush1.bf16.msra.mxu0 %v606
        %629 = vmatprep.subr.bf16.mxu0 0
        %630 = vmatpush1.bf16.msra.mxu0 %v607
        %631 = vmatprep.subr.bf16.mxu0 0
        %632 = vmatpush1.bf16.msra.mxu0 %v608
        %633 = vmatprep.subr.bf16.mxu0 0
        %634 = vmatpush1.bf16.msra.mxu0 0
        %635 = vmatprep.subr.bf16.mxu0 0
        %636 = vmatpush1.bf16.msra.mxu0 0
        %637 = vmatprep.subr.bf16.mxu0 0
        %638 = vmatpush1.bf16.msra.mxu0 0
        %639 = vmatprep.subr.bf16.mxu0 0
        %640 = vmatpush1.bf16.msra.mxu0 0
        %641 = vmatprep.subr.bf16.mxu0 0
        %642 = vmatpush1.bf16.msra.mxu0 0
        %643 = vmatprep.subr.bf16.mxu0 0
        %644 = vmatpush1.bf16.msra.mxu0 0
        %645 = vmatprep.subr.bf16.mxu0 0
        %646 = vmatpush1.bf16.msra.mxu0 0
        %647 = vmatprep.subr.bf16.mxu0 0
        %648 = vmatpush1.bf16.msra.mxu0 0
        %649 = vmatprep.mubr.bf16.mxu0 0
        %650 = vmatmul.mubr.bf16.gmra.mrb[0].mxu0 %v551
        %v651 = vpop.f32.mrb[0].mxu0
        %v652 = vadd.f32 0.0, %v651
        %v653 = vpop.f32.mrb[0].mxu0
        %v654 = vpop.f32.mrb[0].mxu0
        %v655 = vadd.f32 0.0, %v654
        %v656 = vpop.f32.mrb[0].mxu0
        %657 = vdwg.mxu0
        %v658 = vadd.f32 %v531, %v652
        %v659 = vadd.f32 %v534, %v655
        %v660 = vld [vmem:[%s302 + $0x7] sm:$0xff]
        %v661 = vld [vmem:[%s302 + $0xf] sm:$0xff]
        %v662 = vmul.f32 %v660, %v313
        %v663 = vmul.f32 %v661, %v318
        %v664 = vpack.c.bf16 %v663, %v662
        %s665 = scalar_lea.vmem %s1, 192
        %v666 = vld [vmem:[%s665] sm:$0xf]
        %v667 = vld [vmem:[%s665 + $0x4] sm:$0xf]
        %v668 = vld [vmem:[%s665 + $0x8] sm:$0xf]
        %v669 = vld [vmem:[%s665 + $0xc] sm:$0xf]
        %v670 = vld [vmem:[%s665 + $0x10] sm:$0xf]
        %v671 = vld [vmem:[%s665 + $0x14] sm:$0xf]
        %v672 = vld [vmem:[%s665 + $0x18] sm:$0xf]
        %v673 = vld [vmem:[%s665 + $0x1c] sm:$0xf]
        %v674 = vld [vmem:[%s665 + $0x20] sm:$0xf]
        %v675 = vld [vmem:[%s665 + $0x24] sm:$0xf]
        %v676 = vld [vmem:[%s665 + $0x28] sm:$0xf]
        %v677 = vld [vmem:[%s665 + $0x2c] sm:$0xf]
        %v678 = vld [vmem:[%s665 + $0x30] sm:$0xf]
        %v679 = vld [vmem:[%s665 + $0x34] sm:$0xf]
        %v680 = vld [vmem:[%s665 + $0x38] sm:$0xf]
        %v681 = vld [vmem:[%s665 + $0x3c] sm:$0xf]
        %v698 = vunpack.c.l.b16 %v666
        %v699 = vunpack.c.l.b16 %v667
        %v700 = vunpack.c.l.b16 %v668
        %v701 = vunpack.c.l.b16 %v669
        %v702 = vunpack.c.l.b16 %v670
        %v703 = vunpack.c.l.b16 %v671
        %v704 = vunpack.c.l.b16 %v672
        %v705 = vunpack.c.l.b16 %v673
        %v706 = vunpack.c.l.b16 %v674
        %v707 = vunpack.c.l.b16 %v675
        %v708 = vunpack.c.l.b16 %v676
        %v709 = vunpack.c.l.b16 %v677
        %v710 = vunpack.c.l.b16 %v678
        %v711 = vunpack.c.l.b16 %v679
        %v712 = vunpack.c.l.b16 %v680
        %v713 = vunpack.c.l.b16 %v681
        %v714 = vpack.c.b16 %v699, %v698
        %v715 = vpack.c.b16 %v701, %v700
        %v716 = vpack.c.b16 %v703, %v702
        %v717 = vpack.c.b16 %v705, %v704
        %v718 = vpack.c.b16 %v707, %v706
        %v719 = vpack.c.b16 %v709, %v708
        %v720 = vpack.c.b16 %v711, %v710
        %v721 = vpack.c.b16 %v713, %v712
        %730 = vmatprep.subr.bf16.mxu0 0
        %731 = vmatpush1.bf16.msra.mxu0 %v714
        %732 = vmatprep.subr.bf16.mxu0 0
        %733 = vmatpush1.bf16.msra.mxu0 %v715
        %734 = vmatprep.subr.bf16.mxu0 0
        %735 = vmatpush1.bf16.msra.mxu0 %v716
        %736 = vmatprep.subr.bf16.mxu0 0
        %737 = vmatpush1.bf16.msra.mxu0 %v717
        %738 = vmatprep.subr.bf16.mxu0 0
        %739 = vmatpush1.bf16.msra.mxu0 %v718
        %740 = vmatprep.subr.bf16.mxu0 0
        %741 = vmatpush1.bf16.msra.mxu0 %v719
        %742 = vmatprep.subr.bf16.mxu0 0
        %743 = vmatpush1.bf16.msra.mxu0 %v720
        %744 = vmatprep.subr.bf16.mxu0 0
        %745 = vmatpush1.bf16.msra.mxu0 %v721
        %746 = vmatprep.subr.bf16.mxu0 0
        %747 = vmatpush1.bf16.msra.mxu0 0
        %748 = vmatprep.subr.bf16.mxu0 0
        %749 = vmatpush1.bf16.msra.mxu0 0
        %750 = vmatprep.subr.bf16.mxu0 0
        %751 = vmatpush1.bf16.msra.mxu0 0
        %752 = vmatprep.subr.bf16.mxu0 0
        %753 = vmatpush1.bf16.msra.mxu0 0
        %754 = vmatprep.subr.bf16.mxu0 0
        %755 = vmatpush1.bf16.msra.mxu0 0
        %756 = vmatprep.subr.bf16.mxu0 0
        %757 = vmatpush1.bf16.msra.mxu0 0
        %758 = vmatprep.subr.bf16.mxu0 0
        %759 = vmatpush1.bf16.msra.mxu0 0
        %760 = vmatprep.subr.bf16.mxu0 0
        %761 = vmatpush1.bf16.msra.mxu0 0
        %762 = vmatprep.mubr.bf16.mxu0 0
        %763 = vmatmul.mubr.bf16.gmra.mrb[0].mxu0 %v664
        %v764 = vpop.f32.mrb[0].mxu0
        %v765 = vadd.f32 0.0, %v764
        %v766 = vpop.f32.mrb[0].mxu0
        %v767 = vpop.f32.mrb[0].mxu0
        %v768 = vadd.f32 0.0, %v767
        %v769 = vpop.f32.mrb[0].mxu0
        %770 = vdwg.mxu0
        %v771 = vadd.f32 %v658, %v765
        %v772 = vadd.f32 %v659, %v768
        %v773 = vld [vmem:[%s302 + $0x8] sm:$0xff]
        %v774 = vld [vmem:[%s302 + $0x10] sm:$0xff]
        %v775 = vpack.c.bf16 %v774, %v773
        %s776 = scalar_lea.vmem %s1, 256
        %v777 = vld [vmem:[%s776] sm:$0xf]
        %v778 = vld [vmem:[%s776 + $0x4] sm:$0xf]
        %v779 = vld [vmem:[%s776 + $0x8] sm:$0xf]
        %v780 = vld [vmem:[%s776 + $0xc] sm:$0xf]
        %v781 = vld [vmem:[%s776 + $0x10] sm:$0xf]
        %v782 = vld [vmem:[%s776 + $0x14] sm:$0xf]
        %v783 = vld [vmem:[%s776 + $0x18] sm:$0xf]
        %v784 = vld [vmem:[%s776 + $0x1c] sm:$0xf]
        %v785 = vld [vmem:[%s776 + $0x20] sm:$0xf]
        %v786 = vld [vmem:[%s776 + $0x24] sm:$0xf]
        %v787 = vld [vmem:[%s776 + $0x28] sm:$0xf]
        %v788 = vld [vmem:[%s776 + $0x2c] sm:$0xf]
        %v789 = vld [vmem:[%s776 + $0x30] sm:$0xf]
        %v790 = vld [vmem:[%s776 + $0x34] sm:$0xf]
        %v791 = vld [vmem:[%s776 + $0x38] sm:$0xf]
        %v792 = vld [vmem:[%s776 + $0x3c] sm:$0xf]
        %v809 = vunpack.c.l.b16 %v777
        %v810 = vunpack.c.l.b16 %v778
        %v811 = vunpack.c.l.b16 %v779
        %v812 = vunpack.c.l.b16 %v780
        %v813 = vunpack.c.l.b16 %v781
        %v814 = vunpack.c.l.b16 %v782
        %v815 = vunpack.c.l.b16 %v783
        %v816 = vunpack.c.l.b16 %v784
        %v817 = vunpack.c.l.b16 %v785
        %v818 = vunpack.c.l.b16 %v786
        %v819 = vunpack.c.l.b16 %v787
        %v820 = vunpack.c.l.b16 %v788
        %v821 = vunpack.c.l.b16 %v789
        %v822 = vunpack.c.l.b16 %v790
        %v823 = vunpack.c.l.b16 %v791
        %v824 = vunpack.c.l.b16 %v792
        %v825 = vpack.c.b16 %v810, %v809
        %v826 = vpack.c.b16 %v812, %v811
        %v827 = vpack.c.b16 %v814, %v813
        %v828 = vpack.c.b16 %v816, %v815
        %v829 = vpack.c.b16 %v818, %v817
        %v830 = vpack.c.b16 %v820, %v819
        %v831 = vpack.c.b16 %v822, %v821
        %v832 = vpack.c.b16 %v824, %v823
        %841 = vmatprep.subr.bf16.mxu0 0
        %842 = vmatpush1.bf16.msra.mxu0 %v825
        %843 = vmatprep.subr.bf16.mxu0 0
        %844 = vmatpush1.bf16.msra.mxu0 %v826
        %845 = vmatprep.subr.bf16.mxu0 0
        %846 = vmatpush1.bf16.msra.mxu0 %v827
        %847 = vmatprep.subr.bf16.mxu0 0
        %848 = vmatpush1.bf16.msra.mxu0 %v828
        %849 = vmatprep.subr.bf16.mxu0 0
        %850 = vmatpush1.bf16.msra.mxu0 %v829
        %851 = vmatprep.subr.bf16.mxu0 0
        %852 = vmatpush1.bf16.msra.mxu0 %v830
        %853 = vmatprep.subr.bf16.mxu0 0
        %854 = vmatpush1.bf16.msra.mxu0 %v831
        %855 = vmatprep.subr.bf16.mxu0 0
        %856 = vmatpush1.bf16.msra.mxu0 %v832
        %857 = vmatprep.subr.bf16.mxu0 0
        %858 = vmatpush1.bf16.msra.mxu0 0
        %859 = vmatprep.subr.bf16.mxu0 0
        %860 = vmatpush1.bf16.msra.mxu0 0
        %861 = vmatprep.subr.bf16.mxu0 0
        %862 = vmatpush1.bf16.msra.mxu0 0
        %863 = vmatprep.subr.bf16.mxu0 0
        %864 = vmatpush1.bf16.msra.mxu0 0
        %865 = vmatprep.subr.bf16.mxu0 0
        %866 = vmatpush1.bf16.msra.mxu0 0
        %867 = vmatprep.subr.bf16.mxu0 0
        %868 = vmatpush1.bf16.msra.mxu0 0
        %869 = vmatprep.subr.bf16.mxu0 0
        %870 = vmatpush1.bf16.msra.mxu0 0
        %871 = vmatprep.subr.bf16.mxu0 0
        %872 = vmatpush1.bf16.msra.mxu0 0
        %873 = vmatprep.mubr.bf16.mxu0 0
        %874 = vmatmul.mubr.bf16.gmra.mrb[0].mxu0 %v775
        %v875 = vpop.f32.mrb[0].mxu0
        %v876 = vadd.f32 0.0, %v875
        %v877 = vpop.f32.mrb[0].mxu0
        %v878 = vpop.f32.mrb[0].mxu0
        %v879 = vadd.f32 0.0, %v878
        %v880 = vpop.f32.mrb[0].mxu0
        %881 = vdwg.mxu0
        %v882 = vadd.f32 %v771, %v876
        %v883 = vadd.f32 %v772, %v879
        %v884 = vld [vmem:[%s302 + $0x9] sm:$0xff]
        %v885 = vld [vmem:[%s302 + $0x11] sm:$0xff]
        %v886 = vmul.f32 %v884, %v542
        %v887 = vmul.f32 %v885, %v547
        %v888 = vpack.c.bf16 %v887, %v886
        %s889 = scalar_lea.vmem %s1, 320
        %v890 = vld [vmem:[%s889] sm:$0xf]
        %v891 = vld [vmem:[%s889 + $0x4] sm:$0xf]
        %v892 = vld [vmem:[%s889 + $0x8] sm:$0xf]
        %v893 = vld [vmem:[%s889 + $0xc] sm:$0xf]
        %v894 = vld [vmem:[%s889 + $0x10] sm:$0xf]
        %v895 = vld [vmem:[%s889 + $0x14] sm:$0xf]
        %v896 = vld [vmem:[%s889 + $0x18] sm:$0xf]
        %v897 = vld [vmem:[%s889 + $0x1c] sm:$0xf]
        %v898 = vld [vmem:[%s889 + $0x20] sm:$0xf]
        %v899 = vld [vmem:[%s889 + $0x24] sm:$0xf]
        %v900 = vld [vmem:[%s889 + $0x28] sm:$0xf]
        %v901 = vld [vmem:[%s889 + $0x2c] sm:$0xf]
        %v902 = vld [vmem:[%s889 + $0x30] sm:$0xf]
        %v903 = vld [vmem:[%s889 + $0x34] sm:$0xf]
        %v904 = vld [vmem:[%s889 + $0x38] sm:$0xf]
        %v905 = vld [vmem:[%s889 + $0x3c] sm:$0xf]
        %v922 = vunpack.c.l.b16 %v890
        %v923 = vunpack.c.l.b16 %v891
        %v924 = vunpack.c.l.b16 %v892
        %v925 = vunpack.c.l.b16 %v893
        %v926 = vunpack.c.l.b16 %v894
        %v927 = vunpack.c.l.b16 %v895
        %v928 = vunpack.c.l.b16 %v896
        %v929 = vunpack.c.l.b16 %v897
        %v930 = vunpack.c.l.b16 %v898
        %v931 = vunpack.c.l.b16 %v899
        %v932 = vunpack.c.l.b16 %v900
        %v933 = vunpack.c.l.b16 %v901
        %v934 = vunpack.c.l.b16 %v902
        %v935 = vunpack.c.l.b16 %v903
        %v936 = vunpack.c.l.b16 %v904
        %v937 = vunpack.c.l.b16 %v905
        %v938 = vpack.c.b16 %v923, %v922
        %v939 = vpack.c.b16 %v925, %v924
        %v940 = vpack.c.b16 %v927, %v926
        %v941 = vpack.c.b16 %v929, %v928
        %v942 = vpack.c.b16 %v931, %v930
        %v943 = vpack.c.b16 %v933, %v932
        %v944 = vpack.c.b16 %v935, %v934
        %v945 = vpack.c.b16 %v937, %v936
        %954 = vmatprep.subr.bf16.mxu0 0
        %955 = vmatpush1.bf16.msra.mxu0 %v938
        %956 = vmatprep.subr.bf16.mxu0 0
        %957 = vmatpush1.bf16.msra.mxu0 %v939
        %958 = vmatprep.subr.bf16.mxu0 0
        %959 = vmatpush1.bf16.msra.mxu0 %v940
        %960 = vmatprep.subr.bf16.mxu0 0
        %961 = vmatpush1.bf16.msra.mxu0 %v941
        %962 = vmatprep.subr.bf16.mxu0 0
        %963 = vmatpush1.bf16.msra.mxu0 %v942
        %964 = vmatprep.subr.bf16.mxu0 0
        %965 = vmatpush1.bf16.msra.mxu0 %v943
        %966 = vmatprep.subr.bf16.mxu0 0
        %967 = vmatpush1.bf16.msra.mxu0 %v944
        %968 = vmatprep.subr.bf16.mxu0 0
        %969 = vmatpush1.bf16.msra.mxu0 %v945
        %970 = vmatprep.subr.bf16.mxu0 0
        %971 = vmatpush1.bf16.msra.mxu0 0
        %972 = vmatprep.subr.bf16.mxu0 0
        %973 = vmatpush1.bf16.msra.mxu0 0
        %974 = vmatprep.subr.bf16.mxu0 0
        %975 = vmatpush1.bf16.msra.mxu0 0
        %976 = vmatprep.subr.bf16.mxu0 0
        %977 = vmatpush1.bf16.msra.mxu0 0
        %978 = vmatprep.subr.bf16.mxu0 0
        %979 = vmatpush1.bf16.msra.mxu0 0
        %980 = vmatprep.subr.bf16.mxu0 0
        %981 = vmatpush1.bf16.msra.mxu0 0
        %982 = vmatprep.subr.bf16.mxu0 0
        %983 = vmatpush1.bf16.msra.mxu0 0
        %984 = vmatprep.subr.bf16.mxu0 0
        %985 = vmatpush1.bf16.msra.mxu0 0
        %986 = vmatprep.mubr.bf16.mxu0 0
        %987 = vmatmul.mubr.bf16.gmra.mrb[0].mxu0 %v888
        %v988 = vpop.f32.mrb[0].mxu0
        %v989 = vadd.f32 0.0, %v988
        %v990 = vpop.f32.mrb[0].mxu0
        %v991 = vpop.f32.mrb[0].mxu0
        %v992 = vadd.f32 0.0, %v991
        %v993 = vpop.f32.mrb[0].mxu0
        %994 = vdwg.mxu0
        %v995 = vadd.f32 %v882, %v989
        %v996 = vadd.f32 %v883, %v992
        %v997 = vld [vmem:[%s302 + $0xb] sm:$0xff]
        %v998 = vld [vmem:[%s302 + $0x13] sm:$0xff]
        %v999 = vmul.f32 %v997, %v313
        %v1000 = vmul.f32 %v998, %v318
        %v1001 = vpack.c.bf16 %v1000, %v999
        %s1002 = scalar_lea.vmem %s1, 384
        %v1003 = vld [vmem:[%s1002] sm:$0xf]
        %v1004 = vld [vmem:[%s1002 + $0x4] sm:$0xf]
        %v1005 = vld [vmem:[%s1002 + $0x8] sm:$0xf]
        %v1006 = vld [vmem:[%s1002 + $0xc] sm:$0xf]
        %v1007 = vld [vmem:[%s1002 + $0x10] sm:$0xf]
        %v1008 = vld [vmem:[%s1002 + $0x14] sm:$0xf]
        %v1009 = vld [vmem:[%s1002 + $0x18] sm:$0xf]
        %v1010 = vld [vmem:[%s1002 + $0x1c] sm:$0xf]
        %v1011 = vld [vmem:[%s1002 + $0x20] sm:$0xf]
        %v1012 = vld [vmem:[%s1002 + $0x24] sm:$0xf]
        %v1013 = vld [vmem:[%s1002 + $0x28] sm:$0xf]
        %v1014 = vld [vmem:[%s1002 + $0x2c] sm:$0xf]
        %v1015 = vld [vmem:[%s1002 + $0x30] sm:$0xf]
        %v1016 = vld [vmem:[%s1002 + $0x34] sm:$0xf]
        %v1017 = vld [vmem:[%s1002 + $0x38] sm:$0xf]
        %v1018 = vld [vmem:[%s1002 + $0x3c] sm:$0xf]
        %v1035 = vunpack.c.l.b16 %v1003
        %v1036 = vunpack.c.l.b16 %v1004
        %v1037 = vunpack.c.l.b16 %v1005
        %v1038 = vunpack.c.l.b16 %v1006
        %v1039 = vunpack.c.l.b16 %v1007
        %v1040 = vunpack.c.l.b16 %v1008
        %v1041 = vunpack.c.l.b16 %v1009
        %v1042 = vunpack.c.l.b16 %v1010
        %v1043 = vunpack.c.l.b16 %v1011
        %v1044 = vunpack.c.l.b16 %v1012
        %v1045 = vunpack.c.l.b16 %v1013
        %v1046 = vunpack.c.l.b16 %v1014
        %v1047 = vunpack.c.l.b16 %v1015
        %v1048 = vunpack.c.l.b16 %v1016
        %v1049 = vunpack.c.l.b16 %v1017
        %v1050 = vunpack.c.l.b16 %v1018
        %v1051 = vpack.c.b16 %v1036, %v1035
        %v1052 = vpack.c.b16 %v1038, %v1037
        %v1053 = vpack.c.b16 %v1040, %v1039
        %v1054 = vpack.c.b16 %v1042, %v1041
        %v1055 = vpack.c.b16 %v1044, %v1043
        %v1056 = vpack.c.b16 %v1046, %v1045
        %v1057 = vpack.c.b16 %v1048, %v1047
        %v1058 = vpack.c.b16 %v1050, %v1049
        %1067 = vmatprep.subr.bf16.mxu0 0
        %1068 = vmatpush1.bf16.msra.mxu0 %v1051
        %1069 = vmatprep.subr.bf16.mxu0 0
        %1070 = vmatpush1.bf16.msra.mxu0 %v1052
        %1071 = vmatprep.subr.bf16.mxu0 0
        %1072 = vmatpush1.bf16.msra.mxu0 %v1053
        %1073 = vmatprep.subr.bf16.mxu0 0
        %1074 = vmatpush1.bf16.msra.mxu0 %v1054
        %1075 = vmatprep.subr.bf16.mxu0 0
        %1076 = vmatpush1.bf16.msra.mxu0 %v1055
        %1077 = vmatprep.subr.bf16.mxu0 0
        %1078 = vmatpush1.bf16.msra.mxu0 %v1056
        %1079 = vmatprep.subr.bf16.mxu0 0
        %1080 = vmatpush1.bf16.msra.mxu0 %v1057
        %1081 = vmatprep.subr.bf16.mxu0 0
        %1082 = vmatpush1.bf16.msra.mxu0 %v1058
        %1083 = vmatprep.subr.bf16.mxu0 0
        %1084 = vmatpush1.bf16.msra.mxu0 0
        %1085 = vmatprep.subr.bf16.mxu0 0
        %1086 = vmatpush1.bf16.msra.mxu0 0
        %1087 = vmatprep.subr.bf16.mxu0 0
        %1088 = vmatpush1.bf16.msra.mxu0 0
        %1089 = vmatprep.subr.bf16.mxu0 0
        %1090 = vmatpush1.bf16.msra.mxu0 0
        %1091 = vmatprep.subr.bf16.mxu0 0
        %1092 = vmatpush1.bf16.msra.mxu0 0
        %1093 = vmatprep.subr.bf16.mxu0 0
        %1094 = vmatpush1.bf16.msra.mxu0 0
        %1095 = vmatprep.subr.bf16.mxu0 0
        %1096 = vmatpush1.bf16.msra.mxu0 0
        %1097 = vmatprep.subr.bf16.mxu0 0
        %1098 = vmatpush1.bf16.msra.mxu0 0
        %1099 = vmatprep.mubr.bf16.mxu0 0
        %1100 = vmatmul.mubr.bf16.gmra.mrb[0].mxu0 %v1001
        %v1101 = vpop.f32.mrb[0].mxu0
        %v1102 = vadd.f32 0.0, %v1101
        %v1103 = vpop.f32.mrb[0].mxu0
        %v1104 = vpop.f32.mrb[0].mxu0
        %v1105 = vadd.f32 0.0, %v1104
        %v1106 = vpop.f32.mrb[0].mxu0
        %1107 = vdwg.mxu0
        %v1108 = vadd.f32 %v995, %v1102
        %v1109 = vadd.f32 %v996, %v1105
        %v1110 = vld [vmem:[%s302 + $0xc] sm:$0xff]
        %v1111 = vld [vmem:[%s302 + $0x14] sm:$0xff]
        %v1112 = vpack.c.bf16 %v1111, %v1110
        %s1113 = scalar_lea.vmem %s1, 448
        %v1114 = vld [vmem:[%s1113] sm:$0xf]
        %v1115 = vld [vmem:[%s1113 + $0x4] sm:$0xf]
        %v1116 = vld [vmem:[%s1113 + $0x8] sm:$0xf]
        %v1117 = vld [vmem:[%s1113 + $0xc] sm:$0xf]
        %v1118 = vld [vmem:[%s1113 + $0x10] sm:$0xf]
        %v1119 = vld [vmem:[%s1113 + $0x14] sm:$0xf]
        %v1120 = vld [vmem:[%s1113 + $0x18] sm:$0xf]
        %v1121 = vld [vmem:[%s1113 + $0x1c] sm:$0xf]
        %v1122 = vld [vmem:[%s1113 + $0x20] sm:$0xf]
        %v1123 = vld [vmem:[%s1113 + $0x24] sm:$0xf]
        %v1124 = vld [vmem:[%s1113 + $0x28] sm:$0xf]
        %v1125 = vld [vmem:[%s1113 + $0x2c] sm:$0xf]
        %v1126 = vld [vmem:[%s1113 + $0x30] sm:$0xf]
        %v1127 = vld [vmem:[%s1113 + $0x34] sm:$0xf]
        %v1128 = vld [vmem:[%s1113 + $0x38] sm:$0xf]
        %v1129 = vld [vmem:[%s1113 + $0x3c] sm:$0xf]
        %v1146 = vunpack.c.l.b16 %v1114
        %v1147 = vunpack.c.l.b16 %v1115
        %v1148 = vunpack.c.l.b16 %v1116
        %v1149 = vunpack.c.l.b16 %v1117
        %v1150 = vunpack.c.l.b16 %v1118
        %v1151 = vunpack.c.l.b16 %v1119
        %v1152 = vunpack.c.l.b16 %v1120
        %v1153 = vunpack.c.l.b16 %v1121
        %v1154 = vunpack.c.l.b16 %v1122
        %v1155 = vunpack.c.l.b16 %v1123
        %v1156 = vunpack.c.l.b16 %v1124
        %v1157 = vunpack.c.l.b16 %v1125
        %v1158 = vunpack.c.l.b16 %v1126
        %v1159 = vunpack.c.l.b16 %v1127
        %v1160 = vunpack.c.l.b16 %v1128
        %v1161 = vunpack.c.l.b16 %v1129
        %v1162 = vpack.c.b16 %v1147, %v1146
        %v1163 = vpack.c.b16 %v1149, %v1148
        %v1164 = vpack.c.b16 %v1151, %v1150
        %v1165 = vpack.c.b16 %v1153, %v1152
        %v1166 = vpack.c.b16 %v1155, %v1154
        %v1167 = vpack.c.b16 %v1157, %v1156
        %v1168 = vpack.c.b16 %v1159, %v1158
        %v1169 = vpack.c.b16 %v1161, %v1160
        %1178 = vmatprep.subr.bf16.mxu0 0
        %1179 = vmatpush1.bf16.msra.mxu0 %v1162
        %1180 = vmatprep.subr.bf16.mxu0 0
        %1181 = vmatpush1.bf16.msra.mxu0 %v1163
        %1182 = vmatprep.subr.bf16.mxu0 0
        %1183 = vmatpush1.bf16.msra.mxu0 %v1164
        %1184 = vmatprep.subr.bf16.mxu0 0
        %1185 = vmatpush1.bf16.msra.mxu0 %v1165
        %1186 = vmatprep.subr.bf16.mxu0 0
        %1187 = vmatpush1.bf16.msra.mxu0 %v1166
        %1188 = vmatprep.subr.bf16.mxu0 0
        %1189 = vmatpush1.bf16.msra.mxu0 %v1167
        %1190 = vmatprep.subr.bf16.mxu0 0
        %1191 = vmatpush1.bf16.msra.mxu0 %v1168
        %1192 = vmatprep.subr.bf16.mxu0 0
        %1193 = vmatpush1.bf16.msra.mxu0 %v1169
        %1194 = vmatprep.subr.bf16.mxu0 0
        %1195 = vmatpush1.bf16.msra.mxu0 0
        %1196 = vmatprep.subr.bf16.mxu0 0
        %1197 = vmatpush1.bf16.msra.mxu0 0
        %1198 = vmatprep.subr.bf16.mxu0 0
        %1199 = vmatpush1.bf16.msra.mxu0 0
        %1200 = vmatprep.subr.bf16.mxu0 0
        %1201 = vmatpush1.bf16.msra.mxu0 0
        %1202 = vmatprep.subr.bf16.mxu0 0
        %1203 = vmatpush1.bf16.msra.mxu0 0
        %1204 = vmatprep.subr.bf16.mxu0 0
        %1205 = vmatpush1.bf16.msra.mxu0 0
        %1206 = vmatprep.subr.bf16.mxu0 0
        %1207 = vmatpush1.bf16.msra.mxu0 0
        %1208 = vmatprep.subr.bf16.mxu0 0
        %1209 = vmatpush1.bf16.msra.mxu0 0
        %1210 = vmatprep.mubr.bf16.mxu0 0
        %1211 = vmatmul.mubr.bf16.gmra.mrb[0].mxu0 %v1112
        %v1212 = vpop.f32.mrb[0].mxu0
        %v1213 = vadd.f32 0.0, %v1212
        %v1214 = vpop.f32.mrb[0].mxu0
        %v1215 = vpop.f32.mrb[0].mxu0
        %v1216 = vadd.f32 0.0, %v1215
        %v1217 = vpop.f32.mrb[0].mxu0
        %1218 = vdwg.mxu0
        %v1219 = vadd.f32 %v1108, %v1213
        %v1220 = vadd.f32 %v1109, %v1216
        %v1221 = vld [vmem:[%s302 + $0xd] sm:$0xff]
        %v1222 = vld [vmem:[%s302 + $0x15] sm:$0xff]
        %v1223 = vmul.f32 %v1221, %v542
        %v1224 = vmul.f32 %v1222, %v547
        %v1225 = vpack.c.bf16 %v1224, %v1223
        %s1226 = scalar_lea.vmem %s1, 512
        %v1227 = vld [vmem:[%s1226] sm:$0xf]
        %v1228 = vld [vmem:[%s1226 + $0x4] sm:$0xf]
        %v1229 = vld [vmem:[%s1226 + $0x8] sm:$0xf]
        %v1230 = vld [vmem:[%s1226 + $0xc] sm:$0xf]
        %v1231 = vld [vmem:[%s1226 + $0x10] sm:$0xf]
        %v1232 = vld [vmem:[%s1226 + $0x14] sm:$0xf]
        %v1233 = vld [vmem:[%s1226 + $0x18] sm:$0xf]
        %v1234 = vld [vmem:[%s1226 + $0x1c] sm:$0xf]
        %v1235 = vld [vmem:[%s1226 + $0x20] sm:$0xf]
        %v1236 = vld [vmem:[%s1226 + $0x24] sm:$0xf]
        %v1237 = vld [vmem:[%s1226 + $0x28] sm:$0xf]
        %v1238 = vld [vmem:[%s1226 + $0x2c] sm:$0xf]
        %v1239 = vld [vmem:[%s1226 + $0x30] sm:$0xf]
        %v1240 = vld [vmem:[%s1226 + $0x34] sm:$0xf]
        %v1241 = vld [vmem:[%s1226 + $0x38] sm:$0xf]
        %v1242 = vld [vmem:[%s1226 + $0x3c] sm:$0xf]
        %v1259 = vunpack.c.l.b16 %v1227
        %v1260 = vunpack.c.l.b16 %v1228
        %v1261 = vunpack.c.l.b16 %v1229
        %v1262 = vunpack.c.l.b16 %v1230
        %v1263 = vunpack.c.l.b16 %v1231
        %v1264 = vunpack.c.l.b16 %v1232
        %v1265 = vunpack.c.l.b16 %v1233
        %v1266 = vunpack.c.l.b16 %v1234
        %v1267 = vunpack.c.l.b16 %v1235
        %v1268 = vunpack.c.l.b16 %v1236
        %v1269 = vunpack.c.l.b16 %v1237
        %v1270 = vunpack.c.l.b16 %v1238
        %v1271 = vunpack.c.l.b16 %v1239
        %v1272 = vunpack.c.l.b16 %v1240
        %v1273 = vunpack.c.l.b16 %v1241
        %v1274 = vunpack.c.l.b16 %v1242
        %v1275 = vpack.c.b16 %v1260, %v1259
        %v1276 = vpack.c.b16 %v1262, %v1261
        %v1277 = vpack.c.b16 %v1264, %v1263
        %v1278 = vpack.c.b16 %v1266, %v1265
        %v1279 = vpack.c.b16 %v1268, %v1267
        %v1280 = vpack.c.b16 %v1270, %v1269
        %v1281 = vpack.c.b16 %v1272, %v1271
        %v1282 = vpack.c.b16 %v1274, %v1273
        %1291 = vmatprep.subr.bf16.mxu0 0
        %1292 = vmatpush1.bf16.msra.mxu0 %v1275
        %1293 = vmatprep.subr.bf16.mxu0 0
        %1294 = vmatpush1.bf16.msra.mxu0 %v1276
        %1295 = vmatprep.subr.bf16.mxu0 0
        %1296 = vmatpush1.bf16.msra.mxu0 %v1277
        %1297 = vmatprep.subr.bf16.mxu0 0
        %1298 = vmatpush1.bf16.msra.mxu0 %v1278
        %1299 = vmatprep.subr.bf16.mxu0 0
        %1300 = vmatpush1.bf16.msra.mxu0 %v1279
        %1301 = vmatprep.subr.bf16.mxu0 0
        %1302 = vmatpush1.bf16.msra.mxu0 %v1280
        %1303 = vmatprep.subr.bf16.mxu0 0
        %1304 = vmatpush1.bf16.msra.mxu0 %v1281
        %1305 = vmatprep.subr.bf16.mxu0 0
        %1306 = vmatpush1.bf16.msra.mxu0 %v1282
        %1307 = vmatprep.subr.bf16.mxu0 0
        %1308 = vmatpush1.bf16.msra.mxu0 0
        %1309 = vmatprep.subr.bf16.mxu0 0
        %1310 = vmatpush1.bf16.msra.mxu0 0
        %1311 = vmatprep.subr.bf16.mxu0 0
        %1312 = vmatpush1.bf16.msra.mxu0 0
        %1313 = vmatprep.subr.bf16.mxu0 0
        %1314 = vmatpush1.bf16.msra.mxu0 0
        %1315 = vmatprep.subr.bf16.mxu0 0
        %1316 = vmatpush1.bf16.msra.mxu0 0
        %1317 = vmatprep.subr.bf16.mxu0 0
        %1318 = vmatpush1.bf16.msra.mxu0 0
        %1319 = vmatprep.subr.bf16.mxu0 0
        %1320 = vmatpush1.bf16.msra.mxu0 0
        %1321 = vmatprep.subr.bf16.mxu0 0
        %1322 = vmatpush1.bf16.msra.mxu0 0
        %1323 = vmatprep.mubr.bf16.mxu0 0
        %1324 = vmatmul.mubr.bf16.gmra.mrb[0].mxu0 %v1225
        %v1325 = vpop.f32.mrb[0].mxu0
        %v1326 = vadd.f32 0.0, %v1325
        %v1327 = vpop.f32.mrb[0].mxu0
        %v1328 = vpop.f32.mrb[0].mxu0
        %v1329 = vadd.f32 0.0, %v1328
        %v1330 = vpop.f32.mrb[0].mxu0
        %1331 = vdwg.mxu0
        %v1332 = vadd.f32 %v1219, %v1326
        %v1333 = vadd.f32 %v1220, %v1329
        %v1334 = vld [vmem:[%s2] sm:$0x1]
        %v1336 = vlaneseq
        %v1337 = vshrl.u32 %v1336, 7
        %v1338 = vsub.s32 0, %v1337
        %v1339 = vrot.slane %v1334, %v1338
        %v1341 = vadd.f32 %v1332, %v1339
        %v1342 = vadd.f32 %v1333, %v1339
        %v1343 = vmax.f32 %v1341, 0.0
        %v1344 = vmax.f32 %v1342, 0.0
        %1345 = vst [vmem:[#allocation2] sm:$0xff] %v1343
        %1346 = vst [vmem:[#allocation2 + $0x8] sm:$0xff] %v1344
        %1347 = vst [vmem:[#allocation2 + $0x10] sm:$0xff] 0.0
        %v1348 = vld [vmem:[#allocation2] sm:$0xff]
        %v1349 = vld [vmem:[#allocation2 + $0x8] sm:$0xff]
        %v1350 = vld [vmem:[#allocation2 + $0x1] sm:$0xff]
        %v1351 = vld [vmem:[#allocation2 + $0x9] sm:$0xff]
        %v1352 = vmax.f32 %v1348, %v1350
        %v1353 = vmax.f32 %v1349, %v1351
        %v1354 = vld [vmem:[#allocation2 + $0x4] sm:$0xff]
        %v1355 = vld [vmem:[#allocation2 + $0xc] sm:$0xff]
        %v1356 = vld [vmem:[#allocation2 + $0x5] sm:$0xff]
        %v1357 = vld [vmem:[#allocation2 + $0xd] sm:$0xff]
        %v1358 = vmax.f32 %v1354, %v1356
        %v1359 = vmax.f32 %v1355, %v1357
        %v1360 = vmax.f32 %v1352, %v1358
        %v1361 = vmax.f32 %v1353, %v1359
        %v1362 = vld [vmem:[%s5] sm:$0x1]
        %vm1363 = vcmask 130048
        %v1365 = vsel %vm1363, %v1362, 0
        %1367 = vmatprep.subr.mxu0 0.0
        %1368 = vmatpush1.msra.mxu0 %v1360
        %1369 = vmatprep.subr.mxu0 0.0
        %1370 = vmatpush1.msra.mxu0 %v1361
        %1371 = vmatprep.subr.mxu0 0.0
        %1372 = vmatpush1.msra.mxu0 0.0
        %1373 = vmatprep.subr.mxu0 0.0
        %1374 = vmatpush1.msra.mxu0 0.0
        %1375 = vmatprep.subr.mxu0 0.0
        %1376 = vmatpush1.msra.mxu0 0.0
        %1377 = vmatprep.subr.mxu0 0.0
        %1378 = vmatpush1.msra.mxu0 0.0
        %1379 = vmatprep.subr.mxu0 0.0
        %1380 = vmatpush1.msra.mxu0 0.0
        %1381 = vmatprep.subr.mxu0 0.0
        %1382 = vmatpush1.msra.mxu0 0.0
        %1383 = vmatprep.subr.mxu0 0.0
        %1384 = vmatpush1.msra.mxu0 0.0
        %1385 = vmatprep.subr.mxu0 0.0
        %1386 = vmatpush1.msra.mxu0 0.0
        %1387 = vmatprep.subr.mxu0 0.0
        %1388 = vmatpush1.msra.mxu0 0.0
        %1389 = vmatprep.subr.mxu0 0.0
        %1390 = vmatpush1.msra.mxu0 0.0
        %1391 = vmatprep.subr.mxu0 0.0
        %1392 = vmatpush1.msra.mxu0 0.0
        %1393 = vmatprep.subr.mxu0 0.0
        %1394 = vmatpush1.msra.mxu0 0.0
        %1395 = vmatprep.subr.mxu0 0.0
        %1396 = vmatpush1.msra.mxu0 0.0
        %1397 = vmatprep.subr.mxu0 0.0
        %1398 = vmatpush1.msra.mxu0 0.0
        %1399 = vmatprep.subr.mxu0 0.0
        %1400 = vmatpush1.msra.mxu0 0.0
        %1401 = vmatprep.subr.mxu0 0.0
        %1402 = vmatpush1.msra.mxu0 0.0
        %1403 = vmatprep.subr.mxu0 0.0
        %1404 = vmatpush1.msra.mxu0 0.0
        %1405 = vmatprep.subr.mxu0 0.0
        %1406 = vmatpush1.msra.mxu0 0.0
        %1407 = vmatprep.subr.mxu0 0.0
        %1408 = vmatpush1.msra.mxu0 0.0
        %1409 = vmatprep.subr.mxu0 0.0
        %1410 = vmatpush1.msra.mxu0 0.0
        %1411 = vmatprep.subr.mxu0 0.0
        %1412 = vmatpush1.msra.mxu0 0.0
        %1413 = vmatprep.subr.mxu0 0.0
        %1414 = vmatpush1.msra.mxu0 0.0
        %1415 = vmatprep.subr.mxu0 0.0
        %1416 = vmatpush1.msra.mxu0 0.0
        %1417 = vmatprep.subr.mxu0 0.0
        %1418 = vmatpush1.msra.mxu0 0.0
        %1419 = vmatprep.subr.mxu0 0.0
        %1420 = vmatpush1.msra.mxu0 0.0
        %1421 = vmatprep.subr.mxu0 0.0
        %1422 = vmatpush1.msra.mxu0 0.0
        %1423 = vmatprep.subr.mxu0 0.0
        %1424 = vmatpush1.msra.mxu0 0.0
        %1425 = vmatprep.subr.mxu0 0.0
        %1426 = vmatpush1.msra.mxu0 0.0
        %1427 = vmatprep.subr.mxu0 0.0
        %1428 = vmatpush1.msra.mxu0 0.0
        %1429 = vmatprep.subr.mxu0 0.0
        %1430 = vmatpush1.msra.mxu0 0.0
        %1431 = vmatprep.mubr.f32.mxu0 0.0
        %1432 = vmatmul.mubr.f32.gmra.mrb[0].mxu0 %v1365
        %v1433 = vpop.f32.mrb[0].mxu0
        %v1434 = vadd.f32 0.0, %v1433
        %v1435 = vpop.f32.mrb[0].mxu0
        %1436 = vdwg.mxu0
        %v1437 = vld [vmem:[%s6] sm:$0xff]
        %v1438 = vld [vmem:[%s6 + $0x8] sm:$0xff]
        %v1439 = vld [vmem:[%s6 + $0x10] sm:$0xff]
        %v1440 = vld [vmem:[%s6 + $0x18] sm:$0xff]
        %v1441 = vld [vmem:[%s6 + $0x20] sm:$0xff]
        %v1442 = vld [vmem:[%s6 + $0x28] sm:$0xff]
        %v1443 = vld [vmem:[%s6 + $0x30] sm:$0xff]
        %v1444 = vld [vmem:[%s6 + $0x38] sm:$0xff]
        %v1445 = vld [vmem:[%s6 + $0x40] sm:$0xff]
        %v1446 = vld [vmem:[%s6 + $0x48] sm:$0xff]
        %v1447 = vld [vmem:[%s6 + $0x50] sm:$0xff]
        %v1448 = vld [vmem:[%s6 + $0x58] sm:$0xff]
        %v1449 = vld [vmem:[%s6 + $0x60] sm:$0xff]
        %v1450 = vld [vmem:[%s6 + $0x68] sm:$0xff]
        %v1451 = vld [vmem:[%s6 + $0x70] sm:$0xff]
        %v1452 = vld [vmem:[%s6 + $0x78] sm:$0xff]
        %v1453 = vld [vmem:[%s7] sm:$0x1]
        %1454 = vmatprep.subr.mxu0 0.0
        %1455 = vmatpush1.msra.mxu0 %v1437
        %1456 = vmatprep.subr.mxu0 0.0
        %1457 = vmatpush1.msra.mxu0 %v1438
        %1458 = vmatprep.subr.mxu0 0.0
        %1459 = vmatpush1.msra.mxu0 %v1439
        %1460 = vmatprep.subr.mxu0 0.0
        %1461 = vmatpush1.msra.mxu0 %v1440
        %1462 = vmatprep.subr.mxu0 0.0
        %1463 = vmatpush1.msra.mxu0 %v1441
        %1464 = vmatprep.subr.mxu0 0.0
        %1465 = vmatpush1.msra.mxu0 %v1442
        %1466 = vmatprep.subr.mxu0 0.0
        %1467 = vmatpush1.msra.mxu0 %v1443
        %1468 = vmatprep.subr.mxu0 0.0
        %1469 = vmatpush1.msra.mxu0 %v1444
        %1470 = vmatprep.subr.mxu0 0.0
        %1471 = vmatpush1.msra.mxu0 %v1445
        %1472 = vmatprep.subr.mxu0 0.0
        %1473 = vmatpush1.msra.mxu0 %v1446
        %1474 = vmatprep.subr.mxu0 0.0
        %1475 = vmatpush1.msra.mxu0 %v1447
        %1476 = vmatprep.subr.mxu0 0.0
        %1477 = vmatpush1.msra.mxu0 %v1448
        %1478 = vmatprep.subr.mxu0 0.0
        %1479 = vmatpush1.msra.mxu0 %v1449
        %1480 = vmatprep.subr.mxu0 0.0
        %1481 = vmatpush1.msra.mxu0 %v1450
        %1482 = vmatprep.subr.mxu0 0.0
        %1483 = vmatpush1.msra.mxu0 %v1451
        %1484 = vmatprep.subr.mxu0 0.0
        %1485 = vmatpush1.msra.mxu0 %v1452
        %1486 = vmatprep.subr.mxu0 0.0
        %1487 = vmatpush1.msra.mxu0 0.0
        %1488 = vmatprep.subr.mxu0 0.0
        %1489 = vmatpush1.msra.mxu0 0.0
        %1490 = vmatprep.subr.mxu0 0.0
        %1491 = vmatpush1.msra.mxu0 0.0
        %1492 = vmatprep.subr.mxu0 0.0
        %1493 = vmatpush1.msra.mxu0 0.0
        %1494 = vmatprep.subr.mxu0 0.0
        %1495 = vmatpush1.msra.mxu0 0.0
        %1496 = vmatprep.subr.mxu0 0.0
        %1497 = vmatpush1.msra.mxu0 0.0
        %1498 = vmatprep.subr.mxu0 0.0
        %1499 = vmatpush1.msra.mxu0 0.0
        %1500 = vmatprep.subr.mxu0 0.0
        %1501 = vmatpush1.msra.mxu0 0.0
        %1502 = vmatprep.subr.mxu0 0.0
        %1503 = vmatpush1.msra.mxu0 0.0
        %1504 = vmatprep.subr.mxu0 0.0
        %1505 = vmatpush1.msra.mxu0 0.0
        %1506 = vmatprep.subr.mxu0 0.0
        %1507 = vmatpush1.msra.mxu0 0.0
        %1508 = vmatprep.subr.mxu0 0.0
        %1509 = vmatpush1.msra.mxu0 0.0
        %1510 = vmatprep.subr.mxu0 0.0
        %1511 = vmatpush1.msra.mxu0 0.0
        %1512 = vmatprep.subr.mxu0 0.0
        %1513 = vmatpush1.msra.mxu0 0.0
        %1514 = vmatprep.subr.mxu0 0.0
        %1515 = vmatpush1.msra.mxu0 0.0
        %1516 = vmatprep.subr.mxu0 0.0
        %1517 = vmatpush1.msra.mxu0 0.0
        %1518 = vmatprep.mubr.f32.mxu0 0.0
        %1519 = vmatmul.mubr.f32.gmra.mrb[0].mxu0 %v1434
        %v1520 = vpop.f32.mrb[0].mxu0
        %v1521 = vadd.f32 %v1453, %v1520
        %v1522 = vpop.f32.mrb[0].mxu0
        %1523 = vdwg.mxu0
        %1524 = vst [vmem:[%s297] sm:$0x1] %v1521
        %s1525 = sand.u32 %s203, 1
        %s1526 = scalar_lea.sflag [#allocation4], %s1525
        %s1527 = sand.u32 %s203, 1
        %s1528 = scalar_lea.vmem [#allocation3], %s1527
        // Predicated region
        $region53: #{audio_cnn_forward.5} parent=51 // pred_check
          %p1529 = pneg %p213
        $region54: #{audio_cnn_forward.5} parent=51 // pred_check_branch
          %1531 = sbr.rel (%p1529) target = $region56
        $region55: #{audio_cnn_forward.5} parent=51 // pred_region
          %s1533 = ssub.s32 16, 16
          %1534 = vsyncadd %s1526, %s1533
          %s1535 = smul.addr %s22, 16
          %s1536 = scalar_lea.hbm %s8, %s1535
          %s1538 = sshll.u32 %s1528, 4
          %s1539 = int_to_ptr.vmem [resolvable:$true] %s1538
          %1541 = dma.vmem_to_hbm [thread:$0]  %s1539, 16, %s1536, %s1526
        $region56: #{audio_cnn_forward.5} parent=51 // pred_fallthru
          _
      $region52: #{audio_cnn_forward.5} parent=5 // pred_fallthru
        _
      %p1542 = scmp.le.s32.totalorder 2, %s17
      // Predicated region
      $region57: #{audio_cnn_forward.5} parent=5 // pred_check
        %p1543 = pneg %p1542
      $region58: #{audio_cnn_forward.5} parent=5 // pred_check_branch
        %1545 = sbr.rel (%p1543) target = $region60
      $region59: #{audio_cnn_forward.5} parent=5 // pred_region
        %s1546 = ssub.s32 %s17, 2
        // Predicated region
        $region61: #{audio_cnn_forward.5} parent=59 // pred_check
          %p1547 = pneg %p219
        $region62: #{audio_cnn_forward.5} parent=59 // pred_check_branch
          %1549 = sbr.rel (%p1547) target = $region64
        $region63: #{audio_cnn_forward.5} parent=59 // pred_region
          %s1550 = sand.u32 %s204, 1
          %s1551 = scalar_lea.sflag [#allocation4], %s1550
          %s1552 = sand.u32 %s204, 1
          %s1553 = scalar_lea.vmem [#allocation3], %s1552
          %1554 = dma.done %s1551, 16
        $region64: #{audio_cnn_forward.5} parent=59 // pred_fallthru
          _
      $region60: #{audio_cnn_forward.5} parent=5 // pred_fallthru
        _
    $region6: #{audio_cnn_forward.5} parent=1 // loop_footer
      %s21 = sadd.s32 1, %s17
    $region7: #{audio_cnn_forward.5} parent=1 // loop_footer_branch
      %16 = sbr.rel target = $region3
    $region8: #{audio_cnn_forward.5} parent=1 // loop_exit
      _
    %1555 = vsyncpa [#allocation4], 1
    %s1556 = scalar_lea.sflag [#allocation4], 1
    %1557 = vsyncpa %s1556, 1

// kernel: audio_cnn_forward.3
$region0: #{audio_cnn_forward.3}
  #allocation0 [shape = 'u32[]', space=smem, size = 0x4, offset = 0x4, fixed_abs, tag = 'smem constant byte address 0x4 - core index']
  #allocation1 [shape = 'u32[144,128]{1,0:T(1,128)}', space=vmem, size = 0x12000, scoped, tag = 'internal scratch']
  #allocation2 [shape = 'f32[288,128]{1,0:T(8,128)}', space=vmem, size = 0x24000, scoped, tag = 'scratch operand']
  %s0 = inlined_call_operand.vmem [shape: f32[2,320,8], index: 0, kind: input, shape index: {}]
  %s1 = inlined_call_operand.vmem [shape: bf16[9,8,128], index: 1, kind: input, shape index: {}]
  %s2 = inlined_call_operand.vmem [shape: f32[1,128], index: 2, kind: input, shape index: {}]
  %s3 = inlined_call_operand.vmem [shape: f32[256,1], index: 3, kind: input, shape index: {}]
  %s4 = inlined_call_operand.vmem [shape: f32[256,1], index: 4, kind: input, shape index: {}]
  %s5 = inlined_call_operand.vmem [shape: f32[64,256], index: 5, kind: input, shape index: {}]
  %s6 = inlined_call_operand.vmem [shape: f32[2,96,128], index: 6, kind: output, shape index: {}]
  %s7 = sld [smem:[#allocation0]]
  $region57: #{audio_cnn_forward.3} parent=0
    _
  %s9 = ssub.s32 1, %s7
  %s10 = scalar_select 0, %s9, %s7
  loop: start=0, step=1, limit=4
  $region2: #{audio_cnn_forward.3} parent=0 // loop_pre_header
    _
  $region3: #{audio_cnn_forward.3} parent=0 // loop_header
    %s12 = sphi 0, %s16
    %p13 = scmp.ge.s32.totalorder %s12, 4
    %s22 = sphi 0, %s24
    %s25 = sphi 0, %s22
    %s26 = sphi 0, %s25
    %s42 = sphi 0, %s26
    %s46 = sphi 0, %s46
    %s48 = sphi 0, %s46
    %s49 = sphi 0, %s48
    %s63 = sphi 0, %s49
    %s67 = sphi 0, %s67
    %s69 = sphi 0, %s67
    %s70 = sphi 0, %s69
    %s84 = sphi 0, %s70
    %s88 = sphi 0, %s88
    %s90 = sphi 0, %s88
    %s91 = sphi 0, %s90
    %s105 = sphi 0, %s91
    %s109 = sphi 0, %s109
    %s111 = sphi 0, %s109
    %s112 = sphi 0, %s111
    %s126 = sphi 0, %s112
    %s130 = sphi 0, %s130
    %s132 = sphi 0, %s130
    %s133 = sphi 0, %s132
    %s147 = sphi 0, %s133
    %s153 = sphi 0, %s155
    %s156 = sphi 0, %s153
    %s157 = sphi 0, %s156
    %s173 = sphi 0, %s157
  $region4: #{audio_cnn_forward.3} parent=0 // loop_header_branch
    %15 = sbr.rel (%p13) target = $region8
  $region5: #{audio_cnn_forward.3} parent=0 // loop_body
    %s17 = ssub.s32 %s12, 1
    %s18 = ssub.s32 %s12, 2
    %s19 = sadd.s32 %s12, 1
    %s20 = ssub.s32 %s12, %s19
    %p21 = scmp.eq.s32.totalorder %s20, 0
    %s23 = sadd.s32 %s22, 1
    %s24 = scalar_select %p21, %s22, %s23
    %p27 = pneg %p21
    %p28 = scmp.eq.s32.totalorder %s12, 1
    %p29 = por %p27, %p28
    %p30 = scmp.ne.s32.totalorder %s22, %s25
    %p31 = scmp.eq.s32.totalorder %s12, 0
    %p32 = por %p30, %p31
    %p33 = scmp.ne.s32.totalorder %s22, %s25
    %p34 = scmp.eq.s32.totalorder %s17, 1
    %p35 = por %p33, %p34
    %p36 = scmp.ne.s32.totalorder %s25, %s26
    %p37 = scmp.eq.s32.totalorder %s17, 0
    %p38 = por %p36, %p37
    %p39 = scmp.ne.s32.totalorder %s25, %s26
    %p40 = scmp.eq.s32.totalorder %s18, 1
    %p41 = por %p39, %p40
    %p43 = scmp.ne.s32.totalorder %s26, %s42
    %p44 = scmp.eq.s32.totalorder %s18, 0
    %p45 = por %p43, %p44
    %s47 = sadd.s32 %s46, 1
    %p50 = scmp.eq.s32.totalorder %s12, 1
    %p51 = scmp.ne.s32.totalorder %s46, %s48
    %p52 = scmp.eq.s32.totalorder %s12, 0
    %p53 = por %p51, %p52
    %p54 = scmp.ne.s32.totalorder %s46, %s48
    %p55 = scmp.eq.s32.totalorder %s17, 1
    %p56 = por %p54, %p55
    %p57 = scmp.ne.s32.totalorder %s48, %s49
    %p58 = scmp.eq.s32.totalorder %s17, 0
    %p59 = por %p57, %p58
    %p60 = scmp.ne.s32.totalorder %s48, %s49
    %p61 = scmp.eq.s32.totalorder %s18, 1
    %p62 = por %p60, %p61
    %p64 = scmp.ne.s32.totalorder %s49, %s63
    %p65 = scmp.eq.s32.totalorder %s18, 0
    %p66 = por %p64, %p65
    %s68 = sadd.s32 %s67, 1
    %p71 = scmp.eq.s32.totalorder %s12, 1
    %p72 = scmp.ne.s32.totalorder %s67, %s69
    %p73 = scmp.eq.s32.totalorder %s12, 0
    %p74 = por %p72, %p73
    %p75 = scmp.ne.s32.totalorder %s67, %s69
    %p76 = scmp.eq.s32.totalorder %s17, 1
    %p77 = por %p75, %p76
    %p78 = scmp.ne.s32.totalorder %s69, %s70
    %p79 = scmp.eq.s32.totalorder %s17, 0
    %p80 = por %p78, %p79
    %p81 = scmp.ne.s32.totalorder %s69, %s70
    %p82 = scmp.eq.s32.totalorder %s18, 1
    %p83 = por %p81, %p82
    %p85 = scmp.ne.s32.totalorder %s70, %s84
    %p86 = scmp.eq.s32.totalorder %s18, 0
    %p87 = por %p85, %p86
    %s89 = sadd.s32 %s88, 1
    %p92 = scmp.eq.s32.totalorder %s12, 1
    %p93 = scmp.ne.s32.totalorder %s88, %s90
    %p94 = scmp.eq.s32.totalorder %s12, 0
    %p95 = por %p93, %p94
    %p96 = scmp.ne.s32.totalorder %s88, %s90
    %p97 = scmp.eq.s32.totalorder %s17, 1
    %p98 = por %p96, %p97
    %p99 = scmp.ne.s32.totalorder %s90, %s91
    %p100 = scmp.eq.s32.totalorder %s17, 0
    %p101 = por %p99, %p100
    %p102 = scmp.ne.s32.totalorder %s90, %s91
    %p103 = scmp.eq.s32.totalorder %s18, 1
    %p104 = por %p102, %p103
    %p106 = scmp.ne.s32.totalorder %s91, %s105
    %p107 = scmp.eq.s32.totalorder %s18, 0
    %p108 = por %p106, %p107
    %s110 = sadd.s32 %s109, 1
    %p113 = scmp.eq.s32.totalorder %s12, 1
    %p114 = scmp.ne.s32.totalorder %s109, %s111
    %p115 = scmp.eq.s32.totalorder %s12, 0
    %p116 = por %p114, %p115
    %p117 = scmp.ne.s32.totalorder %s109, %s111
    %p118 = scmp.eq.s32.totalorder %s17, 1
    %p119 = por %p117, %p118
    %p120 = scmp.ne.s32.totalorder %s111, %s112
    %p121 = scmp.eq.s32.totalorder %s17, 0
    %p122 = por %p120, %p121
    %p123 = scmp.ne.s32.totalorder %s111, %s112
    %p124 = scmp.eq.s32.totalorder %s18, 1
    %p125 = por %p123, %p124
    %p127 = scmp.ne.s32.totalorder %s112, %s126
    %p128 = scmp.eq.s32.totalorder %s18, 0
    %p129 = por %p127, %p128
    %s131 = sadd.s32 %s130, 1
    %p134 = scmp.eq.s32.totalorder %s12, 1
    %p135 = scmp.ne.s32.totalorder %s130, %s132
    %p136 = scmp.eq.s32.totalorder %s12, 0
    %p137 = por %p135, %p136
    %p138 = scmp.ne.s32.totalorder %s130, %s132
    %p139 = scmp.eq.s32.totalorder %s17, 1
    %p140 = por %p138, %p139
    %p141 = scmp.ne.s32.totalorder %s132, %s133
    %p142 = scmp.eq.s32.totalorder %s17, 0
    %p143 = por %p141, %p142
    %p144 = scmp.ne.s32.totalorder %s132, %s133
    %p145 = scmp.eq.s32.totalorder %s18, 1
    %p146 = por %p144, %p145
    %p148 = scmp.ne.s32.totalorder %s133, %s147
    %p149 = scmp.eq.s32.totalorder %s18, 0
    %p150 = por %p148, %p149
    %s151 = ssub.s32 %s12, %s19
    %p152 = scmp.eq.s32.totalorder %s151, 0
    %s154 = sadd.s32 %s153, 1
    %s155 = scalar_select %p152, %s153, %s154
    %p158 = pneg %p152
    %p159 = scmp.eq.s32.totalorder %s12, 1
    %p160 = por %p158, %p159
    %p161 = scmp.ne.s32.totalorder %s153, %s156
    %p162 = scmp.eq.s32.totalorder %s12, 0
    %p163 = por %p161, %p162
    %p164 = scmp.ne.s32.totalorder %s153, %s156
    %p165 = scmp.eq.s32.totalorder %s17, 1
    %p166 = por %p164, %p165
    %p167 = scmp.ne.s32.totalorder %s156, %s157
    %p168 = scmp.eq.s32.totalorder %s17, 0
    %p169 = por %p167, %p168
    %p170 = scmp.ne.s32.totalorder %s156, %s157
    %p171 = scmp.eq.s32.totalorder %s18, 1
    %p172 = por %p170, %p171
    %p174 = scmp.ne.s32.totalorder %s157, %s173
    %p175 = scmp.eq.s32.totalorder %s18, 0
    %p176 = por %p174, %p175
    %p177 = scmp.le.s32.totalorder 1, %s12
    %p178 = scmp.lt.s32.totalorder %s12, 3
    %p179 = pnand %p177, %p178
    %p180 = pneg %p179
    // Predicated region
    $region9: #{audio_cnn_forward.3} parent=5 // pred_check
      _
    $region10: #{audio_cnn_forward.3} parent=5 // pred_check_branch
      %182 = sbr.rel (%p179) target = $region12
    $region11: #{audio_cnn_forward.3} parent=5 // pred_region
      %s183 = ssub.s32 %s12, 1
      // Predicated region
      $region13: #{audio_cnn_forward.3} parent=11 // pred_check
        %p184 = pneg %p59
      $region14: #{audio_cnn_forward.3} parent=11 // pred_check_branch
        %186 = sbr.rel (%p184) target = $region16
      $region15: #{audio_cnn_forward.3} parent=11 // pred_region
        _
      $region16: #{audio_cnn_forward.3} parent=11 // pred_fallthru
        _
      // Predicated region
      $region17: #{audio_cnn_forward.3} parent=11 // pred_check
        %p187 = pneg %p80
      $region18: #{audio_cnn_forward.3} parent=11 // pred_check_branch
        %189 = sbr.rel (%p187) target = $region20
      $region19: #{audio_cnn_forward.3} parent=11 // pred_region
        _
      $region20: #{audio_cnn_forward.3} parent=11 // pred_fallthru
        _
      // Predicated region
      $region21: #{audio_cnn_forward.3} parent=11 // pred_check
        %p190 = pneg %p101
      $region22: #{audio_cnn_forward.3} parent=11 // pred_check_branch
        %192 = sbr.rel (%p190) target = $region24
      $region23: #{audio_cnn_forward.3} parent=11 // pred_region
        _
      $region24: #{audio_cnn_forward.3} parent=11 // pred_fallthru
        _
      // Predicated region
      $region25: #{audio_cnn_forward.3} parent=11 // pred_check
        %p193 = pneg %p122
      $region26: #{audio_cnn_forward.3} parent=11 // pred_check_branch
        %195 = sbr.rel (%p193) target = $region28
      $region27: #{audio_cnn_forward.3} parent=11 // pred_region
        _
      $region28: #{audio_cnn_forward.3} parent=11 // pred_fallthru
        _
      // Predicated region
      $region29: #{audio_cnn_forward.3} parent=11 // pred_check
        %p196 = pneg %p143
      $region30: #{audio_cnn_forward.3} parent=11 // pred_check_branch
        %198 = sbr.rel (%p196) target = $region32
      $region31: #{audio_cnn_forward.3} parent=11 // pred_region
        _
      $region32: #{audio_cnn_forward.3} parent=11 // pred_fallthru
        _
    $region12: #{audio_cnn_forward.3} parent=5 // pred_fallthru
      _
    %p199 = scmp.lt.s32.totalorder %s12, 2
    // Predicated region
    $region33: #{audio_cnn_forward.3} parent=5 // pred_check
      %p200 = pneg %p199
    $region34: #{audio_cnn_forward.3} parent=5 // pred_check_branch
      %202 = sbr.rel (%p200) target = $region36
    $region35: #{audio_cnn_forward.3} parent=5 // pred_region
      // Predicated region
      $region37: #{audio_cnn_forward.3} parent=35 // pred_check
        %p203 = pneg %p32
      $region38: #{audio_cnn_forward.3} parent=35 // pred_check_branch
        %205 = sbr.rel (%p203) target = $region40
      $region39: #{audio_cnn_forward.3} parent=35 // pred_region
        %p206 = scmp.lt.s32.totalorder %s12, 1
        %s207 = scalar_select %p206, %s12, 1
        %s208 = smul.addr %s207, 40
        %s209 = smul.addr %s208, 8
        %s210 = scalar_lea.vmem %s0, %s209
      $region40: #{audio_cnn_forward.3} parent=35 // pred_fallthru
        _
    $region36: #{audio_cnn_forward.3} parent=5 // pred_fallthru
      _
    %p211 = scmp.le.s32.totalorder 1, %s12
    %p212 = scmp.lt.s32.totalorder %s12, 3
    %p213 = pnand %p211, %p212
    %p214 = pneg %p213
    // Predicated region
    $region41: #{audio_cnn_forward.3} parent=5 // pred_check
      _
    $region42: #{audio_cnn_forward.3} parent=5 // pred_check_branch
      %216 = sbr.rel (%p213) target = $region44
    $region43: #{audio_cnn_forward.3} parent=5 // pred_region
      %s217 = ssub.s32 %s12, 1
      %p218 = scmp.lt.s32.totalorder %s17, 1
      %s219 = scalar_select %p218, %s17, 1
      %s220 = smul.addr %s219, 40
      %s221 = smul.addr %s220, 8
      %s222 = scalar_lea.vmem %s0, %s221
      %p223 = pneg %p38
      %p224 = pneg %p35
      %p225 = pneg %p59
      %p226 = pneg %p56
      %p227 = pneg %p80
      %p228 = pneg %p77
      %p229 = pneg %p101
      %p230 = pneg %p98
      %p231 = pneg %p122
      %p232 = pneg %p119
      %p233 = pneg %p143
      %p234 = pneg %p140
      %p235 = pneg %p169
      %p236 = pneg %p166
      %p237 = scmp.lt.s32.totalorder %s17, 1
      %s238 = scalar_select %p237, %s17, 1
      %s239 = smul.addr %s238, 12
      %s240 = smul.addr %s239, 8
      %s241 = scalar_lea.vmem %s6, %s240
      %p242 = scmp.lt.s32.totalorder %s17, 1
      %s243 = scalar_select %p242, %s17, 1
      %s244 = smul.addr %s243, 40
      %s245 = smul.addr %s244, 8
      %s246 = scalar_lea.vmem %s0, %s245
      %p247 = scmp.lt.s32.totalorder %s17, 1
      %s248 = scalar_select %p247, %s17, 1
      %s249 = smul.addr %s248, 12
      %s250 = smul.addr %s249, 8
      %s251 = scalar_lea.vmem %s6, %s250
      %v253 = vld [vmem:[%s3] sm:$0xff]
      %v254 = vld [vmem:[%s3 + $0x8] sm:$0xff]
      %v255 = vld [vmem:[%s3 + $0x10] sm:$0xff]
      %v256 = vld [vmem:[%s3 + $0x18] sm:$0xff]
      %v257 = vld [vmem:[%s3 + $0x20] sm:$0xff]
      %v258 = vld [vmem:[%s3 + $0x28] sm:$0xff]
      %v259 = vld [vmem:[%s3 + $0x30] sm:$0xff]
      %v260 = vld [vmem:[%s3 + $0x38] sm:$0xff]
      %v261 = vld [vmem:[%s3 + $0x40] sm:$0xff]
      %v262 = vld [vmem:[%s3 + $0x48] sm:$0xff]
      %v263 = vld [vmem:[%s3 + $0x50] sm:$0xff]
      %v264 = vld [vmem:[%s3 + $0x58] sm:$0xff]
      %v265 = vld [vmem:[%s3 + $0x60] sm:$0xff]
      %v266 = vld [vmem:[%s3 + $0x68] sm:$0xff]
      %v267 = vld [vmem:[%s3 + $0x70] sm:$0xff]
      %v268 = vld [vmem:[%s3 + $0x78] sm:$0xff]
      %v269 = vld [vmem:[%s3 + $0x80] sm:$0xff]
      %v270 = vld [vmem:[%s3 + $0x88] sm:$0xff]
      %v271 = vld [vmem:[%s3 + $0x90] sm:$0xff]
      %v272 = vld [vmem:[%s3 + $0x98] sm:$0xff]
      %v273 = vld [vmem:[%s3 + $0xa0] sm:$0xff]
      %v274 = vld [vmem:[%s3 + $0xa8] sm:$0xff]
      %v275 = vld [vmem:[%s3 + $0xb0] sm:$0xff]
      %v276 = vld [vmem:[%s3 + $0xb8] sm:$0xff]
      %v277 = vld [vmem:[%s3 + $0xc0] sm:$0xff]
      %v278 = vld [vmem:[%s3 + $0xc8] sm:$0xff]
      %v279 = vld [vmem:[%s3 + $0xd0] sm:$0xff]
      %v280 = vld [vmem:[%s3 + $0xd8] sm:$0xff]
      %v281 = vld [vmem:[%s3 + $0xe0] sm:$0xff]
      %v282 = vld [vmem:[%s3 + $0xe8] sm:$0xff]
      %v283 = vld [vmem:[%s3 + $0xf0] sm:$0xff]
      %v284 = vld [vmem:[%s3 + $0xf8] sm:$0xff]
      %v285 = vld [vmem:[%s4] sm:$0xff]
      %v286 = vld [vmem:[%s4 + $0x8] sm:$0xff]
      %v287 = vld [vmem:[%s4 + $0x10] sm:$0xff]
      %v288 = vld [vmem:[%s4 + $0x18] sm:$0xff]
      %v289 = vld [vmem:[%s4 + $0x20] sm:$0xff]
      %v290 = vld [vmem:[%s4 + $0x28] sm:$0xff]
      %v291 = vld [vmem:[%s4 + $0x30] sm:$0xff]
      %v292 = vld [vmem:[%s4 + $0x38] sm:$0xff]
      %v293 = vld [vmem:[%s4 + $0x40] sm:$0xff]
      %v294 = vld [vmem:[%s4 + $0x48] sm:$0xff]
      %v295 = vld [vmem:[%s4 + $0x50] sm:$0xff]
      %v296 = vld [vmem:[%s4 + $0x58] sm:$0xff]
      %v297 = vld [vmem:[%s4 + $0x60] sm:$0xff]
      %v298 = vld [vmem:[%s4 + $0x68] sm:$0xff]
      %v299 = vld [vmem:[%s4 + $0x70] sm:$0xff]
      %v300 = vld [vmem:[%s4 + $0x78] sm:$0xff]
      %v301 = vld [vmem:[%s4 + $0x80] sm:$0xff]
      %v302 = vld [vmem:[%s4 + $0x88] sm:$0xff]
      %v303 = vld [vmem:[%s4 + $0x90] sm:$0xff]
      %v304 = vld [vmem:[%s4 + $0x98] sm:$0xff]
      %v305 = vld [vmem:[%s4 + $0xa0] sm:$0xff]
      %v306 = vld [vmem:[%s4 + $0xa8] sm:$0xff]
      %v307 = vld [vmem:[%s4 + $0xb0] sm:$0xff]
      %v308 = vld [vmem:[%s4 + $0xb8] sm:$0xff]
      %v309 = vld [vmem:[%s4 + $0xc0] sm:$0xff]
      %v310 = vld [vmem:[%s4 + $0xc8] sm:$0xff]
      %v311 = vld [vmem:[%s4 + $0xd0] sm:$0xff]
      %v312 = vld [vmem:[%s4 + $0xd8] sm:$0xff]
      %v313 = vld [vmem:[%s4 + $0xe0] sm:$0xff]
      %v314 = vld [vmem:[%s4 + $0xe8] sm:$0xff]
      %v315 = vld [vmem:[%s4 + $0xf0] sm:$0xff]
      %v316 = vld [vmem:[%s4 + $0xf8] sm:$0xff]
      %v317 = vld [vmem:[%s246 + $0xf] sm:$0xff]
      %v318 = vld [vmem:[%s246 + $0x17] sm:$0xff]
      %v319 = vld [vmem:[%s246 + $0x1f] sm:$0xff]
      %v320 = vld [vmem:[%s246 + $0x27] sm:$0xff]
      %v321 = vld [vmem:[%s246 + $0x2f] sm:$0xff]
      %v322 = vld [vmem:[%s246 + $0x37] sm:$0xff]
      %v323 = vld [vmem:[%s246 + $0x3f] sm:$0xff]
      %v324 = vld [vmem:[%s246 + $0x47] sm:$0xff]
      %v325 = vld [vmem:[%s246 + $0x4f] sm:$0xff]
      %v326 = vld [vmem:[%s246 + $0x57] sm:$0xff]
      %v327 = vld [vmem:[%s246 + $0x5f] sm:$0xff]
      %v328 = vld [vmem:[%s246 + $0x67] sm:$0xff]
      %v329 = vld [vmem:[%s246 + $0x6f] sm:$0xff]
      %v330 = vld [vmem:[%s246 + $0x77] sm:$0xff]
      %v331 = vld [vmem:[%s246 + $0x7f] sm:$0xff]
      %v332 = vld [vmem:[%s246 + $0x87] sm:$0xff]
      %v333 = vld [vmem:[%s246 + $0x8f] sm:$0xff]
      %v334 = vld [vmem:[%s246 + $0x97] sm:$0xff]
      %v335 = vld [vmem:[%s246 + $0x9f] sm:$0xff]
      %v336 = vld [vmem:[%s246 + $0xa7] sm:$0xff]
      %v337 = vld [vmem:[%s246 + $0xaf] sm:$0xff]
      %v338 = vld [vmem:[%s246 + $0xb7] sm:$0xff]
      %v339 = vld [vmem:[%s246 + $0xbf] sm:$0xff]
      %v340 = vld [vmem:[%s246 + $0xc7] sm:$0xff]
      %v341 = vld [vmem:[%s246 + $0xcf] sm:$0xff]
      %v342 = vld [vmem:[%s246 + $0xd7] sm:$0xff]
      %v343 = vld [vmem:[%s246 + $0xdf] sm:$0xff]
      %v344 = vld [vmem:[%s246 + $0xe7] sm:$0xff]
      %v345 = vld [vmem:[%s246 + $0xef] sm:$0xff]
      %v346 = vld [vmem:[%s246 + $0xf7] sm:$0xff]
      %v347 = vld [vmem:[%s246 + $0xff] sm:$0xff]
      %v348 = vld [vmem:[%s246 + $0x107] sm:$0xff]
      %350 = vset.pattern.permute.xlu0 0
      %351 = vperm.xlu0 %350, %v253
      %v352 = vpop.permute.xlu0 %351
      %355 = vset.pattern.permute.xlu0 0
      %356 = vperm.xlu0 %355, %v254
      %v357 = vpop.permute.xlu0 %356
      %360 = vset.pattern.permute.xlu0 0
      %361 = vperm.xlu0 %360, %v255
      %v362 = vpop.permute.xlu0 %361
      %365 = vset.pattern.permute.xlu0 0
      %366 = vperm.xlu0 %365, %v256
      %v367 = vpop.permute.xlu0 %366
      %370 = vset.pattern.permute.xlu0 0
      %371 = vperm.xlu0 %370, %v257
      %v372 = vpop.permute.xlu0 %371
      %375 = vset.pattern.permute.xlu0 0
      %376 = vperm.xlu0 %375, %v258
      %v377 = vpop.permute.xlu0 %376
      %380 = vset.pattern.permute.xlu0 0
      %381 = vperm.xlu0 %380, %v259
      %v382 = vpop.permute.xlu0 %381
      %385 = vset.pattern.permute.xlu0 0
      %386 = vperm.xlu0 %385, %v260
      %v387 = vpop.permute.xlu0 %386
      %390 = vset.pattern.permute.xlu0 0
      %391 = vperm.xlu0 %390, %v261
      %v392 = vpop.permute.xlu0 %391
      %395 = vset.pattern.permute.xlu0 0
      %396 = vperm.xlu0 %395, %v262
      %v397 = vpop.permute.xlu0 %396
      %400 = vset.pattern.permute.xlu0 0
      %401 = vperm.xlu0 %400, %v263
      %v402 = vpop.permute.xlu0 %401
      %405 = vset.pattern.permute.xlu0 0
      %406 = vperm.xlu0 %405, %v264
      %v407 = vpop.permute.xlu0 %406
      %410 = vset.pattern.permute.xlu0 0
      %411 = vperm.xlu0 %410, %v265
      %v412 = vpop.permute.xlu0 %411
      %415 = vset.pattern.permute.xlu0 0
      %416 = vperm.xlu0 %415, %v266
      %v417 = vpop.permute.xlu0 %416
      %420 = vset.pattern.permute.xlu0 0
      %421 = vperm.xlu0 %420, %v267
      %v422 = vpop.permute.xlu0 %421
      %425 = vset.pattern.permute.xlu0 0
      %426 = vperm.xlu0 %425, %v268
      %v427 = vpop.permute.xlu0 %426
      %430 = vset.pattern.permute.xlu0 0
      %431 = vperm.xlu0 %430, %v269
      %v432 = vpop.permute.xlu0 %431
      %435 = vset.pattern.permute.xlu0 0
      %436 = vperm.xlu0 %435, %v270
      %v437 = vpop.permute.xlu0 %436
      %440 = vset.pattern.permute.xlu0 0
      %441 = vperm.xlu0 %440, %v271
      %v442 = vpop.permute.xlu0 %441
      %445 = vset.pattern.permute.xlu0 0
      %446 = vperm.xlu0 %445, %v272
      %v447 = vpop.permute.xlu0 %446
      %450 = vset.pattern.permute.xlu0 0
      %451 = vperm.xlu0 %450, %v273
      %v452 = vpop.permute.xlu0 %451
      %455 = vset.pattern.permute.xlu0 0
      %456 = vperm.xlu0 %455, %v274
      %v457 = vpop.permute.xlu0 %456
      %460 = vset.pattern.permute.xlu0 0
      %461 = vperm.xlu0 %460, %v275
      %v462 = vpop.permute.xlu0 %461
      %465 = vset.pattern.permute.xlu0 0
      %466 = vperm.xlu0 %465, %v276
      %v467 = vpop.permute.xlu0 %466
      %470 = vset.pattern.permute.xlu0 0
      %471 = vperm.xlu0 %470, %v277
      %v472 = vpop.permute.xlu0 %471
      %475 = vset.pattern.permute.xlu0 0
      %476 = vperm.xlu0 %475, %v278
      %v477 = vpop.permute.xlu0 %476
      %480 = vset.pattern.permute.xlu0 0
      %481 = vperm.xlu0 %480, %v279
      %v482 = vpop.permute.xlu0 %481
      %485 = vset.pattern.permute.xlu0 0
      %486 = vperm.xlu0 %485, %v280
      %v487 = vpop.permute.xlu0 %486
      %490 = vset.pattern.permute.xlu0 0
      %491 = vperm.xlu0 %490, %v281
      %v492 = vpop.permute.xlu0 %491
      %495 = vset.pattern.permute.xlu0 0
      %496 = vperm.xlu0 %495, %v282
      %v497 = vpop.permute.xlu0 %496
      %500 = vset.pattern.permute.xlu0 0
      %501 = vperm.xlu0 %500, %v283
      %v502 = vpop.permute.xlu0 %501
      %505 = vset.pattern.permute.xlu0 0
      %506 = vperm.xlu0 %505, %v284
      %v507 = vpop.permute.xlu0 %506
      %v509 = vmul.f32 %v317, %v352
      %v510 = vmul.f32 %v318, %v357
      %v511 = vmul.f32 %v319, %v362
      %v512 = vmul.f32 %v320, %v367
      %v513 = vmul.f32 %v321, %v372
      %v514 = vmul.f32 %v322, %v377
      %v515 = vmul.f32 %v323, %v382
      %v516 = vmul.f32 %v324, %v387
      %v517 = vmul.f32 %v325, %v392
      %v518 = vmul.f32 %v326, %v397
      %v519 = vmul.f32 %v327, %v402
      %v520 = vmul.f32 %v328, %v407
      %v521 = vmul.f32 %v329, %v412
      %v522 = vmul.f32 %v330, %v417
      %v523 = vmul.f32 %v331, %v422
      %v524 = vmul.f32 %v332, %v427
      %v525 = vmul.f32 %v333, %v432
      %v526 = vmul.f32 %v334, %v437
      %v527 = vmul.f32 %v335, %v442
      %v528 = vmul.f32 %v336, %v447
      %v529 = vmul.f32 %v337, %v452
      %v530 = vmul.f32 %v338, %v457
      %v531 = vmul.f32 %v339, %v462
      %v532 = vmul.f32 %v340, %v467
      %v533 = vmul.f32 %v341, %v472
      %v534 = vmul.f32 %v342, %v477
      %v535 = vmul.f32 %v343, %v482
      %v536 = vmul.f32 %v344, %v487
      %v537 = vmul.f32 %v345, %v492
      %v538 = vmul.f32 %v346, %v497
      %v539 = vmul.f32 %v347, %v502
      %v540 = vmul.f32 %v348, %v507
      %v541 = vpack.c.bf16 %v510, %v509
      %v542 = vpack.c.bf16 %v512, %v511
      %v543 = vpack.c.bf16 %v514, %v513
      %v544 = vpack.c.bf16 %v516, %v515
      %v545 = vpack.c.bf16 %v518, %v517
      %v546 = vpack.c.bf16 %v520, %v519
      %v547 = vpack.c.bf16 %v522, %v521
      %v548 = vpack.c.bf16 %v524, %v523
      %v549 = vpack.c.bf16 %v526, %v525
      %v550 = vpack.c.bf16 %v528, %v527
      %v551 = vpack.c.bf16 %v530, %v529
      %v552 = vpack.c.bf16 %v532, %v531
      %v553 = vpack.c.bf16 %v534, %v533
      %v554 = vpack.c.bf16 %v536, %v535
      %v555 = vpack.c.bf16 %v538, %v537
      %v556 = vpack.c.bf16 %v540, %v539
      %v557 = vld [vmem:[%s1] sm:$0xf]
      %v558 = vld [vmem:[%s246 + $0x10] sm:$0xff]
      %v559 = vld [vmem:[%s246 + $0x18] sm:$0xff]
      %v560 = vld [vmem:[%s246 + $0x20] sm:$0xff]
      %v561 = vld [vmem:[%s246 + $0x28] sm:$0xff]
      %v562 = vld [vmem:[%s246 + $0x30] sm:$0xff]
      %v563 = vld [vmem:[%s246 + $0x38] sm:$0xff]
      %v564 = vld [vmem:[%s246 + $0x40] sm:$0xff]
      %v565 = vld [vmem:[%s246 + $0x48] sm:$0xff]
      %v566 = vld [vmem:[%s246 + $0x50] sm:$0xff]
      %v567 = vld [vmem:[%s246 + $0x58] sm:$0xff]
      %v568 = vld [vmem:[%s246 + $0x60] sm:$0xff]
      %v569 = vld [vmem:[%s246 + $0x68] sm:$0xff]
      %v570 = vld [vmem:[%s246 + $0x70] sm:$0xff]
      %v571 = vld [vmem:[%s246 + $0x78] sm:$0xff]
      %v572 = vld [vmem:[%s246 + $0x80] sm:$0xff]
      %v573 = vld [vmem:[%s246 + $0x88] sm:$0xff]
      %v574 = vld [vmem:[%s246 + $0x90] sm:$0xff]
      %v575 = vld [vmem:[%s246 + $0x98] sm:$0xff]
      %v576 = vld [vmem:[%s246 + $0xa0] sm:$0xff]
      %v577 = vld [vmem:[%s246 + $0xa8] sm:$0xff]
      %v578 = vld [vmem:[%s246 + $0xb0] sm:$0xff]
      %v579 = vld [vmem:[%s246 + $0xb8] sm:$0xff]
      %v580 = vld [vmem:[%s246 + $0xc0] sm:$0xff]
      %v581 = vld [vmem:[%s246 + $0xc8] sm:$0xff]
      %v582 = vld [vmem:[%s246 + $0xd0] sm:$0xff]
      %v583 = vld [vmem:[%s246 + $0xd8] sm:$0xff]
      %v584 = vld [vmem:[%s246 + $0xe0] sm:$0xff]
      %v585 = vld [vmem:[%s246 + $0xe8] sm:$0xff]
      %v586 = vld [vmem:[%s246 + $0xf0] sm:$0xff]
      %v587 = vld [vmem:[%s246 + $0xf8] sm:$0xff]
      %v588 = vld [vmem:[%s246 + $0x100] sm:$0xff]
      %v589 = vld [vmem:[%s246 + $0x108] sm:$0xff]
      %v590 = vpack.c.bf16 %v559, %v558
      %v591 = vpack.c.bf16 %v561, %v560
      %v592 = vpack.c.bf16 %v563, %v562
      %v593 = vpack.c.bf16 %v565, %v564
      %v594 = vpack.c.bf16 %v567, %v566
      %v595 = vpack.c.bf16 %v569, %v568
      %v596 = vpack.c.bf16 %v571, %v570
      %v597 = vpack.c.bf16 %v573, %v572
      %v598 = vpack.c.bf16 %v575, %v574
      %v599 = vpack.c.bf16 %v577, %v576
      %v600 = vpack.c.bf16 %v579, %v578
      %v601 = vpack.c.bf16 %v581, %v580
      %v602 = vpack.c.bf16 %v583, %v582
      %v603 = vpack.c.bf16 %v585, %v584
      %v604 = vpack.c.bf16 %v587, %v586
      %v605 = vpack.c.bf16 %v589, %v588
      %s606 = scalar_lea.vmem %s1, 4
      %v607 = vld [vmem:[%s606] sm:$0xf]
      %vm608 = vcmask 64512
      %v610 = vsel %vm608, %v590, 0
      %v613 = vsel %vm608, %v591, 0
      %v616 = vsel %vm608, %v592, 0
      %v619 = vsel %vm608, %v593, 0
      %v622 = vsel %vm608, %v594, 0
      %v625 = vsel %vm608, %v595, 0
      %v628 = vsel %vm608, %v596, 0
      %v631 = vsel %vm608, %v597, 0
      %v634 = vsel %vm608, %v598, 0
      %v637 = vsel %vm608, %v599, 0
      %v640 = vsel %vm608, %v600, 0
      %v643 = vsel %vm608, %v601, 0
      %v646 = vsel %vm608, %v602, 0
      %v649 = vsel %vm608, %v603, 0
      %v652 = vsel %vm608, %v604, 0
      %v655 = vsel %vm608, %v605, 0
      %vm657 = vcmask 1043456
      %v659 = vsel %vm657, %v607, 0
      %661 = vmatprep.subr.bf16.mxu0 0
      %662 = vmatpush1.bf16.msra.mxu0 %v659
      %663 = vmatprep.subr.bf16.mxu0 0
      %664 = vmatpush1.bf16.msra.mxu0 0
      %665 = vmatprep.subr.bf16.mxu0 0
      %666 = vmatpush1.bf16.msra.mxu0 0
      %667 = vmatprep.subr.bf16.mxu0 0
      %668 = vmatpush1.bf16.msra.mxu0 0
      %669 = vmatprep.subr.bf16.mxu0 0
      %670 = vmatpush1.bf16.msra.mxu0 0
      %671 = vmatprep.subr.bf16.mxu0 0
      %672 = vmatpush1.bf16.msra.mxu0 0
      %673 = vmatprep.subr.bf16.mxu0 0
      %674 = vmatpush1.bf16.msra.mxu0 0
      %675 = vmatprep.subr.bf16.mxu0 0
      %676 = vmatpush1.bf16.msra.mxu0 0
      %677 = vmatprep.subr.bf16.mxu0 0
      %678 = vmatpush1.bf16.msra.mxu0 0
      %679 = vmatprep.subr.bf16.mxu0 0
      %680 = vmatpush1.bf16.msra.mxu0 0
      %681 = vmatprep.subr.bf16.mxu0 0
      %682 = vmatpush1.bf16.msra.mxu0 0
      %683 = vmatprep.subr.bf16.mxu0 0
      %684 = vmatpush1.bf16.msra.mxu0 0
      %685 = vmatprep.subr.bf16.mxu0 0
      %686 = vmatpush1.bf16.msra.mxu0 0
      %687 = vmatprep.subr.bf16.mxu0 0
      %688 = vmatpush1.bf16.msra.mxu0 0
      %689 = vmatprep.subr.bf16.mxu0 0
      %690 = vmatpush1.bf16.msra.mxu0 0
      %691 = vmatprep.subr.bf16.mxu0 0
      %692 = vmatpush1.bf16.msra.mxu0 0
      %693 = vmatprep.mubr.bf16.mxu0 0
      %694 = vmatmul.mubr.bf16.gmra.mrb[0].mxu0 %v610
      %v695 = vpop.f32.mrb[0].mxu0
      %v696 = vadd.f32 0.0, %v695
      %v697 = vpop.f32.mrb[0].mxu0
      %v698 = vpop.f32.mrb[0].mxu0
      %v699 = vadd.f32 0.0, %v698
      %v700 = vpop.f32.mrb[0].mxu0
      %701 = vmatprep.mubr.bf16.mxu0 0
      %702 = vmatmul.mubr.bf16.gmra.mrb[0].mxu0 %v613
      %v703 = vpop.f32.mrb[0].mxu0
      %v704 = vadd.f32 0.0, %v703
      %v705 = vpop.f32.mrb[0].mxu0
      %v706 = vpop.f32.mrb[0].mxu0
      %v707 = vadd.f32 0.0, %v706
      %v708 = vpop.f32.mrb[0].mxu0
      %709 = vmatprep.mubr.bf16.mxu0 0
      %710 = vmatmul.mubr.bf16.gmra.mrb[0].mxu0 %v616
      %v711 = vpop.f32.mrb[0].mxu0
      %v712 = vadd.f32 0.0, %v711
      %v713 = vpop.f32.mrb[0].mxu0
      %v714 = vpop.f32.mrb[0].mxu0
      %v715 = vadd.f32 0.0, %v714
      %v716 = vpop.f32.mrb[0].mxu0
      %717 = vmatprep.mubr.bf16.mxu0 0
      %718 = vmatmul.mubr.bf16.gmra.mrb[0].mxu0 %v619
      %v719 = vpop.f32.mrb[0].mxu0
      %v720 = vadd.f32 0.0, %v719
      %v721 = vpop.f32.mrb[0].mxu0
      %v722 = vpop.f32.mrb[0].mxu0
      %v723 = vadd.f32 0.0, %v722
      %v724 = vpop.f32.mrb[0].mxu0
      %725 = vmatprep.mubr.bf16.mxu0 0
      %726 = vmatmul.mubr.bf16.gmra.mrb[0].mxu0 %v622
      %v727 = vpop.f32.mrb[0].mxu0
      %v728 = vadd.f32 0.0, %v727
      %v729 = vpop.f32.mrb[0].mxu0
      %v730 = vpop.f32.mrb[0].mxu0
      %v731 = vadd.f32 0.0, %v730
      %v732 = vpop.f32.mrb[0].mxu0
      %733 = vmatprep.mubr.bf16.mxu0 0
      %734 = vmatmul.mubr.bf16.gmra.mrb[0].mxu0 %v625
      %v735 = vpop.f32.mrb[0].mxu0
      %v736 = vadd.f32 0.0, %v735
      %v737 = vpop.f32.mrb[0].mxu0
      %v738 = vpop.f32.mrb[0].mxu0
      %v739 = vadd.f32 0.0, %v738
      %v740 = vpop.f32.mrb[0].mxu0
      %741 = vmatprep.mubr.bf16.mxu0 0
      %742 = vmatmul.mubr.bf16.gmra.mrb[0].mxu0 %v628
      %v743 = vpop.f32.mrb[0].mxu0
      %v744 = vadd.f32 0.0, %v743
      %v745 = vpop.f32.mrb[0].mxu0
      %v746 = vpop.f32.mrb[0].mxu0
      %v747 = vadd.f32 0.0, %v746
      %v748 = vpop.f32.mrb[0].mxu0
      %749 = vmatprep.mubr.bf16.mxu0 0
      %750 = vmatmul.mubr.bf16.gmra.mrb[0].mxu0 %v631
      %v751 = vpop.f32.mrb[0].mxu0
      %v752 = vadd.f32 0.0, %v751
      %v753 = vpop.f32.mrb[0].mxu0
      %v754 = vpop.f32.mrb[0].mxu0
      %v755 = vadd.f32 0.0, %v754
      %v756 = vpop.f32.mrb[0].mxu0
      %757 = vmatprep.mubr.bf16.mxu0 0
      %758 = vmatmul.mubr.bf16.gmra.mrb[0].mxu0 %v634
      %v759 = vpop.f32.mrb[0].mxu0
      %v760 = vadd.f32 0.0, %v759
      %v761 = vpop.f32.mrb[0].mxu0
      %v762 = vpop.f32.mrb[0].mxu0
      %v763 = vadd.f32 0.0, %v762
      %v764 = vpop.f32.mrb[0].mxu0
      %765 = vmatprep.mubr.bf16.mxu0 0
      %766 = vmatmul.mubr.bf16.gmra.mrb[0].mxu0 %v637
      %v767 = vpop.f32.mrb[0].mxu0
      %v768 = vadd.f32 0.0, %v767
      %v769 = vpop.f32.mrb[0].mxu0
      %v770 = vpop.f32.mrb[0].mxu0
      %v771 = vadd.f32 0.0, %v770
      %v772 = vpop.f32.mrb[0].mxu0
      %773 = vmatprep.mubr.bf16.mxu0 0
      %774 = vmatmul.mubr.bf16.gmra.mrb[0].mxu0 %v640
      %v775 = vpop.f32.mrb[0].mxu0
      %v776 = vadd.f32 0.0, %v775
      %v777 = vpop.f32.mrb[0].mxu0
      %v778 = vpop.f32.mrb[0].mxu0
      %v779 = vadd.f32 0.0, %v778
      %v780 = vpop.f32.mrb[0].mxu0
      %781 = vmatprep.mubr.bf16.mxu0 0
      %782 = vmatmul.mubr.bf16.gmra.mrb[0].mxu0 %v643
      %v783 = vpop.f32.mrb[0].mxu0
      %v784 = vadd.f32 0.0, %v783
      %v785 = vpop.f32.mrb[0].mxu0
      %v786 = vpop.f32.mrb[0].mxu0
      %v787 = vadd.f32 0.0, %v786
      %v788 = vpop.f32.mrb[0].mxu0
      %789 = vmatprep.mubr.bf16.mxu0 0
      %790 = vmatmul.mubr.bf16.gmra.mrb[0].mxu0 %v646
      %v791 = vpop.f32.mrb[0].mxu0
      %v792 = vadd.f32 0.0, %v791
      %v793 = vpop.f32.mrb[0].mxu0
      %v794 = vpop.f32.mrb[0].mxu0
      %v795 = vadd.f32 0.0, %v794
      %v796 = vpop.f32.mrb[0].mxu0
      %797 = vmatprep.mubr.bf16.mxu0 0
      %798 = vmatmul.mubr.bf16.gmra.mrb[0].mxu0 %v649
      %v799 = vpop.f32.mrb[0].mxu0
      %v800 = vadd.f32 0.0, %v799
      %v801 = vpop.f32.mrb[0].mxu0
      %v802 = vpop.f32.mrb[0].mxu0
      %v803 = vadd.f32 0.0, %v802
      %v804 = vpop.f32.mrb[0].mxu0
      %805 = vmatprep.mubr.bf16.mxu0 0
      %806 = vmatmul.mubr.bf16.gmra.mrb[0].mxu0 %v652
      %v807 = vpop.f32.mrb[0].mxu0
      %v808 = vadd.f32 0.0, %v807
      %v809 = vpop.f32.mrb[0].mxu0
      %v810 = vpop.f32.mrb[0].mxu0
      %v811 = vadd.f32 0.0, %v810
      %v812 = vpop.f32.mrb[0].mxu0
      %813 = vmatprep.mubr.bf16.mxu0 0
      %814 = vmatmul.mubr.bf16.gmra.mrb[0].mxu0 %v655
      %v815 = vpop.f32.mrb[0].mxu0
      %v816 = vadd.f32 0.0, %v815
      %v817 = vpop.f32.mrb[0].mxu0
      %v818 = vpop.f32.mrb[0].mxu0
      %v819 = vadd.f32 0.0, %v818
      %v820 = vpop.f32.mrb[0].mxu0
      %821 = vdwg.mxu0
      %v823 = vsel %vm608, %v541, 0
      %v826 = vsel %vm608, %v542, 0
      %v829 = vsel %vm608, %v543, 0
      %v832 = vsel %vm608, %v544, 0
      %v835 = vsel %vm608, %v545, 0
      %v838 = vsel %vm608, %v546, 0
      %v841 = vsel %vm608, %v547, 0
      %v844 = vsel %vm608, %v548, 0
      %v847 = vsel %vm608, %v549, 0
      %v850 = vsel %vm608, %v550, 0
      %v853 = vsel %vm608, %v551, 0
      %v856 = vsel %vm608, %v552, 0
      %v859 = vsel %vm608, %v553, 0
      %v862 = vsel %vm608, %v554, 0
      %v865 = vsel %vm608, %v555, 0
      %v868 = vsel %vm608, %v556, 0
      %v871 = vsel %vm657, %v557, 0
      %873 = vmatprep.subr.bf16.mxu0 0
      %874 = vmatpush1.bf16.msra.mxu0 %v871
      %875 = vmatprep.subr.bf16.mxu0 0
      %876 = vmatpush1.bf16.msra.mxu0 0
      %877 = vmatprep.subr.bf16.mxu0 0
      %878 = vmatpush1.bf16.msra.mxu0 0
      %879 = vmatprep.subr.bf16.mxu0 0
      %880 = vmatpush1.bf16.msra.mxu0 0
      %881 = vmatprep.subr.bf16.mxu0 0
      %882 = vmatpush1.bf16.msra.mxu0 0
      %883 = vmatprep.subr.bf16.mxu0 0
      %884 = vmatpush1.bf16.msra.mxu0 0
      %885 = vmatprep.subr.bf16.mxu0 0
      %886 = vmatpush1.bf16.msra.mxu0 0
      %887 = vmatprep.subr.bf16.mxu0 0
      %888 = vmatpush1.bf16.msra.mxu0 0
      %889 = vmatprep.subr.bf16.mxu0 0
      %890 = vmatpush1.bf16.msra.mxu0 0
      %891 = vmatprep.subr.bf16.mxu0 0
      %892 = vmatpush1.bf16.msra.mxu0 0
      %893 = vmatprep.subr.bf16.mxu0 0
      %894 = vmatpush1.bf16.msra.mxu0 0
      %895 = vmatprep.subr.bf16.mxu0 0
      %896 = vmatpush1.bf16.msra.mxu0 0
      %897 = vmatprep.subr.bf16.mxu0 0
      %898 = vmatpush1.bf16.msra.mxu0 0
      %899 = vmatprep.subr.bf16.mxu0 0
      %900 = vmatpush1.bf16.msra.mxu0 0
      %901 = vmatprep.subr.bf16.mxu0 0
      %902 = vmatpush1.bf16.msra.mxu0 0
      %903 = vmatprep.subr.bf16.mxu0 0
      %904 = vmatpush1.bf16.msra.mxu0 0
      %905 = vmatprep.mubr.bf16.mxu0 0
      %906 = vmatmul.mubr.bf16.gmra.mrb[0].mxu0 %v823
      %v907 = vpop.f32.mrb[0].mxu0
      %v908 = vadd.f32 %v696, %v907
      %v909 = vpop.f32.mrb[0].mxu0
      %v910 = vpop.f32.mrb[0].mxu0
      %v911 = vadd.f32 %v699, %v910
      %v912 = vpop.f32.mrb[0].mxu0
      %913 = vmatprep.mubr.bf16.mxu0 0
      %914 = vmatmul.mubr.bf16.gmra.mrb[0].mxu0 %v826
      %v915 = vpop.f32.mrb[0].mxu0
      %v916 = vadd.f32 %v704, %v915
      %v917 = vpop.f32.mrb[0].mxu0
      %v918 = vpop.f32.mrb[0].mxu0
      %v919 = vadd.f32 %v707, %v918
      %v920 = vpop.f32.mrb[0].mxu0
      %921 = vmatprep.mubr.bf16.mxu0 0
      %922 = vmatmul.mubr.bf16.gmra.mrb[0].mxu0 %v829
      %v923 = vpop.f32.mrb[0].mxu0
      %v924 = vadd.f32 %v712, %v923
      %v925 = vpop.f32.mrb[0].mxu0
      %v926 = vpop.f32.mrb[0].mxu0
      %v927 = vadd.f32 %v715, %v926
      %v928 = vpop.f32.mrb[0].mxu0
      %929 = vmatprep.mubr.bf16.mxu0 0
      %930 = vmatmul.mubr.bf16.gmra.mrb[0].mxu0 %v832
      %v931 = vpop.f32.mrb[0].mxu0
      %v932 = vadd.f32 %v720, %v931
      %v933 = vpop.f32.mrb[0].mxu0
      %v934 = vpop.f32.mrb[0].mxu0
      %v935 = vadd.f32 %v723, %v934
      %v936 = vpop.f32.mrb[0].mxu0
      %937 = vmatprep.mubr.bf16.mxu0 0
      %938 = vmatmul.mubr.bf16.gmra.mrb[0].mxu0 %v835
      %v939 = vpop.f32.mrb[0].mxu0
      %v940 = vadd.f32 %v728, %v939
      %v941 = vpop.f32.mrb[0].mxu0
      %v942 = vpop.f32.mrb[0].mxu0
      %v943 = vadd.f32 %v731, %v942
      %v944 = vpop.f32.mrb[0].mxu0
      %945 = vmatprep.mubr.bf16.mxu0 0
      %946 = vmatmul.mubr.bf16.gmra.mrb[0].mxu0 %v838
      %v947 = vpop.f32.mrb[0].mxu0
      %v948 = vadd.f32 %v736, %v947
      %v949 = vpop.f32.mrb[0].mxu0
      %v950 = vpop.f32.mrb[0].mxu0
      %v951 = vadd.f32 %v739, %v950
      %v952 = vpop.f32.mrb[0].mxu0
      %953 = vmatprep.mubr.bf16.mxu0 0
      %954 = vmatmul.mubr.bf16.gmra.mrb[0].mxu0 %v841
      %v955 = vpop.f32.mrb[0].mxu0
      %v956 = vadd.f32 %v744, %v955
      %v957 = vpop.f32.mrb[0].mxu0
      %v958 = vpop.f32.mrb[0].mxu0
      %v959 = vadd.f32 %v747, %v958
      %v960 = vpop.f32.mrb[0].mxu0
      %961 = vmatprep.mubr.bf16.mxu0 0
      %962 = vmatmul.mubr.bf16.gmra.mrb[0].mxu0 %v844
      %v963 = vpop.f32.mrb[0].mxu0
      %v964 = vadd.f32 %v752, %v963
      %v965 = vpop.f32.mrb[0].mxu0
      %v966 = vpop.f32.mrb[0].mxu0
      %v967 = vadd.f32 %v755, %v966
      %v968 = vpop.f32.mrb[0].mxu0
      %969 = vmatprep.mubr.bf16.mxu0 0
      %970 = vmatmul.mubr.bf16.gmra.mrb[0].mxu0 %v847
      %v971 = vpop.f32.mrb[0].mxu0
      %v972 = vadd.f32 %v760, %v971
      %v973 = vpop.f32.mrb[0].mxu0
      %v974 = vpop.f32.mrb[0].mxu0
      %v975 = vadd.f32 %v763, %v974
      %v976 = vpop.f32.mrb[0].mxu0
      %977 = vmatprep.mubr.bf16.mxu0 0
      %978 = vmatmul.mubr.bf16.gmra.mrb[0].mxu0 %v850
      %v979 = vpop.f32.mrb[0].mxu0
      %v980 = vadd.f32 %v768, %v979
      %v981 = vpop.f32.mrb[0].mxu0
      %v982 = vpop.f32.mrb[0].mxu0
      %v983 = vadd.f32 %v771, %v982
      %v984 = vpop.f32.mrb[0].mxu0
      %985 = vmatprep.mubr.bf16.mxu0 0
      %986 = vmatmul.mubr.bf16.gmra.mrb[0].mxu0 %v853
      %v987 = vpop.f32.mrb[0].mxu0
      %v988 = vadd.f32 %v776, %v987
      %v989 = vpop.f32.mrb[0].mxu0
      %v990 = vpop.f32.mrb[0].mxu0
      %v991 = vadd.f32 %v779, %v990
      %v992 = vpop.f32.mrb[0].mxu0
      %993 = vmatprep.mubr.bf16.mxu0 0
      %994 = vmatmul.mubr.bf16.gmra.mrb[0].mxu0 %v856
      %v995 = vpop.f32.mrb[0].mxu0
      %v996 = vadd.f32 %v784, %v995
      %v997 = vpop.f32.mrb[0].mxu0
      %v998 = vpop.f32.mrb[0].mxu0
      %v999 = vadd.f32 %v787, %v998
      %v1000 = vpop.f32.mrb[0].mxu0
      %1001 = vmatprep.mubr.bf16.mxu0 0
      %1002 = vmatmul.mubr.bf16.gmra.mrb[0].mxu0 %v859
      %v1003 = vpop.f32.mrb[0].mxu0
      %v1004 = vadd.f32 %v792, %v1003
      %v1005 = vpop.f32.mrb[0].mxu0
      %v1006 = vpop.f32.mrb[0].mxu0
      %v1007 = vadd.f32 %v795, %v1006
      %v1008 = vpop.f32.mrb[0].mxu0
      %1009 = vmatprep.mubr.bf16.mxu0 0
      %1010 = vmatmul.mubr.bf16.gmra.mrb[0].mxu0 %v862
      %v1011 = vpop.f32.mrb[0].mxu0
      %v1012 = vadd.f32 %v800, %v1011
      %v1013 = vpop.f32.mrb[0].mxu0
      %v1014 = vpop.f32.mrb[0].mxu0
      %v1015 = vadd.f32 %v803, %v1014
      %v1016 = vpop.f32.mrb[0].mxu0
      %1017 = vmatprep.mubr.bf16.mxu0 0
      %1018 = vmatmul.mubr.bf16.gmra.mrb[0].mxu0 %v865
      %v1019 = vpop.f32.mrb[0].mxu0
      %v1020 = vadd.f32 %v808, %v1019
      %v1021 = vpop.f32.mrb[0].mxu0
      %v1022 = vpop.f32.mrb[0].mxu0
      %v1023 = vadd.f32 %v811, %v1022
      %v1024 = vpop.f32.mrb[0].mxu0
      %1025 = vmatprep.mubr.bf16.mxu0 0
      %1026 = vmatmul.mubr.bf16.gmra.mrb[0].mxu0 %v868
      %v1027 = vpop.f32.mrb[0].mxu0
      %v1028 = vadd.f32 %v816, %v1027
      %v1029 = vpop.f32.mrb[0].mxu0
      %v1030 = vpop.f32.mrb[0].mxu0
      %v1031 = vadd.f32 %v819, %v1030
      %v1032 = vpop.f32.mrb[0].mxu0
      %1033 = vdwg.mxu0
      %v1034 = vld [vmem:[%s246 + $0x11] sm:$0xff]
      %v1035 = vld [vmem:[%s246 + $0x19] sm:$0xff]
      %v1036 = vld [vmem:[%s246 + $0x21] sm:$0xff]
      %v1037 = vld [vmem:[%s246 + $0x29] sm:$0xff]
      %v1038 = vld [vmem:[%s246 + $0x31] sm:$0xff]
      %v1039 = vld [vmem:[%s246 + $0x39] sm:$0xff]
      %v1040 = vld [vmem:[%s246 + $0x41] sm:$0xff]
      %v1041 = vld [vmem:[%s246 + $0x49] sm:$0xff]
      %v1042 = vld [vmem:[%s246 + $0x51] sm:$0xff]
      %v1043 = vld [vmem:[%s246 + $0x59] sm:$0xff]
      %v1044 = vld [vmem:[%s246 + $0x61] sm:$0xff]
      %v1045 = vld [vmem:[%s246 + $0x69] sm:$0xff]
      %v1046 = vld [vmem:[%s246 + $0x71] sm:$0xff]
      %v1047 = vld [vmem:[%s246 + $0x79] sm:$0xff]
      %v1048 = vld [vmem:[%s246 + $0x81] sm:$0xff]
      %v1049 = vld [vmem:[%s246 + $0x89] sm:$0xff]
      %v1050 = vld [vmem:[%s246 + $0x91] sm:$0xff]
      %v1051 = vld [vmem:[%s246 + $0x99] sm:$0xff]
      %v1052 = vld [vmem:[%s246 + $0xa1] sm:$0xff]
      %v1053 = vld [vmem:[%s246 + $0xa9] sm:$0xff]
      %v1054 = vld [vmem:[%s246 + $0xb1] sm:$0xff]
      %v1055 = vld [vmem:[%s246 + $0xb9] sm:$0xff]
      %v1056 = vld [vmem:[%s246 + $0xc1] sm:$0xff]
      %v1057 = vld [vmem:[%s246 + $0xc9] sm:$0xff]
      %v1058 = vld [vmem:[%s246 + $0xd1] sm:$0xff]
      %v1059 = vld [vmem:[%s246 + $0xd9] sm:$0xff]
      %v1060 = vld [vmem:[%s246 + $0xe1] sm:$0xff]
      %v1061 = vld [vmem:[%s246 + $0xe9] sm:$0xff]
      %v1062 = vld [vmem:[%s246 + $0xf1] sm:$0xff]
      %v1063 = vld [vmem:[%s246 + $0xf9] sm:$0xff]
      %v1064 = vld [vmem:[%s246 + $0x101] sm:$0xff]
      %v1065 = vld [vmem:[%s246 + $0x109] sm:$0xff]
      %1067 = vset.pattern.permute.xlu0 0
      %1068 = vperm.xlu0 %1067, %v285
      %v1069 = vpop.permute.xlu0 %1068
      %1072 = vset.pattern.permute.xlu0 0
      %1073 = vperm.xlu0 %1072, %v286
      %v1074 = vpop.permute.xlu0 %1073
      %1077 = vset.pattern.permute.xlu0 0
      %1078 = vperm.xlu0 %1077, %v287
      %v1079 = vpop.permute.xlu0 %1078
      %1082 = vset.pattern.permute.xlu0 0
      %1083 = vperm.xlu0 %1082, %v288
      %v1084 = vpop.permute.xlu0 %1083
      %1087 = vset.pattern.permute.xlu0 0
      %1088 = vperm.xlu0 %1087, %v289
      %v1089 = vpop.permute.xlu0 %1088
      %1092 = vset.pattern.permute.xlu0 0
      %1093 = vperm.xlu0 %1092, %v290
      %v1094 = vpop.permute.xlu0 %1093
      %1097 = vset.pattern.permute.xlu0 0
      %1098 = vperm.xlu0 %1097, %v291
      %v1099 = vpop.permute.xlu0 %1098
      %1102 = vset.pattern.permute.xlu0 0
      %1103 = vperm.xlu0 %1102, %v292
      %v1104 = vpop.permute.xlu0 %1103
      %1107 = vset.pattern.permute.xlu0 0
      %1108 = vperm.xlu0 %1107, %v293
      %v1109 = vpop.permute.xlu0 %1108
      %1112 = vset.pattern.permute.xlu0 0
      %1113 = vperm.xlu0 %1112, %v294
      %v1114 = vpop.permute.xlu0 %1113
      %1117 = vset.pattern.permute.xlu0 0
      %1118 = vperm.xlu0 %1117, %v295
      %v1119 = vpop.permute.xlu0 %1118
      %1122 = vset.pattern.permute.xlu0 0
      %1123 = vperm.xlu0 %1122, %v296
      %v1124 = vpop.permute.xlu0 %1123
      %1127 = vset.pattern.permute.xlu0 0
      %1128 = vperm.xlu0 %1127, %v297
      %v1129 = vpop.permute.xlu0 %1128
      %1132 = vset.pattern.permute.xlu0 0
      %1133 = vperm.xlu0 %1132, %v298
      %v1134 = vpop.permute.xlu0 %1133
      %1137 = vset.pattern.permute.xlu0 0
      %1138 = vperm.xlu0 %1137, %v299
      %v1139 = vpop.permute.xlu0 %1138
      %1142 = vset.pattern.permute.xlu0 0
      %1143 = vperm.xlu0 %1142, %v300
      %v1144 = vpop.permute.xlu0 %1143
      %1147 = vset.pattern.permute.xlu0 0
      %1148 = vperm.xlu0 %1147, %v301
      %v1149 = vpop.permute.xlu0 %1148
      %1152 = vset.pattern.permute.xlu0 0
      %1153 = vperm.xlu0 %1152, %v302
      %v1154 = vpop.permute.xlu0 %1153
      %1157 = vset.pattern.permute.xlu0 0
      %1158 = vperm.xlu0 %1157, %v303
      %v1159 = vpop.permute.xlu0 %1158
      %1162 = vset.pattern.permute.xlu0 0
      %1163 = vperm.xlu0 %1162, %v304
      %v1164 = vpop.permute.xlu0 %1163
      %1167 = vset.pattern.permute.xlu0 0
      %1168 = vperm.xlu0 %1167, %v305
      %v1169 = vpop.permute.xlu0 %1168
      %1172 = vset.pattern.permute.xlu0 0
      %1173 = vperm.xlu0 %1172, %v306
      %v1174 = vpop.permute.xlu0 %1173
      %1177 = vset.pattern.permute.xlu0 0
      %1178 = vperm.xlu0 %1177, %v307
      %v1179 = vpop.permute.xlu0 %1178
      %1182 = vset.pattern.permute.xlu0 0
      %1183 = vperm.xlu0 %1182, %v308
      %v1184 = vpop.permute.xlu0 %1183
      %1187 = vset.pattern.permute.xlu0 0
      %1188 = vperm.xlu0 %1187, %v309
      %v1189 = vpop.permute.xlu0 %1188
      %1192 = vset.pattern.permute.xlu0 0
      %1193 = vperm.xlu0 %1192, %v310
      %v1194 = vpop.permute.xlu0 %1193
      %1197 = vset.pattern.permute.xlu0 0
      %1198 = vperm.xlu0 %1197, %v311
      %v1199 = vpop.permute.xlu0 %1198
      %1202 = vset.pattern.permute.xlu0 0
      %1203 = vperm.xlu0 %1202, %v312
      %v1204 = vpop.permute.xlu0 %1203
      %1207 = vset.pattern.permute.xlu0 0
      %1208 = vperm.xlu0 %1207, %v313
      %v1209 = vpop.permute.xlu0 %1208
      %1212 = vset.pattern.permute.xlu0 0
      %1213 = vperm.xlu0 %1212, %v314
      %v1214 = vpop.permute.xlu0 %1213
      %1217 = vset.pattern.permute.xlu0 0
      %1218 = vperm.xlu0 %1217, %v315
      %v1219 = vpop.permute.xlu0 %1218
      %1222 = vset.pattern.permute.xlu0 0
      %1223 = vperm.xlu0 %1222, %v316
      %v1224 = vpop.permute.xlu0 %1223
      %v1226 = vmul.f32 %v1034, %v1069
      %v1227 = vmul.f32 %v1035, %v1074
      %v1228 = vmul.f32 %v1036, %v1079
      %v1229 = vmul.f32 %v1037, %v1084
      %v1230 = vmul.f32 %v1038, %v1089
      %v1231 = vmul.f32 %v1039, %v1094
      %v1232 = vmul.f32 %v1040, %v1099
      %v1233 = vmul.f32 %v1041, %v1104
      %v1234 = vmul.f32 %v1042, %v1109
      %v1235 = vmul.f32 %v1043, %v1114
      %v1236 = vmul.f32 %v1044, %v1119
      %v1237 = vmul.f32 %v1045, %v1124
      %v1238 = vmul.f32 %v1046, %v1129
      %v1239 = vmul.f32 %v1047, %v1134
      %v1240 = vmul.f32 %v1048, %v1139
      %v1241 = vmul.f32 %v1049, %v1144
      %v1242 = vmul.f32 %v1050, %v1149
      %v1243 = vmul.f32 %v1051, %v1154
      %v1244 = vmul.f32 %v1052, %v1159
      %v1245 = vmul.f32 %v1053, %v1164
      %v1246 = vmul.f32 %v1054, %v1169
      %v1247 = vmul.f32 %v1055, %v1174
      %v1248 = vmul.f32 %v1056, %v1179
      %v1249 = vmul.f32 %v1057, %v1184
      %v1250 = vmul.f32 %v1058, %v1189
      %v1251 = vmul.f32 %v1059, %v1194
      %v1252 = vmul.f32 %v1060, %v1199
      %v1253 = vmul.f32 %v1061, %v1204
      %v1254 = vmul.f32 %v1062, %v1209
      %v1255 = vmul.f32 %v1063, %v1214
      %v1256 = vmul.f32 %v1064, %v1219
      %v1257 = vmul.f32 %v1065, %v1224
      %v1258 = vpack.c.bf16 %v1227, %v1226
      %v1259 = vpack.c.bf16 %v1229, %v1228
      %v1260 = vpack.c.bf16 %v1231, %v1230
      %v1261 = vpack.c.bf16 %v1233, %v1232
      %v1262 = vpack.c.bf16 %v1235, %v1234
      %v1263 = vpack.c.bf16 %v1237, %v1236
      %v1264 = vpack.c.bf16 %v1239, %v1238
      %v1265 = vpack.c.bf16 %v1241, %v1240
      %v1266 = vpack.c.bf16 %v1243, %v1242
      %v1267 = vpack.c.bf16 %v1245, %v1244
      %v1268 = vpack.c.bf16 %v1247, %v1246
      %v1269 = vpack.c.bf16 %v1249, %v1248
      %v1270 = vpack.c.bf16 %v1251, %v1250
      %v1271 = vpack.c.bf16 %v1253, %v1252
      %v1272 = vpack.c.bf16 %v1255, %v1254
      %v1273 = vpack.c.bf16 %v1257, %v1256
      %s1274 = scalar_lea.vmem %s1, 8
      %v1275 = vld [vmem:[%s1274] sm:$0xf]
      %v1277 = vsel %vm608, %v1258, 0
      %v1280 = vsel %vm608, %v1259, 0
      %v1283 = vsel %vm608, %v1260, 0
      %v1286 = vsel %vm608, %v1261, 0
      %v1289 = vsel %vm608, %v1262, 0
      %v1292 = vsel %vm608, %v1263, 0
      %v1295 = vsel %vm608, %v1264, 0
      %v1298 = vsel %vm608, %v1265, 0
      %v1301 = vsel %vm608, %v1266, 0
      %v1304 = vsel %vm608, %v1267, 0
      %v1307 = vsel %vm608, %v1268, 0
      %v1310 = vsel %vm608, %v1269, 0
      %v1313 = vsel %vm608, %v1270, 0
      %v1316 = vsel %vm608, %v1271, 0
      %v1319 = vsel %vm608, %v1272, 0
      %v1322 = vsel %vm608, %v1273, 0
      %v1325 = vsel %vm657, %v1275, 0
      %1327 = vmatprep.subr.bf16.mxu0 0
      %1328 = vmatpush1.bf16.msra.mxu0 %v1325
      %1329 = vmatprep.subr.bf16.mxu0 0
      %1330 = vmatpush1.bf16.msra.mxu0 0
      %1331 = vmatprep.subr.bf16.mxu0 0
      %1332 = vmatpush1.bf16.msra.mxu0 0
      %1333 = vmatprep.subr.bf16.mxu0 0
      %1334 = vmatpush1.bf16.msra.mxu0 0
      %1335 = vmatprep.subr.bf16.mxu0 0
      %1336 = vmatpush1.bf16.msra.mxu0 0
      %1337 = vmatprep.subr.bf16.mxu0 0
      %1338 = vmatpush1.bf16.msra.mxu0 0
      %1339 = vmatprep.subr.bf16.mxu0 0
      %1340 = vmatpush1.bf16.msra.mxu0 0
      %1341 = vmatprep.subr.bf16.mxu0 0
      %1342 = vmatpush1.bf16.msra.mxu0 0
      %1343 = vmatprep.subr.bf16.mxu0 0
      %1344 = vmatpush1.bf16.msra.mxu0 0
      %1345 = vmatprep.subr.bf16.mxu0 0
      %1346 = vmatpush1.bf16.msra.mxu0 0
      %1347 = vmatprep.subr.bf16.mxu0 0
      %1348 = vmatpush1.bf16.msra.mxu0 0
      %1349 = vmatprep.subr.bf16.mxu0 0
      %1350 = vmatpush1.bf16.msra.mxu0 0
      %1351 = vmatprep.subr.bf16.mxu0 0
      %1352 = vmatpush1.bf16.msra.mxu0 0
      %1353 = vmatprep.subr.bf16.mxu0 0
      %1354 = vmatpush1.bf16.msra.mxu0 0
      %1355 = vmatprep.subr.bf16.mxu0 0
      %1356 = vmatpush1.bf16.msra.mxu0 0
      %1357 = vmatprep.subr.bf16.mxu0 0
      %1358 = vmatpush1.bf16.msra.mxu0 0
      %1359 = vmatprep.mubr.bf16.mxu0 0
      %1360 = vmatmul.mubr.bf16.gmra.mrb[0].mxu0 %v1277
      %v1361 = vpop.f32.mrb[0].mxu0
      %v1362 = vadd.f32 0.0, %v1361
      %v1363 = vpop.f32.mrb[0].mxu0
      %v1364 = vpop.f32.mrb[0].mxu0
      %v1365 = vadd.f32 0.0, %v1364
      %v1366 = vpop.f32.mrb[0].mxu0
      %1367 = vmatprep.mubr.bf16.mxu0 0
      %1368 = vmatmul.mubr.bf16.gmra.mrb[0].mxu0 %v1280
      %v1369 = vpop.f32.mrb[0].mxu0
      %v1370 = vadd.f32 0.0, %v1369
      %v1371 = vpop.f32.mrb[0].mxu0
      %v1372 = vpop.f32.mrb[0].mxu0
      %v1373 = vadd.f32 0.0, %v1372
      %v1374 = vpop.f32.mrb[0].mxu0
      %1375 = vmatprep.mubr.bf16.mxu0 0
      %1376 = vmatmul.mubr.bf16.gmra.mrb[0].mxu0 %v1283
      %v1377 = vpop.f32.mrb[0].mxu0
      %v1378 = vadd.f32 0.0, %v1377
      %v1379 = vpop.f32.mrb[0].mxu0
      %v1380 = vpop.f32.mrb[0].mxu0
      %v1381 = vadd.f32 0.0, %v1380
      %v1382 = vpop.f32.mrb[0].mxu0
      %1383 = vmatprep.mubr.bf16.mxu0 0
      %1384 = vmatmul.mubr.bf16.gmra.mrb[0].mxu0 %v1286
      %v1385 = vpop.f32.mrb[0].mxu0
      %v1386 = vadd.f32 0.0, %v1385
      %v1387 = vpop.f32.mrb[0].mxu0
      %v1388 = vpop.f32.mrb[0].mxu0
      %v1389 = vadd.f32 0.0, %v1388
      %v1390 = vpop.f32.mrb[0].mxu0
      %1391 = vmatprep.mubr.bf16.mxu0 0
      %1392 = vmatmul.mubr.bf16.gmra.mrb[0].mxu0 %v1289
      %v1393 = vpop.f32.mrb[0].mxu0
      %v1394 = vadd.f32 0.0, %v1393
      %v1395 = vpop.f32.mrb[0].mxu0
      %v1396 = vpop.f32.mrb[0].mxu0
      %v1397 = vadd.f32 0.0, %v1396
      %v1398 = vpop.f32.mrb[0].mxu0
      %1399 = vmatprep.mubr.bf16.mxu0 0
      %1400 = vmatmul.mubr.bf16.gmra.mrb[0].mxu0 %v1292
      %v1401 = vpop.f32.mrb[0].mxu0
      %v1402 = vadd.f32 0.0, %v1401
      %v1403 = vpop.f32.mrb[0].mxu0
      %v1404 = vpop.f32.mrb[0].mxu0
      %v1405 = vadd.f32 0.0, %v1404
      %v1406 = vpop.f32.mrb[0].mxu0
      %1407 = vmatprep.mubr.bf16.mxu0 0
      %1408 = vmatmul.mubr.bf16.gmra.mrb[0].mxu0 %v1295
      %v1409 = vpop.f32.mrb[0].mxu0
      %v1410 = vadd.f32 0.0, %v1409
      %v1411 = vpop.f32.mrb[0].mxu0
      %v1412 = vpop.f32.mrb[0].mxu0
      %v1413 = vadd.f32 0.0, %v1412
      %v1414 = vpop.f32.mrb[0].mxu0
      %1415 = vmatprep.mubr.bf16.mxu0 0
      %1416 = vmatmul.mubr.bf16.gmra.mrb[0].mxu0 %v1298
      %v1417 = vpop.f32.mrb[0].mxu0
      %v1418 = vadd.f32 0.0, %v1417
      %v1419 = vpop.f32.mrb[0].mxu0
      %v1420 = vpop.f32.mrb[0].mxu0
      %v1421 = vadd.f32 0.0, %v1420
      %v1422 = vpop.f32.mrb[0].mxu0
      %1423 = vmatprep.mubr.bf16.mxu0 0
      %1424 = vmatmul.mubr.bf16.gmra.mrb[0].mxu0 %v1301
      %v1425 = vpop.f32.mrb[0].mxu0
      %v1426 = vadd.f32 0.0, %v1425
      %v1427 = vpop.f32.mrb[0].mxu0
      %v1428 = vpop.f32.mrb[0].mxu0
      %v1429 = vadd.f32 0.0, %v1428
      %v1430 = vpop.f32.mrb[0].mxu0
      %1431 = vmatprep.mubr.bf16.mxu0 0
      %1432 = vmatmul.mubr.bf16.gmra.mrb[0].mxu0 %v1304
      %v1433 = vpop.f32.mrb[0].mxu0
      %v1434 = vadd.f32 0.0, %v1433
      %v1435 = vpop.f32.mrb[0].mxu0
      %v1436 = vpop.f32.mrb[0].mxu0
      %v1437 = vadd.f32 0.0, %v1436
      %v1438 = vpop.f32.mrb[0].mxu0
      %1439 = vmatprep.mubr.bf16.mxu0 0
      %1440 = vmatmul.mubr.bf16.gmra.mrb[0].mxu0 %v1307
      %v1441 = vpop.f32.mrb[0].mxu0
      %v1442 = vadd.f32 0.0, %v1441
      %v1443 = vpop.f32.mrb[0].mxu0
      %v1444 = vpop.f32.mrb[0].mxu0
      %v1445 = vadd.f32 0.0, %v1444
      %v1446 = vpop.f32.mrb[0].mxu0
      %1447 = vmatprep.mubr.bf16.mxu0 0
      %1448 = vmatmul.mubr.bf16.gmra.mrb[0].mxu0 %v1310
      %v1449 = vpop.f32.mrb[0].mxu0
      %v1450 = vadd.f32 0.0, %v1449
      %v1451 = vpop.f32.mrb[0].mxu0
      %v1452 = vpop.f32.mrb[0].mxu0
      %v1453 = vadd.f32 0.0, %v1452
      %v1454 = vpop.f32.mrb[0].mxu0
      %1455 = vmatprep.mubr.bf16.mxu0 0
      %1456 = vmatmul.mubr.bf16.gmra.mrb[0].mxu0 %v1313
      %v1457 = vpop.f32.mrb[0].mxu0
      %v1458 = vadd.f32 0.0, %v1457
      %v1459 = vpop.f32.mrb[0].mxu0
      %v1460 = vpop.f32.mrb[0].mxu0
      %v1461 = vadd.f32 0.0, %v1460
      %v1462 = vpop.f32.mrb[0].mxu0
      %1463 = vmatprep.mubr.bf16.mxu0 0
      %1464 = vmatmul.mubr.bf16.gmra.mrb[0].mxu0 %v1316
      %v1465 = vpop.f32.mrb[0].mxu0
      %v1466 = vadd.f32 0.0, %v1465
      %v1467 = vpop.f32.mrb[0].mxu0
      %v1468 = vpop.f32.mrb[0].mxu0
      %v1469 = vadd.f32 0.0, %v1468
      %v1470 = vpop.f32.mrb[0].mxu0
      %1471 = vmatprep.mubr.bf16.mxu0 0
      %1472 = vmatmul.mubr.bf16.gmra.mrb[0].mxu0 %v1319
      %v1473 = vpop.f32.mrb[0].mxu0
      %v1474 = vadd.f32 0.0, %v1473
      %v1475 = vpop.f32.mrb[0].mxu0
      %v1476 = vpop.f32.mrb[0].mxu0
      %v1477 = vadd.f32 0.0, %v1476
      %v1478 = vpop.f32.mrb[0].mxu0
      %1479 = vmatprep.mubr.bf16.mxu0 0
      %1480 = vmatmul.mubr.bf16.gmra.mrb[0].mxu0 %v1322
      %v1481 = vpop.f32.mrb[0].mxu0
      %v1482 = vadd.f32 0.0, %v1481
      %v1483 = vpop.f32.mrb[0].mxu0
      %v1484 = vpop.f32.mrb[0].mxu0
      %v1485 = vadd.f32 0.0, %v1484
      %v1486 = vpop.f32.mrb[0].mxu0
      %1487 = vdwg.mxu0
      %v1488 = vadd.f32 %v908, %v1362
      %v1489 = vadd.f32 %v911, %v1365
      %v1490 = vadd.f32 %v916, %v1370
      %v1491 = vadd.f32 %v919, %v1373
      %v1492 = vadd.f32 %v924, %v1378
      %v1493 = vadd.f32 %v927, %v1381
      %v1494 = vadd.f32 %v932, %v1386
      %v1495 = vadd.f32 %v935, %v1389
      %v1496 = vadd.f32 %v940, %v1394
      %v1497 = vadd.f32 %v943, %v1397
      %v1498 = vadd.f32 %v948, %v1402
      %v1499 = vadd.f32 %v951, %v1405
      %v1500 = vadd.f32 %v956, %v1410
      %v1501 = vadd.f32 %v959, %v1413
      %v1502 = vadd.f32 %v964, %v1418
      %v1503 = vadd.f32 %v967, %v1421
      %v1504 = vadd.f32 %v972, %v1426
      %v1505 = vadd.f32 %v975, %v1429
      %v1506 = vadd.f32 %v980, %v1434
      %v1507 = vadd.f32 %v983, %v1437
      %v1508 = vadd.f32 %v988, %v1442
      %v1509 = vadd.f32 %v991, %v1445
      %v1510 = vadd.f32 %v996, %v1450
      %v1511 = vadd.f32 %v999, %v1453
      %v1512 = vadd.f32 %v1004, %v1458
      %v1513 = vadd.f32 %v1007, %v1461
      %v1514 = vadd.f32 %v1012, %v1466
      %v1515 = vadd.f32 %v1015, %v1469
      %v1516 = vadd.f32 %v1020, %v1474
      %v1517 = vadd.f32 %v1023, %v1477
      %v1518 = vadd.f32 %v1028, %v1482
      %v1519 = vadd.f32 %v1031, %v1485
      %v1520 = vld [vmem:[%s246 + $0x1f] sm:$0xff]
      %v1521 = vld [vmem:[%s246 + $0x27] sm:$0xff]
      %v1522 = vld [vmem:[%s246 + $0x2f] sm:$0xff]
      %v1523 = vld [vmem:[%s246 + $0x37] sm:$0xff]
      %v1524 = vld [vmem:[%s246 + $0x3f] sm:$0xff]
      %v1525 = vld [vmem:[%s246 + $0x47] sm:$0xff]
      %v1526 = vld [vmem:[%s246 + $0x4f] sm:$0xff]
      %v1527 = vld [vmem:[%s246 + $0x57] sm:$0xff]
      %v1528 = vld [vmem:[%s246 + $0x5f] sm:$0xff]
      %v1529 = vld [vmem:[%s246 + $0x67] sm:$0xff]
      %v1530 = vld [vmem:[%s246 + $0x6f] sm:$0xff]
      %v1531 = vld [vmem:[%s246 + $0x77] sm:$0xff]
      %v1532 = vld [vmem:[%s246 + $0x7f] sm:$0xff]
      %v1533 = vld [vmem:[%s246 + $0x87] sm:$0xff]
      %v1534 = vld [vmem:[%s246 + $0x8f] sm:$0xff]
      %v1535 = vld [vmem:[%s246 + $0x97] sm:$0xff]
      %v1536 = vld [vmem:[%s246 + $0x9f] sm:$0xff]
      %v1537 = vld [vmem:[%s246 + $0xa7] sm:$0xff]
      %v1538 = vld [vmem:[%s246 + $0xaf] sm:$0xff]
      %v1539 = vld [vmem:[%s246 + $0xb7] sm:$0xff]
      %v1540 = vld [vmem:[%s246 + $0xbf] sm:$0xff]
      %v1541 = vld [vmem:[%s246 + $0xc7] sm:$0xff]
      %v1542 = vld [vmem:[%s246 + $0xcf] sm:$0xff]
      %v1543 = vld [vmem:[%s246 + $0xd7] sm:$0xff]
      %v1544 = vld [vmem:[%s246 + $0xdf] sm:$0xff]
      %v1545 = vld [vmem:[%s246 + $0xe7] sm:$0xff]
      %v1546 = vld [vmem:[%s246 + $0xef] sm:$0xff]
      %v1547 = vld [vmem:[%s246 + $0xf7] sm:$0xff]
      %v1548 = vld [vmem:[%s246 + $0xff] sm:$0xff]
      %v1549 = vld [vmem:[%s246 + $0x107] sm:$0xff]
      %v1550 = vld [vmem:[%s246 + $0x10f] sm:$0xff]
      %v1551 = vld [vmem:[%s246 + $0x117] sm:$0xff]
      %v1552 = vmul.f32 %v1520, %v352
      %v1553 = vmul.f32 %v1521, %v357
      %v1554 = vmul.f32 %v1522, %v362
      %v1555 = vmul.f32 %v1523, %v367
      %v1556 = vmul.f32 %v1524, %v372
      %v1557 = vmul.f32 %v1525, %v377
      %v1558 = vmul.f32 %v1526, %v382
      %v1559 = vmul.f32 %v1527, %v387
      %v1560 = vmul.f32 %v1528, %v392
      %v1561 = vmul.f32 %v1529, %v397
      %v1562 = vmul.f32 %v1530, %v402
      %v1563 = vmul.f32 %v1531, %v407
      %v1564 = vmul.f32 %v1532, %v412
      %v1565 = vmul.f32 %v1533, %v417
      %v1566 = vmul.f32 %v1534, %v422
      %v1567 = vmul.f32 %v1535, %v427
      %v1568 = vmul.f32 %v1536, %v432
      %v1569 = vmul.f32 %v1537, %v437
      %v1570 = vmul.f32 %v1538, %v442
      %v1571 = vmul.f32 %v1539, %v447
      %v1572 = vmul.f32 %v1540, %v452
      %v1573 = vmul.f32 %v1541, %v457
      %v1574 = vmul.f32 %v1542, %v462
      %v1575 = vmul.f32 %v1543, %v467
      %v1576 = vmul.f32 %v1544, %v472
      %v1577 = vmul.f32 %v1545, %v477
      %v1578 = vmul.f32 %v1546, %v482
      %v1579 = vmul.f32 %v1547, %v487
      %v1580 = vmul.f32 %v1548, %v492
      %v1581 = vmul.f32 %v1549, %v497
      %v1582 = vmul.f32 %v1550, %v502
      %v1583 = vmul.f32 %v1551, %v507
      %v1584 = vpack.c.bf16 %v1553, %v1552
      %v1585 = vpack.c.bf16 %v1555, %v1554
      %v1586 = vpack.c.bf16 %v1557, %v1556
      %v1587 = vpack.c.bf16 %v1559, %v1558
      %v1588 = vpack.c.bf16 %v1561, %v1560
      %v1589 = vpack.c.bf16 %v1563, %v1562
      %v1590 = vpack.c.bf16 %v1565, %v1564
      %v1591 = vpack.c.bf16 %v1567, %v1566
      %v1592 = vpack.c.bf16 %v1569, %v1568
      %v1593 = vpack.c.bf16 %v1571, %v1570
      %v1594 = vpack.c.bf16 %v1573, %v1572
      %v1595 = vpack.c.bf16 %v1575, %v1574
      %v1596 = vpack.c.bf16 %v1577, %v1576
      %v1597 = vpack.c.bf16 %v1579, %v1578
      %v1598 = vpack.c.bf16 %v1581, %v1580
      %v1599 = vpack.c.bf16 %v1583, %v1582
      %s1600 = scalar_lea.vmem %s1, 12
      %v1601 = vld [vmem:[%s1600] sm:$0xf]
      %v1603 = vsel %vm608, %v1584, 0
      %v1606 = vsel %vm608, %v1585, 0
      %v1609 = vsel %vm608, %v1586, 0
      %v1612 = vsel %vm608, %v1587, 0
      %v1615 = vsel %vm608, %v1588, 0
      %v1618 = vsel %vm608, %v1589, 0
      %v1621 = vsel %vm608, %v1590, 0
      %v1624 = vsel %vm608, %v1591, 0
      %v1627 = vsel %vm608, %v1592, 0
      %v1630 = vsel %vm608, %v1593, 0
      %v1633 = vsel %vm608, %v1594, 0
      %v1636 = vsel %vm608, %v1595, 0
      %v1639 = vsel %vm608, %v1596, 0
      %v1642 = vsel %vm608, %v1597, 0
      %v1645 = vsel %vm608, %v1598, 0
      %v1648 = vsel %vm608, %v1599, 0
      %v1651 = vsel %vm657, %v1601, 0
      %1653 = vmatprep.subr.bf16.mxu0 0
      %1654 = vmatpush1.bf16.msra.mxu0 %v1651
      %1655 = vmatprep.subr.bf16.mxu0 0
      %1656 = vmatpush1.bf16.msra.mxu0 0
      %1657 = vmatprep.subr.bf16.mxu0 0
      %1658 = vmatpush1.bf16.msra.mxu0 0
      %1659 = vmatprep.subr.bf16.mxu0 0
      %1660 = vmatpush1.bf16.msra.mxu0 0
      %1661 = vmatprep.subr.bf16.mxu0 0
      %1662 = vmatpush1.bf16.msra.mxu0 0
      %1663 = vmatprep.subr.bf16.mxu0 0
      %1664 = vmatpush1.bf16.msra.mxu0 0
      %1665 = vmatprep.subr.bf16.mxu0 0
      %1666 = vmatpush1.bf16.msra.mxu0 0
      %1667 = vmatprep.subr.bf16.mxu0 0
      %1668 = vmatpush1.bf16.msra.mxu0 0
      %1669 = vmatprep.subr.bf16.mxu0 0
      %1670 = vmatpush1.bf16.msra.mxu0 0
      %1671 = vmatprep.subr.bf16.mxu0 0
      %1672 = vmatpush1.bf16.msra.mxu0 0
      %1673 = vmatprep.subr.bf16.mxu0 0
      %1674 = vmatpush1.bf16.msra.mxu0 0
      %1675 = vmatprep.subr.bf16.mxu0 0
      %1676 = vmatpush1.bf16.msra.mxu0 0
      %1677 = vmatprep.subr.bf16.mxu0 0
      %1678 = vmatpush1.bf16.msra.mxu0 0
      %1679 = vmatprep.subr.bf16.mxu0 0
      %1680 = vmatpush1.bf16.msra.mxu0 0
      %1681 = vmatprep.subr.bf16.mxu0 0
      %1682 = vmatpush1.bf16.msra.mxu0 0
      %1683 = vmatprep.subr.bf16.mxu0 0
      %1684 = vmatpush1.bf16.msra.mxu0 0
      %1685 = vmatprep.mubr.bf16.mxu0 0
      %1686 = vmatmul.mubr.bf16.gmra.mrb[0].mxu0 %v1603
      %v1687 = vpop.f32.mrb[0].mxu0
      %v1688 = vadd.f32 0.0, %v1687
      %v1689 = vpop.f32.mrb[0].mxu0
      %v1690 = vpop.f32.mrb[0].mxu0
      %v1691 = vadd.f32 0.0, %v1690
      %v1692 = vpop.f32.mrb[0].mxu0
      %1693 = vmatprep.mubr.bf16.mxu0 0
      %1694 = vmatmul.mubr.bf16.gmra.mrb[0].mxu0 %v1606
      %v1695 = vpop.f32.mrb[0].mxu0
      %v1696 = vadd.f32 0.0, %v1695
      %v1697 = vpop.f32.mrb[0].mxu0
      %v1698 = vpop.f32.mrb[0].mxu0
      %v1699 = vadd.f32 0.0, %v1698
      %v1700 = vpop.f32.mrb[0].mxu0
      %1701 = vmatprep.mubr.bf16.mxu0 0
      %1702 = vmatmul.mubr.bf16.gmra.mrb[0].mxu0 %v1609
      %v1703 = vpop.f32.mrb[0].mxu0
      %v1704 = vadd.f32 0.0, %v1703
      %v1705 = vpop.f32.mrb[0].mxu0
      %v1706 = vpop.f32.mrb[0].mxu0
      %v1707 = vadd.f32 0.0, %v1706
      %v1708 = vpop.f32.mrb[0].mxu0
      %1709 = vmatprep.mubr.bf16.mxu0 0
      %1710 = vmatmul.mubr.bf16.gmra.mrb[0].mxu0 %v1612
      %v1711 = vpop.f32.mrb[0].mxu0
      %v1712 = vadd.f32 0.0, %v1711
      %v1713 = vpop.f32.mrb[0].mxu0
      %v1714 = vpop.f32.mrb[0].mxu0
      %v1715 = vadd.f32 0.0, %v1714
      %v1716 = vpop.f32.mrb[0].mxu0
      %1717 = vmatprep.mubr.bf16.mxu0 0
      %1718 = vmatmul.mubr.bf16.gmra.mrb[0].mxu0 %v1615
      %v1719 = vpop.f32.mrb[0].mxu0
      %v1720 = vadd.f32 0.0, %v1719
      %v1721 = vpop.f32.mrb[0].mxu0
      %v1722 = vpop.f32.mrb[0].mxu0
      %v1723 = vadd.f32 0.0, %v1722
      %v1724 = vpop.f32.mrb[0].mxu0
      %1725 = vmatprep.mubr.bf16.mxu0 0
      %1726 = vmatmul.mubr.bf16.gmra.mrb[0].mxu0 %v1618
      %v1727 = vpop.f32.mrb[0].mxu0
      %v1728 = vadd.f32 0.0, %v1727
      %v1729 = vpop.f32.mrb[0].mxu0
      %v1730 = vpop.f32.mrb[0].mxu0
      %v1731 = vadd.f32 0.0, %v1730
      %v1732 = vpop.f32.mrb[0].mxu0
      %1733 = vmatprep.mubr.bf16.mxu0 0
      %1734 = vmatmul.mubr.bf16.gmra.mrb[0].mxu0 %v1621
      %v1735 = vpop.f32.mrb[0].mxu0
      %v1736 = vadd.f32 0.0, %v1735
      %v1737 = vpop.f32.mrb[0].mxu0
      %v1738 = vpop.f32.mrb[0].mxu0
      %v1739 = vadd.f32 0.0, %v1738
      %v1740 = vpop.f32.mrb[0].mxu0
      %1741 = vmatprep.mubr.bf16.mxu0 0
      %1742 = vmatmul.mubr.bf16.gmra.mrb[0].mxu0 %v1624
      %v1743 = vpop.f32.mrb[0].mxu0
      %v1744 = vadd.f32 0.0, %v1743
      %v1745 = vpop.f32.mrb[0].mxu0
      %v1746 = vpop.f32.mrb[0].mxu0
      %v1747 = vadd.f32 0.0, %v1746
      %v1748 = vpop.f32.mrb[0].mxu0
      %1749 = vmatprep.mubr.bf16.mxu0 0
      %1750 = vmatmul.mubr.bf16.gmra.mrb[0].mxu0 %v1627
      %v1751 = vpop.f32.mrb[0].mxu0
      %v1752 = vadd.f32 0.0, %v1751
      %v1753 = vpop.f32.mrb[0].mxu0
      %v1754 = vpop.f32.mrb[0].mxu0
      %v1755 = vadd.f32 0.0, %v1754
      %v1756 = vpop.f32.mrb[0].mxu0
      %1757 = vmatprep.mubr.bf16.mxu0 0
      %1758 = vmatmul.mubr.bf16.gmra.mrb[0].mxu0 %v1630
      %v1759 = vpop.f32.mrb[0].mxu0
      %v1760 = vadd.f32 0.0, %v1759
      %v1761 = vpop.f32.mrb[0].mxu0
      %v1762 = vpop.f32.mrb[0].mxu0
      %v1763 = vadd.f32 0.0, %v1762
      %v1764 = vpop.f32.mrb[0].mxu0
      %1765 = vmatprep.mubr.bf16.mxu0 0
      %1766 = vmatmul.mubr.bf16.gmra.mrb[0].mxu0 %v1633
      %v1767 = vpop.f32.mrb[0].mxu0
      %v1768 = vadd.f32 0.0, %v1767
      %v1769 = vpop.f32.mrb[0].mxu0
      %v1770 = vpop.f32.mrb[0].mxu0
      %v1771 = vadd.f32 0.0, %v1770
      %v1772 = vpop.f32.mrb[0].mxu0
      %1773 = vmatprep.mubr.bf16.mxu0 0
      %1774 = vmatmul.mubr.bf16.gmra.mrb[0].mxu0 %v1636
      %v1775 = vpop.f32.mrb[0].mxu0
      %v1776 = vadd.f32 0.0, %v1775
      %v1777 = vpop.f32.mrb[0].mxu0
      %v1778 = vpop.f32.mrb[0].mxu0
      %v1779 = vadd.f32 0.0, %v1778
      %v1780 = vpop.f32.mrb[0].mxu0
      %1781 = vmatprep.mubr.bf16.mxu0 0
      %1782 = vmatmul.mubr.bf16.gmra.mrb[0].mxu0 %v1639
      %v1783 = vpop.f32.mrb[0].mxu0
      %v1784 = vadd.f32 0.0, %v1783
      %v1785 = vpop.f32.mrb[0].mxu0
      %v1786 = vpop.f32.mrb[0].mxu0
      %v1787 = vadd.f32 0.0, %v1786
      %v1788 = vpop.f32.mrb[0].mxu0
      %1789 = vmatprep.mubr.bf16.mxu0 0
      %1790 = vmatmul.mubr.bf16.gmra.mrb[0].mxu0 %v1642
      %v1791 = vpop.f32.mrb[0].mxu0
      %v1792 = vadd.f32 0.0, %v1791
      %v1793 = vpop.f32.mrb[0].mxu0
      %v1794 = vpop.f32.mrb[0].mxu0
      %v1795 = vadd.f32 0.0, %v1794
      %v1796 = vpop.f32.mrb[0].mxu0
      %1797 = vmatprep.mubr.bf16.mxu0 0
      %1798 = vmatmul.mubr.bf16.gmra.mrb[0].mxu0 %v1645
      %v1799 = vpop.f32.mrb[0].mxu0
      %v1800 = vadd.f32 0.0, %v1799
      %v1801 = vpop.f32.mrb[0].mxu0
      %v1802 = vpop.f32.mrb[0].mxu0
      %v1803 = vadd.f32 0.0, %v1802
      %v1804 = vpop.f32.mrb[0].mxu0
      %1805 = vmatprep.mubr.bf16.mxu0 0
      %1806 = vmatmul.mubr.bf16.gmra.mrb[0].mxu0 %v1648
      %v1807 = vpop.f32.mrb[0].mxu0
      %v1808 = vadd.f32 0.0, %v1807
      %v1809 = vpop.f32.mrb[0].mxu0
      %v1810 = vpop.f32.mrb[0].mxu0
      %v1811 = vadd.f32 0.0, %v1810
      %v1812 = vpop.f32.mrb[0].mxu0
      %1813 = vdwg.mxu0
      %v1814 = vadd.f32 %v1488, %v1688
      %v1815 = vadd.f32 %v1489, %v1691
      %v1816 = vadd.f32 %v1490, %v1696
      %v1817 = vadd.f32 %v1491, %v1699
      %v1818 = vadd.f32 %v1492, %v1704
      %v1819 = vadd.f32 %v1493, %v1707
      %v1820 = vadd.f32 %v1494, %v1712
      %v1821 = vadd.f32 %v1495, %v1715
      %v1822 = vadd.f32 %v1496, %v1720
      %v1823 = vadd.f32 %v1497, %v1723
      %v1824 = vadd.f32 %v1498, %v1728
      %v1825 = vadd.f32 %v1499, %v1731
      %v1826 = vadd.f32 %v1500, %v1736
      %v1827 = vadd.f32 %v1501, %v1739
      %v1828 = vadd.f32 %v1502, %v1744
      %v1829 = vadd.f32 %v1503, %v1747
      %v1830 = vadd.f32 %v1504, %v1752
      %v1831 = vadd.f32 %v1505, %v1755
      %v1832 = vadd.f32 %v1506, %v1760
      %v1833 = vadd.f32 %v1507, %v1763
      %v1834 = vadd.f32 %v1508, %v1768
      %v1835 = vadd.f32 %v1509, %v1771
      %v1836 = vadd.f32 %v1510, %v1776
      %v1837 = vadd.f32 %v1511, %v1779
      %v1838 = vadd.f32 %v1512, %v1784
      %v1839 = vadd.f32 %v1513, %v1787
      %v1840 = vadd.f32 %v1514, %v1792
      %v1841 = vadd.f32 %v1515, %v1795
      %v1842 = vadd.f32 %v1516, %v1800
      %v1843 = vadd.f32 %v1517, %v1803
      %v1844 = vadd.f32 %v1518, %v1808
      %v1845 = vadd.f32 %v1519, %v1811
      %v1846 = vld [vmem:[%s246 + $0x20] sm:$0xff]
      %v1847 = vld [vmem:[%s246 + $0x28] sm:$0xff]
      %v1848 = vld [vmem:[%s246 + $0x30] sm:$0xff]
      %v1849 = vld [vmem:[%s246 + $0x38] sm:$0xff]
      %v1850 = vld [vmem:[%s246 + $0x40] sm:$0xff]
      %v1851 = vld [vmem:[%s246 + $0x48] sm:$0xff]
      %v1852 = vld [vmem:[%s246 + $0x50] sm:$0xff]
      %v1853 = vld [vmem:[%s246 + $0x58] sm:$0xff]
      %v1854 = vld [vmem:[%s246 + $0x60] sm:$0xff]
      %v1855 = vld [vmem:[%s246 + $0x68] sm:$0xff]
      %v1856 = vld [vmem:[%s246 + $0x70] sm:$0xff]
      %v1857 = vld [vmem:[%s246 + $0x78] sm:$0xff]
      %v1858 = vld [vmem:[%s246 + $0x80] sm:$0xff]
      %v1859 = vld [vmem:[%s246 + $0x88] sm:$0xff]
      %v1860 = vld [vmem:[%s246 + $0x90] sm:$0xff]
      %v1861 = vld [vmem:[%s246 + $0x98] sm:$0xff]
      %v1862 = vld [vmem:[%s246 + $0xa0] sm:$0xff]
      %v1863 = vld [vmem:[%s246 + $0xa8] sm:$0xff]
      %v1864 = vld [vmem:[%s246 + $0xb0] sm:$0xff]
      %v1865 = vld [vmem:[%s246 + $0xb8] sm:$0xff]
      %v1866 = vld [vmem:[%s246 + $0xc0] sm:$0xff]
      %v1867 = vld [vmem:[%s246 + $0xc8] sm:$0xff]
      %v1868 = vld [vmem:[%s246 + $0xd0] sm:$0xff]
      %v1869 = vld [vmem:[%s246 + $0xd8] sm:$0xff]
      %v1870 = vld [vmem:[%s246 + $0xe0] sm:$0xff]
      %v1871 = vld [vmem:[%s246 + $0xe8] sm:$0xff]
      %v1872 = vld [vmem:[%s246 + $0xf0] sm:$0xff]
      %v1873 = vld [vmem:[%s246 + $0xf8] sm:$0xff]
      %v1874 = vld [vmem:[%s246 + $0x100] sm:$0xff]
      %v1875 = vld [vmem:[%s246 + $0x108] sm:$0xff]
      %v1876 = vld [vmem:[%s246 + $0x110] sm:$0xff]
      %v1877 = vld [vmem:[%s246 + $0x118] sm:$0xff]
      %v1878 = vpack.c.bf16 %v1847, %v1846
      %v1879 = vpack.c.bf16 %v1849, %v1848
      %v1880 = vpack.c.bf16 %v1851, %v1850
      %v1881 = vpack.c.bf16 %v1853, %v1852
      %v1882 = vpack.c.bf16 %v1855, %v1854
      %v1883 = vpack.c.bf16 %v1857, %v1856
      %v1884 = vpack.c.bf16 %v1859, %v1858
      %v1885 = vpack.c.bf16 %v1861, %v1860
      %v1886 = vpack.c.bf16 %v1863, %v1862
      %v1887 = vpack.c.bf16 %v1865, %v1864
      %v1888 = vpack.c.bf16 %v1867, %v1866
      %v1889 = vpack.c.bf16 %v1869, %v1868
      %v1890 = vpack.c.bf16 %v1871, %v1870
      %v1891 = vpack.c.bf16 %v1873, %v1872
      %v1892 = vpack.c.bf16 %v1875, %v1874
      %v1893 = vpack.c.bf16 %v1877, %v1876
      %s1894 = scalar_lea.vmem %s1, 16
      %v1895 = vld [vmem:[%s1894] sm:$0xf]
      %v1897 = vsel %vm608, %v1878, 0
      %v1900 = vsel %vm608, %v1879, 0
      %v1903 = vsel %vm608, %v1880, 0
      %v1906 = vsel %vm608, %v1881, 0
      %v1909 = vsel %vm608, %v1882, 0
      %v1912 = vsel %vm608, %v1883, 0
      %v1915 = vsel %vm608, %v1884, 0
      %v1918 = vsel %vm608, %v1885, 0
      %v1921 = vsel %vm608, %v1886, 0
      %v1924 = vsel %vm608, %v1887, 0
      %v1927 = vsel %vm608, %v1888, 0
      %v1930 = vsel %vm608, %v1889, 0
      %v1933 = vsel %vm608, %v1890, 0
      %v1936 = vsel %vm608, %v1891, 0
      %v1939 = vsel %vm608, %v1892, 0
      %v1942 = vsel %vm608, %v1893, 0
      %v1945 = vsel %vm657, %v1895, 0
      %1947 = vmatprep.subr.bf16.mxu0 0
      %1948 = vmatpush1.bf16.msra.mxu0 %v1945
      %1949 = vmatprep.subr.bf16.mxu0 0
      %1950 = vmatpush1.bf16.msra.mxu0 0
      %1951 = vmatprep.subr.bf16.mxu0 0
      %1952 = vmatpush1.bf16.msra.mxu0 0
      %1953 = vmatprep.subr.bf16.mxu0 0
      %1954 = vmatpush1.bf16.msra.mxu0 0
      %1955 = vmatprep.subr.bf16.mxu0 0
      %1956 = vmatpush1.bf16.msra.mxu0 0
      %1957 = vmatprep.subr.bf16.mxu0 0
      %1958 = vmatpush1.bf16.msra.mxu0 0
      %1959 = vmatprep.subr.bf16.mxu0 0
      %1960 = vmatpush1.bf16.msra.mxu0 0
      %1961 = vmatprep.subr.bf16.mxu0 0
      %1962 = vmatpush1.bf16.msra.mxu0 0
      %1963 = vmatprep.subr.bf16.mxu0 0
      %1964 = vmatpush1.bf16.msra.mxu0 0
      %1965 = vmatprep.subr.bf16.mxu0 0
      %1966 = vmatpush1.bf16.msra.mxu0 0
      %1967 = vmatprep.subr.bf16.mxu0 0
      %1968 = vmatpush1.bf16.msra.mxu0 0
      %1969 = vmatprep.subr.bf16.mxu0 0
      %1970 = vmatpush1.bf16.msra.mxu0 0
      %1971 = vmatprep.subr.bf16.mxu0 0
      %1972 = vmatpush1.bf16.msra.mxu0 0
      %1973 = vmatprep.subr.bf16.mxu0 0
      %1974 = vmatpush1.bf16.msra.mxu0 0
      %1975 = vmatprep.subr.bf16.mxu0 0
      %1976 = vmatpush1.bf16.msra.mxu0 0
      %1977 = vmatprep.subr.bf16.mxu0 0
      %1978 = vmatpush1.bf16.msra.mxu0 0
      %1979 = vmatprep.mubr.bf16.mxu0 0
      %1980 = vmatmul.mubr.bf16.gmra.mrb[0].mxu0 %v1897
      %v1981 = vpop.f32.mrb[0].mxu0
      %v1982 = vadd.f32 0.0, %v1981
      %v1983 = vpop.f32.mrb[0].mxu0
      %v1984 = vpop.f32.mrb[0].mxu0
      %v1985 = vadd.f32 0.0, %v1984
      %v1986 = vpop.f32.mrb[0].mxu0
      %1987 = vmatprep.mubr.bf16.mxu0 0
      %1988 = vmatmul.mubr.bf16.gmra.mrb[0].mxu0 %v1900
      %v1989 = vpop.f32.mrb[0].mxu0
      %v1990 = vadd.f32 0.0, %v1989
      %v1991 = vpop.f32.mrb[0].mxu0
      %v1992 = vpop.f32.mrb[0].mxu0
      %v1993 = vadd.f32 0.0, %v1992
      %v1994 = vpop.f32.mrb[0].mxu0
      %1995 = vmatprep.mubr.bf16.mxu0 0
      %1996 = vmatmul.mubr.bf16.gmra.mrb[0].mxu0 %v1903
      %v1997 = vpop.f32.mrb[0].mxu0
      %v1998 = vadd.f32 0.0, %v1997
      %v1999 = vpop.f32.mrb[0].mxu0
      %v2000 = vpop.f32.mrb[0].mxu0
      %v2001 = vadd.f32 0.0, %v2000
      %v2002 = vpop.f32.mrb[0].mxu0
      %2003 = vmatprep.mubr.bf16.mxu0 0
      %2004 = vmatmul.mubr.bf16.gmra.mrb[0].mxu0 %v1906
      %v2005 = vpop.f32.mrb[0].mxu0
      %v2006 = vadd.f32 0.0, %v2005
      %v2007 = vpop.f32.mrb[0].mxu0
      %v2008 = vpop.f32.mrb[0].mxu0
      %v2009 = vadd.f32 0.0, %v2008
      %v2010 = vpop.f32.mrb[0].mxu0
      %2011 = vmatprep.mubr.bf16.mxu0 0
      %2012 = vmatmul.mubr.bf16.gmra.mrb[0].mxu0 %v1909
      %v2013 = vpop.f32.mrb[0].mxu0
      %v2014 = vadd.f32 0.0, %v2013
      %v2015 = vpop.f32.mrb[0].mxu0
      %v2016 = vpop.f32.mrb[0].mxu0
      %v2017 = vadd.f32 0.0, %v2016
      %v2018 = vpop.f32.mrb[0].mxu0
      %2019 = vmatprep.mubr.bf16.mxu0 0
      %2020 = vmatmul.mubr.bf16.gmra.mrb[0].mxu0 %v1912
      %v2021 = vpop.f32.mrb[0].mxu0
      %v2022 = vadd.f32 0.0, %v2021
      %v2023 = vpop.f32.mrb[0].mxu0
      %v2024 = vpop.f32.mrb[0].mxu0
      %v2025 = vadd.f32 0.0, %v2024
      %v2026 = vpop.f32.mrb[0].mxu0
      %2027 = vmatprep.mubr.bf16.mxu0 0
      %2028 = vmatmul.mubr.bf16.gmra.mrb[0].mxu0 %v1915
      %v2029 = vpop.f32.mrb[0].mxu0
      %v2030 = vadd.f32 0.0, %v2029
      %v2031 = vpop.f32.mrb[0].mxu0
      %v2032 = vpop.f32.mrb[0].mxu0
      %v2033 = vadd.f32 0.0, %v2032
      %v2034 = vpop.f32.mrb[0].mxu0
      %2035 = vmatprep.mubr.bf16.mxu0 0
      %2036 = vmatmul.mubr.bf16.gmra.mrb[0].mxu0 %v1918
      %v2037 = vpop.f32.mrb[0].mxu0
      %v2038 = vadd.f32 0.0, %v2037
      %v2039 = vpop.f32.mrb[0].mxu0
      %v2040 = vpop.f32.mrb[0].mxu0
      %v2041 = vadd.f32 0.0, %v2040
      %v2042 = vpop.f32.mrb[0].mxu0
      %2043 = vmatprep.mubr.bf16.mxu0 0
      %2044 = vmatmul.mubr.bf16.gmra.mrb[0].mxu0 %v1921
      %v2045 = vpop.f32.mrb[0].mxu0
      %v2046 = vadd.f32 0.0, %v2045
      %v2047 = vpop.f32.mrb[0].mxu0
      %v2048 = vpop.f32.mrb[0].mxu0
      %v2049 = vadd.f32 0.0, %v2048
      %v2050 = vpop.f32.mrb[0].mxu0
      %2051 = vmatprep.mubr.bf16.mxu0 0
      %2052 = vmatmul.mubr.bf16.gmra.mrb[0].mxu0 %v1924
      %v2053 = vpop.f32.mrb[0].mxu0
      %v2054 = vadd.f32 0.0, %v2053
      %v2055 = vpop.f32.mrb[0].mxu0
      %v2056 = vpop.f32.mrb[0].mxu0
      %v2057 = vadd.f32 0.0, %v2056
      %v2058 = vpop.f32.mrb[0].mxu0
      %2059 = vmatprep.mubr.bf16.mxu0 0
      %2060 = vmatmul.mubr.bf16.gmra.mrb[0].mxu0 %v1927
      %v2061 = vpop.f32.mrb[0].mxu0
      %v2062 = vadd.f32 0.0, %v2061
      %v2063 = vpop.f32.mrb[0].mxu0
      %v2064 = vpop.f32.mrb[0].mxu0
      %v2065 = vadd.f32 0.0, %v2064
      %v2066 = vpop.f32.mrb[0].mxu0
      %2067 = vmatprep.mubr.bf16.mxu0 0
      %2068 = vmatmul.mubr.bf16.gmra.mrb[0].mxu0 %v1930
      %v2069 = vpop.f32.mrb[0].mxu0
      %v2070 = vadd.f32 0.0, %v2069
      %v2071 = vpop.f32.mrb[0].mxu0
      %v2072 = vpop.f32.mrb[0].mxu0
      %v2073 = vadd.f32 0.0, %v2072
      %v2074 = vpop.f32.mrb[0].mxu0
      %2075 = vmatprep.mubr.bf16.mxu0 0
      %2076 = vmatmul.mubr.bf16.gmra.mrb[0].mxu0 %v1933
      %v2077 = vpop.f32.mrb[0].mxu0
      %v2078 = vadd.f32 0.0, %v2077
      %v2079 = vpop.f32.mrb[0].mxu0
      %v2080 = vpop.f32.mrb[0].mxu0
      %v2081 = vadd.f32 0.0, %v2080
      %v2082 = vpop.f32.mrb[0].mxu0
      %2083 = vmatprep.mubr.bf16.mxu0 0
      %2084 = vmatmul.mubr.bf16.gmra.mrb[0].mxu0 %v1936
      %v2085 = vpop.f32.mrb[0].mxu0
      %v2086 = vadd.f32 0.0, %v2085
      %v2087 = vpop.f32.mrb[0].mxu0
      %v2088 = vpop.f32.mrb[0].mxu0
      %v2089 = vadd.f32 0.0, %v2088
      %v2090 = vpop.f32.mrb[0].mxu0
      %2091 = vmatprep.mubr.bf16.mxu0 0
      %2092 = vmatmul.mubr.bf16.gmra.mrb[0].mxu0 %v1939
      %v2093 = vpop.f32.mrb[0].mxu0
      %v2094 = vadd.f32 0.0, %v2093
      %v2095 = vpop.f32.mrb[0].mxu0
      %v2096 = vpop.f32.mrb[0].mxu0
      %v2097 = vadd.f32 0.0, %v2096
      %v2098 = vpop.f32.mrb[0].mxu0
      %2099 = vmatprep.mubr.bf16.mxu0 0
      %2100 = vmatmul.mubr.bf16.gmra.mrb[0].mxu0 %v1942
      %v2101 = vpop.f32.mrb[0].mxu0
      %v2102 = vadd.f32 0.0, %v2101
      %v2103 = vpop.f32.mrb[0].mxu0
      %v2104 = vpop.f32.mrb[0].mxu0
      %v2105 = vadd.f32 0.0, %v2104
      %v2106 = vpop.f32.mrb[0].mxu0
      %2107 = vdwg.mxu0
      %v2108 = vadd.f32 %v1814, %v1982
      %v2109 = vadd.f32 %v1815, %v1985
      %v2110 = vadd.f32 %v1816, %v1990
      %v2111 = vadd.f32 %v1817, %v1993
      %v2112 = vadd.f32 %v1818, %v1998
      %v2113 = vadd.f32 %v1819, %v2001
      %v2114 = vadd.f32 %v1820, %v2006
      %v2115 = vadd.f32 %v1821, %v2009
      %v2116 = vadd.f32 %v1822, %v2014
      %v2117 = vadd.f32 %v1823, %v2017
      %v2118 = vadd.f32 %v1824, %v2022
      %v2119 = vadd.f32 %v1825, %v2025
      %v2120 = vadd.f32 %v1826, %v2030
      %v2121 = vadd.f32 %v1827, %v2033
      %v2122 = vadd.f32 %v1828, %v2038
      %v2123 = vadd.f32 %v1829, %v2041
      %v2124 = vadd.f32 %v1830, %v2046
      %v2125 = vadd.f32 %v1831, %v2049
      %v2126 = vadd.f32 %v1832, %v2054
      %v2127 = vadd.f32 %v1833, %v2057
      %v2128 = vadd.f32 %v1834, %v2062
      %v2129 = vadd.f32 %v1835, %v2065
      %v2130 = vadd.f32 %v1836, %v2070
      %v2131 = vadd.f32 %v1837, %v2073
      %v2132 = vadd.f32 %v1838, %v2078
      %v2133 = vadd.f32 %v1839, %v2081
      %v2134 = vadd.f32 %v1840, %v2086
      %v2135 = vadd.f32 %v1841, %v2089
      %v2136 = vadd.f32 %v1842, %v2094
      %v2137 = vadd.f32 %v1843, %v2097
      %v2138 = vadd.f32 %v1844, %v2102
      %v2139 = vadd.f32 %v1845, %v2105
      %v2140 = vld [vmem:[%s246 + $0x21] sm:$0xff]
      %v2141 = vld [vmem:[%s246 + $0x29] sm:$0xff]
      %v2142 = vld [vmem:[%s246 + $0x31] sm:$0xff]
      %v2143 = vld [vmem:[%s246 + $0x39] sm:$0xff]
      %v2144 = vld [vmem:[%s246 + $0x41] sm:$0xff]
      %v2145 = vld [vmem:[%s246 + $0x49] sm:$0xff]
      %v2146 = vld [vmem:[%s246 + $0x51] sm:$0xff]
      %v2147 = vld [vmem:[%s246 + $0x59] sm:$0xff]
      %v2148 = vld [vmem:[%s246 + $0x61] sm:$0xff]
      %v2149 = vld [vmem:[%s246 + $0x69] sm:$0xff]
      %v2150 = vld [vmem:[%s246 + $0x71] sm:$0xff]
      %v2151 = vld [vmem:[%s246 + $0x79] sm:$0xff]
      %v2152 = vld [vmem:[%s246 + $0x81] sm:$0xff]
      %v2153 = vld [vmem:[%s246 + $0x89] sm:$0xff]
      %v2154 = vld [vmem:[%s246 + $0x91] sm:$0xff]
      %v2155 = vld [vmem:[%s246 + $0x99] sm:$0xff]
      %v2156 = vld [vmem:[%s246 + $0xa1] sm:$0xff]
      %v2157 = vld [vmem:[%s246 + $0xa9] sm:$0xff]
      %v2158 = vld [vmem:[%s246 + $0xb1] sm:$0xff]
      %v2159 = vld [vmem:[%s246 + $0xb9] sm:$0xff]
      %v2160 = vld [vmem:[%s246 + $0xc1] sm:$0xff]
      %v2161 = vld [vmem:[%s246 + $0xc9] sm:$0xff]
      %v2162 = vld [vmem:[%s246 + $0xd1] sm:$0xff]
      %v2163 = vld [vmem:[%s246 + $0xd9] sm:$0xff]
      %v2164 = vld [vmem:[%s246 + $0xe1] sm:$0xff]
      %v2165 = vld [vmem:[%s246 + $0xe9] sm:$0xff]
      %v2166 = vld [vmem:[%s246 + $0xf1] sm:$0xff]
      %v2167 = vld [vmem:[%s246 + $0xf9] sm:$0xff]
      %v2168 = vld [vmem:[%s246 + $0x101] sm:$0xff]
      %v2169 = vld [vmem:[%s246 + $0x109] sm:$0xff]
      %v2170 = vld [vmem:[%s246 + $0x111] sm:$0xff]
      %v2171 = vld [vmem:[%s246 + $0x119] sm:$0xff]
      %v2172 = vmul.f32 %v2140, %v1069
      %v2173 = vmul.f32 %v2141, %v1074
      %v2174 = vmul.f32 %v2142, %v1079
      %v2175 = vmul.f32 %v2143, %v1084
      %v2176 = vmul.f32 %v2144, %v1089
      %v2177 = vmul.f32 %v2145, %v1094
      %v2178 = vmul.f32 %v2146, %v1099
      %v2179 = vmul.f32 %v2147, %v1104
      %v2180 = vmul.f32 %v2148, %v1109
      %v2181 = vmul.f32 %v2149, %v1114
      %v2182 = vmul.f32 %v2150, %v1119
      %v2183 = vmul.f32 %v2151, %v1124
      %v2184 = vmul.f32 %v2152, %v1129
      %v2185 = vmul.f32 %v2153, %v1134
      %v2186 = vmul.f32 %v2154, %v1139
      %v2187 = vmul.f32 %v2155, %v1144
      %v2188 = vmul.f32 %v2156, %v1149
      %v2189 = vmul.f32 %v2157, %v1154
      %v2190 = vmul.f32 %v2158, %v1159
      %v2191 = vmul.f32 %v2159, %v1164
      %v2192 = vmul.f32 %v2160, %v1169
      %v2193 = vmul.f32 %v2161, %v1174
      %v2194 = vmul.f32 %v2162, %v1179
      %v2195 = vmul.f32 %v2163, %v1184
      %v2196 = vmul.f32 %v2164, %v1189
      %v2197 = vmul.f32 %v2165, %v1194
      %v2198 = vmul.f32 %v2166, %v1199
      %v2199 = vmul.f32 %v2167, %v1204
      %v2200 = vmul.f32 %v2168, %v1209
      %v2201 = vmul.f32 %v2169, %v1214
      %v2202 = vmul.f32 %v2170, %v1219
      %v2203 = vmul.f32 %v2171, %v1224
      %v2204 = vpack.c.bf16 %v2173, %v2172
      %v2205 = vpack.c.bf16 %v2175, %v2174
      %v2206 = vpack.c.bf16 %v2177, %v2176
      %v2207 = vpack.c.bf16 %v2179, %v2178
      %v2208 = vpack.c.bf16 %v2181, %v2180
      %v2209 = vpack.c.bf16 %v2183, %v2182
      %v2210 = vpack.c.bf16 %v2185, %v2184
      %v2211 = vpack.c.bf16 %v2187, %v2186
      %v2212 = vpack.c.bf16 %v2189, %v2188
      %v2213 = vpack.c.bf16 %v2191, %v2190
      %v2214 = vpack.c.bf16 %v2193, %v2192
      %v2215 = vpack.c.bf16 %v2195, %v2194
      %v2216 = vpack.c.bf16 %v2197, %v2196
      %v2217 = vpack.c.bf16 %v2199, %v2198
      %v2218 = vpack.c.bf16 %v2201, %v2200
      %v2219 = vpack.c.bf16 %v2203, %v2202
      %s2220 = scalar_lea.vmem %s1, 20
      %v2221 = vld [vmem:[%s2220] sm:$0xf]
      %v2223 = vsel %vm608, %v2204, 0
      %v2226 = vsel %vm608, %v2205, 0
      %v2229 = vsel %vm608, %v2206, 0
      %v2232 = vsel %vm608, %v2207, 0
      %v2235 = vsel %vm608, %v2208, 0
      %v2238 = vsel %vm608, %v2209, 0
      %v2241 = vsel %vm608, %v2210, 0
      %v2244 = vsel %vm608, %v2211, 0
      %v2247 = vsel %vm608, %v2212, 0
      %v2250 = vsel %vm608, %v2213, 0
      %v2253 = vsel %vm608, %v2214, 0
      %v2256 = vsel %vm608, %v2215, 0
      %v2259 = vsel %vm608, %v2216, 0
      %v2262 = vsel %vm608, %v2217, 0
      %v2265 = vsel %vm608, %v2218, 0
      %v2268 = vsel %vm608, %v2219, 0
      %v2271 = vsel %vm657, %v2221, 0
      %2273 = vmatprep.subr.bf16.mxu0 0
      %2274 = vmatpush1.bf16.msra.mxu0 %v2271
      %2275 = vmatprep.subr.bf16.mxu0 0
      %2276 = vmatpush1.bf16.msra.mxu0 0
      %2277 = vmatprep.subr.bf16.mxu0 0
      %2278 = vmatpush1.bf16.msra.mxu0 0
      %2279 = vmatprep.subr.bf16.mxu0 0
      %2280 = vmatpush1.bf16.msra.mxu0 0
      %2281 = vmatprep.subr.bf16.mxu0 0
      %2282 = vmatpush1.bf16.msra.mxu0 0
      %2283 = vmatprep.subr.bf16.mxu0 0
      %2284 = vmatpush1.bf16.msra.mxu0 0
      %2285 = vmatprep.subr.bf16.mxu0 0
      %2286 = vmatpush1.bf16.msra.mxu0 0
      %2287 = vmatprep.subr.bf16.mxu0 0
      %2288 = vmatpush1.bf16.msra.mxu0 0
      %2289 = vmatprep.subr.bf16.mxu0 0
      %2290 = vmatpush1.bf16.msra.mxu0 0
      %2291 = vmatprep.subr.bf16.mxu0 0
      %2292 = vmatpush1.bf16.msra.mxu0 0
      %2293 = vmatprep.subr.bf16.mxu0 0
      %2294 = vmatpush1.bf16.msra.mxu0 0
      %2295 = vmatprep.subr.bf16.mxu0 0
      %2296 = vmatpush1.bf16.msra.mxu0 0
      %2297 = vmatprep.subr.bf16.mxu0 0
      %2298 = vmatpush1.bf16.msra.mxu0 0
      %2299 = vmatprep.subr.bf16.mxu0 0
      %2300 = vmatpush1.bf16.msra.mxu0 0
      %2301 = vmatprep.subr.bf16.mxu0 0
      %2302 = vmatpush1.bf16.msra.mxu0 0
      %2303 = vmatprep.subr.bf16.mxu0 0
      %2304 = vmatpush1.bf16.msra.mxu0 0
      %2305 = vmatprep.mubr.bf16.mxu0 0
      %2306 = vmatmul.mubr.bf16.gmra.mrb[0].mxu0 %v2223
      %v2307 = vpop.f32.mrb[0].mxu0
      %v2308 = vadd.f32 0.0, %v2307
      %v2309 = vpop.f32.mrb[0].mxu0
      %v2310 = vpop.f32.mrb[0].mxu0
      %v2311 = vadd.f32 0.0, %v2310
      %v2312 = vpop.f32.mrb[0].mxu0
      %2313 = vmatprep.mubr.bf16.mxu0 0
      %2314 = vmatmul.mubr.bf16.gmra.mrb[0].mxu0 %v2226
      %v2315 = vpop.f32.mrb[0].mxu0
      %v2316 = vadd.f32 0.0, %v2315
      %v2317 = vpop.f32.mrb[0].mxu0
      %v2318 = vpop.f32.mrb[0].mxu0
      %v2319 = vadd.f32 0.0, %v2318
      %v2320 = vpop.f32.mrb[0].mxu0
      %2321 = vmatprep.mubr.bf16.mxu0 0
      %2322 = vmatmul.mubr.bf16.gmra.mrb[0].mxu0 %v2229
      %v2323 = vpop.f32.mrb[0].mxu0
      %v2324 = vadd.f32 0.0, %v2323
      %v2325 = vpop.f32.mrb[0].mxu0
      %v2326 = vpop.f32.mrb[0].mxu0
      %v2327 = vadd.f32 0.0, %v2326
      %v2328 = vpop.f32.mrb[0].mxu0
      %2329 = vmatprep.mubr.bf16.mxu0 0
      %2330 = vmatmul.mubr.bf16.gmra.mrb[0].mxu0 %v2232
      %v2331 = vpop.f32.mrb[0].mxu0
      %v2332 = vadd.f32 0.0, %v2331
      %v2333 = vpop.f32.mrb[0].mxu0
      %v2334 = vpop.f32.mrb[0].mxu0
      %v2335 = vadd.f32 0.0, %v2334
      %v2336 = vpop.f32.mrb[0].mxu0
      %2337 = vmatprep.mubr.bf16.mxu0 0
      %2338 = vmatmul.mubr.bf16.gmra.mrb[0].mxu0 %v2235
      %v2339 = vpop.f32.mrb[0].mxu0
      %v2340 = vadd.f32 0.0, %v2339
      %v2341 = vpop.f32.mrb[0].mxu0
      %v2342 = vpop.f32.mrb[0].mxu0
      %v2343 = vadd.f32 0.0, %v2342
      %v2344 = vpop.f32.mrb[0].mxu0
      %2345 = vmatprep.mubr.bf16.mxu0 0
      %2346 = vmatmul.mubr.bf16.gmra.mrb[0].mxu0 %v2238
      %v2347 = vpop.f32.mrb[0].mxu0
      %v2348 = vadd.f32 0.0, %v2347
      %v2349 = vpop.f32.mrb[0].mxu0
      %v2350 = vpop.f32.mrb[0].mxu0
      %v2351 = vadd.f32 0.0, %v2350
      %v2352 = vpop.f32.mrb[0].mxu0
      %2353 = vmatprep.mubr.bf16.mxu0 0
      %2354 = vmatmul.mubr.bf16.gmra.mrb[0].mxu0 %v2241
      %v2355 = vpop.f32.mrb[0].mxu0
      %v2356 = vadd.f32 0.0, %v2355
      %v2357 = vpop.f32.mrb[0].mxu0
      %v2358 = vpop.f32.mrb[0].mxu0
      %v2359 = vadd.f32 0.0, %v2358
      %v2360 = vpop.f32.mrb[0].mxu0
      %2361 = vmatprep.mubr.bf16.mxu0 0
      %2362 = vmatmul.mubr.bf16.gmra.mrb[0].mxu0 %v2244
      %v2363 = vpop.f32.mrb[0].mxu0
      %v2364 = vadd.f32 0.0, %v2363
      %v2365 = vpop.f32.mrb[0].mxu0
      %v2366 = vpop.f32.mrb[0].mxu0
      %v2367 = vadd.f32 0.0, %v2366
      %v2368 = vpop.f32.mrb[0].mxu0
      %2369 = vmatprep.mubr.bf16.mxu0 0
      %2370 = vmatmul.mubr.bf16.gmra.mrb[0].mxu0 %v2247
      %v2371 = vpop.f32.mrb[0].mxu0
      %v2372 = vadd.f32 0.0, %v2371
      %v2373 = vpop.f32.mrb[0].mxu0
      %v2374 = vpop.f32.mrb[0].mxu0
      %v2375 = vadd.f32 0.0, %v2374
      %v2376 = vpop.f32.mrb[0].mxu0
      %2377 = vmatprep.mubr.bf16.mxu0 0
      %2378 = vmatmul.mubr.bf16.gmra.mrb[0].mxu0 %v2250
      %v2379 = vpop.f32.mrb[0].mxu0
      %v2380 = vadd.f32 0.0, %v2379
      %v2381 = vpop.f32.mrb[0].mxu0
      %v2382 = vpop.f32.mrb[0].mxu0
      %v2383 = vadd.f32 0.0, %v2382
      %v2384 = vpop.f32.mrb[0].mxu0
      %2385 = vmatprep.mubr.bf16.mxu0 0
      %2386 = vmatmul.mubr.bf16.gmra.mrb[0].mxu0 %v2253
      %v2387 = vpop.f32.mrb[0].mxu0
      %v2388 = vadd.f32 0.0, %v2387
      %v2389 = vpop.f32.mrb[0].mxu0
      %v2390 = vpop.f32.mrb[0].mxu0
      %v2391 = vadd.f32 0.0, %v2390
      %v2392 = vpop.f32.mrb[0].mxu0
      %2393 = vmatprep.mubr.bf16.mxu0 0
      %2394 = vmatmul.mubr.bf16.gmra.mrb[0].mxu0 %v2256
      %v2395 = vpop.f32.mrb[0].mxu0
      %v2396 = vadd.f32 0.0, %v2395
      %v2397 = vpop.f32.mrb[0].mxu0
      %v2398 = vpop.f32.mrb[0].mxu0
      %v2399 = vadd.f32 0.0, %v2398
      %v2400 = vpop.f32.mrb[0].mxu0
      %2401 = vmatprep.mubr.bf16.mxu0 0
      %2402 = vmatmul.mubr.bf16.gmra.mrb[0].mxu0 %v2259
      %v2403 = vpop.f32.mrb[0].mxu0
      %v2404 = vadd.f32 0.0, %v2403
      %v2405 = vpop.f32.mrb[0].mxu0
      %v2406 = vpop.f32.mrb[0].mxu0
      %v2407 = vadd.f32 0.0, %v2406
      %v2408 = vpop.f32.mrb[0].mxu0
      %2409 = vmatprep.mubr.bf16.mxu0 0
      %2410 = vmatmul.mubr.bf16.gmra.mrb[0].mxu0 %v2262
      %v2411 = vpop.f32.mrb[0].mxu0
      %v2412 = vadd.f32 0.0, %v2411
      %v2413 = vpop.f32.mrb[0].mxu0
      %v2414 = vpop.f32.mrb[0].mxu0
      %v2415 = vadd.f32 0.0, %v2414
      %v2416 = vpop.f32.mrb[0].mxu0
      %2417 = vmatprep.mubr.bf16.mxu0 0
      %2418 = vmatmul.mubr.bf16.gmra.mrb[0].mxu0 %v2265
      %v2419 = vpop.f32.mrb[0].mxu0
      %v2420 = vadd.f32 0.0, %v2419
      %v2421 = vpop.f32.mrb[0].mxu0
      %v2422 = vpop.f32.mrb[0].mxu0
      %v2423 = vadd.f32 0.0, %v2422
      %v2424 = vpop.f32.mrb[0].mxu0
      %2425 = vmatprep.mubr.bf16.mxu0 0
      %2426 = vmatmul.mubr.bf16.gmra.mrb[0].mxu0 %v2268
      %v2427 = vpop.f32.mrb[0].mxu0
      %v2428 = vadd.f32 0.0, %v2427
      %v2429 = vpop.f32.mrb[0].mxu0
      %v2430 = vpop.f32.mrb[0].mxu0
      %v2431 = vadd.f32 0.0, %v2430
      %v2432 = vpop.f32.mrb[0].mxu0
      %2433 = vdwg.mxu0
      %v2434 = vadd.f32 %v2108, %v2308
      %v2435 = vadd.f32 %v2109, %v2311
      %v2436 = vadd.f32 %v2110, %v2316
      %v2437 = vadd.f32 %v2111, %v2319
      %v2438 = vadd.f32 %v2112, %v2324
      %v2439 = vadd.f32 %v2113, %v2327
      %v2440 = vadd.f32 %v2114, %v2332
      %v2441 = vadd.f32 %v2115, %v2335
      %v2442 = vadd.f32 %v2116, %v2340
      %v2443 = vadd.f32 %v2117, %v2343
      %v2444 = vadd.f32 %v2118, %v2348
      %v2445 = vadd.f32 %v2119, %v2351
      %v2446 = vadd.f32 %v2120, %v2356
      %v2447 = vadd.f32 %v2121, %v2359
      %v2448 = vadd.f32 %v2122, %v2364
      %v2449 = vadd.f32 %v2123, %v2367
      %v2450 = vadd.f32 %v2124, %v2372
      %v2451 = vadd.f32 %v2125, %v2375
      %v2452 = vadd.f32 %v2126, %v2380
      %v2453 = vadd.f32 %v2127, %v2383
      %v2454 = vadd.f32 %v2128, %v2388
      %v2455 = vadd.f32 %v2129, %v2391
      %v2456 = vadd.f32 %v2130, %v2396
      %v2457 = vadd.f32 %v2131, %v2399
      %v2458 = vadd.f32 %v2132, %v2404
      %v2459 = vadd.f32 %v2133, %v2407
      %v2460 = vadd.f32 %v2134, %v2412
      %v2461 = vadd.f32 %v2135, %v2415
      %v2462 = vadd.f32 %v2136, %v2420
      %v2463 = vadd.f32 %v2137, %v2423
      %v2464 = vadd.f32 %v2138, %v2428
      %v2465 = vadd.f32 %v2139, %v2431
      %v2466 = vld [vmem:[%s246 + $0x2f] sm:$0xff]
      %v2467 = vld [vmem:[%s246 + $0x37] sm:$0xff]
      %v2468 = vld [vmem:[%s246 + $0x3f] sm:$0xff]
      %v2469 = vld [vmem:[%s246 + $0x47] sm:$0xff]
      %v2470 = vld [vmem:[%s246 + $0x4f] sm:$0xff]
      %v2471 = vld [vmem:[%s246 + $0x57] sm:$0xff]
      %v2472 = vld [vmem:[%s246 + $0x5f] sm:$0xff]
      %v2473 = vld [vmem:[%s246 + $0x67] sm:$0xff]
      %v2474 = vld [vmem:[%s246 + $0x6f] sm:$0xff]
      %v2475 = vld [vmem:[%s246 + $0x77] sm:$0xff]
      %v2476 = vld [vmem:[%s246 + $0x7f] sm:$0xff]
      %v2477 = vld [vmem:[%s246 + $0x87] sm:$0xff]
      %v2478 = vld [vmem:[%s246 + $0x8f] sm:$0xff]
      %v2479 = vld [vmem:[%s246 + $0x97] sm:$0xff]
      %v2480 = vld [vmem:[%s246 + $0x9f] sm:$0xff]
      %v2481 = vld [vmem:[%s246 + $0xa7] sm:$0xff]
      %v2482 = vld [vmem:[%s246 + $0xaf] sm:$0xff]
      %v2483 = vld [vmem:[%s246 + $0xb7] sm:$0xff]
      %v2484 = vld [vmem:[%s246 + $0xbf] sm:$0xff]
      %v2485 = vld [vmem:[%s246 + $0xc7] sm:$0xff]
      %v2486 = vld [vmem:[%s246 + $0xcf] sm:$0xff]
      %v2487 = vld [vmem:[%s246 + $0xd7] sm:$0xff]
      %v2488 = vld [vmem:[%s246 + $0xdf] sm:$0xff]
      %v2489 = vld [vmem:[%s246 + $0xe7] sm:$0xff]
      %v2490 = vld [vmem:[%s246 + $0xef] sm:$0xff]
      %v2491 = vld [vmem:[%s246 + $0xf7] sm:$0xff]
      %v2492 = vld [vmem:[%s246 + $0xff] sm:$0xff]
      %v2493 = vld [vmem:[%s246 + $0x107] sm:$0xff]
      %v2494 = vld [vmem:[%s246 + $0x10f] sm:$0xff]
      %v2495 = vld [vmem:[%s246 + $0x117] sm:$0xff]
      %v2496 = vld [vmem:[%s246 + $0x11f] sm:$0xff]
      %v2497 = vld [vmem:[%s246 + $0x127] sm:$0xff]
      %v2498 = vmul.f32 %v2466, %v352
      %v2499 = vmul.f32 %v2467, %v357
      %v2500 = vmul.f32 %v2468, %v362
      %v2501 = vmul.f32 %v2469, %v367
      %v2502 = vmul.f32 %v2470, %v372
      %v2503 = vmul.f32 %v2471, %v377
      %v2504 = vmul.f32 %v2472, %v382
      %v2505 = vmul.f32 %v2473, %v387
      %v2506 = vmul.f32 %v2474, %v392
      %v2507 = vmul.f32 %v2475, %v397
      %v2508 = vmul.f32 %v2476, %v402
      %v2509 = vmul.f32 %v2477, %v407
      %v2510 = vmul.f32 %v2478, %v412
      %v2511 = vmul.f32 %v2479, %v417
      %v2512 = vmul.f32 %v2480, %v422
      %v2513 = vmul.f32 %v2481, %v427
      %v2514 = vmul.f32 %v2482, %v432
      %v2515 = vmul.f32 %v2483, %v437
      %v2516 = vmul.f32 %v2484, %v442
      %v2517 = vmul.f32 %v2485, %v447
      %v2518 = vmul.f32 %v2486, %v452
      %v2519 = vmul.f32 %v2487, %v457
      %v2520 = vmul.f32 %v2488, %v462
      %v2521 = vmul.f32 %v2489, %v467
      %v2522 = vmul.f32 %v2490, %v472
      %v2523 = vmul.f32 %v2491, %v477
      %v2524 = vmul.f32 %v2492, %v482
      %v2525 = vmul.f32 %v2493, %v487
      %v2526 = vmul.f32 %v2494, %v492
      %v2527 = vmul.f32 %v2495, %v497
      %v2528 = vmul.f32 %v2496, %v502
      %v2529 = vmul.f32 %v2497, %v507
      %v2530 = vpack.c.bf16 %v2499, %v2498
      %v2531 = vpack.c.bf16 %v2501, %v2500
      %v2532 = vpack.c.bf16 %v2503, %v2502
      %v2533 = vpack.c.bf16 %v2505, %v2504
      %v2534 = vpack.c.bf16 %v2507, %v2506
      %v2535 = vpack.c.bf16 %v2509, %v2508
      %v2536 = vpack.c.bf16 %v2511, %v2510
      %v2537 = vpack.c.bf16 %v2513, %v2512
      %v2538 = vpack.c.bf16 %v2515, %v2514
      %v2539 = vpack.c.bf16 %v2517, %v2516
      %v2540 = vpack.c.bf16 %v2519, %v2518
      %v2541 = vpack.c.bf16 %v2521, %v2520
      %v2542 = vpack.c.bf16 %v2523, %v2522
      %v2543 = vpack.c.bf16 %v2525, %v2524
      %v2544 = vpack.c.bf16 %v2527, %v2526
      %v2545 = vpack.c.bf16 %v2529, %v2528
      %s2546 = scalar_lea.vmem %s1, 24
      %v2547 = vld [vmem:[%s2546] sm:$0xf]
      %v2549 = vsel %vm608, %v2530, 0
      %v2552 = vsel %vm608, %v2531, 0
      %v2555 = vsel %vm608, %v2532, 0
      %v2558 = vsel %vm608, %v2533, 0
      %v2561 = vsel %vm608, %v2534, 0
      %v2564 = vsel %vm608, %v2535, 0
      %v2567 = vsel %vm608, %v2536, 0
      %v2570 = vsel %vm608, %v2537, 0
      %v2573 = vsel %vm608, %v2538, 0
      %v2576 = vsel %vm608, %v2539, 0
      %v2579 = vsel %vm608, %v2540, 0
      %v2582 = vsel %vm608, %v2541, 0
      %v2585 = vsel %vm608, %v2542, 0
      %v2588 = vsel %vm608, %v2543, 0
      %v2591 = vsel %vm608, %v2544, 0
      %v2594 = vsel %vm608, %v2545, 0
      %v2597 = vsel %vm657, %v2547, 0
      %2599 = vmatprep.subr.bf16.mxu0 0
      %2600 = vmatpush1.bf16.msra.mxu0 %v2597
      %2601 = vmatprep.subr.bf16.mxu0 0
      %2602 = vmatpush1.bf16.msra.mxu0 0
      %2603 = vmatprep.subr.bf16.mxu0 0
      %2604 = vmatpush1.bf16.msra.mxu0 0
      %2605 = vmatprep.subr.bf16.mxu0 0
      %2606 = vmatpush1.bf16.msra.mxu0 0
      %2607 = vmatprep.subr.bf16.mxu0 0
      %2608 = vmatpush1.bf16.msra.mxu0 0
      %2609 = vmatprep.subr.bf16.mxu0 0
      %2610 = vmatpush1.bf16.msra.mxu0 0
      %2611 = vmatprep.subr.bf16.mxu0 0
      %2612 = vmatpush1.bf16.msra.mxu0 0
      %2613 = vmatprep.subr.bf16.mxu0 0
      %2614 = vmatpush1.bf16.msra.mxu0 0
      %2615 = vmatprep.subr.bf16.mxu0 0
      %2616 = vmatpush1.bf16.msra.mxu0 0
      %2617 = vmatprep.subr.bf16.mxu0 0
      %2618 = vmatpush1.bf16.msra.mxu0 0
      %2619 = vmatprep.subr.bf16.mxu0 0
      %2620 = vmatpush1.bf16.msra.mxu0 0
      %2621 = vmatprep.subr.bf16.mxu0 0
      %2622 = vmatpush1.bf16.msra.mxu0 0
      %2623 = vmatprep.subr.bf16.mxu0 0
      %2624 = vmatpush1.bf16.msra.mxu0 0
      %2625 = vmatprep.subr.bf16.mxu0 0
      %2626 = vmatpush1.bf16.msra.mxu0 0
      %2627 = vmatprep.subr.bf16.mxu0 0
      %2628 = vmatpush1.bf16.msra.mxu0 0
      %2629 = vmatprep.subr.bf16.mxu0 0
      %2630 = vmatpush1.bf16.msra.mxu0 0
      %2631 = vmatprep.mubr.bf16.mxu0 0
      %2632 = vmatmul.mubr.bf16.gmra.mrb[0].mxu0 %v2549
      %v2633 = vpop.f32.mrb[0].mxu0
      %v2634 = vadd.f32 0.0, %v2633
      %v2635 = vpop.f32.mrb[0].mxu0
      %v2636 = vpop.f32.mrb[0].mxu0
      %v2637 = vadd.f32 0.0, %v2636
      %v2638 = vpop.f32.mrb[0].mxu0
      %2639 = vmatprep.mubr.bf16.mxu0 0
      %2640 = vmatmul.mubr.bf16.gmra.mrb[0].mxu0 %v2552
      %v2641 = vpop.f32.mrb[0].mxu0
      %v2642 = vadd.f32 0.0, %v2641
      %v2643 = vpop.f32.mrb[0].mxu0
      %v2644 = vpop.f32.mrb[0].mxu0
      %v2645 = vadd.f32 0.0, %v2644
      %v2646 = vpop.f32.mrb[0].mxu0
      %2647 = vmatprep.mubr.bf16.mxu0 0
      %2648 = vmatmul.mubr.bf16.gmra.mrb[0].mxu0 %v2555
      %v2649 = vpop.f32.mrb[0].mxu0
      %v2650 = vadd.f32 0.0, %v2649
      %v2651 = vpop.f32.mrb[0].mxu0
      %v2652 = vpop.f32.mrb[0].mxu0
      %v2653 = vadd.f32 0.0, %v2652
      %v2654 = vpop.f32.mrb[0].mxu0
      %2655 = vmatprep.mubr.bf16.mxu0 0
      %2656 = vmatmul.mubr.bf16.gmra.mrb[0].mxu0 %v2558
      %v2657 = vpop.f32.mrb[0].mxu0
      %v2658 = vadd.f32 0.0, %v2657
      %v2659 = vpop.f32.mrb[0].mxu0
      %v2660 = vpop.f32.mrb[0].mxu0
      %v2661 = vadd.f32 0.0, %v2660
      %v2662 = vpop.f32.mrb[0].mxu0
      %2663 = vmatprep.mubr.bf16.mxu0 0
      %2664 = vmatmul.mubr.bf16.gmra.mrb[0].mxu0 %v2561
      %v2665 = vpop.f32.mrb[0].mxu0
      %v2666 = vadd.f32 0.0, %v2665
      %v2667 = vpop.f32.mrb[0].mxu0
      %v2668 = vpop.f32.mrb[0].mxu0
      %v2669 = vadd.f32 0.0, %v2668
      %v2670 = vpop.f32.mrb[0].mxu0
      %2671 = vmatprep.mubr.bf16.mxu0 0
      %2672 = vmatmul.mubr.bf16.gmra.mrb[0].mxu0 %v2564
      %v2673 = vpop.f32.mrb[0].mxu0
      %v2674 = vadd.f32 0.0, %v2673
      %v2675 = vpop.f32.mrb[0].mxu0
      %v2676 = vpop.f32.mrb[0].mxu0
      %v2677 = vadd.f32 0.0, %v2676
      %v2678 = vpop.f32.mrb[0].mxu0
      %2679 = vmatprep.mubr.bf16.mxu0 0
      %2680 = vmatmul.mubr.bf16.gmra.mrb[0].mxu0 %v2567
      %v2681 = vpop.f32.mrb[0].mxu0
      %v2682 = vadd.f32 0.0, %v2681
      %v2683 = vpop.f32.mrb[0].mxu0
      %v2684 = vpop.f32.mrb[0].mxu0
      %v2685 = vadd.f32 0.0, %v2684
      %v2686 = vpop.f32.mrb[0].mxu0
      %2687 = vmatprep.mubr.bf16.mxu0 0
      %2688 = vmatmul.mubr.bf16.gmra.mrb[0].mxu0 %v2570
      %v2689 = vpop.f32.mrb[0].mxu0
      %v2690 = vadd.f32 0.0, %v2689
      %v2691 = vpop.f32.mrb[0].mxu0
      %v2692 = vpop.f32.mrb[0].mxu0
      %v2693 = vadd.f32 0.0, %v2692
      %v2694 = vpop.f32.mrb[0].mxu0
      %2695 = vmatprep.mubr.bf16.mxu0 0
      %2696 = vmatmul.mubr.bf16.gmra.mrb[0].mxu0 %v2573
      %v2697 = vpop.f32.mrb[0].mxu0
      %v2698 = vadd.f32 0.0, %v2697
      %v2699 = vpop.f32.mrb[0].mxu0
      %v2700 = vpop.f32.mrb[0].mxu0
      %v2701 = vadd.f32 0.0, %v2700
      %v2702 = vpop.f32.mrb[0].mxu0
      %2703 = vmatprep.mubr.bf16.mxu0 0
      %2704 = vmatmul.mubr.bf16.gmra.mrb[0].mxu0 %v2576
      %v2705 = vpop.f32.mrb[0].mxu0
      %v2706 = vadd.f32 0.0, %v2705
      %v2707 = vpop.f32.mrb[0].mxu0
      %v2708 = vpop.f32.mrb[0].mxu0
      %v2709 = vadd.f32 0.0, %v2708
      %v2710 = vpop.f32.mrb[0].mxu0
      %2711 = vmatprep.mubr.bf16.mxu0 0
      %2712 = vmatmul.mubr.bf16.gmra.mrb[0].mxu0 %v2579
      %v2713 = vpop.f32.mrb[0].mxu0
      %v2714 = vadd.f32 0.0, %v2713
      %v2715 = vpop.f32.mrb[0].mxu0
      %v2716 = vpop.f32.mrb[0].mxu0
      %v2717 = vadd.f32 0.0, %v2716
      %v2718 = vpop.f32.mrb[0].mxu0
      %2719 = vmatprep.mubr.bf16.mxu0 0
      %2720 = vmatmul.mubr.bf16.gmra.mrb[0].mxu0 %v2582
      %v2721 = vpop.f32.mrb[0].mxu0
      %v2722 = vadd.f32 0.0, %v2721
      %v2723 = vpop.f32.mrb[0].mxu0
      %v2724 = vpop.f32.mrb[0].mxu0
      %v2725 = vadd.f32 0.0, %v2724
      %v2726 = vpop.f32.mrb[0].mxu0
      %2727 = vmatprep.mubr.bf16.mxu0 0
      %2728 = vmatmul.mubr.bf16.gmra.mrb[0].mxu0 %v2585
      %v2729 = vpop.f32.mrb[0].mxu0
      %v2730 = vadd.f32 0.0, %v2729
      %v2731 = vpop.f32.mrb[0].mxu0
      %v2732 = vpop.f32.mrb[0].mxu0
      %v2733 = vadd.f32 0.0, %v2732
      %v2734 = vpop.f32.mrb[0].mxu0
      %2735 = vmatprep.mubr.bf16.mxu0 0
      %2736 = vmatmul.mubr.bf16.gmra.mrb[0].mxu0 %v2588
      %v2737 = vpop.f32.mrb[0].mxu0
      %v2738 = vadd.f32 0.0, %v2737
      %v2739 = vpop.f32.mrb[0].mxu0
      %v2740 = vpop.f32.mrb[0].mxu0
      %v2741 = vadd.f32 0.0, %v2740
      %v2742 = vpop.f32.mrb[0].mxu0
      %2743 = vmatprep.mubr.bf16.mxu0 0
      %2744 = vmatmul.mubr.bf16.gmra.mrb[0].mxu0 %v2591
      %v2745 = vpop.f32.mrb[0].mxu0
      %v2746 = vadd.f32 0.0, %v2745
      %v2747 = vpop.f32.mrb[0].mxu0
      %v2748 = vpop.f32.mrb[0].mxu0
      %v2749 = vadd.f32 0.0, %v2748
      %v2750 = vpop.f32.mrb[0].mxu0
      %2751 = vmatprep.mubr.bf16.mxu0 0
      %2752 = vmatmul.mubr.bf16.gmra.mrb[0].mxu0 %v2594
      %v2753 = vpop.f32.mrb[0].mxu0
      %v2754 = vadd.f32 0.0, %v2753
      %v2755 = vpop.f32.mrb[0].mxu0
      %v2756 = vpop.f32.mrb[0].mxu0
      %v2757 = vadd.f32 0.0, %v2756
      %v2758 = vpop.f32.mrb[0].mxu0
      %2759 = vdwg.mxu0
      %v2760 = vadd.f32 %v2434, %v2634
      %v2761 = vadd.f32 %v2435, %v2637
      %v2762 = vadd.f32 %v2436, %v2642
      %v2763 = vadd.f32 %v2437, %v2645
      %v2764 = vadd.f32 %v2438, %v2650
      %v2765 = vadd.f32 %v2439, %v2653
      %v2766 = vadd.f32 %v2440, %v2658
      %v2767 = vadd.f32 %v2441, %v2661
      %v2768 = vadd.f32 %v2442, %v2666
      %v2769 = vadd.f32 %v2443, %v2669
      %v2770 = vadd.f32 %v2444, %v2674
      %v2771 = vadd.f32 %v2445, %v2677
      %v2772 = vadd.f32 %v2446, %v2682
      %v2773 = vadd.f32 %v2447, %v2685
      %v2774 = vadd.f32 %v2448, %v2690
      %v2775 = vadd.f32 %v2449, %v2693
      %v2776 = vadd.f32 %v2450, %v2698
      %v2777 = vadd.f32 %v2451, %v2701
      %v2778 = vadd.f32 %v2452, %v2706
      %v2779 = vadd.f32 %v2453, %v2709
      %v2780 = vadd.f32 %v2454, %v2714
      %v2781 = vadd.f32 %v2455, %v2717
      %v2782 = vadd.f32 %v2456, %v2722
      %v2783 = vadd.f32 %v2457, %v2725
      %v2784 = vadd.f32 %v2458, %v2730
      %v2785 = vadd.f32 %v2459, %v2733
      %v2786 = vadd.f32 %v2460, %v2738
      %v2787 = vadd.f32 %v2461, %v2741
      %v2788 = vadd.f32 %v2462, %v2746
      %v2789 = vadd.f32 %v2463, %v2749
      %v2790 = vadd.f32 %v2464, %v2754
      %v2791 = vadd.f32 %v2465, %v2757
      %v2792 = vld [vmem:[%s246 + $0x30] sm:$0xff]
      %v2793 = vld [vmem:[%s246 + $0x38] sm:$0xff]
      %v2794 = vld [vmem:[%s246 + $0x40] sm:$0xff]
      %v2795 = vld [vmem:[%s246 + $0x48] sm:$0xff]
      %v2796 = vld [vmem:[%s246 + $0x50] sm:$0xff]
      %v2797 = vld [vmem:[%s246 + $0x58] sm:$0xff]
      %v2798 = vld [vmem:[%s246 + $0x60] sm:$0xff]
      %v2799 = vld [vmem:[%s246 + $0x68] sm:$0xff]
      %v2800 = vld [vmem:[%s246 + $0x70] sm:$0xff]
      %v2801 = vld [vmem:[%s246 + $0x78] sm:$0xff]
      %v2802 = vld [vmem:[%s246 + $0x80] sm:$0xff]
      %v2803 = vld [vmem:[%s246 + $0x88] sm:$0xff]
      %v2804 = vld [vmem:[%s246 + $0x90] sm:$0xff]
      %v2805 = vld [vmem:[%s246 + $0x98] sm:$0xff]
      %v2806 = vld [vmem:[%s246 + $0xa0] sm:$0xff]
      %v2807 = vld [vmem:[%s246 + $0xa8] sm:$0xff]
      %v2808 = vld [vmem:[%s246 + $0xb0] sm:$0xff]
      %v2809 = vld [vmem:[%s246 + $0xb8] sm:$0xff]
      %v2810 = vld [vmem:[%s246 + $0xc0] sm:$0xff]
      %v2811 = vld [vmem:[%s246 + $0xc8] sm:$0xff]
      %v2812 = vld [vmem:[%s246 + $0xd0] sm:$0xff]
      %v2813 = vld [vmem:[%s246 + $0xd8] sm:$0xff]
      %v2814 = vld [vmem:[%s246 + $0xe0] sm:$0xff]
      %v2815 = vld [vmem:[%s246 + $0xe8] sm:$0xff]
      %v2816 = vld [vmem:[%s246 + $0xf0] sm:$0xff]
      %v2817 = vld [vmem:[%s246 + $0xf8] sm:$0xff]
      %v2818 = vld [vmem:[%s246 + $0x100] sm:$0xff]
      %v2819 = vld [vmem:[%s246 + $0x108] sm:$0xff]
      %v2820 = vld [vmem:[%s246 + $0x110] sm:$0xff]
      %v2821 = vld [vmem:[%s246 + $0x118] sm:$0xff]
      %v2822 = vld [vmem:[%s246 + $0x120] sm:$0xff]
      %v2823 = vld [vmem:[%s246 + $0x128] sm:$0xff]
      %v2824 = vpack.c.bf16 %v2793, %v2792
      %v2825 = vpack.c.bf16 %v2795, %v2794
      %v2826 = vpack.c.bf16 %v2797, %v2796
      %v2827 = vpack.c.bf16 %v2799, %v2798
      %v2828 = vpack.c.bf16 %v2801, %v2800
      %v2829 = vpack.c.bf16 %v2803, %v2802
      %v2830 = vpack.c.bf16 %v2805, %v2804
      %v2831 = vpack.c.bf16 %v2807, %v2806
      %v2832 = vpack.c.bf16 %v2809, %v2808
      %v2833 = vpack.c.bf16 %v2811, %v2810
      %v2834 = vpack.c.bf16 %v2813, %v2812
      %v2835 = vpack.c.bf16 %v2815, %v2814
      %v2836 = vpack.c.bf16 %v2817, %v2816
      %v2837 = vpack.c.bf16 %v2819, %v2818
      %v2838 = vpack.c.bf16 %v2821, %v2820
      %v2839 = vpack.c.bf16 %v2823, %v2822
      %s2840 = scalar_lea.vmem %s1, 28
      %v2841 = vld [vmem:[%s2840] sm:$0xf]
      %v2843 = vsel %vm608, %v2824, 0
      %v2846 = vsel %vm608, %v2825, 0
      %v2849 = vsel %vm608, %v2826, 0
      %v2852 = vsel %vm608, %v2827, 0
      %v2855 = vsel %vm608, %v2828, 0
      %v2858 = vsel %vm608, %v2829, 0
      %v2861 = vsel %vm608, %v2830, 0
      %v2864 = vsel %vm608, %v2831, 0
      %v2867 = vsel %vm608, %v2832, 0
      %v2870 = vsel %vm608, %v2833, 0
      %v2873 = vsel %vm608, %v2834, 0
      %v2876 = vsel %vm608, %v2835, 0
      %v2879 = vsel %vm608, %v2836, 0
      %v2882 = vsel %vm608, %v2837, 0
      %v2885 = vsel %vm608, %v2838, 0
      %v2888 = vsel %vm608, %v2839, 0
      %v2891 = vsel %vm657, %v2841, 0
      %2893 = vmatprep.subr.bf16.mxu0 0
      %2894 = vmatpush1.bf16.msra.mxu0 %v2891
      %2895 = vmatprep.subr.bf16.mxu0 0
      %2896 = vmatpush1.bf16.msra.mxu0 0
      %2897 = vmatprep.subr.bf16.mxu0 0
      %2898 = vmatpush1.bf16.msra.mxu0 0
      %2899 = vmatprep.subr.bf16.mxu0 0
      %2900 = vmatpush1.bf16.msra.mxu0 0
      %2901 = vmatprep.subr.bf16.mxu0 0
      %2902 = vmatpush1.bf16.msra.mxu0 0
      %2903 = vmatprep.subr.bf16.mxu0 0
      %2904 = vmatpush1.bf16.msra.mxu0 0
      %2905 = vmatprep.subr.bf16.mxu0 0
      %2906 = vmatpush1.bf16.msra.mxu0 0
      %2907 = vmatprep.subr.bf16.mxu0 0
      %2908 = vmatpush1.bf16.msra.mxu0 0
      %2909 = vmatprep.subr.bf16.mxu0 0
      %2910 = vmatpush1.bf16.msra.mxu0 0
      %2911 = vmatprep.subr.bf16.mxu0 0
      %2912 = vmatpush1.bf16.msra.mxu0 0
      %2913 = vmatprep.subr.bf16.mxu0 0
      %2914 = vmatpush1.bf16.msra.mxu0 0
      %2915 = vmatprep.subr.bf16.mxu0 0
      %2916 = vmatpush1.bf16.msra.mxu0 0
      %2917 = vmatprep.subr.bf16.mxu0 0
      %2918 = vmatpush1.bf16.msra.mxu0 0
      %2919 = vmatprep.subr.bf16.mxu0 0
      %2920 = vmatpush1.bf16.msra.mxu0 0
      %2921 = vmatprep.subr.bf16.mxu0 0
      %2922 = vmatpush1.bf16.msra.mxu0 0
      %2923 = vmatprep.subr.bf16.mxu0 0
      %2924 = vmatpush1.bf16.msra.mxu0 0
      %2925 = vmatprep.mubr.bf16.mxu0 0
      %2926 = vmatmul.mubr.bf16.gmra.mrb[0].mxu0 %v2843
      %v2927 = vpop.f32.mrb[0].mxu0
      %v2928 = vadd.f32 0.0, %v2927
      %v2929 = vpop.f32.mrb[0].mxu0
      %v2930 = vpop.f32.mrb[0].mxu0
      %v2931 = vadd.f32 0.0, %v2930
      %v2932 = vpop.f32.mrb[0].mxu0
      %2933 = vmatprep.mubr.bf16.mxu0 0
      %2934 = vmatmul.mubr.bf16.gmra.mrb[0].mxu0 %v2846
      %v2935 = vpop.f32.mrb[0].mxu0
      %v2936 = vadd.f32 0.0, %v2935
      %v2937 = vpop.f32.mrb[0].mxu0
      %v2938 = vpop.f32.mrb[0].mxu0
      %v2939 = vadd.f32 0.0, %v2938
      %v2940 = vpop.f32.mrb[0].mxu0
      %2941 = vmatprep.mubr.bf16.mxu0 0
      %2942 = vmatmul.mubr.bf16.gmra.mrb[0].mxu0 %v2849
      %v2943 = vpop.f32.mrb[0].mxu0
      %v2944 = vadd.f32 0.0, %v2943
      %v2945 = vpop.f32.mrb[0].mxu0
      %v2946 = vpop.f32.mrb[0].mxu0
      %v2947 = vadd.f32 0.0, %v2946
      %v2948 = vpop.f32.mrb[0].mxu0
      %2949 = vmatprep.mubr.bf16.mxu0 0
      %2950 = vmatmul.mubr.bf16.gmra.mrb[0].mxu0 %v2852
      %v2951 = vpop.f32.mrb[0].mxu0
      %v2952 = vadd.f32 0.0, %v2951
      %v2953 = vpop.f32.mrb[0].mxu0
      %v2954 = vpop.f32.mrb[0].mxu0
      %v2955 = vadd.f32 0.0, %v2954
      %v2956 = vpop.f32.mrb[0].mxu0
      %2957 = vmatprep.mubr.bf16.mxu0 0
      %2958 = vmatmul.mubr.bf16.gmra.mrb[0].mxu0 %v2855
      %v2959 = vpop.f32.mrb[0].mxu0
      %v2960 = vadd.f32 0.0, %v2959
      %v2961 = vpop.f32.mrb[0].mxu0
      %v2962 = vpop.f32.mrb[0].mxu0
      %v2963 = vadd.f32 0.0, %v2962
      %v2964 = vpop.f32.mrb[0].mxu0
      %2965 = vmatprep.mubr.bf16.mxu0 0
      %2966 = vmatmul.mubr.bf16.gmra.mrb[0].mxu0 %v2858
      %v2967 = vpop.f32.mrb[0].mxu0
      %v2968 = vadd.f32 0.0, %v2967
      %v2969 = vpop.f32.mrb[0].mxu0
      %v2970 = vpop.f32.mrb[0].mxu0
      %v2971 = vadd.f32 0.0, %v2970
      %v2972 = vpop.f32.mrb[0].mxu0
      %2973 = vmatprep.mubr.bf16.mxu0 0
      %2974 = vmatmul.mubr.bf16.gmra.mrb[0].mxu0 %v2861
      %v2975 = vpop.f32.mrb[0].mxu0
      %v2976 = vadd.f32 0.0, %v2975
      %v2977 = vpop.f32.mrb[0].mxu0
      %v2978 = vpop.f32.mrb[0].mxu0
      %v2979 = vadd.f32 0.0, %v2978
      %v2980 = vpop.f32.mrb[0].mxu0
      %2981 = vmatprep.mubr.bf16.mxu0 0
      %2982 = vmatmul.mubr.bf16.gmra.mrb[0].mxu0 %v2864
      %v2983 = vpop.f32.mrb[0].mxu0
      %v2984 = vadd.f32 0.0, %v2983
      %v2985 = vpop.f32.mrb[0].mxu0
      %v2986 = vpop.f32.mrb[0].mxu0
      %v2987 = vadd.f32 0.0, %v2986
      %v2988 = vpop.f32.mrb[0].mxu0
      %2989 = vmatprep.mubr.bf16.mxu0 0
      %2990 = vmatmul.mubr.bf16.gmra.mrb[0].mxu0 %v2867
      %v2991 = vpop.f32.mrb[0].mxu0
      %v2992 = vadd.f32 0.0, %v2991
      %v2993 = vpop.f32.mrb[0].mxu0
      %v2994 = vpop.f32.mrb[0].mxu0
      %v2995 = vadd.f32 0.0, %v2994
      %v2996 = vpop.f32.mrb[0].mxu0
      %2997 = vmatprep.mubr.bf16.mxu0 0
      %2998 = vmatmul.mubr.bf16.gmra.mrb[0].mxu0 %v2870
      %v2999 = vpop.f32.mrb[0].mxu0
      %v3000 = vadd.f32 0.0, %v2999
      %v3001 = vpop.f32.mrb[0].mxu0
      %v3002 = vpop.f32.mrb[0].mxu0
      %v3003 = vadd.f32 0.0, %v3002
      %v3004 = vpop.f32.mrb[0].mxu0
      %3005 = vmatprep.mubr.bf16.mxu0 0
      %3006 = vmatmul.mubr.bf16.gmra.mrb[0].mxu0 %v2873
      %v3007 = vpop.f32.mrb[0].mxu0
      %v3008 = vadd.f32 0.0, %v3007
      %v3009 = vpop.f32.mrb[0].mxu0
      %v3010 = vpop.f32.mrb[0].mxu0
      %v3011 = vadd.f32 0.0, %v3010
      %v3012 = vpop.f32.mrb[0].mxu0
      %3013 = vmatprep.mubr.bf16.mxu0 0
      %3014 = vmatmul.mubr.bf16.gmra.mrb[0].mxu0 %v2876
      %v3015 = vpop.f32.mrb[0].mxu0
      %v3016 = vadd.f32 0.0, %v3015
      %v3017 = vpop.f32.mrb[0].mxu0
      %v3018 = vpop.f32.mrb[0].mxu0
      %v3019 = vadd.f32 0.0, %v3018
      %v3020 = vpop.f32.mrb[0].mxu0
      %3021 = vmatprep.mubr.bf16.mxu0 0
      %3022 = vmatmul.mubr.bf16.gmra.mrb[0].mxu0 %v2879
      %v3023 = vpop.f32.mrb[0].mxu0
      %v3024 = vadd.f32 0.0, %v3023
      %v3025 = vpop.f32.mrb[0].mxu0
      %v3026 = vpop.f32.mrb[0].mxu0
      %v3027 = vadd.f32 0.0, %v3026
      %v3028 = vpop.f32.mrb[0].mxu0
      %3029 = vmatprep.mubr.bf16.mxu0 0
      %3030 = vmatmul.mubr.bf16.gmra.mrb[0].mxu0 %v2882
      %v3031 = vpop.f32.mrb[0].mxu0
      %v3032 = vadd.f32 0.0, %v3031
      %v3033 = vpop.f32.mrb[0].mxu0
      %v3034 = vpop.f32.mrb[0].mxu0
      %v3035 = vadd.f32 0.0, %v3034
      %v3036 = vpop.f32.mrb[0].mxu0
      %3037 = vmatprep.mubr.bf16.mxu0 0
      %3038 = vmatmul.mubr.bf16.gmra.mrb[0].mxu0 %v2885
      %v3039 = vpop.f32.mrb[0].mxu0
      %v3040 = vadd.f32 0.0, %v3039
      %v3041 = vpop.f32.mrb[0].mxu0
      %v3042 = vpop.f32.mrb[0].mxu0
      %v3043 = vadd.f32 0.0, %v3042
      %v3044 = vpop.f32.mrb[0].mxu0
      %3045 = vmatprep.mubr.bf16.mxu0 0
      %3046 = vmatmul.mubr.bf16.gmra.mrb[0].mxu0 %v2888
      %v3047 = vpop.f32.mrb[0].mxu0
      %v3048 = vadd.f32 0.0, %v3047
      %v3049 = vpop.f32.mrb[0].mxu0
      %v3050 = vpop.f32.mrb[0].mxu0
      %v3051 = vadd.f32 0.0, %v3050
      %v3052 = vpop.f32.mrb[0].mxu0
      %3053 = vdwg.mxu0
      %v3054 = vadd.f32 %v2760, %v2928
      %v3055 = vadd.f32 %v2761, %v2931
      %v3056 = vadd.f32 %v2762, %v2936
      %v3057 = vadd.f32 %v2763, %v2939
      %v3058 = vadd.f32 %v2764, %v2944
      %v3059 = vadd.f32 %v2765, %v2947
      %v3060 = vadd.f32 %v2766, %v2952
      %v3061 = vadd.f32 %v2767, %v2955
      %v3062 = vadd.f32 %v2768, %v2960
      %v3063 = vadd.f32 %v2769, %v2963
      %v3064 = vadd.f32 %v2770, %v2968
      %v3065 = vadd.f32 %v2771, %v2971
      %v3066 = vadd.f32 %v2772, %v2976
      %v3067 = vadd.f32 %v2773, %v2979
      %v3068 = vadd.f32 %v2774, %v2984
      %v3069 = vadd.f32 %v2775, %v2987
      %v3070 = vadd.f32 %v2776, %v2992
      %v3071 = vadd.f32 %v2777, %v2995
      %v3072 = vadd.f32 %v2778, %v3000
      %v3073 = vadd.f32 %v2779, %v3003
      %v3074 = vadd.f32 %v2780, %v3008
      %v3075 = vadd.f32 %v2781, %v3011
      %v3076 = vadd.f32 %v2782, %v3016
      %v3077 = vadd.f32 %v2783, %v3019
      %v3078 = vadd.f32 %v2784, %v3024
      %v3079 = vadd.f32 %v2785, %v3027
      %v3080 = vadd.f32 %v2786, %v3032
      %v3081 = vadd.f32 %v2787, %v3035
      %v3082 = vadd.f32 %v2788, %v3040
      %v3083 = vadd.f32 %v2789, %v3043
      %v3084 = vadd.f32 %v2790, %v3048
      %v3085 = vadd.f32 %v2791, %v3051
      %v3086 = vld [vmem:[%s246 + $0x31] sm:$0xff]
      %v3087 = vld [vmem:[%s246 + $0x39] sm:$0xff]
      %v3088 = vld [vmem:[%s246 + $0x41] sm:$0xff]
      %v3089 = vld [vmem:[%s246 + $0x49] sm:$0xff]
      %v3090 = vld [vmem:[%s246 + $0x51] sm:$0xff]
      %v3091 = vld [vmem:[%s246 + $0x59] sm:$0xff]
      %v3092 = vld [vmem:[%s246 + $0x61] sm:$0xff]
      %v3093 = vld [vmem:[%s246 + $0x69] sm:$0xff]
      %v3094 = vld [vmem:[%s246 + $0x71] sm:$0xff]
      %v3095 = vld [vmem:[%s246 + $0x79] sm:$0xff]
      %v3096 = vld [vmem:[%s246 + $0x81] sm:$0xff]
      %v3097 = vld [vmem:[%s246 + $0x89] sm:$0xff]
      %v3098 = vld [vmem:[%s246 + $0x91] sm:$0xff]
      %v3099 = vld [vmem:[%s246 + $0x99] sm:$0xff]
      %v3100 = vld [vmem:[%s246 + $0xa1] sm:$0xff]
      %v3101 = vld [vmem:[%s246 + $0xa9] sm:$0xff]
      %v3102 = vld [vmem:[%s246 + $0xb1] sm:$0xff]
      %v3103 = vld [vmem:[%s246 + $0xb9] sm:$0xff]
      %v3104 = vld [vmem:[%s246 + $0xc1] sm:$0xff]
      %v3105 = vld [vmem:[%s246 + $0xc9] sm:$0xff]
      %v3106 = vld [vmem:[%s246 + $0xd1] sm:$0xff]
      %v3107 = vld [vmem:[%s246 + $0xd9] sm:$0xff]
      %v3108 = vld [vmem:[%s246 + $0xe1] sm:$0xff]
      %v3109 = vld [vmem:[%s246 + $0xe9] sm:$0xff]
      %v3110 = vld [vmem:[%s246 + $0xf1] sm:$0xff]
      %v3111 = vld [vmem:[%s246 + $0xf9] sm:$0xff]
      %v3112 = vld [vmem:[%s246 + $0x101] sm:$0xff]
      %v3113 = vld [vmem:[%s246 + $0x109] sm:$0xff]
      %v3114 = vld [vmem:[%s246 + $0x111] sm:$0xff]
      %v3115 = vld [vmem:[%s246 + $0x119] sm:$0xff]
      %v3116 = vld [vmem:[%s246 + $0x121] sm:$0xff]
      %v3117 = vld [vmem:[%s246 + $0x129] sm:$0xff]
      %v3118 = vmul.f32 %v3086, %v1069
      %v3119 = vmul.f32 %v3087, %v1074
      %v3120 = vmul.f32 %v3088, %v1079
      %v3121 = vmul.f32 %v3089, %v1084
      %v3122 = vmul.f32 %v3090, %v1089
      %v3123 = vmul.f32 %v3091, %v1094
      %v3124 = vmul.f32 %v3092, %v1099
      %v3125 = vmul.f32 %v3093, %v1104
      %v3126 = vmul.f32 %v3094, %v1109
      %v3127 = vmul.f32 %v3095, %v1114
      %v3128 = vmul.f32 %v3096, %v1119
      %v3129 = vmul.f32 %v3097, %v1124
      %v3130 = vmul.f32 %v3098, %v1129
      %v3131 = vmul.f32 %v3099, %v1134
      %v3132 = vmul.f32 %v3100, %v1139
      %v3133 = vmul.f32 %v3101, %v1144
      %v3134 = vmul.f32 %v3102, %v1149
      %v3135 = vmul.f32 %v3103, %v1154
      %v3136 = vmul.f32 %v3104, %v1159
      %v3137 = vmul.f32 %v3105, %v1164
      %v3138 = vmul.f32 %v3106, %v1169
      %v3139 = vmul.f32 %v3107, %v1174
      %v3140 = vmul.f32 %v3108, %v1179
      %v3141 = vmul.f32 %v3109, %v1184
      %v3142 = vmul.f32 %v3110, %v1189
      %v3143 = vmul.f32 %v3111, %v1194
      %v3144 = vmul.f32 %v3112, %v1199
      %v3145 = vmul.f32 %v3113, %v1204
      %v3146 = vmul.f32 %v3114, %v1209
      %v3147 = vmul.f32 %v3115, %v1214
      %v3148 = vmul.f32 %v3116, %v1219
      %v3149 = vmul.f32 %v3117, %v1224
      %v3150 = vpack.c.bf16 %v3119, %v3118
      %v3151 = vpack.c.bf16 %v3121, %v3120
      %v3152 = vpack.c.bf16 %v3123, %v3122
      %v3153 = vpack.c.bf16 %v3125, %v3124
      %v3154 = vpack.c.bf16 %v3127, %v3126
      %v3155 = vpack.c.bf16 %v3129, %v3128
      %v3156 = vpack.c.bf16 %v3131, %v3130
      %v3157 = vpack.c.bf16 %v3133, %v3132
      %v3158 = vpack.c.bf16 %v3135, %v3134
      %v3159 = vpack.c.bf16 %v3137, %v3136
      %v3160 = vpack.c.bf16 %v3139, %v3138
      %v3161 = vpack.c.bf16 %v3141, %v3140
      %v3162 = vpack.c.bf16 %v3143, %v3142
      %v3163 = vpack.c.bf16 %v3145, %v3144
      %v3164 = vpack.c.bf16 %v3147, %v3146
      %v3165 = vpack.c.bf16 %v3149, %v3148
      %s3166 = scalar_lea.vmem %s1, 32
      %v3167 = vld [vmem:[%s3166] sm:$0xf]
      %v3169 = vsel %vm608, %v3150, 0
      %v3172 = vsel %vm608, %v3151, 0
      %v3175 = vsel %vm608, %v3152, 0
      %v3178 = vsel %vm608, %v3153, 0
      %v3181 = vsel %vm608, %v3154, 0
      %v3184 = vsel %vm608, %v3155, 0
      %v3187 = vsel %vm608, %v3156, 0
      %v3190 = vsel %vm608, %v3157, 0
      %v3193 = vsel %vm608, %v3158, 0
      %v3196 = vsel %vm608, %v3159, 0
      %v3199 = vsel %vm608, %v3160, 0
      %v3202 = vsel %vm608, %v3161, 0
      %v3205 = vsel %vm608, %v3162, 0
      %v3208 = vsel %vm608, %v3163, 0
      %v3211 = vsel %vm608, %v3164, 0
      %v3214 = vsel %vm608, %v3165, 0
      %v3217 = vsel %vm657, %v3167, 0
      %3219 = vmatprep.subr.bf16.mxu0 0
      %3220 = vmatpush1.bf16.msra.mxu0 %v3217
      %3221 = vmatprep.subr.bf16.mxu0 0
      %3222 = vmatpush1.bf16.msra.mxu0 0
      %3223 = vmatprep.subr.bf16.mxu0 0
      %3224 = vmatpush1.bf16.msra.mxu0 0
      %3225 = vmatprep.subr.bf16.mxu0 0
      %3226 = vmatpush1.bf16.msra.mxu0 0
      %3227 = vmatprep.subr.bf16.mxu0 0
      %3228 = vmatpush1.bf16.msra.mxu0 0
      %3229 = vmatprep.subr.bf16.mxu0 0
      %3230 = vmatpush1.bf16.msra.mxu0 0
      %3231 = vmatprep.subr.bf16.mxu0 0
      %3232 = vmatpush1.bf16.msra.mxu0 0
      %3233 = vmatprep.subr.bf16.mxu0 0
      %3234 = vmatpush1.bf16.msra.mxu0 0
      %3235 = vmatprep.subr.bf16.mxu0 0
      %3236 = vmatpush1.bf16.msra.mxu0 0
      %3237 = vmatprep.subr.bf16.mxu0 0
      %3238 = vmatpush1.bf16.msra.mxu0 0
      %3239 = vmatprep.subr.bf16.mxu0 0
      %3240 = vmatpush1.bf16.msra.mxu0 0
      %3241 = vmatprep.subr.bf16.mxu0 0
      %3242 = vmatpush1.bf16.msra.mxu0 0
      %3243 = vmatprep.subr.bf16.mxu0 0
      %3244 = vmatpush1.bf16.msra.mxu0 0
      %3245 = vmatprep.subr.bf16.mxu0 0
      %3246 = vmatpush1.bf16.msra.mxu0 0
      %3247 = vmatprep.subr.bf16.mxu0 0
      %3248 = vmatpush1.bf16.msra.mxu0 0
      %3249 = vmatprep.subr.bf16.mxu0 0
      %3250 = vmatpush1.bf16.msra.mxu0 0
      %3251 = vmatprep.mubr.bf16.mxu0 0
      %3252 = vmatmul.mubr.bf16.gmra.mrb[0].mxu0 %v3169
      %v3253 = vpop.f32.mrb[0].mxu0
      %v3254 = vadd.f32 0.0, %v3253
      %v3255 = vpop.f32.mrb[0].mxu0
      %v3256 = vpop.f32.mrb[0].mxu0
      %v3257 = vadd.f32 0.0, %v3256
      %v3258 = vpop.f32.mrb[0].mxu0
      %3259 = vmatprep.mubr.bf16.mxu0 0
      %3260 = vmatmul.mubr.bf16.gmra.mrb[0].mxu0 %v3172
      %v3261 = vpop.f32.mrb[0].mxu0
      %v3262 = vadd.f32 0.0, %v3261
      %v3263 = vpop.f32.mrb[0].mxu0
      %v3264 = vpop.f32.mrb[0].mxu0
      %v3265 = vadd.f32 0.0, %v3264
      %v3266 = vpop.f32.mrb[0].mxu0
      %3267 = vmatprep.mubr.bf16.mxu0 0
      %3268 = vmatmul.mubr.bf16.gmra.mrb[0].mxu0 %v3175
      %v3269 = vpop.f32.mrb[0].mxu0
      %v3270 = vadd.f32 0.0, %v3269
      %v3271 = vpop.f32.mrb[0].mxu0
      %v3272 = vpop.f32.mrb[0].mxu0
      %v3273 = vadd.f32 0.0, %v3272
      %v3274 = vpop.f32.mrb[0].mxu0
      %3275 = vmatprep.mubr.bf16.mxu0 0
      %3276 = vmatmul.mubr.bf16.gmra.mrb[0].mxu0 %v3178
      %v3277 = vpop.f32.mrb[0].mxu0
      %v3278 = vadd.f32 0.0, %v3277
      %v3279 = vpop.f32.mrb[0].mxu0
      %v3280 = vpop.f32.mrb[0].mxu0
      %v3281 = vadd.f32 0.0, %v3280
      %v3282 = vpop.f32.mrb[0].mxu0
      %3283 = vmatprep.mubr.bf16.mxu0 0
      %3284 = vmatmul.mubr.bf16.gmra.mrb[0].mxu0 %v3181
      %v3285 = vpop.f32.mrb[0].mxu0
      %v3286 = vadd.f32 0.0, %v3285
      %v3287 = vpop.f32.mrb[0].mxu0
      %v3288 = vpop.f32.mrb[0].mxu0
      %v3289 = vadd.f32 0.0, %v3288
      %v3290 = vpop.f32.mrb[0].mxu0
      %3291 = vmatprep.mubr.bf16.mxu0 0
      %3292 = vmatmul.mubr.bf16.gmra.mrb[0].mxu0 %v3184
      %v3293 = vpop.f32.mrb[0].mxu0
      %v3294 = vadd.f32 0.0, %v3293
      %v3295 = vpop.f32.mrb[0].mxu0
      %v3296 = vpop.f32.mrb[0].mxu0
      %v3297 = vadd.f32 0.0, %v3296
      %v3298 = vpop.f32.mrb[0].mxu0
      %3299 = vmatprep.mubr.bf16.mxu0 0
      %3300 = vmatmul.mubr.bf16.gmra.mrb[0].mxu0 %v3187
      %v3301 = vpop.f32.mrb[0].mxu0
      %v3302 = vadd.f32 0.0, %v3301
      %v3303 = vpop.f32.mrb[0].mxu0
      %v3304 = vpop.f32.mrb[0].mxu0
      %v3305 = vadd.f32 0.0, %v3304
      %v3306 = vpop.f32.mrb[0].mxu0
      %3307 = vmatprep.mubr.bf16.mxu0 0
      %3308 = vmatmul.mubr.bf16.gmra.mrb[0].mxu0 %v3190
      %v3309 = vpop.f32.mrb[0].mxu0
      %v3310 = vadd.f32 0.0, %v3309
      %v3311 = vpop.f32.mrb[0].mxu0
      %v3312 = vpop.f32.mrb[0].mxu0
      %v3313 = vadd.f32 0.0, %v3312
      %v3314 = vpop.f32.mrb[0].mxu0
      %3315 = vmatprep.mubr.bf16.mxu0 0
      %3316 = vmatmul.mubr.bf16.gmra.mrb[0].mxu0 %v3193
      %v3317 = vpop.f32.mrb[0].mxu0
      %v3318 = vadd.f32 0.0, %v3317
      %v3319 = vpop.f32.mrb[0].mxu0
      %v3320 = vpop.f32.mrb[0].mxu0
      %v3321 = vadd.f32 0.0, %v3320
      %v3322 = vpop.f32.mrb[0].mxu0
      %3323 = vmatprep.mubr.bf16.mxu0 0
      %3324 = vmatmul.mubr.bf16.gmra.mrb[0].mxu0 %v3196
      %v3325 = vpop.f32.mrb[0].mxu0
      %v3326 = vadd.f32 0.0, %v3325
      %v3327 = vpop.f32.mrb[0].mxu0
      %v3328 = vpop.f32.mrb[0].mxu0
      %v3329 = vadd.f32 0.0, %v3328
      %v3330 = vpop.f32.mrb[0].mxu0
      %3331 = vmatprep.mubr.bf16.mxu0 0
      %3332 = vmatmul.mubr.bf16.gmra.mrb[0].mxu0 %v3199
      %v3333 = vpop.f32.mrb[0].mxu0
      %v3334 = vadd.f32 0.0, %v3333
      %v3335 = vpop.f32.mrb[0].mxu0
      %v3336 = vpop.f32.mrb[0].mxu0
      %v3337 = vadd.f32 0.0, %v3336
      %v3338 = vpop.f32.mrb[0].mxu0
      %3339 = vmatprep.mubr.bf16.mxu0 0
      %3340 = vmatmul.mubr.bf16.gmra.mrb[0].mxu0 %v3202
      %v3341 = vpop.f32.mrb[0].mxu0
      %v3342 = vadd.f32 0.0, %v3341
      %v3343 = vpop.f32.mrb[0].mxu0
      %v3344 = vpop.f32.mrb[0].mxu0
      %v3345 = vadd.f32 0.0, %v3344
      %v3346 = vpop.f32.mrb[0].mxu0
      %3347 = vmatprep.mubr.bf16.mxu0 0
      %3348 = vmatmul.mubr.bf16.gmra.mrb[0].mxu0 %v3205
      %v3349 = vpop.f32.mrb[0].mxu0
      %v3350 = vadd.f32 0.0, %v3349
      %v3351 = vpop.f32.mrb[0].mxu0
      %v3352 = vpop.f32.mrb[0].mxu0
      %v3353 = vadd.f32 0.0, %v3352
      %v3354 = vpop.f32.mrb[0].mxu0
      %3355 = vmatprep.mubr.bf16.mxu0 0
      %3356 = vmatmul.mubr.bf16.gmra.mrb[0].mxu0 %v3208
      %v3357 = vpop.f32.mrb[0].mxu0
      %v3358 = vadd.f32 0.0, %v3357
      %v3359 = vpop.f32.mrb[0].mxu0
      %v3360 = vpop.f32.mrb[0].mxu0
      %v3361 = vadd.f32 0.0, %v3360
      %v3362 = vpop.f32.mrb[0].mxu0
      %3363 = vmatprep.mubr.bf16.mxu0 0
      %3364 = vmatmul.mubr.bf16.gmra.mrb[0].mxu0 %v3211
      %v3365 = vpop.f32.mrb[0].mxu0
      %v3366 = vadd.f32 0.0, %v3365
      %v3367 = vpop.f32.mrb[0].mxu0
      %v3368 = vpop.f32.mrb[0].mxu0
      %v3369 = vadd.f32 0.0, %v3368
      %v3370 = vpop.f32.mrb[0].mxu0
      %3371 = vmatprep.mubr.bf16.mxu0 0
      %3372 = vmatmul.mubr.bf16.gmra.mrb[0].mxu0 %v3214
      %v3373 = vpop.f32.mrb[0].mxu0
      %v3374 = vadd.f32 0.0, %v3373
      %v3375 = vpop.f32.mrb[0].mxu0
      %v3376 = vpop.f32.mrb[0].mxu0
      %v3377 = vadd.f32 0.0, %v3376
      %v3378 = vpop.f32.mrb[0].mxu0
      %3379 = vdwg.mxu0
      %v3380 = vadd.f32 %v3054, %v3254
      %v3381 = vadd.f32 %v3055, %v3257
      %v3382 = vadd.f32 %v3056, %v3262
      %v3383 = vadd.f32 %v3057, %v3265
      %v3384 = vadd.f32 %v3058, %v3270
      %v3385 = vadd.f32 %v3059, %v3273
      %v3386 = vadd.f32 %v3060, %v3278
      %v3387 = vadd.f32 %v3061, %v3281
      %v3388 = vadd.f32 %v3062, %v3286
      %v3389 = vadd.f32 %v3063, %v3289
      %v3390 = vadd.f32 %v3064, %v3294
      %v3391 = vadd.f32 %v3065, %v3297
      %v3392 = vadd.f32 %v3066, %v3302
      %v3393 = vadd.f32 %v3067, %v3305
      %v3394 = vadd.f32 %v3068, %v3310
      %v3395 = vadd.f32 %v3069, %v3313
      %v3396 = vadd.f32 %v3070, %v3318
      %v3397 = vadd.f32 %v3071, %v3321
      %v3398 = vadd.f32 %v3072, %v3326
      %v3399 = vadd.f32 %v3073, %v3329
      %v3400 = vadd.f32 %v3074, %v3334
      %v3401 = vadd.f32 %v3075, %v3337
      %v3402 = vadd.f32 %v3076, %v3342
      %v3403 = vadd.f32 %v3077, %v3345
      %v3404 = vadd.f32 %v3078, %v3350
      %v3405 = vadd.f32 %v3079, %v3353
      %v3406 = vadd.f32 %v3080, %v3358
      %v3407 = vadd.f32 %v3081, %v3361
      %v3408 = vadd.f32 %v3082, %v3366
      %v3409 = vadd.f32 %v3083, %v3369
      %v3410 = vadd.f32 %v3084, %v3374
      %v3411 = vadd.f32 %v3085, %v3377
      %v3412 = vld [vmem:[%s2] sm:$0x1]
      %v3414 = vlaneseq
      %v3415 = vshrl.u32 %v3414, 7
      %v3416 = vsub.s32 0, %v3415
      %v3417 = vrot.slane %v3412, %v3416
      %v3419 = vadd.f32 %v3380, %v3417
      %v3420 = vadd.f32 %v3381, %v3417
      %v3421 = vadd.f32 %v3382, %v3417
      %v3422 = vadd.f32 %v3383, %v3417
      %v3423 = vadd.f32 %v3384, %v3417
      %v3424 = vadd.f32 %v3385, %v3417
      %v3425 = vadd.f32 %v3386, %v3417
      %v3426 = vadd.f32 %v3387, %v3417
      %v3427 = vadd.f32 %v3388, %v3417
      %v3428 = vadd.f32 %v3389, %v3417
      %v3429 = vadd.f32 %v3390, %v3417
      %v3430 = vadd.f32 %v3391, %v3417
      %v3431 = vadd.f32 %v3392, %v3417
      %v3432 = vadd.f32 %v3393, %v3417
      %v3433 = vadd.f32 %v3394, %v3417
      %v3434 = vadd.f32 %v3395, %v3417
      %v3435 = vadd.f32 %v3396, %v3417
      %v3436 = vadd.f32 %v3397, %v3417
      %v3437 = vadd.f32 %v3398, %v3417
      %v3438 = vadd.f32 %v3399, %v3417
      %v3439 = vadd.f32 %v3400, %v3417
      %v3440 = vadd.f32 %v3401, %v3417
      %v3441 = vadd.f32 %v3402, %v3417
      %v3442 = vadd.f32 %v3403, %v3417
      %v3443 = vadd.f32 %v3404, %v3417
      %v3444 = vadd.f32 %v3405, %v3417
      %v3445 = vadd.f32 %v3406, %v3417
      %v3446 = vadd.f32 %v3407, %v3417
      %v3447 = vadd.f32 %v3408, %v3417
      %v3448 = vadd.f32 %v3409, %v3417
      %v3449 = vadd.f32 %v3410, %v3417
      %v3450 = vadd.f32 %v3411, %v3417
      %v3451 = vmax.f32 %v3419, 0.0
      %v3452 = vmax.f32 %v3420, 0.0
      %v3453 = vmax.f32 %v3421, 0.0
      %v3454 = vmax.f32 %v3422, 0.0
      %v3455 = vmax.f32 %v3423, 0.0
      %v3456 = vmax.f32 %v3424, 0.0
      %v3457 = vmax.f32 %v3425, 0.0
      %v3458 = vmax.f32 %v3426, 0.0
      %v3459 = vmax.f32 %v3427, 0.0
      %v3460 = vmax.f32 %v3428, 0.0
      %v3461 = vmax.f32 %v3429, 0.0
      %v3462 = vmax.f32 %v3430, 0.0
      %v3463 = vmax.f32 %v3431, 0.0
      %v3464 = vmax.f32 %v3432, 0.0
      %v3465 = vmax.f32 %v3433, 0.0
      %v3466 = vmax.f32 %v3434, 0.0
      %v3467 = vmax.f32 %v3435, 0.0
      %v3468 = vmax.f32 %v3436, 0.0
      %v3469 = vmax.f32 %v3437, 0.0
      %v3470 = vmax.f32 %v3438, 0.0
      %v3471 = vmax.f32 %v3439, 0.0
      %v3472 = vmax.f32 %v3440, 0.0
      %v3473 = vmax.f32 %v3441, 0.0
      %v3474 = vmax.f32 %v3442, 0.0
      %v3475 = vmax.f32 %v3443, 0.0
      %v3476 = vmax.f32 %v3444, 0.0
      %v3477 = vmax.f32 %v3445, 0.0
      %v3478 = vmax.f32 %v3446, 0.0
      %v3479 = vmax.f32 %v3447, 0.0
      %v3480 = vmax.f32 %v3448, 0.0
      %v3481 = vmax.f32 %v3449, 0.0
      %v3482 = vmax.f32 %v3450, 0.0
      %3483 = vst [vmem:[#allocation2] sm:$0xff] %v3451
      %3484 = vst [vmem:[#allocation2 + $0x8] sm:$0xff] %v3452
      %3485 = vst [vmem:[#allocation2 + $0x10] sm:$0xff] %v3453
      %3486 = vst [vmem:[#allocation2 + $0x18] sm:$0xff] %v3454
      %3487 = vst [vmem:[#allocation2 + $0x20] sm:$0xff] %v3455
      %3488 = vst [vmem:[#allocation2 + $0x28] sm:$0xff] %v3456
      %3489 = vst [vmem:[#allocation2 + $0x30] sm:$0xff] %v3457
      %3490 = vst [vmem:[#allocation2 + $0x38] sm:$0xff] %v3458
      %3491 = vst [vmem:[#allocation2 + $0x40] sm:$0xff] %v3459
      %3492 = vst [vmem:[#allocation2 + $0x48] sm:$0xff] %v3460
      %3493 = vst [vmem:[#allocation2 + $0x50] sm:$0xff] %v3461
      %3494 = vst [vmem:[#allocation2 + $0x58] sm:$0xff] %v3462
      %3495 = vst [vmem:[#allocation2 + $0x60] sm:$0xff] %v3463
      %3496 = vst [vmem:[#allocation2 + $0x68] sm:$0xff] %v3464
      %3497 = vst [vmem:[#allocation2 + $0x70] sm:$0xff] %v3465
      %3498 = vst [vmem:[#allocation2 + $0x78] sm:$0xff] %v3466
      %3499 = vst [vmem:[#allocation2 + $0x80] sm:$0xff] %v3467
      %3500 = vst [vmem:[#allocation2 + $0x88] sm:$0xff] %v3468
      %3501 = vst [vmem:[#allocation2 + $0x90] sm:$0xff] %v3469
      %3502 = vst [vmem:[#allocation2 + $0x98] sm:$0xff] %v3470
      %3503 = vst [vmem:[#allocation2 + $0xa0] sm:$0xff] %v3471
      %3504 = vst [vmem:[#allocation2 + $0xa8] sm:$0xff] %v3472
      %3505 = vst [vmem:[#allocation2 + $0xb0] sm:$0xff] %v3473
      %3506 = vst [vmem:[#allocation2 + $0xb8] sm:$0xff] %v3474
      %3507 = vst [vmem:[#allocation2 + $0xc0] sm:$0xff] %v3475
      %3508 = vst [vmem:[#allocation2 + $0xc8] sm:$0xff] %v3476
      %3509 = vst [vmem:[#allocation2 + $0xd0] sm:$0xff] %v3477
      %3510 = vst [vmem:[#allocation2 + $0xd8] sm:$0xff] %v3478
      %3511 = vst [vmem:[#allocation2 + $0xe0] sm:$0xff] %v3479
      %3512 = vst [vmem:[#allocation2 + $0xe8] sm:$0xff] %v3480
      %3513 = vst [vmem:[#allocation2 + $0xf0] sm:$0xff] %v3481
      %3514 = vst [vmem:[#allocation2 + $0xf8] sm:$0xff] %v3482
      %3515 = vst [vmem:[#allocation2 + $0x100] sm:$0xff] 0.0
      %3516 = vst [vmem:[#allocation2 + $0x108] sm:$0xff] 0.0
      %3517 = vst [vmem:[#allocation2 + $0x110] sm:$0xff] 0.0
      %3518 = vst [vmem:[#allocation2 + $0x118] sm:$0xff] 0.0
      %v3519 = vld [vmem:[#allocation2] sm:$0xff]
      %v3520 = vld [vmem:[#allocation2 + $0x8] sm:$0xff]
      %v3521 = vld [vmem:[#allocation2 + $0x10] sm:$0xff]
      %v3522 = vld [vmem:[#allocation2 + $0x18] sm:$0xff]
      %v3523 = vld [vmem:[#allocation2 + $0x20] sm:$0xff]
      %v3524 = vld [vmem:[#allocation2 + $0x28] sm:$0xff]
      %v3525 = vld [vmem:[#allocation2 + $0x30] sm:$0xff]
      %v3526 = vld [vmem:[#allocation2 + $0x38] sm:$0xff]
      %v3527 = vld [vmem:[#allocation2 + $0x40] sm:$0xff]
      %v3528 = vld [vmem:[#allocation2 + $0x48] sm:$0xff]
      %v3529 = vld [vmem:[#allocation2 + $0x50] sm:$0xff]
      %v3530 = vld [vmem:[#allocation2 + $0x58] sm:$0xff]
      %v3531 = vld [vmem:[#allocation2 + $0x60] sm:$0xff]
      %v3532 = vld [vmem:[#allocation2 + $0x68] sm:$0xff]
      %v3533 = vld [vmem:[#allocation2 + $0x70] sm:$0xff]
      %v3534 = vld [vmem:[#allocation2 + $0x78] sm:$0xff]
      %v3535 = vld [vmem:[#allocation2 + $0x80] sm:$0xff]
      %v3536 = vld [vmem:[#allocation2 + $0x88] sm:$0xff]
      %v3537 = vld [vmem:[#allocation2 + $0x90] sm:$0xff]
      %v3538 = vld [vmem:[#allocation2 + $0x98] sm:$0xff]
      %v3539 = vld [vmem:[#allocation2 + $0xa0] sm:$0xff]
      %v3540 = vld [vmem:[#allocation2 + $0xa8] sm:$0xff]
      %v3541 = vld [vmem:[#allocation2 + $0xb0] sm:$0xff]
      %v3542 = vld [vmem:[#allocation2 + $0xb8] sm:$0xff]
      %v3543 = vld [vmem:[#allocation2 + $0xc0] sm:$0xff]
      %v3544 = vld [vmem:[#allocation2 + $0xc8] sm:$0xff]
      %v3545 = vld [vmem:[#allocation2 + $0xd0] sm:$0xff]
      %v3546 = vld [vmem:[#allocation2 + $0xd8] sm:$0xff]
      %v3547 = vld [vmem:[#allocation2 + $0xe0] sm:$0xff]
      %v3548 = vld [vmem:[#allocation2 + $0xe8] sm:$0xff]
      %v3549 = vld [vmem:[#allocation2 + $0xf0] sm:$0xff]
      %v3550 = vld [vmem:[#allocation2 + $0xf8] sm:$0xff]
      %v3551 = vld [vmem:[#allocation2 + $0x1] sm:$0xff]
      %v3552 = vld [vmem:[#allocation2 + $0x9] sm:$0xff]
      %v3553 = vld [vmem:[#allocation2 + $0x11] sm:$0xff]
      %v3554 = vld [vmem:[#allocation2 + $0x19] sm:$0xff]
      %v3555 = vld [vmem:[#allocation2 + $0x21] sm:$0xff]
      %v3556 = vld [vmem:[#allocation2 + $0x29] sm:$0xff]
      %v3557 = vld [vmem:[#allocation2 + $0x31] sm:$0xff]
      %v3558 = vld [vmem:[#allocation2 + $0x39] sm:$0xff]
      %v3559 = vld [vmem:[#allocation2 + $0x41] sm:$0xff]
      %v3560 = vld [vmem:[#allocation2 + $0x49] sm:$0xff]
      %v3561 = vld [vmem:[#allocation2 + $0x51] sm:$0xff]
      %v3562 = vld [vmem:[#allocation2 + $0x59] sm:$0xff]
      %v3563 = vld [vmem:[#allocation2 + $0x61] sm:$0xff]
      %v3564 = vld [vmem:[#allocation2 + $0x69] sm:$0xff]
      %v3565 = vld [vmem:[#allocation2 + $0x71] sm:$0xff]
      %v3566 = vld [vmem:[#allocation2 + $0x79] sm:$0xff]
      %v3567 = vld [vmem:[#allocation2 + $0x81] sm:$0xff]
      %v3568 = vld [vmem:[#allocation2 + $0x89] sm:$0xff]
      %v3569 = vld [vmem:[#allocation2 + $0x91] sm:$0xff]
      %v3570 = vld [vmem:[#allocation2 + $0x99] sm:$0xff]
      %v3571 = vld [vmem:[#allocation2 + $0xa1] sm:$0xff]
      %v3572 = vld [vmem:[#allocation2 + $0xa9] sm:$0xff]
      %v3573 = vld [vmem:[#allocation2 + $0xb1] sm:$0xff]
      %v3574 = vld [vmem:[#allocation2 + $0xb9] sm:$0xff]
      %v3575 = vld [vmem:[#allocation2 + $0xc1] sm:$0xff]
      %v3576 = vld [vmem:[#allocation2 + $0xc9] sm:$0xff]
      %v3577 = vld [vmem:[#allocation2 + $0xd1] sm:$0xff]
      %v3578 = vld [vmem:[#allocation2 + $0xd9] sm:$0xff]
      %v3579 = vld [vmem:[#allocation2 + $0xe1] sm:$0xff]
      %v3580 = vld [vmem:[#allocation2 + $0xe9] sm:$0xff]
      %v3581 = vld [vmem:[#allocation2 + $0xf1] sm:$0xff]
      %v3582 = vld [vmem:[#allocation2 + $0xf9] sm:$0xff]
      %v3583 = vmax.f32 %v3519, %v3551
      %v3584 = vmax.f32 %v3520, %v3552
      %v3585 = vmax.f32 %v3521, %v3553
      %v3586 = vmax.f32 %v3522, %v3554
      %v3587 = vmax.f32 %v3523, %v3555
      %v3588 = vmax.f32 %v3524, %v3556
      %v3589 = vmax.f32 %v3525, %v3557
      %v3590 = vmax.f32 %v3526, %v3558
      %v3591 = vmax.f32 %v3527, %v3559
      %v3592 = vmax.f32 %v3528, %v3560
      %v3593 = vmax.f32 %v3529, %v3561
      %v3594 = vmax.f32 %v3530, %v3562
      %v3595 = vmax.f32 %v3531, %v3563
      %v3596 = vmax.f32 %v3532, %v3564
      %v3597 = vmax.f32 %v3533, %v3565
      %v3598 = vmax.f32 %v3534, %v3566
      %v3599 = vmax.f32 %v3535, %v3567
      %v3600 = vmax.f32 %v3536, %v3568
      %v3601 = vmax.f32 %v3537, %v3569
      %v3602 = vmax.f32 %v3538, %v3570
      %v3603 = vmax.f32 %v3539, %v3571
      %v3604 = vmax.f32 %v3540, %v3572
      %v3605 = vmax.f32 %v3541, %v3573
      %v3606 = vmax.f32 %v3542, %v3574
      %v3607 = vmax.f32 %v3543, %v3575
      %v3608 = vmax.f32 %v3544, %v3576
      %v3609 = vmax.f32 %v3545, %v3577
      %v3610 = vmax.f32 %v3546, %v3578
      %v3611 = vmax.f32 %v3547, %v3579
      %v3612 = vmax.f32 %v3548, %v3580
      %v3613 = vmax.f32 %v3549, %v3581
      %v3614 = vmax.f32 %v3550, %v3582
      %v3615 = vld [vmem:[#allocation2 + $0x100] sm:$0xff]
      %v3616 = vld [vmem:[#allocation2 + $0x108] sm:$0xff]
      %v3617 = vld [vmem:[#allocation2 + $0x101] sm:$0xff]
      %v3618 = vld [vmem:[#allocation2 + $0x109] sm:$0xff]
      %v3619 = vmax.f32 %v3615, %v3617
      %v3620 = vmax.f32 %v3616, %v3618
      %v3621 = vmax.f32 %v3583, %v3585
      %v3622 = vmax.f32 %v3584, %v3586
      %v3623 = vmax.f32 %v3585, %v3587
      %v3624 = vmax.f32 %v3586, %v3588
      %v3625 = vmax.f32 %v3587, %v3589
      %v3626 = vmax.f32 %v3588, %v3590
      %v3627 = vmax.f32 %v3589, %v3591
      %v3628 = vmax.f32 %v3590, %v3592
      %v3629 = vmax.f32 %v3591, %v3593
      %v3630 = vmax.f32 %v3592, %v3594
      %v3631 = vmax.f32 %v3593, %v3595
      %v3632 = vmax.f32 %v3594, %v3596
      %v3633 = vmax.f32 %v3595, %v3597
      %v3634 = vmax.f32 %v3596, %v3598
      %v3635 = vmax.f32 %v3597, %v3599
      %v3636 = vmax.f32 %v3598, %v3600
      %v3637 = vmax.f32 %v3599, %v3601
      %v3638 = vmax.f32 %v3600, %v3602
      %v3639 = vmax.f32 %v3601, %v3603
      %v3640 = vmax.f32 %v3602, %v3604
      %v3641 = vmax.f32 %v3603, %v3605
      %v3642 = vmax.f32 %v3604, %v3606
      %v3643 = vmax.f32 %v3605, %v3607
      %v3644 = vmax.f32 %v3606, %v3608
      %v3645 = vmax.f32 %v3607, %v3609
      %v3646 = vmax.f32 %v3608, %v3610
      %v3647 = vmax.f32 %v3609, %v3611
      %v3648 = vmax.f32 %v3610, %v3612
      %v3649 = vmax.f32 %v3611, %v3613
      %v3650 = vmax.f32 %v3612, %v3614
      %v3651 = vmax.f32 %v3613, %v3619
      %v3652 = vmax.f32 %v3614, %v3620
      %v3653 = vld [vmem:[%s5] sm:$0xff]
      %v3654 = vld [vmem:[%s5 + $0x8] sm:$0xff]
      %v3655 = vld [vmem:[%s5 + $0x10] sm:$0xff]
      %v3656 = vld [vmem:[%s5 + $0x18] sm:$0xff]
      %v3657 = vld [vmem:[%s5 + $0x20] sm:$0xff]
      %v3658 = vld [vmem:[%s5 + $0x28] sm:$0xff]
      %v3659 = vld [vmem:[%s5 + $0x30] sm:$0xff]
      %v3660 = vld [vmem:[%s5 + $0x38] sm:$0xff]
      %v3661 = vld [vmem:[%s5 + $0x40] sm:$0xff]
      %v3662 = vld [vmem:[%s5 + $0x48] sm:$0xff]
      %v3663 = vld [vmem:[%s5 + $0x50] sm:$0xff]
      %v3664 = vld [vmem:[%s5 + $0x58] sm:$0xff]
      %v3665 = vld [vmem:[%s5 + $0x60] sm:$0xff]
      %v3666 = vld [vmem:[%s5 + $0x68] sm:$0xff]
      %v3667 = vld [vmem:[%s5 + $0x70] sm:$0xff]
      %v3668 = vld [vmem:[%s5 + $0x78] sm:$0xff]
      %3669 = vmatprep.subr.mxu0 0.0
      %3670 = vmatpush1.msra.mxu0 %v3621
      %3671 = vmatprep.subr.mxu0 0.0
      %3672 = vmatpush1.msra.mxu0 %v3622
      %3673 = vmatprep.subr.mxu0 0.0
      %3674 = vmatpush1.msra.mxu0 %v3623
      %3675 = vmatprep.subr.mxu0 0.0
      %3676 = vmatpush1.msra.mxu0 %v3624
      %3677 = vmatprep.subr.mxu0 0.0
      %3678 = vmatpush1.msra.mxu0 %v3625
      %3679 = vmatprep.subr.mxu0 0.0
      %3680 = vmatpush1.msra.mxu0 %v3626
      %3681 = vmatprep.subr.mxu0 0.0
      %3682 = vmatpush1.msra.mxu0 %v3627
      %3683 = vmatprep.subr.mxu0 0.0
      %3684 = vmatpush1.msra.mxu0 %v3628
      %3685 = vmatprep.subr.mxu0 0.0
      %3686 = vmatpush1.msra.mxu0 %v3629
      %3687 = vmatprep.subr.mxu0 0.0
      %3688 = vmatpush1.msra.mxu0 %v3630
      %3689 = vmatprep.subr.mxu0 0.0
      %3690 = vmatpush1.msra.mxu0 %v3631
      %3691 = vmatprep.subr.mxu0 0.0
      %3692 = vmatpush1.msra.mxu0 %v3632
      %3693 = vmatprep.subr.mxu0 0.0
      %3694 = vmatpush1.msra.mxu0 %v3633
      %3695 = vmatprep.subr.mxu0 0.0
      %3696 = vmatpush1.msra.mxu0 %v3634
      %3697 = vmatprep.subr.mxu0 0.0
      %3698 = vmatpush1.msra.mxu0 %v3635
      %3699 = vmatprep.subr.mxu0 0.0
      %3700 = vmatpush1.msra.mxu0 %v3636
      %3701 = vmatprep.subr.mxu0 0.0
      %3702 = vmatpush1.msra.mxu0 %v3637
      %3703 = vmatprep.subr.mxu0 0.0
      %3704 = vmatpush1.msra.mxu0 %v3638
      %3705 = vmatprep.subr.mxu0 0.0
      %3706 = vmatpush1.msra.mxu0 %v3639
      %3707 = vmatprep.subr.mxu0 0.0
      %3708 = vmatpush1.msra.mxu0 %v3640
      %3709 = vmatprep.subr.mxu0 0.0
      %3710 = vmatpush1.msra.mxu0 %v3641
      %3711 = vmatprep.subr.mxu0 0.0
      %3712 = vmatpush1.msra.mxu0 %v3642
      %3713 = vmatprep.subr.mxu0 0.0
      %3714 = vmatpush1.msra.mxu0 %v3643
      %3715 = vmatprep.subr.mxu0 0.0
      %3716 = vmatpush1.msra.mxu0 %v3644
      %3717 = vmatprep.subr.mxu0 0.0
      %3718 = vmatpush1.msra.mxu0 %v3645
      %3719 = vmatprep.subr.mxu0 0.0
      %3720 = vmatpush1.msra.mxu0 %v3646
      %3721 = vmatprep.subr.mxu0 0.0
      %3722 = vmatpush1.msra.mxu0 %v3647
      %3723 = vmatprep.subr.mxu0 0.0
      %3724 = vmatpush1.msra.mxu0 %v3648
      %3725 = vmatprep.subr.mxu0 0.0
      %3726 = vmatpush1.msra.mxu0 %v3649
      %3727 = vmatprep.subr.mxu0 0.0
      %3728 = vmatpush1.msra.mxu0 %v3650
      %3729 = vmatprep.subr.mxu0 0.0
      %3730 = vmatpush1.msra.mxu0 %v3651
      %3731 = vmatprep.subr.mxu0 0.0
      %3732 = vmatpush1.msra.mxu0 %v3652
      %3733 = vmatprep.mubr.f32.mxu0 %v3654
      %3734 = vmatmul.mubr.f32.gmra.mrb[0].mxu0 %v3653
      %v3735 = vpop.f32.mrb[0].mxu0
      %v3736 = vadd.f32 0.0, %v3735
      %v3737 = vpop.f32.mrb[0].mxu0
      %3738 = vmatprep.mubr.f32.mxu0 %v3656
      %3739 = vmatmul.mubr.f32.gmra.mrb[0].mxu0 %v3655
      %v3740 = vpop.f32.mrb[0].mxu0
      %v3741 = vadd.f32 0.0, %v3740
      %v3742 = vpop.f32.mrb[0].mxu0
      %3743 = vmatprep.mubr.f32.mxu0 %v3658
      %3744 = vmatmul.mubr.f32.gmra.mrb[0].mxu0 %v3657
      %v3745 = vpop.f32.mrb[0].mxu0
      %v3746 = vadd.f32 0.0, %v3745
      %v3747 = vpop.f32.mrb[0].mxu0
      %3748 = vmatprep.mubr.f32.mxu0 %v3660
      %3749 = vmatmul.mubr.f32.gmra.mrb[0].mxu0 %v3659
      %v3750 = vpop.f32.mrb[0].mxu0
      %v3751 = vadd.f32 0.0, %v3750
      %v3752 = vpop.f32.mrb[0].mxu0
      %3753 = vmatprep.mubr.f32.mxu0 %v3662
      %3754 = vmatmul.mubr.f32.gmra.mrb[0].mxu0 %v3661
      %v3755 = vpop.f32.mrb[0].mxu0
      %v3756 = vadd.f32 0.0, %v3755
      %v3757 = vpop.f32.mrb[0].mxu0
      %3758 = vmatprep.mubr.f32.mxu0 %v3664
      %3759 = vmatmul.mubr.f32.gmra.mrb[0].mxu0 %v3663
      %v3760 = vpop.f32.mrb[0].mxu0
      %v3761 = vadd.f32 0.0, %v3760
      %v3762 = vpop.f32.mrb[0].mxu0
      %3763 = vmatprep.mubr.f32.mxu0 %v3666
      %3764 = vmatmul.mubr.f32.gmra.mrb[0].mxu0 %v3665
      %v3765 = vpop.f32.mrb[0].mxu0
      %v3766 = vadd.f32 0.0, %v3765
      %v3767 = vpop.f32.mrb[0].mxu0
      %3768 = vmatprep.mubr.f32.mxu0 %v3668
      %3769 = vmatmul.mubr.f32.gmra.mrb[0].mxu0 %v3667
      %v3770 = vpop.f32.mrb[0].mxu0
      %v3771 = vadd.f32 0.0, %v3770
      %v3772 = vpop.f32.mrb[0].mxu0
      %3773 = vdwg.mxu0
      %3774 = vst [vmem:[%s251] sm:$0xff] 0.0
      %3775 = vst [vmem:[%s251 + $0x8] sm:$0xff] 0.0
      %3776 = vst [vmem:[%s251 + $0x10] sm:$0xff] %v3736
      %3777 = vst [vmem:[%s251 + $0x18] sm:$0xff] %v3741
      %3778 = vst [vmem:[%s251 + $0x20] sm:$0xff] %v3746
      %3779 = vst [vmem:[%s251 + $0x28] sm:$0xff] %v3751
      %3780 = vst [vmem:[%s251 + $0x30] sm:$0xff] %v3756
      %3781 = vst [vmem:[%s251 + $0x38] sm:$0xff] %v3761
      %3782 = vst [vmem:[%s251 + $0x40] sm:$0xff] %v3766
      %3783 = vst [vmem:[%s251 + $0x48] sm:$0xff] %v3771
      %3784 = vst [vmem:[%s251 + $0x50] sm:$0xff] 0.0
      %3785 = vst [vmem:[%s251 + $0x58] sm:$0xff] 0.0
      %p3786 = scmp.lt.s32.totalorder %s17, 1
      %s3787 = scalar_select %p3786, %s17, 1
      %s3788 = smul.addr %s3787, 12
      %s3789 = smul.addr %s3788, 8
      %s3790 = scalar_lea.vmem %s6, %s3789
      // Predicated region
      $region45: #{audio_cnn_forward.3} parent=43 // pred_check
        %p3791 = pneg %p166
      $region46: #{audio_cnn_forward.3} parent=43 // pred_check_branch
        %3793 = sbr.rel (%p3791) target = $region48
      $region47: #{audio_cnn_forward.3} parent=43 // pred_region
        _
      $region48: #{audio_cnn_forward.3} parent=43 // pred_fallthru
        _
    $region44: #{audio_cnn_forward.3} parent=5 // pred_fallthru
      _
    %p3794 = scmp.le.s32.totalorder 2, %s12
    // Predicated region
    $region49: #{audio_cnn_forward.3} parent=5 // pred_check
      %p3795 = pneg %p3794
    $region50: #{audio_cnn_forward.3} parent=5 // pred_check_branch
      %3797 = sbr.rel (%p3795) target = $region52
    $region51: #{audio_cnn_forward.3} parent=5 // pred_region
      %s3798 = ssub.s32 %s12, 2
      // Predicated region
      $region53: #{audio_cnn_forward.3} parent=51 // pred_check
        %p3799 = pneg %p172
      $region54: #{audio_cnn_forward.3} parent=51 // pred_check_branch
        %3801 = sbr.rel (%p3799) target = $region56
      $region55: #{audio_cnn_forward.3} parent=51 // pred_region
        %p3802 = scmp.lt.s32.totalorder %s18, 1
        %s3803 = scalar_select %p3802, %s18, 1
        %s3804 = smul.addr %s3803, 12
        %s3805 = smul.addr %s3804, 8
        %s3806 = scalar_lea.vmem %s6, %s3805
      $region56: #{audio_cnn_forward.3} parent=51 // pred_fallthru
        _
    $region52: #{audio_cnn_forward.3} parent=5 // pred_fallthru
      _
  $region6: #{audio_cnn_forward.3} parent=0 // loop_footer
    %s16 = sadd.s32 1, %s12
  $region7: #{audio_cnn_forward.3} parent=0 // loop_footer_branch
    %11 = sbr.rel target = $region3
  $region8: #{audio_cnn_forward.3} parent=0 // loop_exit
    _

</llo_original>
